<compile_context>
chip_gen: v5e
topology: v5e:2x2
jax: 0.10.0
libtpu: 0.0.40
codegen_flags: <defaults>
</compile_context>

<pallas_src>
import functools

import jax
import jax.numpy as jnp
import numpy as np
from jax import lax
from jax.experimental import pallas as pl
from jax.experimental.pallas import tpu as pltpu

_UNROLL_LIMIT = 64  # full static unroll of the recurrence up to this many steps


def _lstm_fc_kernel(x_ref, wih_ref, whh_ref, b_ref, wfc_ref, bfc_ref,
                    out_ref, gates_ref, h_all_ref, *,
                    seq_len, batch_pad, hidden_pad, out_steps):
    """Fused LSTM recurrence + deferred Linear.

    x_ref    : (T*Bp, I)        time-major input, batch padded to Bp
    wih_ref  : (I, 4Hp)         input->gates weight, gate blocks (i, f, o, g)
    whh_ref  : (Hp, 4Hp)        hidden->gates weight, gate blocks (i, f, o, g)
    b_ref    : (1, 4Hp)         combined bias (b_ih + b_hh), reordered/padded
    wfc_ref  : (Hp, Op)         fc weight (transposed, zero-padded)
    bfc_ref  : (1, Op)          fc bias (zero-padded)
    out_ref  : (T_out*Bp, Op)   fc(h_t) for the last T_out steps, time-major
    gates_ref: (T*Bp, 4Hp)      VMEM scratch: hoisted input projection
    h_all_ref: (T*Bp, Hp)       VMEM scratch: per-step hidden states
    """
    T, Bp, Hp, T_out = seq_len, batch_pad, hidden_pad, out_steps

    # (1) Hoisted input projection + bias for all T steps, staged into VMEM
    #     scratch so nothing big stays live in vregs across the recurrence.
    x = x_ref[...]
    if x.shape[1] == 1:
        # K=1 contraction: VPU broadcast multiply, keep the MXU out of it.
        gates_ref[...] = x * wih_ref[...] + b_ref[...]
    else:
        gates_ref[...] = (
            jnp.dot(x, wih_ref[...], preferred_element_type=jnp.float32)
            + b_ref[...])

    h0 = jnp.zeros((Bp, Hp), jnp.float32)
    c0 = jnp.zeros((Bp, Hp), jnp.float32)

    def step(row, h, c):
        # (8,128)-aligned row-block read; only h @ W_hh + elementwise work sits
        # on the serial chain.
        g = gates_ref[pl.ds(row, Bp), :] + jnp.dot(
            h, whh_ref[...], preferred_element_type=jnp.float32)    # (Bp, 4Hp)
        sig = jax.nn.sigmoid(g[:, :3 * Hp])        # i, f, o in one lane-aligned slab
        i_g = sig[:, 0 * Hp:1 * Hp]
        f_g = sig[:, 1 * Hp:2 * Hp]
        o_g = sig[:, 2 * Hp:3 * Hp]
        g_g = jnp.tanh(g[:, 3 * Hp:])
        c_new = f_g * c + i_g * g_g
        h_new = o_g * jnp.tanh(c_new)
        h_all_ref[pl.ds(row, Bp), :] = h_new       # aligned, unmasked store
        return h_new, c_new

    if T <= _UNROLL_LIMIT:
        # (2a) Fully-unrolled recurrence (small static T).
        h, c = h0, c0
        for t in range(T):
            h, c = step(t * Bp, h, c)
    else:
        # (2b) Bounded-unroll loop for long sequences.
        def body(t, carry):
            h, c = carry
            row = pl.multiple_of(t * Bp, Bp)
            return step(row, h, c)
        lax.fori_loop(0, T, body, (h0, c0), unroll=8)

    # (3) Deferred fc over the last T_out steps: one matmul + one lane-dense
    #     (128-wide) unmasked store.
    h_tail = h_all_ref[pl.ds((T - T_out) * Bp, T_out * Bp), :]
    out_ref[...] = (jnp.dot(h_tail, wfc_ref[...],
                            preferred_element_type=jnp.float32) + bfc_ref[...])


def _round_up(n, m):
    return ((n + m - 1) // m) * m


def _pad_last(a, target):
    pad = target - a.shape[-1]
    if pad == 0:
        return a
    return jnp.pad(a, [(0, 0)] * (a.ndim - 1) + [(0, pad)])


def _prep_gate_cols(a, hidden, hidden_pad):
    """(..., 4H) in torch gate order (i, f, g, o) -> (..., 4*Hp) in (i, f, o, g),
    each gate block zero-padded from H to Hp columns."""
    i, f, g, o = jnp.split(a, 4, axis=-1)
    return jnp.concatenate(
        [_pad_last(blk, hidden_pad) for blk in (i, f, o, g)], axis=-1)


def lstm_model30_forward(x, params):
    """x: (B, T, input_size) float32 -> (B, min(T, 30), output_size)."""
    w_ih, w_hh, b_ih, b_hh, w_fc, b_fc = params
    B, T, I = x.shape
    H = w_hh.shape[1]
    O = w_fc.shape[0]
    T_out = min(T, 30)

    Bp = _round_up(B, 8)      # sublane-aligned batch
    Hp = _round_up(H, 128)    # lane-aligned hidden / gate blocks
    Op = _round_up(O, 128)    # lane-dense fc output

    f32 = jnp.float32

    # Time-major, batch-padded, flattened over (T, Bp).
    x_tm = jnp.transpose(x.astype(f32), (1, 0, 2))                # (T, B, I)
    x_tm = jnp.pad(x_tm, ((0, 0), (0, Bp - B), (0, 0)))           # (T, Bp, I)
    x2d = x_tm.reshape(T * Bp, I)

    # Weights: transpose to (in, 4H)/(H, O), reorder gate blocks to
    # (i, f, o, g), zero-pad to tile-aligned shapes.  Zero padding keeps the
    # padded h/c lanes exactly 0 through the recurrence.
    wih_p = _prep_gate_cols(jnp.transpose(w_ih).astype(f32), H, Hp)   # (I, 4Hp)
    whh_p = _prep_gate_cols(jnp.transpose(w_hh).astype(f32), H, Hp)   # (H, 4Hp)
    whh_p = jnp.pad(whh_p, ((0, Hp - H), (0, 0)))                     # (Hp, 4Hp)
    b_p = _prep_gate_cols((b_ih + b_hh).reshape(1, 4 * H).astype(f32), H, Hp)
    wfc_p = jnp.pad(jnp.transpose(w_fc).astype(f32),
                    ((0, Hp - H), (0, Op - O)))                       # (Hp, Op)
    bfc_p = _pad_last(b_fc.reshape(1, O).astype(f32), Op)             # (1, Op)

    # Scoped-VMEM limit sized to the actual resident footprint (2x headroom).
    resident_elems = (x2d.size + wih_p.size + whh_p.size + b_p.size
                      + wfc_p.size + bfc_p.size + T_out * Bp * Op
                      + T * Bp * 4 * Hp + T * Bp * Hp)
    vmem_limit = int(min(100 * 2**20, max(32 * 2**20, 8 * resident_elems)))

    vmem = pl.BlockSpec(memory_space=pltpu.MemorySpace.VMEM)
    out2d = pl.pallas_call(
        functools.partial(_lstm_fc_kernel, seq_len=T, batch_pad=Bp,
                          hidden_pad=Hp, out_steps=T_out),
        out_shape=jax.ShapeDtypeStruct((T_out * Bp, Op), f32),
        in_specs=[vmem] * 6,
        out_specs=vmem,
        scratch_shapes=[pltpu.VMEM((T * Bp, 4 * Hp), f32),
                        pltpu.VMEM((T * Bp, Hp), f32)],
        compiler_params=pltpu.CompilerParams(vmem_limit_bytes=vmem_limit),
    )(x2d, wih_p, whh_p, b_p, wfc_p, bfc_p)

    # Layout plumbing back to batch-first (B, T_out, O), matching PyTorch.
    out = out2d.reshape(T_out, Bp, Op)
    return jnp.transpose(out, (1, 0, 2))[:B, :, :O]


def _reference_forward(x, params):
    """Pure-JAX reference (mirrors torch.nn.LSTM + Linear)."""
    w_ih, w_hh, b_ih, b_hh, w_fc, b_fc = params
    H = w_hh.shape[1]
    B = x.shape[0]

    def step(carry, x_t):
        h, c = carry
        gates = x_t @ w_ih.T + b_ih + h @ w_hh.T + b_hh
        i_g = jax.nn.sigmoid(gates[:, 0 * H:1 * H])
        f_g = jax.nn.sigmoid(gates[:, 1 * H:2 * H])
        g_g = jnp.tanh(gates[:, 2 * H:3 * H])
        o_g = jax.nn.sigmoid(gates[:, 3 * H:4 * H])
        c_new = f_g * c + i_g * g_g
        h_new = o_g * jnp.tanh(c_new)
        return (h_new, c_new), h_new

    h0 = jnp.zeros((B, H), jnp.float32)
    c0 = jnp.zeros((B, H), jnp.float32)
    _, hs = lax.scan(step, (h0, c0), jnp.transpose(x, (1, 0, 2)))
    hs = jnp.transpose(hs, (1, 0, 2))              # (B, T, H)
    out = hs @ w_fc.T + b_fc                       # (B, T, O)
    return out[:, -30:, :]


def init_params(key, input_size, hidden_size, output_size):
    """Deterministic uniform(-1/sqrt(H), 1/sqrt(H)) init (PyTorch default)."""
    k = 1.0 / np.sqrt(hidden_size)
    keys = jax.random.split(key, 6)
    w_ih = jax.random.uniform(keys[0], (4 * hidden_size, input_size), jnp.float32, -k, k)
    w_hh = jax.random.uniform(keys[1], (4 * hidden_size, hidden_size), jnp.float32, -k, k)
    b_ih = jax.random.uniform(keys[2], (4 * hidden_size,), jnp.float32, -k, k)
    b_hh = jax.random.uniform(keys[3], (4 * hidden_size,), jnp.float32, -k, k)
    w_fc = jax.random.uniform(keys[4], (output_size, hidden_size), jnp.float32, -k, k)
    b_fc = jax.random.uniform(keys[5], (output_size,), jnp.float32, -k, k)
    return (w_ih, w_hh, b_ih, b_hh, w_fc, b_fc)


if __name__ == "__main__":
    # Small shapes consistent with the module (input_size=1, hidden=64, output=1);
    # seq=35 exercises the out[:, -30:, :] slice, batch=4 exercises sublane padding.
    batch, seq, input_size, hidden_size, output_size = 4, 35, 1, 64, 1

    key = jax.random.PRNGKey(0)
    kx, kp = jax.random.split(key)
    x = jax.random.normal(kx, (batch, seq, input_size), jnp.float32)
    params = init_params(kp, input_size, hidden_size, output_size)

    out = jax.block_until_ready(lstm_model30_forward(x, params))
    ref = jax.block_until_ready(_reference_forward(x, params))

    assert out.shape == (batch, min(seq, 30), output_size), out.shape
    np.testing.assert_allclose(np.asarray(out), np.asarray(ref), rtol=1e-5, atol=1e-5)
    print("KERNEL_OK")
</pallas_src>

<mosaic_0001>
module attributes {stable_mosaic.version = 11 : i64} {
  func.func @_lstm_fc_kernel(%arg0: memref<280x1xf32, #tpu.memory_space<vmem>>, %arg1: memref<1x512xf32, #tpu.memory_space<vmem>>, %arg2: memref<128x512xf32, #tpu.memory_space<vmem>>, %arg3: memref<1x512xf32, #tpu.memory_space<vmem>>, %arg4: memref<128x128xf32, #tpu.memory_space<vmem>>, %arg5: memref<1x128xf32, #tpu.memory_space<vmem>>, %arg6: memref<240x128xf32, #tpu.memory_space<vmem>>, %arg7: memref<280x512xf32, #tpu.memory_space<vmem>>, %arg8: memref<280x128xf32, #tpu.memory_space<vmem>>) attributes {dimension_semantics = [], scalar_prefetch = 0 : i64, scratch_operands = 2 : i64, tpu.core_type = #tpu.core_type<tc>} {
    %c0 = arith.constant 0 : index
    %c0_0 = arith.constant 0 : index
    %0 = vector.load %arg0[%c0, %c0_0] : memref<280x1xf32, #tpu.memory_space<vmem>>, vector<280x1xf32>
    %c0_1 = arith.constant 0 : index
    %c0_2 = arith.constant 0 : index
    %1 = vector.load %arg1[%c0_1, %c0_2] : memref<1x512xf32, #tpu.memory_space<vmem>>, vector<1x512xf32>
    %2 = vector.broadcast %0 : vector<280x1xf32> to vector<280x512xf32>
    %3 = vector.broadcast %1 : vector<1x512xf32> to vector<280x512xf32>
    %4 = arith.mulf %2, %3 : vector<280x512xf32>
    %c0_3 = arith.constant 0 : index
    %c0_4 = arith.constant 0 : index
    %5 = vector.load %arg3[%c0_3, %c0_4] : memref<1x512xf32, #tpu.memory_space<vmem>>, vector<1x512xf32>
    %6 = vector.broadcast %5 : vector<1x512xf32> to vector<280x512xf32>
    %7 = arith.addf %4, %6 : vector<280x512xf32>
    %c0_5 = arith.constant 0 : index
    %c0_6 = arith.constant 0 : index
    %8 = vector.load %arg7[%c0_5, %c0_6] : memref<280x512xf32, #tpu.memory_space<vmem>>, vector<280x512xf32>
    tpu.vector_store %arg7[%c0_5, %c0_6], %7 {strides = array<i32>} : memref<280x512xf32, #tpu.memory_space<vmem>>, vector<280x512xf32>,
    %cst = arith.constant 0.000000e+00 : f32
    %9 = vector.broadcast %cst : f32 to vector<8x128xf32>
    %cst_7 = arith.constant 0.000000e+00 : f32
    %10 = vector.broadcast %cst_7 : f32 to vector<8x128xf32>
    %c0_8 = arith.constant 0 : index
    %c0_9 = arith.constant 0 : index
    %11 = vector.load %arg7[%c0_8, %c0_9] : memref<280x512xf32, #tpu.memory_space<vmem>>, vector<8x512xf32>
    %c0_10 = arith.constant 0 : index
    %c0_11 = arith.constant 0 : index
    %12 = vector.load %arg2[%c0_10, %c0_11] : memref<128x512xf32, #tpu.memory_space<vmem>>, vector<128x512xf32>
    %cst_12 = arith.constant dense<0.000000e+00> : vector<8x512xf32>
    %13 = tpu.matmul %9, %12, %cst_12 {dimension_numbers = #tpu.dot_dimension_numbers<[1], [0], [0], [1], [0, 0, 1, 1], [], []>} : vector<8x128xf32>, vector<128x512xf32>, vector<8x512xf32> -> vector<8x512xf32>
    %14 = arith.addf %11, %13 : vector<8x512xf32>
    %15 = vector.extract_strided_slice %14 {offsets = [0, 0], sizes = [8, 384], strides = [1, 1]} : vector<8x512xf32> to vector<8x384xf32>
    %16 = arith.negf %15 : vector<8x384xf32>
    %17 = math.exp %16 : vector<8x384xf32>
    %cst_13 = arith.constant 1.000000e+00 : f32
    %18 = vector.broadcast %cst_13 : f32 to vector<8x384xf32>
    %19 = arith.addf %18, %17 : vector<8x384xf32>
    %20 = arith.divf %18, %19 : vector<8x384xf32>
    %21 = vector.extract_strided_slice %20 {offsets = [0, 0], sizes = [8, 128], strides = [1, 1]} : vector<8x384xf32> to vector<8x128xf32>
    %22 = vector.extract_strided_slice %20 {offsets = [0, 128], sizes = [8, 128], strides = [1, 1]} : vector<8x384xf32> to vector<8x128xf32>
    %23 = vector.extract_strided_slice %20 {offsets = [0, 256], sizes = [8, 128], strides = [1, 1]} : vector<8x384xf32> to vector<8x128xf32>
    %24 = vector.extract_strided_slice %14 {offsets = [0, 384], sizes = [8, 128], strides = [1, 1]} : vector<8x512xf32> to vector<8x128xf32>
    %25 = math.tanh %24 : vector<8x128xf32>
    %26 = arith.mulf %22, %10 : vector<8x128xf32>
    %27 = arith.mulf %21, %25 : vector<8x128xf32>
    %28 = arith.addf %26, %27 : vector<8x128xf32>
    %29 = math.tanh %28 : vector<8x128xf32>
    %30 = arith.mulf %23, %29 : vector<8x128xf32>
    %c0_14 = arith.constant 0 : index
    %c0_15 = arith.constant 0 : index
    %31 = vector.load %arg8[%c0_14, %c0_15] : memref<280x128xf32, #tpu.memory_space<vmem>>, vector<8x128xf32>
    tpu.vector_store %arg8[%c0_14, %c0_15], %30 {strides = array<i32>} : memref<280x128xf32, #tpu.memory_space<vmem>>, vector<8x128xf32>,
    %c8 = arith.constant 8 : index
    %c0_16 = arith.constant 0 : index
    %32 = vector.load %arg7[%c8, %c0_16] : memref<280x512xf32, #tpu.memory_space<vmem>>, vector<8x512xf32>
    %c0_17 = arith.constant 0 : index
    %c0_18 = arith.constant 0 : index
    %33 = vector.load %arg2[%c0_17, %c0_18] : memref<128x512xf32, #tpu.memory_space<vmem>>, vector<128x512xf32>
    %cst_19 = arith.constant dense<0.000000e+00> : vector<8x512xf32>
    %34 = tpu.matmul %30, %33, %cst_19 {dimension_numbers = #tpu.dot_dimension_numbers<[1], [0], [0], [1], [0, 0, 1, 1], [], []>} : vector<8x128xf32>, vector<128x512xf32>, vector<8x512xf32> -> vector<8x512xf32>
    %35 = arith.addf %32, %34 : vector<8x512xf32>
    %36 = vector.extract_strided_slice %35 {offsets = [0, 0], sizes = [8, 384], strides = [1, 1]} : vector<8x512xf32> to vector<8x384xf32>
    %37 = arith.negf %36 : vector<8x384xf32>
    %38 = math.exp %37 : vector<8x384xf32>
    %cst_20 = arith.constant 1.000000e+00 : f32
    %39 = vector.broadcast %cst_20 : f32 to vector<8x384xf32>
    %40 = arith.addf %39, %38 : vector<8x384xf32>
    %41 = arith.divf %39, %40 : vector<8x384xf32>
    %42 = vector.extract_strided_slice %41 {offsets = [0, 0], sizes = [8, 128], strides = [1, 1]} : vector<8x384xf32> to vector<8x128xf32>
    %43 = vector.extract_strided_slice %41 {offsets = [0, 128], sizes = [8, 128], strides = [1, 1]} : vector<8x384xf32> to vector<8x128xf32>
    %44 = vector.extract_strided_slice %41 {offsets = [0, 256], sizes = [8, 128], strides = [1, 1]} : vector<8x384xf32> to vector<8x128xf32>
    %45 = vector.extract_strided_slice %35 {offsets = [0, 384], sizes = [8, 128], strides = [1, 1]} : vector<8x512xf32> to vector<8x128xf32>
    %46 = math.tanh %45 : vector<8x128xf32>
    %47 = arith.mulf %43, %28 : vector<8x128xf32>
    %48 = arith.mulf %42, %46 : vector<8x128xf32>
    %49 = arith.addf %47, %48 : vector<8x128xf32>
    %50 = math.tanh %49 : vector<8x128xf32>
    %51 = arith.mulf %44, %50 : vector<8x128xf32>
    %c8_21 = arith.constant 8 : index
    %c0_22 = arith.constant 0 : index
    %52 = vector.load %arg8[%c8_21, %c0_22] : memref<280x128xf32, #tpu.memory_space<vmem>>, vector<8x128xf32>
    tpu.vector_store %arg8[%c8_21, %c0_22], %51 {strides = array<i32>} : memref<280x128xf32, #tpu.memory_space<vmem>>, vector<8x128xf32>,
    %c16 = arith.constant 16 : index
    %c0_23 = arith.constant 0 : index
    %53 = vector.load %arg7[%c16, %c0_23] : memref<280x512xf32, #tpu.memory_space<vmem>>, vector<8x512xf32>
    %c0_24 = arith.constant 0 : index
    %c0_25 = arith.constant 0 : index
    %54 = vector.load %arg2[%c0_24, %c0_25] : memref<128x512xf32, #tpu.memory_space<vmem>>, vector<128x512xf32>
    %cst_26 = arith.constant dense<0.000000e+00> : vector<8x512xf32>
    %55 = tpu.matmul %51, %54, %cst_26 {dimension_numbers = #tpu.dot_dimension_numbers<[1], [0], [0], [1], [0, 0, 1, 1], [], []>} : vector<8x128xf32>, vector<128x512xf32>, vector<8x512xf32> -> vector<8x512xf32>
    %56 = arith.addf %53, %55 : vector<8x512xf32>
    %57 = vector.extract_strided_slice %56 {offsets = [0, 0], sizes = [8, 384], strides = [1, 1]} : vector<8x512xf32> to vector<8x384xf32>
    %58 = arith.negf %57 : vector<8x384xf32>
    %59 = math.exp %58 : vector<8x384xf32>
    %cst_27 = arith.constant 1.000000e+00 : f32
    %60 = vector.broadcast %cst_27 : f32 to vector<8x384xf32>
    %61 = arith.addf %60, %59 : vector<8x384xf32>
    %62 = arith.divf %60, %61 : vector<8x384xf32>
    %63 = vector.extract_strided_slice %62 {offsets = [0, 0], sizes = [8, 128], strides = [1, 1]} : vector<8x384xf32> to vector<8x128xf32>
    %64 = vector.extract_strided_slice %62 {offsets = [0, 128], sizes = [8, 128], strides = [1, 1]} : vector<8x384xf32> to vector<8x128xf32>
    %65 = vector.extract_strided_slice %62 {offsets = [0, 256], sizes = [8, 128], strides = [1, 1]} : vector<8x384xf32> to vector<8x128xf32>
    %66 = vector.extract_strided_slice %56 {offsets = [0, 384], sizes = [8, 128], strides = [1, 1]} : vector<8x512xf32> to vector<8x128xf32>
    %67 = math.tanh %66 : vector<8x128xf32>
    %68 = arith.mulf %64, %49 : vector<8x128xf32>
    %69 = arith.mulf %63, %67 : vector<8x128xf32>
    %70 = arith.addf %68, %69 : vector<8x128xf32>
    %71 = math.tanh %70 : vector<8x128xf32>
    %72 = arith.mulf %65, %71 : vector<8x128xf32>
    %c16_28 = arith.constant 16 : index
    %c0_29 = arith.constant 0 : index
    %73 = vector.load %arg8[%c16_28, %c0_29] : memref<280x128xf32, #tpu.memory_space<vmem>>, vector<8x128xf32>
    tpu.vector_store %arg8[%c16_28, %c0_29], %72 {strides = array<i32>} : memref<280x128xf32, #tpu.memory_space<vmem>>, vector<8x128xf32>,
    %c24 = arith.constant 24 : index
    %c0_30 = arith.constant 0 : index
    %74 = vector.load %arg7[%c24, %c0_30] : memref<280x512xf32, #tpu.memory_space<vmem>>, vector<8x512xf32>
    %c0_31 = arith.constant 0 : index
    %c0_32 = arith.constant 0 : index
    %75 = vector.load %arg2[%c0_31, %c0_32] : memref<128x512xf32, #tpu.memory_space<vmem>>, vector<128x512xf32>
    %cst_33 = arith.constant dense<0.000000e+00> : vector<8x512xf32>
    %76 = tpu.matmul %72, %75, %cst_33 {dimension_numbers = #tpu.dot_dimension_numbers<[1], [0], [0], [1], [0, 0, 1, 1], [], []>} : vector<8x128xf32>, vector<128x512xf32>, vector<8x512xf32> -> vector<8x512xf32>
    %77 = arith.addf %74, %76 : vector<8x512xf32>
    %78 = vector.extract_strided_slice %77 {offsets = [0, 0], sizes = [8, 384], strides = [1, 1]} : vector<8x512xf32> to vector<8x384xf32>
    %79 = arith.negf %78 : vector<8x384xf32>
    %80 = math.exp %79 : vector<8x384xf32>
    %cst_34 = arith.constant 1.000000e+00 : f32
    %81 = vector.broadcast %cst_34 : f32 to vector<8x384xf32>
    %82 = arith.addf %81, %80 : vector<8x384xf32>
    %83 = arith.divf %81, %82 : vector<8x384xf32>
    %84 = vector.extract_strided_slice %83 {offsets = [0, 0], sizes = [8, 128], strides = [1, 1]} : vector<8x384xf32> to vector<8x128xf32>
    %85 = vector.extract_strided_slice %83 {offsets = [0, 128], sizes = [8, 128], strides = [1, 1]} : vector<8x384xf32> to vector<8x128xf32>
    %86 = vector.extract_strided_slice %83 {offsets = [0, 256], sizes = [8, 128], strides = [1, 1]} : vector<8x384xf32> to vector<8x128xf32>
    %87 = vector.extract_strided_slice %77 {offsets = [0, 384], sizes = [8, 128], strides = [1, 1]} : vector<8x512xf32> to vector<8x128xf32>
    %88 = math.tanh %87 : vector<8x128xf32>
    %89 = arith.mulf %85, %70 : vector<8x128xf32>
    %90 = arith.mulf %84, %88 : vector<8x128xf32>
    %91 = arith.addf %89, %90 : vector<8x128xf32>
    %92 = math.tanh %91 : vector<8x128xf32>
    %93 = arith.mulf %86, %92 : vector<8x128xf32>
    %c24_35 = arith.constant 24 : index
    %c0_36 = arith.constant 0 : index
    %94 = vector.load %arg8[%c24_35, %c0_36] : memref<280x128xf32, #tpu.memory_space<vmem>>, vector<8x128xf32>
    tpu.vector_store %arg8[%c24_35, %c0_36], %93 {strides = array<i32>} : memref<280x128xf32, #tpu.memory_space<vmem>>, vector<8x128xf32>,
    %c32 = arith.constant 32 : index
    %c0_37 = arith.constant 0 : index
    %95 = vector.load %arg7[%c32, %c0_37] : memref<280x512xf32, #tpu.memory_space<vmem>>, vector<8x512xf32>
    %c0_38 = arith.constant 0 : index
    %c0_39 = arith.constant 0 : index
    %96 = vector.load %arg2[%c0_38, %c0_39] : memref<128x512xf32, #tpu.memory_space<vmem>>, vector<128x512xf32>
    %cst_40 = arith.constant dense<0.000000e+00> : vector<8x512xf32>
    %97 = tpu.matmul %93, %96, %cst_40 {dimension_numbers = #tpu.dot_dimension_numbers<[1], [0], [0], [1], [0, 0, 1, 1], [], []>} : vector<8x128xf32>, vector<128x512xf32>, vector<8x512xf32> -> vector<8x512xf32>
    %98 = arith.addf %95, %97 : vector<8x512xf32>
    %99 = vector.extract_strided_slice %98 {offsets = [0, 0], sizes = [8, 384], strides = [1, 1]} : vector<8x512xf32> to vector<8x384xf32>
    %100 = arith.negf %99 : vector<8x384xf32>
    %101 = math.exp %100 : vector<8x384xf32>
    %cst_41 = arith.constant 1.000000e+00 : f32
    %102 = vector.broadcast %cst_41 : f32 to vector<8x384xf32>
    %103 = arith.addf %102, %101 : vector<8x384xf32>
    %104 = arith.divf %102, %103 : vector<8x384xf32>
    %105 = vector.extract_strided_slice %104 {offsets = [0, 0], sizes = [8, 128], strides = [1, 1]} : vector<8x384xf32> to vector<8x128xf32>
    %106 = vector.extract_strided_slice %104 {offsets = [0, 128], sizes = [8, 128], strides = [1, 1]} : vector<8x384xf32> to vector<8x128xf32>
    %107 = vector.extract_strided_slice %104 {offsets = [0, 256], sizes = [8, 128], strides = [1, 1]} : vector<8x384xf32> to vector<8x128xf32>
    %108 = vector.extract_strided_slice %98 {offsets = [0, 384], sizes = [8, 128], strides = [1, 1]} : vector<8x512xf32> to vector<8x128xf32>
    %109 = math.tanh %108 : vector<8x128xf32>
    %110 = arith.mulf %106, %91 : vector<8x128xf32>
    %111 = arith.mulf %105, %109 : vector<8x128xf32>
    %112 = arith.addf %110, %111 : vector<8x128xf32>
    %113 = math.tanh %112 : vector<8x128xf32>
    %114 = arith.mulf %107, %113 : vector<8x128xf32>
    %c32_42 = arith.constant 32 : index
    %c0_43 = arith.constant 0 : index
    %115 = vector.load %arg8[%c32_42, %c0_43] : memref<280x128xf32, #tpu.memory_space<vmem>>, vector<8x128xf32>
    tpu.vector_store %arg8[%c32_42, %c0_43], %114 {strides = array<i32>} : memref<280x128xf32, #tpu.memory_space<vmem>>, vector<8x128xf32>,
    %c40 = arith.constant 40 : index
    %c0_44 = arith.constant 0 : index
    %116 = vector.load %arg7[%c40, %c0_44] : memref<280x512xf32, #tpu.memory_space<vmem>>, vector<8x512xf32>
    %c0_45 = arith.constant 0 : index
    %c0_46 = arith.constant 0 : index
    %117 = vector.load %arg2[%c0_45, %c0_46] : memref<128x512xf32, #tpu.memory_space<vmem>>, vector<128x512xf32>
    %cst_47 = arith.constant dense<0.000000e+00> : vector<8x512xf32>
    %118 = tpu.matmul %114, %117, %cst_47 {dimension_numbers = #tpu.dot_dimension_numbers<[1], [0], [0], [1], [0, 0, 1, 1], [], []>} : vector<8x128xf32>, vector<128x512xf32>, vector<8x512xf32> -> vector<8x512xf32>
    %119 = arith.addf %116, %118 : vector<8x512xf32>
    %120 = vector.extract_strided_slice %119 {offsets = [0, 0], sizes = [8, 384], strides = [1, 1]} : vector<8x512xf32> to vector<8x384xf32>
    %121 = arith.negf %120 : vector<8x384xf32>
    %122 = math.exp %121 : vector<8x384xf32>
    %cst_48 = arith.constant 1.000000e+00 : f32
    %123 = vector.broadcast %cst_48 : f32 to vector<8x384xf32>
    %124 = arith.addf %123, %122 : vector<8x384xf32>
    %125 = arith.divf %123, %124 : vector<8x384xf32>
    %126 = vector.extract_strided_slice %125 {offsets = [0, 0], sizes = [8, 128], strides = [1, 1]} : vector<8x384xf32> to vector<8x128xf32>
    %127 = vector.extract_strided_slice %125 {offsets = [0, 128], sizes = [8, 128], strides = [1, 1]} : vector<8x384xf32> to vector<8x128xf32>
    %128 = vector.extract_strided_slice %125 {offsets = [0, 256], sizes = [8, 128], strides = [1, 1]} : vector<8x384xf32> to vector<8x128xf32>
    %129 = vector.extract_strided_slice %119 {offsets = [0, 384], sizes = [8, 128], strides = [1, 1]} : vector<8x512xf32> to vector<8x128xf32>
    %130 = math.tanh %129 : vector<8x128xf32>
    %131 = arith.mulf %127, %112 : vector<8x128xf32>
    %132 = arith.mulf %126, %130 : vector<8x128xf32>
    %133 = arith.addf %131, %132 : vector<8x128xf32>
    %134 = math.tanh %133 : vector<8x128xf32>
    %135 = arith.mulf %128, %134 : vector<8x128xf32>
    %c40_49 = arith.constant 40 : index
    %c0_50 = arith.constant 0 : index
    %136 = vector.load %arg8[%c40_49, %c0_50] : memref<280x128xf32, #tpu.memory_space<vmem>>, vector<8x128xf32>
    tpu.vector_store %arg8[%c40_49, %c0_50], %135 {strides = array<i32>} : memref<280x128xf32, #tpu.memory_space<vmem>>, vector<8x128xf32>,
    %c48 = arith.constant 48 : index
    %c0_51 = arith.constant 0 : index
    %137 = vector.load %arg7[%c48, %c0_51] : memref<280x512xf32, #tpu.memory_space<vmem>>, vector<8x512xf32>
    %c0_52 = arith.constant 0 : index
    %c0_53 = arith.constant 0 : index
    %138 = vector.load %arg2[%c0_52, %c0_53] : memref<128x512xf32, #tpu.memory_space<vmem>>, vector<128x512xf32>
    %cst_54 = arith.constant dense<0.000000e+00> : vector<8x512xf32>
    %139 = tpu.matmul %135, %138, %cst_54 {dimension_numbers = #tpu.dot_dimension_numbers<[1], [0], [0], [1], [0, 0, 1, 1], [], []>} : vector<8x128xf32>, vector<128x512xf32>, vector<8x512xf32> -> vector<8x512xf32>
    %140 = arith.addf %137, %139 : vector<8x512xf32>
    %141 = vector.extract_strided_slice %140 {offsets = [0, 0], sizes = [8, 384], strides = [1, 1]} : vector<8x512xf32> to vector<8x384xf32>
    %142 = arith.negf %141 : vector<8x384xf32>
    %143 = math.exp %142 : vector<8x384xf32>
    %cst_55 = arith.constant 1.000000e+00 : f32
    %144 = vector.broadcast %cst_55 : f32 to vector<8x384xf32>
    %145 = arith.addf %144, %143 : vector<8x384xf32>
    %146 = arith.divf %144, %145 : vector<8x384xf32>
    %147 = vector.extract_strided_slice %146 {offsets = [0, 0], sizes = [8, 128], strides = [1, 1]} : vector<8x384xf32> to vector<8x128xf32>
    %148 = vector.extract_strided_slice %146 {offsets = [0, 128], sizes = [8, 128], strides = [1, 1]} : vector<8x384xf32> to vector<8x128xf32>
    %149 = vector.extract_strided_slice %146 {offsets = [0, 256], sizes = [8, 128], strides = [1, 1]} : vector<8x384xf32> to vector<8x128xf32>
    %150 = vector.extract_strided_slice %140 {offsets = [0, 384], sizes = [8, 128], strides = [1, 1]} : vector<8x512xf32> to vector<8x128xf32>
    %151 = math.tanh %150 : vector<8x128xf32>
    %152 = arith.mulf %148, %133 : vector<8x128xf32>
    %153 = arith.mulf %147, %151 : vector<8x128xf32>
    %154 = arith.addf %152, %153 : vector<8x128xf32>
    %155 = math.tanh %154 : vector<8x128xf32>
    %156 = arith.mulf %149, %155 : vector<8x128xf32>
    %c48_56 = arith.constant 48 : index
    %c0_57 = arith.constant 0 : index
    %157 = vector.load %arg8[%c48_56, %c0_57] : memref<280x128xf32, #tpu.memory_space<vmem>>, vector<8x128xf32>
    tpu.vector_store %arg8[%c48_56, %c0_57], %156 {strides = array<i32>} : memref<280x128xf32, #tpu.memory_space<vmem>>, vector<8x128xf32>,
    %c56 = arith.constant 56 : index
    %c0_58 = arith.constant 0 : index
    %158 = vector.load %arg7[%c56, %c0_58] : memref<280x512xf32, #tpu.memory_space<vmem>>, vector<8x512xf32>
    %c0_59 = arith.constant 0 : index
    %c0_60 = arith.constant 0 : index
    %159 = vector.load %arg2[%c0_59, %c0_60] : memref<128x512xf32, #tpu.memory_space<vmem>>, vector<128x512xf32>
    %cst_61 = arith.constant dense<0.000000e+00> : vector<8x512xf32>
    %160 = tpu.matmul %156, %159, %cst_61 {dimension_numbers = #tpu.dot_dimension_numbers<[1], [0], [0], [1], [0, 0, 1, 1], [], []>} : vector<8x128xf32>, vector<128x512xf32>, vector<8x512xf32> -> vector<8x512xf32>
    %161 = arith.addf %158, %160 : vector<8x512xf32>
    %162 = vector.extract_strided_slice %161 {offsets = [0, 0], sizes = [8, 384], strides = [1, 1]} : vector<8x512xf32> to vector<8x384xf32>
    %163 = arith.negf %162 : vector<8x384xf32>
    %164 = math.exp %163 : vector<8x384xf32>
    %cst_62 = arith.constant 1.000000e+00 : f32
    %165 = vector.broadcast %cst_62 : f32 to vector<8x384xf32>
    %166 = arith.addf %165, %164 : vector<8x384xf32>
    %167 = arith.divf %165, %166 : vector<8x384xf32>
    %168 = vector.extract_strided_slice %167 {offsets = [0, 0], sizes = [8, 128], strides = [1, 1]} : vector<8x384xf32> to vector<8x128xf32>
    %169 = vector.extract_strided_slice %167 {offsets = [0, 128], sizes = [8, 128], strides = [1, 1]} : vector<8x384xf32> to vector<8x128xf32>
    %170 = vector.extract_strided_slice %167 {offsets = [0, 256], sizes = [8, 128], strides = [1, 1]} : vector<8x384xf32> to vector<8x128xf32>
    %171 = vector.extract_strided_slice %161 {offsets = [0, 384], sizes = [8, 128], strides = [1, 1]} : vector<8x512xf32> to vector<8x128xf32>
    %172 = math.tanh %171 : vector<8x128xf32>
    %173 = arith.mulf %169, %154 : vector<8x128xf32>
    %174 = arith.mulf %168, %172 : vector<8x128xf32>
    %175 = arith.addf %173, %174 : vector<8x128xf32>
    %176 = math.tanh %175 : vector<8x128xf32>
    %177 = arith.mulf %170, %176 : vector<8x128xf32>
    %c56_63 = arith.constant 56 : index
    %c0_64 = arith.constant 0 : index
    %178 = vector.load %arg8[%c56_63, %c0_64] : memref<280x128xf32, #tpu.memory_space<vmem>>, vector<8x128xf32>
    tpu.vector_store %arg8[%c56_63, %c0_64], %177 {strides = array<i32>} : memref<280x128xf32, #tpu.memory_space<vmem>>, vector<8x128xf32>,
    %c64 = arith.constant 64 : index
    %c0_65 = arith.constant 0 : index
    %179 = vector.load %arg7[%c64, %c0_65] : memref<280x512xf32, #tpu.memory_space<vmem>>, vector<8x512xf32>
    %c0_66 = arith.constant 0 : index
    %c0_67 = arith.constant 0 : index
    %180 = vector.load %arg2[%c0_66, %c0_67] : memref<128x512xf32, #tpu.memory_space<vmem>>, vector<128x512xf32>
    %cst_68 = arith.constant dense<0.000000e+00> : vector<8x512xf32>
    %181 = tpu.matmul %177, %180, %cst_68 {dimension_numbers = #tpu.dot_dimension_numbers<[1], [0], [0], [1], [0, 0, 1, 1], [], []>} : vector<8x128xf32>, vector<128x512xf32>, vector<8x512xf32> -> vector<8x512xf32>
    %182 = arith.addf %179, %181 : vector<8x512xf32>
    %183 = vector.extract_strided_slice %182 {offsets = [0, 0], sizes = [8, 384], strides = [1, 1]} : vector<8x512xf32> to vector<8x384xf32>
    %184 = arith.negf %183 : vector<8x384xf32>
    %185 = math.exp %184 : vector<8x384xf32>
    %cst_69 = arith.constant 1.000000e+00 : f32
    %186 = vector.broadcast %cst_69 : f32 to vector<8x384xf32>
    %187 = arith.addf %186, %185 : vector<8x384xf32>
    %188 = arith.divf %186, %187 : vector<8x384xf32>
    %189 = vector.extract_strided_slice %188 {offsets = [0, 0], sizes = [8, 128], strides = [1, 1]} : vector<8x384xf32> to vector<8x128xf32>
    %190 = vector.extract_strided_slice %188 {offsets = [0, 128], sizes = [8, 128], strides = [1, 1]} : vector<8x384xf32> to vector<8x128xf32>
    %191 = vector.extract_strided_slice %188 {offsets = [0, 256], sizes = [8, 128], strides = [1, 1]} : vector<8x384xf32> to vector<8x128xf32>
    %192 = vector.extract_strided_slice %182 {offsets = [0, 384], sizes = [8, 128], strides = [1, 1]} : vector<8x512xf32> to vector<8x128xf32>
    %193 = math.tanh %192 : vector<8x128xf32>
    %194 = arith.mulf %190, %175 : vector<8x128xf32>
    %195 = arith.mulf %189, %193 : vector<8x128xf32>
    %196 = arith.addf %194, %195 : vector<8x128xf32>
    %197 = math.tanh %196 : vector<8x128xf32>
    %198 = arith.mulf %191, %197 : vector<8x128xf32>
    %c64_70 = arith.constant 64 : index
    %c0_71 = arith.constant 0 : index
    %199 = vector.load %arg8[%c64_70, %c0_71] : memref<280x128xf32, #tpu.memory_space<vmem>>, vector<8x128xf32>
    tpu.vector_store %arg8[%c64_70, %c0_71], %198 {strides = array<i32>} : memref<280x128xf32, #tpu.memory_space<vmem>>, vector<8x128xf32>,
    %c72 = arith.constant 72 : index
    %c0_72 = arith.constant 0 : index
    %200 = vector.load %arg7[%c72, %c0_72] : memref<280x512xf32, #tpu.memory_space<vmem>>, vector<8x512xf32>
    %c0_73 = arith.constant 0 : index
    %c0_74 = arith.constant 0 : index
    %201 = vector.load %arg2[%c0_73, %c0_74] : memref<128x512xf32, #tpu.memory_space<vmem>>, vector<128x512xf32>
    %cst_75 = arith.constant dense<0.000000e+00> : vector<8x512xf32>
    %202 = tpu.matmul %198, %201, %cst_75 {dimension_numbers = #tpu.dot_dimension_numbers<[1], [0], [0], [1], [0, 0, 1, 1], [], []>} : vector<8x128xf32>, vector<128x512xf32>, vector<8x512xf32> -> vector<8x512xf32>
    %203 = arith.addf %200, %202 : vector<8x512xf32>
    %204 = vector.extract_strided_slice %203 {offsets = [0, 0], sizes = [8, 384], strides = [1, 1]} : vector<8x512xf32> to vector<8x384xf32>
    %205 = arith.negf %204 : vector<8x384xf32>
    %206 = math.exp %205 : vector<8x384xf32>
    %cst_76 = arith.constant 1.000000e+00 : f32
    %207 = vector.broadcast %cst_76 : f32 to vector<8x384xf32>
    %208 = arith.addf %207, %206 : vector<8x384xf32>
    %209 = arith.divf %207, %208 : vector<8x384xf32>
    %210 = vector.extract_strided_slice %209 {offsets = [0, 0], sizes = [8, 128], strides = [1, 1]} : vector<8x384xf32> to vector<8x128xf32>
    %211 = vector.extract_strided_slice %209 {offsets = [0, 128], sizes = [8, 128], strides = [1, 1]} : vector<8x384xf32> to vector<8x128xf32>
    %212 = vector.extract_strided_slice %209 {offsets = [0, 256], sizes = [8, 128], strides = [1, 1]} : vector<8x384xf32> to vector<8x128xf32>
    %213 = vector.extract_strided_slice %203 {offsets = [0, 384], sizes = [8, 128], strides = [1, 1]} : vector<8x512xf32> to vector<8x128xf32>
    %214 = math.tanh %213 : vector<8x128xf32>
    %215 = arith.mulf %211, %196 : vector<8x128xf32>
    %216 = arith.mulf %210, %214 : vector<8x128xf32>
    %217 = arith.addf %215, %216 : vector<8x128xf32>
    %218 = math.tanh %217 : vector<8x128xf32>
    %219 = arith.mulf %212, %218 : vector<8x128xf32>
    %c72_77 = arith.constant 72 : index
    %c0_78 = arith.constant 0 : index
    %220 = vector.load %arg8[%c72_77, %c0_78] : memref<280x128xf32, #tpu.memory_space<vmem>>, vector<8x128xf32>
    tpu.vector_store %arg8[%c72_77, %c0_78], %219 {strides = array<i32>} : memref<280x128xf32, #tpu.memory_space<vmem>>, vector<8x128xf32>,
    %c80 = arith.constant 80 : index
    %c0_79 = arith.constant 0 : index
    %221 = vector.load %arg7[%c80, %c0_79] : memref<280x512xf32, #tpu.memory_space<vmem>>, vector<8x512xf32>
    %c0_80 = arith.constant 0 : index
    %c0_81 = arith.constant 0 : index
    %222 = vector.load %arg2[%c0_80, %c0_81] : memref<128x512xf32, #tpu.memory_space<vmem>>, vector<128x512xf32>
    %cst_82 = arith.constant dense<0.000000e+00> : vector<8x512xf32>
    %223 = tpu.matmul %219, %222, %cst_82 {dimension_numbers = #tpu.dot_dimension_numbers<[1], [0], [0], [1], [0, 0, 1, 1], [], []>} : vector<8x128xf32>, vector<128x512xf32>, vector<8x512xf32> -> vector<8x512xf32>
    %224 = arith.addf %221, %223 : vector<8x512xf32>
    %225 = vector.extract_strided_slice %224 {offsets = [0, 0], sizes = [8, 384], strides = [1, 1]} : vector<8x512xf32> to vector<8x384xf32>
    %226 = arith.negf %225 : vector<8x384xf32>
    %227 = math.exp %226 : vector<8x384xf32>
    %cst_83 = arith.constant 1.000000e+00 : f32
    %228 = vector.broadcast %cst_83 : f32 to vector<8x384xf32>
    %229 = arith.addf %228, %227 : vector<8x384xf32>
    %230 = arith.divf %228, %229 : vector<8x384xf32>
    %231 = vector.extract_strided_slice %230 {offsets = [0, 0], sizes = [8, 128], strides = [1, 1]} : vector<8x384xf32> to vector<8x128xf32>
    %232 = vector.extract_strided_slice %230 {offsets = [0, 128], sizes = [8, 128], strides = [1, 1]} : vector<8x384xf32> to vector<8x128xf32>
    %233 = vector.extract_strided_slice %230 {offsets = [0, 256], sizes = [8, 128], strides = [1, 1]} : vector<8x384xf32> to vector<8x128xf32>
    %234 = vector.extract_strided_slice %224 {offsets = [0, 384], sizes = [8, 128], strides = [1, 1]} : vector<8x512xf32> to vector<8x128xf32>
    %235 = math.tanh %234 : vector<8x128xf32>
    %236 = arith.mulf %232, %217 : vector<8x128xf32>
    %237 = arith.mulf %231, %235 : vector<8x128xf32>
    %238 = arith.addf %236, %237 : vector<8x128xf32>
    %239 = math.tanh %238 : vector<8x128xf32>
    %240 = arith.mulf %233, %239 : vector<8x128xf32>
    %c80_84 = arith.constant 80 : index
    %c0_85 = arith.constant 0 : index
    %241 = vector.load %arg8[%c80_84, %c0_85] : memref<280x128xf32, #tpu.memory_space<vmem>>, vector<8x128xf32>
    tpu.vector_store %arg8[%c80_84, %c0_85], %240 {strides = array<i32>} : memref<280x128xf32, #tpu.memory_space<vmem>>, vector<8x128xf32>,
    %c88 = arith.constant 88 : index
    %c0_86 = arith.constant 0 : index
    %242 = vector.load %arg7[%c88, %c0_86] : memref<280x512xf32, #tpu.memory_space<vmem>>, vector<8x512xf32>
    %c0_87 = arith.constant 0 : index
    %c0_88 = arith.constant 0 : index
    %243 = vector.load %arg2[%c0_87, %c0_88] : memref<128x512xf32, #tpu.memory_space<vmem>>, vector<128x512xf32>
    %cst_89 = arith.constant dense<0.000000e+00> : vector<8x512xf32>
    %244 = tpu.matmul %240, %243, %cst_89 {dimension_numbers = #tpu.dot_dimension_numbers<[1], [0], [0], [1], [0, 0, 1, 1], [], []>} : vector<8x128xf32>, vector<128x512xf32>, vector<8x512xf32> -> vector<8x512xf32>
    %245 = arith.addf %242, %244 : vector<8x512xf32>
    %246 = vector.extract_strided_slice %245 {offsets = [0, 0], sizes = [8, 384], strides = [1, 1]} : vector<8x512xf32> to vector<8x384xf32>
    %247 = arith.negf %246 : vector<8x384xf32>
    %248 = math.exp %247 : vector<8x384xf32>
    %cst_90 = arith.constant 1.000000e+00 : f32
    %249 = vector.broadcast %cst_90 : f32 to vector<8x384xf32>
    %250 = arith.addf %249, %248 : vector<8x384xf32>
    %251 = arith.divf %249, %250 : vector<8x384xf32>
    %252 = vector.extract_strided_slice %251 {offsets = [0, 0], sizes = [8, 128], strides = [1, 1]} : vector<8x384xf32> to vector<8x128xf32>
    %253 = vector.extract_strided_slice %251 {offsets = [0, 128], sizes = [8, 128], strides = [1, 1]} : vector<8x384xf32> to vector<8x128xf32>
    %254 = vector.extract_strided_slice %251 {offsets = [0, 256], sizes = [8, 128], strides = [1, 1]} : vector<8x384xf32> to vector<8x128xf32>
    %255 = vector.extract_strided_slice %245 {offsets = [0, 384], sizes = [8, 128], strides = [1, 1]} : vector<8x512xf32> to vector<8x128xf32>
    %256 = math.tanh %255 : vector<8x128xf32>
    %257 = arith.mulf %253, %238 : vector<8x128xf32>
    %258 = arith.mulf %252, %256 : vector<8x128xf32>
    %259 = arith.addf %257, %258 : vector<8x128xf32>
    %260 = math.tanh %259 : vector<8x128xf32>
    %261 = arith.mulf %254, %260 : vector<8x128xf32>
    %c88_91 = arith.constant 88 : index
    %c0_92 = arith.constant 0 : index
    %262 = vector.load %arg8[%c88_91, %c0_92] : memref<280x128xf32, #tpu.memory_space<vmem>>, vector<8x128xf32>
    tpu.vector_store %arg8[%c88_91, %c0_92], %261 {strides = array<i32>} : memref<280x128xf32, #tpu.memory_space<vmem>>, vector<8x128xf32>,
    %c96 = arith.constant 96 : index
    %c0_93 = arith.constant 0 : index
    %263 = vector.load %arg7[%c96, %c0_93] : memref<280x512xf32, #tpu.memory_space<vmem>>, vector<8x512xf32>
    %c0_94 = arith.constant 0 : index
    %c0_95 = arith.constant 0 : index
    %264 = vector.load %arg2[%c0_94, %c0_95] : memref<128x512xf32, #tpu.memory_space<vmem>>, vector<128x512xf32>
    %cst_96 = arith.constant dense<0.000000e+00> : vector<8x512xf32>
    %265 = tpu.matmul %261, %264, %cst_96 {dimension_numbers = #tpu.dot_dimension_numbers<[1], [0], [0], [1], [0, 0, 1, 1], [], []>} : vector<8x128xf32>, vector<128x512xf32>, vector<8x512xf32> -> vector<8x512xf32>
    %266 = arith.addf %263, %265 : vector<8x512xf32>
    %267 = vector.extract_strided_slice %266 {offsets = [0, 0], sizes = [8, 384], strides = [1, 1]} : vector<8x512xf32> to vector<8x384xf32>
    %268 = arith.negf %267 : vector<8x384xf32>
    %269 = math.exp %268 : vector<8x384xf32>
    %cst_97 = arith.constant 1.000000e+00 : f32
    %270 = vector.broadcast %cst_97 : f32 to vector<8x384xf32>
    %271 = arith.addf %270, %269 : vector<8x384xf32>
    %272 = arith.divf %270, %271 : vector<8x384xf32>
    %273 = vector.extract_strided_slice %272 {offsets = [0, 0], sizes = [8, 128], strides = [1, 1]} : vector<8x384xf32> to vector<8x128xf32>
    %274 = vector.extract_strided_slice %272 {offsets = [0, 128], sizes = [8, 128], strides = [1, 1]} : vector<8x384xf32> to vector<8x128xf32>
    %275 = vector.extract_strided_slice %272 {offsets = [0, 256], sizes = [8, 128], strides = [1, 1]} : vector<8x384xf32> to vector<8x128xf32>
    %276 = vector.extract_strided_slice %266 {offsets = [0, 384], sizes = [8, 128], strides = [1, 1]} : vector<8x512xf32> to vector<8x128xf32>
    %277 = math.tanh %276 : vector<8x128xf32>
    %278 = arith.mulf %274, %259 : vector<8x128xf32>
    %279 = arith.mulf %273, %277 : vector<8x128xf32>
    %280 = arith.addf %278, %279 : vector<8x128xf32>
    %281 = math.tanh %280 : vector<8x128xf32>
    %282 = arith.mulf %275, %281 : vector<8x128xf32>
    %c96_98 = arith.constant 96 : index
    %c0_99 = arith.constant 0 : index
    %283 = vector.load %arg8[%c96_98, %c0_99] : memref<280x128xf32, #tpu.memory_space<vmem>>, vector<8x128xf32>
    tpu.vector_store %arg8[%c96_98, %c0_99], %282 {strides = array<i32>} : memref<280x128xf32, #tpu.memory_space<vmem>>, vector<8x128xf32>,
    %c104 = arith.constant 104 : index
    %c0_100 = arith.constant 0 : index
    %284 = vector.load %arg7[%c104, %c0_100] : memref<280x512xf32, #tpu.memory_space<vmem>>, vector<8x512xf32>
    %c0_101 = arith.constant 0 : index
    %c0_102 = arith.constant 0 : index
    %285 = vector.load %arg2[%c0_101, %c0_102] : memref<128x512xf32, #tpu.memory_space<vmem>>, vector<128x512xf32>
    %cst_103 = arith.constant dense<0.000000e+00> : vector<8x512xf32>
    %286 = tpu.matmul %282, %285, %cst_103 {dimension_numbers = #tpu.dot_dimension_numbers<[1], [0], [0], [1], [0, 0, 1, 1], [], []>} : vector<8x128xf32>, vector<128x512xf32>, vector<8x512xf32> -> vector<8x512xf32>
    %287 = arith.addf %284, %286 : vector<8x512xf32>
    %288 = vector.extract_strided_slice %287 {offsets = [0, 0], sizes = [8, 384], strides = [1, 1]} : vector<8x512xf32> to vector<8x384xf32>
    %289 = arith.negf %288 : vector<8x384xf32>
    %290 = math.exp %289 : vector<8x384xf32>
    %cst_104 = arith.constant 1.000000e+00 : f32
    %291 = vector.broadcast %cst_104 : f32 to vector<8x384xf32>
    %292 = arith.addf %291, %290 : vector<8x384xf32>
    %293 = arith.divf %291, %292 : vector<8x384xf32>
    %294 = vector.extract_strided_slice %293 {offsets = [0, 0], sizes = [8, 128], strides = [1, 1]} : vector<8x384xf32> to vector<8x128xf32>
    %295 = vector.extract_strided_slice %293 {offsets = [0, 128], sizes = [8, 128], strides = [1, 1]} : vector<8x384xf32> to vector<8x128xf32>
    %296 = vector.extract_strided_slice %293 {offsets = [0, 256], sizes = [8, 128], strides = [1, 1]} : vector<8x384xf32> to vector<8x128xf32>
    %297 = vector.extract_strided_slice %287 {offsets = [0, 384], sizes = [8, 128], strides = [1, 1]} : vector<8x512xf32> to vector<8x128xf32>
    %298 = math.tanh %297 : vector<8x128xf32>
    %299 = arith.mulf %295, %280 : vector<8x128xf32>
    %300 = arith.mulf %294, %298 : vector<8x128xf32>
    %301 = arith.addf %299, %300 : vector<8x128xf32>
    %302 = math.tanh %301 : vector<8x128xf32>
    %303 = arith.mulf %296, %302 : vector<8x128xf32>
    %c104_105 = arith.constant 104 : index
    %c0_106 = arith.constant 0 : index
    %304 = vector.load %arg8[%c104_105, %c0_106] : memref<280x128xf32, #tpu.memory_space<vmem>>, vector<8x128xf32>
    tpu.vector_store %arg8[%c104_105, %c0_106], %303 {strides = array<i32>} : memref<280x128xf32, #tpu.memory_space<vmem>>, vector<8x128xf32>,
    %c112 = arith.constant 112 : index
    %c0_107 = arith.constant 0 : index
    %305 = vector.load %arg7[%c112, %c0_107] : memref<280x512xf32, #tpu.memory_space<vmem>>, vector<8x512xf32>
    %c0_108 = arith.constant 0 : index
    %c0_109 = arith.constant 0 : index
    %306 = vector.load %arg2[%c0_108, %c0_109] : memref<128x512xf32, #tpu.memory_space<vmem>>, vector<128x512xf32>
    %cst_110 = arith.constant dense<0.000000e+00> : vector<8x512xf32>
    %307 = tpu.matmul %303, %306, %cst_110 {dimension_numbers = #tpu.dot_dimension_numbers<[1], [0], [0], [1], [0, 0, 1, 1], [], []>} : vector<8x128xf32>, vector<128x512xf32>, vector<8x512xf32> -> vector<8x512xf32>
    %308 = arith.addf %305, %307 : vector<8x512xf32>
    %309 = vector.extract_strided_slice %308 {offsets = [0, 0], sizes = [8, 384], strides = [1, 1]} : vector<8x512xf32> to vector<8x384xf32>
    %310 = arith.negf %309 : vector<8x384xf32>
    %311 = math.exp %310 : vector<8x384xf32>
    %cst_111 = arith.constant 1.000000e+00 : f32
    %312 = vector.broadcast %cst_111 : f32 to vector<8x384xf32>
    %313 = arith.addf %312, %311 : vector<8x384xf32>
    %314 = arith.divf %312, %313 : vector<8x384xf32>
    %315 = vector.extract_strided_slice %314 {offsets = [0, 0], sizes = [8, 128], strides = [1, 1]} : vector<8x384xf32> to vector<8x128xf32>
    %316 = vector.extract_strided_slice %314 {offsets = [0, 128], sizes = [8, 128], strides = [1, 1]} : vector<8x384xf32> to vector<8x128xf32>
    %317 = vector.extract_strided_slice %314 {offsets = [0, 256], sizes = [8, 128], strides = [1, 1]} : vector<8x384xf32> to vector<8x128xf32>
    %318 = vector.extract_strided_slice %308 {offsets = [0, 384], sizes = [8, 128], strides = [1, 1]} : vector<8x512xf32> to vector<8x128xf32>
    %319 = math.tanh %318 : vector<8x128xf32>
    %320 = arith.mulf %316, %301 : vector<8x128xf32>
    %321 = arith.mulf %315, %319 : vector<8x128xf32>
    %322 = arith.addf %320, %321 : vector<8x128xf32>
    %323 = math.tanh %322 : vector<8x128xf32>
    %324 = arith.mulf %317, %323 : vector<8x128xf32>
    %c112_112 = arith.constant 112 : index
    %c0_113 = arith.constant 0 : index
    %325 = vector.load %arg8[%c112_112, %c0_113] : memref<280x128xf32, #tpu.memory_space<vmem>>, vector<8x128xf32>
    tpu.vector_store %arg8[%c112_112, %c0_113], %324 {strides = array<i32>} : memref<280x128xf32, #tpu.memory_space<vmem>>, vector<8x128xf32>,
    %c120 = arith.constant 120 : index
    %c0_114 = arith.constant 0 : index
    %326 = vector.load %arg7[%c120, %c0_114] : memref<280x512xf32, #tpu.memory_space<vmem>>, vector<8x512xf32>
    %c0_115 = arith.constant 0 : index
    %c0_116 = arith.constant 0 : index
    %327 = vector.load %arg2[%c0_115, %c0_116] : memref<128x512xf32, #tpu.memory_space<vmem>>, vector<128x512xf32>
    %cst_117 = arith.constant dense<0.000000e+00> : vector<8x512xf32>
    %328 = tpu.matmul %324, %327, %cst_117 {dimension_numbers = #tpu.dot_dimension_numbers<[1], [0], [0], [1], [0, 0, 1, 1], [], []>} : vector<8x128xf32>, vector<128x512xf32>, vector<8x512xf32> -> vector<8x512xf32>
    %329 = arith.addf %326, %328 : vector<8x512xf32>
    %330 = vector.extract_strided_slice %329 {offsets = [0, 0], sizes = [8, 384], strides = [1, 1]} : vector<8x512xf32> to vector<8x384xf32>
    %331 = arith.negf %330 : vector<8x384xf32>
    %332 = math.exp %331 : vector<8x384xf32>
    %cst_118 = arith.constant 1.000000e+00 : f32
    %333 = vector.broadcast %cst_118 : f32 to vector<8x384xf32>
    %334 = arith.addf %333, %332 : vector<8x384xf32>
    %335 = arith.divf %333, %334 : vector<8x384xf32>
    %336 = vector.extract_strided_slice %335 {offsets = [0, 0], sizes = [8, 128], strides = [1, 1]} : vector<8x384xf32> to vector<8x128xf32>
    %337 = vector.extract_strided_slice %335 {offsets = [0, 128], sizes = [8, 128], strides = [1, 1]} : vector<8x384xf32> to vector<8x128xf32>
    %338 = vector.extract_strided_slice %335 {offsets = [0, 256], sizes = [8, 128], strides = [1, 1]} : vector<8x384xf32> to vector<8x128xf32>
    %339 = vector.extract_strided_slice %329 {offsets = [0, 384], sizes = [8, 128], strides = [1, 1]} : vector<8x512xf32> to vector<8x128xf32>
    %340 = math.tanh %339 : vector<8x128xf32>
    %341 = arith.mulf %337, %322 : vector<8x128xf32>
    %342 = arith.mulf %336, %340 : vector<8x128xf32>
    %343 = arith.addf %341, %342 : vector<8x128xf32>
    %344 = math.tanh %343 : vector<8x128xf32>
    %345 = arith.mulf %338, %344 : vector<8x128xf32>
    %c120_119 = arith.constant 120 : index
    %c0_120 = arith.constant 0 : index
    %346 = vector.load %arg8[%c120_119, %c0_120] : memref<280x128xf32, #tpu.memory_space<vmem>>, vector<8x128xf32>
    tpu.vector_store %arg8[%c120_119, %c0_120], %345 {strides = array<i32>} : memref<280x128xf32, #tpu.memory_space<vmem>>, vector<8x128xf32>,
    %c128 = arith.constant 128 : index
    %c0_121 = arith.constant 0 : index
    %347 = vector.load %arg7[%c128, %c0_121] : memref<280x512xf32, #tpu.memory_space<vmem>>, vector<8x512xf32>
    %c0_122 = arith.constant 0 : index
    %c0_123 = arith.constant 0 : index
    %348 = vector.load %arg2[%c0_122, %c0_123] : memref<128x512xf32, #tpu.memory_space<vmem>>, vector<128x512xf32>
    %cst_124 = arith.constant dense<0.000000e+00> : vector<8x512xf32>
    %349 = tpu.matmul %345, %348, %cst_124 {dimension_numbers = #tpu.dot_dimension_numbers<[1], [0], [0], [1], [0, 0, 1, 1], [], []>} : vector<8x128xf32>, vector<128x512xf32>, vector<8x512xf32> -> vector<8x512xf32>
    %350 = arith.addf %347, %349 : vector<8x512xf32>
    %351 = vector.extract_strided_slice %350 {offsets = [0, 0], sizes = [8, 384], strides = [1, 1]} : vector<8x512xf32> to vector<8x384xf32>
    %352 = arith.negf %351 : vector<8x384xf32>
    %353 = math.exp %352 : vector<8x384xf32>
    %cst_125 = arith.constant 1.000000e+00 : f32
    %354 = vector.broadcast %cst_125 : f32 to vector<8x384xf32>
    %355 = arith.addf %354, %353 : vector<8x384xf32>
    %356 = arith.divf %354, %355 : vector<8x384xf32>
    %357 = vector.extract_strided_slice %356 {offsets = [0, 0], sizes = [8, 128], strides = [1, 1]} : vector<8x384xf32> to vector<8x128xf32>
    %358 = vector.extract_strided_slice %356 {offsets = [0, 128], sizes = [8, 128], strides = [1, 1]} : vector<8x384xf32> to vector<8x128xf32>
    %359 = vector.extract_strided_slice %356 {offsets = [0, 256], sizes = [8, 128], strides = [1, 1]} : vector<8x384xf32> to vector<8x128xf32>
    %360 = vector.extract_strided_slice %350 {offsets = [0, 384], sizes = [8, 128], strides = [1, 1]} : vector<8x512xf32> to vector<8x128xf32>
    %361 = math.tanh %360 : vector<8x128xf32>
    %362 = arith.mulf %358, %343 : vector<8x128xf32>
    %363 = arith.mulf %357, %361 : vector<8x128xf32>
    %364 = arith.addf %362, %363 : vector<8x128xf32>
    %365 = math.tanh %364 : vector<8x128xf32>
    %366 = arith.mulf %359, %365 : vector<8x128xf32>
    %c128_126 = arith.constant 128 : index
    %c0_127 = arith.constant 0 : index
    %367 = vector.load %arg8[%c128_126, %c0_127] : memref<280x128xf32, #tpu.memory_space<vmem>>, vector<8x128xf32>
    tpu.vector_store %arg8[%c128_126, %c0_127], %366 {strides = array<i32>} : memref<280x128xf32, #tpu.memory_space<vmem>>, vector<8x128xf32>,
    %c136 = arith.constant 136 : index
    %c0_128 = arith.constant 0 : index
    %368 = vector.load %arg7[%c136, %c0_128] : memref<280x512xf32, #tpu.memory_space<vmem>>, vector<8x512xf32>
    %c0_129 = arith.constant 0 : index
    %c0_130 = arith.constant 0 : index
    %369 = vector.load %arg2[%c0_129, %c0_130] : memref<128x512xf32, #tpu.memory_space<vmem>>, vector<128x512xf32>
    %cst_131 = arith.constant dense<0.000000e+00> : vector<8x512xf32>
    %370 = tpu.matmul %366, %369, %cst_131 {dimension_numbers = #tpu.dot_dimension_numbers<[1], [0], [0], [1], [0, 0, 1, 1], [], []>} : vector<8x128xf32>, vector<128x512xf32>, vector<8x512xf32> -> vector<8x512xf32>
    %371 = arith.addf %368, %370 : vector<8x512xf32>
    %372 = vector.extract_strided_slice %371 {offsets = [0, 0], sizes = [8, 384], strides = [1, 1]} : vector<8x512xf32> to vector<8x384xf32>
    %373 = arith.negf %372 : vector<8x384xf32>
    %374 = math.exp %373 : vector<8x384xf32>
    %cst_132 = arith.constant 1.000000e+00 : f32
    %375 = vector.broadcast %cst_132 : f32 to vector<8x384xf32>
    %376 = arith.addf %375, %374 : vector<8x384xf32>
    %377 = arith.divf %375, %376 : vector<8x384xf32>
    %378 = vector.extract_strided_slice %377 {offsets = [0, 0], sizes = [8, 128], strides = [1, 1]} : vector<8x384xf32> to vector<8x128xf32>
    %379 = vector.extract_strided_slice %377 {offsets = [0, 128], sizes = [8, 128], strides = [1, 1]} : vector<8x384xf32> to vector<8x128xf32>
    %380 = vector.extract_strided_slice %377 {offsets = [0, 256], sizes = [8, 128], strides = [1, 1]} : vector<8x384xf32> to vector<8x128xf32>
    %381 = vector.extract_strided_slice %371 {offsets = [0, 384], sizes = [8, 128], strides = [1, 1]} : vector<8x512xf32> to vector<8x128xf32>
    %382 = math.tanh %381 : vector<8x128xf32>
    %383 = arith.mulf %379, %364 : vector<8x128xf32>
    %384 = arith.mulf %378, %382 : vector<8x128xf32>
    %385 = arith.addf %383, %384 : vector<8x128xf32>
    %386 = math.tanh %385 : vector<8x128xf32>
    %387 = arith.mulf %380, %386 : vector<8x128xf32>
    %c136_133 = arith.constant 136 : index
    %c0_134 = arith.constant 0 : index
    %388 = vector.load %arg8[%c136_133, %c0_134] : memref<280x128xf32, #tpu.memory_space<vmem>>, vector<8x128xf32>
    tpu.vector_store %arg8[%c136_133, %c0_134], %387 {strides = array<i32>} : memref<280x128xf32, #tpu.memory_space<vmem>>, vector<8x128xf32>,
    %c144 = arith.constant 144 : index
    %c0_135 = arith.constant 0 : index
    %389 = vector.load %arg7[%c144, %c0_135] : memref<280x512xf32, #tpu.memory_space<vmem>>, vector<8x512xf32>
    %c0_136 = arith.constant 0 : index
    %c0_137 = arith.constant 0 : index
    %390 = vector.load %arg2[%c0_136, %c0_137] : memref<128x512xf32, #tpu.memory_space<vmem>>, vector<128x512xf32>
    %cst_138 = arith.constant dense<0.000000e+00> : vector<8x512xf32>
    %391 = tpu.matmul %387, %390, %cst_138 {dimension_numbers = #tpu.dot_dimension_numbers<[1], [0], [0], [1], [0, 0, 1, 1], [], []>} : vector<8x128xf32>, vector<128x512xf32>, vector<8x512xf32> -> vector<8x512xf32>
    %392 = arith.addf %389, %391 : vector<8x512xf32>
    %393 = vector.extract_strided_slice %392 {offsets = [0, 0], sizes = [8, 384], strides = [1, 1]} : vector<8x512xf32> to vector<8x384xf32>
    %394 = arith.negf %393 : vector<8x384xf32>
    %395 = math.exp %394 : vector<8x384xf32>
    %cst_139 = arith.constant 1.000000e+00 : f32
    %396 = vector.broadcast %cst_139 : f32 to vector<8x384xf32>
    %397 = arith.addf %396, %395 : vector<8x384xf32>
    %398 = arith.divf %396, %397 : vector<8x384xf32>
    %399 = vector.extract_strided_slice %398 {offsets = [0, 0], sizes = [8, 128], strides = [1, 1]} : vector<8x384xf32> to vector<8x128xf32>
    %400 = vector.extract_strided_slice %398 {offsets = [0, 128], sizes = [8, 128], strides = [1, 1]} : vector<8x384xf32> to vector<8x128xf32>
    %401 = vector.extract_strided_slice %398 {offsets = [0, 256], sizes = [8, 128], strides = [1, 1]} : vector<8x384xf32> to vector<8x128xf32>
    %402 = vector.extract_strided_slice %392 {offsets = [0, 384], sizes = [8, 128], strides = [1, 1]} : vector<8x512xf32> to vector<8x128xf32>
    %403 = math.tanh %402 : vector<8x128xf32>
    %404 = arith.mulf %400, %385 : vector<8x128xf32>
    %405 = arith.mulf %399, %403 : vector<8x128xf32>
    %406 = arith.addf %404, %405 : vector<8x128xf32>
    %407 = math.tanh %406 : vector<8x128xf32>
    %408 = arith.mulf %401, %407 : vector<8x128xf32>
    %c144_140 = arith.constant 144 : index
    %c0_141 = arith.constant 0 : index
    %409 = vector.load %arg8[%c144_140, %c0_141] : memref<280x128xf32, #tpu.memory_space<vmem>>, vector<8x128xf32>
    tpu.vector_store %arg8[%c144_140, %c0_141], %408 {strides = array<i32>} : memref<280x128xf32, #tpu.memory_space<vmem>>, vector<8x128xf32>,
    %c152 = arith.constant 152 : index
    %c0_142 = arith.constant 0 : index
    %410 = vector.load %arg7[%c152, %c0_142] : memref<280x512xf32, #tpu.memory_space<vmem>>, vector<8x512xf32>
    %c0_143 = arith.constant 0 : index
    %c0_144 = arith.constant 0 : index
    %411 = vector.load %arg2[%c0_143, %c0_144] : memref<128x512xf32, #tpu.memory_space<vmem>>, vector<128x512xf32>
    %cst_145 = arith.constant dense<0.000000e+00> : vector<8x512xf32>
    %412 = tpu.matmul %408, %411, %cst_145 {dimension_numbers = #tpu.dot_dimension_numbers<[1], [0], [0], [1], [0, 0, 1, 1], [], []>} : vector<8x128xf32>, vector<128x512xf32>, vector<8x512xf32> -> vector<8x512xf32>
    %413 = arith.addf %410, %412 : vector<8x512xf32>
    %414 = vector.extract_strided_slice %413 {offsets = [0, 0], sizes = [8, 384], strides = [1, 1]} : vector<8x512xf32> to vector<8x384xf32>
    %415 = arith.negf %414 : vector<8x384xf32>
    %416 = math.exp %415 : vector<8x384xf32>
    %cst_146 = arith.constant 1.000000e+00 : f32
    %417 = vector.broadcast %cst_146 : f32 to vector<8x384xf32>
    %418 = arith.addf %417, %416 : vector<8x384xf32>
    %419 = arith.divf %417, %418 : vector<8x384xf32>
    %420 = vector.extract_strided_slice %419 {offsets = [0, 0], sizes = [8, 128], strides = [1, 1]} : vector<8x384xf32> to vector<8x128xf32>
    %421 = vector.extract_strided_slice %419 {offsets = [0, 128], sizes = [8, 128], strides = [1, 1]} : vector<8x384xf32> to vector<8x128xf32>
    %422 = vector.extract_strided_slice %419 {offsets = [0, 256], sizes = [8, 128], strides = [1, 1]} : vector<8x384xf32> to vector<8x128xf32>
    %423 = vector.extract_strided_slice %413 {offsets = [0, 384], sizes = [8, 128], strides = [1, 1]} : vector<8x512xf32> to vector<8x128xf32>
    %424 = math.tanh %423 : vector<8x128xf32>
    %425 = arith.mulf %421, %406 : vector<8x128xf32>
    %426 = arith.mulf %420, %424 : vector<8x128xf32>
    %427 = arith.addf %425, %426 : vector<8x128xf32>
    %428 = math.tanh %427 : vector<8x128xf32>
    %429 = arith.mulf %422, %428 : vector<8x128xf32>
    %c152_147 = arith.constant 152 : index
    %c0_148 = arith.constant 0 : index
    %430 = vector.load %arg8[%c152_147, %c0_148] : memref<280x128xf32, #tpu.memory_space<vmem>>, vector<8x128xf32>
    tpu.vector_store %arg8[%c152_147, %c0_148], %429 {strides = array<i32>} : memref<280x128xf32, #tpu.memory_space<vmem>>, vector<8x128xf32>,
    %c160 = arith.constant 160 : index
    %c0_149 = arith.constant 0 : index
    %431 = vector.load %arg7[%c160, %c0_149] : memref<280x512xf32, #tpu.memory_space<vmem>>, vector<8x512xf32>
    %c0_150 = arith.constant 0 : index
    %c0_151 = arith.constant 0 : index
    %432 = vector.load %arg2[%c0_150, %c0_151] : memref<128x512xf32, #tpu.memory_space<vmem>>, vector<128x512xf32>
    %cst_152 = arith.constant dense<0.000000e+00> : vector<8x512xf32>
    %433 = tpu.matmul %429, %432, %cst_152 {dimension_numbers = #tpu.dot_dimension_numbers<[1], [0], [0], [1], [0, 0, 1, 1], [], []>} : vector<8x128xf32>, vector<128x512xf32>, vector<8x512xf32> -> vector<8x512xf32>
    %434 = arith.addf %431, %433 : vector<8x512xf32>
    %435 = vector.extract_strided_slice %434 {offsets = [0, 0], sizes = [8, 384], strides = [1, 1]} : vector<8x512xf32> to vector<8x384xf32>
    %436 = arith.negf %435 : vector<8x384xf32>
    %437 = math.exp %436 : vector<8x384xf32>
    %cst_153 = arith.constant 1.000000e+00 : f32
    %438 = vector.broadcast %cst_153 : f32 to vector<8x384xf32>
    %439 = arith.addf %438, %437 : vector<8x384xf32>
    %440 = arith.divf %438, %439 : vector<8x384xf32>
    %441 = vector.extract_strided_slice %440 {offsets = [0, 0], sizes = [8, 128], strides = [1, 1]} : vector<8x384xf32> to vector<8x128xf32>
    %442 = vector.extract_strided_slice %440 {offsets = [0, 128], sizes = [8, 128], strides = [1, 1]} : vector<8x384xf32> to vector<8x128xf32>
    %443 = vector.extract_strided_slice %440 {offsets = [0, 256], sizes = [8, 128], strides = [1, 1]} : vector<8x384xf32> to vector<8x128xf32>
    %444 = vector.extract_strided_slice %434 {offsets = [0, 384], sizes = [8, 128], strides = [1, 1]} : vector<8x512xf32> to vector<8x128xf32>
    %445 = math.tanh %444 : vector<8x128xf32>
    %446 = arith.mulf %442, %427 : vector<8x128xf32>
    %447 = arith.mulf %441, %445 : vector<8x128xf32>
    %448 = arith.addf %446, %447 : vector<8x128xf32>
    %449 = math.tanh %448 : vector<8x128xf32>
    %450 = arith.mulf %443, %449 : vector<8x128xf32>
    %c160_154 = arith.constant 160 : index
    %c0_155 = arith.constant 0 : index
    %451 = vector.load %arg8[%c160_154, %c0_155] : memref<280x128xf32, #tpu.memory_space<vmem>>, vector<8x128xf32>
    tpu.vector_store %arg8[%c160_154, %c0_155], %450 {strides = array<i32>} : memref<280x128xf32, #tpu.memory_space<vmem>>, vector<8x128xf32>,
    %c168 = arith.constant 168 : index
    %c0_156 = arith.constant 0 : index
    %452 = vector.load %arg7[%c168, %c0_156] : memref<280x512xf32, #tpu.memory_space<vmem>>, vector<8x512xf32>
    %c0_157 = arith.constant 0 : index
    %c0_158 = arith.constant 0 : index
    %453 = vector.load %arg2[%c0_157, %c0_158] : memref<128x512xf32, #tpu.memory_space<vmem>>, vector<128x512xf32>
    %cst_159 = arith.constant dense<0.000000e+00> : vector<8x512xf32>
    %454 = tpu.matmul %450, %453, %cst_159 {dimension_numbers = #tpu.dot_dimension_numbers<[1], [0], [0], [1], [0, 0, 1, 1], [], []>} : vector<8x128xf32>, vector<128x512xf32>, vector<8x512xf32> -> vector<8x512xf32>
    %455 = arith.addf %452, %454 : vector<8x512xf32>
    %456 = vector.extract_strided_slice %455 {offsets = [0, 0], sizes = [8, 384], strides = [1, 1]} : vector<8x512xf32> to vector<8x384xf32>
    %457 = arith.negf %456 : vector<8x384xf32>
    %458 = math.exp %457 : vector<8x384xf32>
    %cst_160 = arith.constant 1.000000e+00 : f32
    %459 = vector.broadcast %cst_160 : f32 to vector<8x384xf32>
    %460 = arith.addf %459, %458 : vector<8x384xf32>
    %461 = arith.divf %459, %460 : vector<8x384xf32>
    %462 = vector.extract_strided_slice %461 {offsets = [0, 0], sizes = [8, 128], strides = [1, 1]} : vector<8x384xf32> to vector<8x128xf32>
    %463 = vector.extract_strided_slice %461 {offsets = [0, 128], sizes = [8, 128], strides = [1, 1]} : vector<8x384xf32> to vector<8x128xf32>
    %464 = vector.extract_strided_slice %461 {offsets = [0, 256], sizes = [8, 128], strides = [1, 1]} : vector<8x384xf32> to vector<8x128xf32>
    %465 = vector.extract_strided_slice %455 {offsets = [0, 384], sizes = [8, 128], strides = [1, 1]} : vector<8x512xf32> to vector<8x128xf32>
    %466 = math.tanh %465 : vector<8x128xf32>
    %467 = arith.mulf %463, %448 : vector<8x128xf32>
    %468 = arith.mulf %462, %466 : vector<8x128xf32>
    %469 = arith.addf %467, %468 : vector<8x128xf32>
    %470 = math.tanh %469 : vector<8x128xf32>
    %471 = arith.mulf %464, %470 : vector<8x128xf32>
    %c168_161 = arith.constant 168 : index
    %c0_162 = arith.constant 0 : index
    %472 = vector.load %arg8[%c168_161, %c0_162] : memref<280x128xf32, #tpu.memory_space<vmem>>, vector<8x128xf32>
    tpu.vector_store %arg8[%c168_161, %c0_162], %471 {strides = array<i32>} : memref<280x128xf32, #tpu.memory_space<vmem>>, vector<8x128xf32>,
    %c176 = arith.constant 176 : index
    %c0_163 = arith.constant 0 : index
    %473 = vector.load %arg7[%c176, %c0_163] : memref<280x512xf32, #tpu.memory_space<vmem>>, vector<8x512xf32>
    %c0_164 = arith.constant 0 : index
    %c0_165 = arith.constant 0 : index
    %474 = vector.load %arg2[%c0_164, %c0_165] : memref<128x512xf32, #tpu.memory_space<vmem>>, vector<128x512xf32>
    %cst_166 = arith.constant dense<0.000000e+00> : vector<8x512xf32>
    %475 = tpu.matmul %471, %474, %cst_166 {dimension_numbers = #tpu.dot_dimension_numbers<[1], [0], [0], [1], [0, 0, 1, 1], [], []>} : vector<8x128xf32>, vector<128x512xf32>, vector<8x512xf32> -> vector<8x512xf32>
    %476 = arith.addf %473, %475 : vector<8x512xf32>
    %477 = vector.extract_strided_slice %476 {offsets = [0, 0], sizes = [8, 384], strides = [1, 1]} : vector<8x512xf32> to vector<8x384xf32>
    %478 = arith.negf %477 : vector<8x384xf32>
    %479 = math.exp %478 : vector<8x384xf32>
    %cst_167 = arith.constant 1.000000e+00 : f32
    %480 = vector.broadcast %cst_167 : f32 to vector<8x384xf32>
    %481 = arith.addf %480, %479 : vector<8x384xf32>
    %482 = arith.divf %480, %481 : vector<8x384xf32>
    %483 = vector.extract_strided_slice %482 {offsets = [0, 0], sizes = [8, 128], strides = [1, 1]} : vector<8x384xf32> to vector<8x128xf32>
    %484 = vector.extract_strided_slice %482 {offsets = [0, 128], sizes = [8, 128], strides = [1, 1]} : vector<8x384xf32> to vector<8x128xf32>
    %485 = vector.extract_strided_slice %482 {offsets = [0, 256], sizes = [8, 128], strides = [1, 1]} : vector<8x384xf32> to vector<8x128xf32>
    %486 = vector.extract_strided_slice %476 {offsets = [0, 384], sizes = [8, 128], strides = [1, 1]} : vector<8x512xf32> to vector<8x128xf32>
    %487 = math.tanh %486 : vector<8x128xf32>
    %488 = arith.mulf %484, %469 : vector<8x128xf32>
    %489 = arith.mulf %483, %487 : vector<8x128xf32>
    %490 = arith.addf %488, %489 : vector<8x128xf32>
    %491 = math.tanh %490 : vector<8x128xf32>
    %492 = arith.mulf %485, %491 : vector<8x128xf32>
    %c176_168 = arith.constant 176 : index
    %c0_169 = arith.constant 0 : index
    %493 = vector.load %arg8[%c176_168, %c0_169] : memref<280x128xf32, #tpu.memory_space<vmem>>, vector<8x128xf32>
    tpu.vector_store %arg8[%c176_168, %c0_169], %492 {strides = array<i32>} : memref<280x128xf32, #tpu.memory_space<vmem>>, vector<8x128xf32>,
    %c184 = arith.constant 184 : index
    %c0_170 = arith.constant 0 : index
    %494 = vector.load %arg7[%c184, %c0_170] : memref<280x512xf32, #tpu.memory_space<vmem>>, vector<8x512xf32>
    %c0_171 = arith.constant 0 : index
    %c0_172 = arith.constant 0 : index
    %495 = vector.load %arg2[%c0_171, %c0_172] : memref<128x512xf32, #tpu.memory_space<vmem>>, vector<128x512xf32>
    %cst_173 = arith.constant dense<0.000000e+00> : vector<8x512xf32>
    %496 = tpu.matmul %492, %495, %cst_173 {dimension_numbers = #tpu.dot_dimension_numbers<[1], [0], [0], [1], [0, 0, 1, 1], [], []>} : vector<8x128xf32>, vector<128x512xf32>, vector<8x512xf32> -> vector<8x512xf32>
    %497 = arith.addf %494, %496 : vector<8x512xf32>
    %498 = vector.extract_strided_slice %497 {offsets = [0, 0], sizes = [8, 384], strides = [1, 1]} : vector<8x512xf32> to vector<8x384xf32>
    %499 = arith.negf %498 : vector<8x384xf32>
    %500 = math.exp %499 : vector<8x384xf32>
    %cst_174 = arith.constant 1.000000e+00 : f32
    %501 = vector.broadcast %cst_174 : f32 to vector<8x384xf32>
    %502 = arith.addf %501, %500 : vector<8x384xf32>
    %503 = arith.divf %501, %502 : vector<8x384xf32>
    %504 = vector.extract_strided_slice %503 {offsets = [0, 0], sizes = [8, 128], strides = [1, 1]} : vector<8x384xf32> to vector<8x128xf32>
    %505 = vector.extract_strided_slice %503 {offsets = [0, 128], sizes = [8, 128], strides = [1, 1]} : vector<8x384xf32> to vector<8x128xf32>
    %506 = vector.extract_strided_slice %503 {offsets = [0, 256], sizes = [8, 128], strides = [1, 1]} : vector<8x384xf32> to vector<8x128xf32>
    %507 = vector.extract_strided_slice %497 {offsets = [0, 384], sizes = [8, 128], strides = [1, 1]} : vector<8x512xf32> to vector<8x128xf32>
    %508 = math.tanh %507 : vector<8x128xf32>
    %509 = arith.mulf %505, %490 : vector<8x128xf32>
    %510 = arith.mulf %504, %508 : vector<8x128xf32>
    %511 = arith.addf %509, %510 : vector<8x128xf32>
    %512 = math.tanh %511 : vector<8x128xf32>
    %513 = arith.mulf %506, %512 : vector<8x128xf32>
    %c184_175 = arith.constant 184 : index
    %c0_176 = arith.constant 0 : index
    %514 = vector.load %arg8[%c184_175, %c0_176] : memref<280x128xf32, #tpu.memory_space<vmem>>, vector<8x128xf32>
    tpu.vector_store %arg8[%c184_175, %c0_176], %513 {strides = array<i32>} : memref<280x128xf32, #tpu.memory_space<vmem>>, vector<8x128xf32>,
    %c192 = arith.constant 192 : index
    %c0_177 = arith.constant 0 : index
    %515 = vector.load %arg7[%c192, %c0_177] : memref<280x512xf32, #tpu.memory_space<vmem>>, vector<8x512xf32>
    %c0_178 = arith.constant 0 : index
    %c0_179 = arith.constant 0 : index
    %516 = vector.load %arg2[%c0_178, %c0_179] : memref<128x512xf32, #tpu.memory_space<vmem>>, vector<128x512xf32>
    %cst_180 = arith.constant dense<0.000000e+00> : vector<8x512xf32>
    %517 = tpu.matmul %513, %516, %cst_180 {dimension_numbers = #tpu.dot_dimension_numbers<[1], [0], [0], [1], [0, 0, 1, 1], [], []>} : vector<8x128xf32>, vector<128x512xf32>, vector<8x512xf32> -> vector<8x512xf32>
    %518 = arith.addf %515, %517 : vector<8x512xf32>
    %519 = vector.extract_strided_slice %518 {offsets = [0, 0], sizes = [8, 384], strides = [1, 1]} : vector<8x512xf32> to vector<8x384xf32>
    %520 = arith.negf %519 : vector<8x384xf32>
    %521 = math.exp %520 : vector<8x384xf32>
    %cst_181 = arith.constant 1.000000e+00 : f32
    %522 = vector.broadcast %cst_181 : f32 to vector<8x384xf32>
    %523 = arith.addf %522, %521 : vector<8x384xf32>
    %524 = arith.divf %522, %523 : vector<8x384xf32>
    %525 = vector.extract_strided_slice %524 {offsets = [0, 0], sizes = [8, 128], strides = [1, 1]} : vector<8x384xf32> to vector<8x128xf32>
    %526 = vector.extract_strided_slice %524 {offsets = [0, 128], sizes = [8, 128], strides = [1, 1]} : vector<8x384xf32> to vector<8x128xf32>
    %527 = vector.extract_strided_slice %524 {offsets = [0, 256], sizes = [8, 128], strides = [1, 1]} : vector<8x384xf32> to vector<8x128xf32>
    %528 = vector.extract_strided_slice %518 {offsets = [0, 384], sizes = [8, 128], strides = [1, 1]} : vector<8x512xf32> to vector<8x128xf32>
    %529 = math.tanh %528 : vector<8x128xf32>
    %530 = arith.mulf %526, %511 : vector<8x128xf32>
    %531 = arith.mulf %525, %529 : vector<8x128xf32>
    %532 = arith.addf %530, %531 : vector<8x128xf32>
    %533 = math.tanh %532 : vector<8x128xf32>
    %534 = arith.mulf %527, %533 : vector<8x128xf32>
    %c192_182 = arith.constant 192 : index
    %c0_183 = arith.constant 0 : index
    %535 = vector.load %arg8[%c192_182, %c0_183] : memref<280x128xf32, #tpu.memory_space<vmem>>, vector<8x128xf32>
    tpu.vector_store %arg8[%c192_182, %c0_183], %534 {strides = array<i32>} : memref<280x128xf32, #tpu.memory_space<vmem>>, vector<8x128xf32>,
    %c200 = arith.constant 200 : index
    %c0_184 = arith.constant 0 : index
    %536 = vector.load %arg7[%c200, %c0_184] : memref<280x512xf32, #tpu.memory_space<vmem>>, vector<8x512xf32>
    %c0_185 = arith.constant 0 : index
    %c0_186 = arith.constant 0 : index
    %537 = vector.load %arg2[%c0_185, %c0_186] : memref<128x512xf32, #tpu.memory_space<vmem>>, vector<128x512xf32>
    %cst_187 = arith.constant dense<0.000000e+00> : vector<8x512xf32>
    %538 = tpu.matmul %534, %537, %cst_187 {dimension_numbers = #tpu.dot_dimension_numbers<[1], [0], [0], [1], [0, 0, 1, 1], [], []>} : vector<8x128xf32>, vector<128x512xf32>, vector<8x512xf32> -> vector<8x512xf32>
    %539 = arith.addf %536, %538 : vector<8x512xf32>
    %540 = vector.extract_strided_slice %539 {offsets = [0, 0], sizes = [8, 384], strides = [1, 1]} : vector<8x512xf32> to vector<8x384xf32>
    %541 = arith.negf %540 : vector<8x384xf32>
    %542 = math.exp %541 : vector<8x384xf32>
    %cst_188 = arith.constant 1.000000e+00 : f32
    %543 = vector.broadcast %cst_188 : f32 to vector<8x384xf32>
    %544 = arith.addf %543, %542 : vector<8x384xf32>
    %545 = arith.divf %543, %544 : vector<8x384xf32>
    %546 = vector.extract_strided_slice %545 {offsets = [0, 0], sizes = [8, 128], strides = [1, 1]} : vector<8x384xf32> to vector<8x128xf32>
    %547 = vector.extract_strided_slice %545 {offsets = [0, 128], sizes = [8, 128], strides = [1, 1]} : vector<8x384xf32> to vector<8x128xf32>
    %548 = vector.extract_strided_slice %545 {offsets = [0, 256], sizes = [8, 128], strides = [1, 1]} : vector<8x384xf32> to vector<8x128xf32>
    %549 = vector.extract_strided_slice %539 {offsets = [0, 384], sizes = [8, 128], strides = [1, 1]} : vector<8x512xf32> to vector<8x128xf32>
    %550 = math.tanh %549 : vector<8x128xf32>
    %551 = arith.mulf %547, %532 : vector<8x128xf32>
    %552 = arith.mulf %546, %550 : vector<8x128xf32>
    %553 = arith.addf %551, %552 : vector<8x128xf32>
    %554 = math.tanh %553 : vector<8x128xf32>
    %555 = arith.mulf %548, %554 : vector<8x128xf32>
    %c200_189 = arith.constant 200 : index
    %c0_190 = arith.constant 0 : index
    %556 = vector.load %arg8[%c200_189, %c0_190] : memref<280x128xf32, #tpu.memory_space<vmem>>, vector<8x128xf32>
    tpu.vector_store %arg8[%c200_189, %c0_190], %555 {strides = array<i32>} : memref<280x128xf32, #tpu.memory_space<vmem>>, vector<8x128xf32>,
    %c208 = arith.constant 208 : index
    %c0_191 = arith.constant 0 : index
    %557 = vector.load %arg7[%c208, %c0_191] : memref<280x512xf32, #tpu.memory_space<vmem>>, vector<8x512xf32>
    %c0_192 = arith.constant 0 : index
    %c0_193 = arith.constant 0 : index
    %558 = vector.load %arg2[%c0_192, %c0_193] : memref<128x512xf32, #tpu.memory_space<vmem>>, vector<128x512xf32>
    %cst_194 = arith.constant dense<0.000000e+00> : vector<8x512xf32>
    %559 = tpu.matmul %555, %558, %cst_194 {dimension_numbers = #tpu.dot_dimension_numbers<[1], [0], [0], [1], [0, 0, 1, 1], [], []>} : vector<8x128xf32>, vector<128x512xf32>, vector<8x512xf32> -> vector<8x512xf32>
    %560 = arith.addf %557, %559 : vector<8x512xf32>
    %561 = vector.extract_strided_slice %560 {offsets = [0, 0], sizes = [8, 384], strides = [1, 1]} : vector<8x512xf32> to vector<8x384xf32>
    %562 = arith.negf %561 : vector<8x384xf32>
    %563 = math.exp %562 : vector<8x384xf32>
    %cst_195 = arith.constant 1.000000e+00 : f32
    %564 = vector.broadcast %cst_195 : f32 to vector<8x384xf32>
    %565 = arith.addf %564, %563 : vector<8x384xf32>
    %566 = arith.divf %564, %565 : vector<8x384xf32>
    %567 = vector.extract_strided_slice %566 {offsets = [0, 0], sizes = [8, 128], strides = [1, 1]} : vector<8x384xf32> to vector<8x128xf32>
    %568 = vector.extract_strided_slice %566 {offsets = [0, 128], sizes = [8, 128], strides = [1, 1]} : vector<8x384xf32> to vector<8x128xf32>
    %569 = vector.extract_strided_slice %566 {offsets = [0, 256], sizes = [8, 128], strides = [1, 1]} : vector<8x384xf32> to vector<8x128xf32>
    %570 = vector.extract_strided_slice %560 {offsets = [0, 384], sizes = [8, 128], strides = [1, 1]} : vector<8x512xf32> to vector<8x128xf32>
    %571 = math.tanh %570 : vector<8x128xf32>
    %572 = arith.mulf %568, %553 : vector<8x128xf32>
    %573 = arith.mulf %567, %571 : vector<8x128xf32>
    %574 = arith.addf %572, %573 : vector<8x128xf32>
    %575 = math.tanh %574 : vector<8x128xf32>
    %576 = arith.mulf %569, %575 : vector<8x128xf32>
    %c208_196 = arith.constant 208 : index
    %c0_197 = arith.constant 0 : index
    %577 = vector.load %arg8[%c208_196, %c0_197] : memref<280x128xf32, #tpu.memory_space<vmem>>, vector<8x128xf32>
    tpu.vector_store %arg8[%c208_196, %c0_197], %576 {strides = array<i32>} : memref<280x128xf32, #tpu.memory_space<vmem>>, vector<8x128xf32>,
    %c216 = arith.constant 216 : index
    %c0_198 = arith.constant 0 : index
    %578 = vector.load %arg7[%c216, %c0_198] : memref<280x512xf32, #tpu.memory_space<vmem>>, vector<8x512xf32>
    %c0_199 = arith.constant 0 : index
    %c0_200 = arith.constant 0 : index
    %579 = vector.load %arg2[%c0_199, %c0_200] : memref<128x512xf32, #tpu.memory_space<vmem>>, vector<128x512xf32>
    %cst_201 = arith.constant dense<0.000000e+00> : vector<8x512xf32>
    %580 = tpu.matmul %576, %579, %cst_201 {dimension_numbers = #tpu.dot_dimension_numbers<[1], [0], [0], [1], [0, 0, 1, 1], [], []>} : vector<8x128xf32>, vector<128x512xf32>, vector<8x512xf32> -> vector<8x512xf32>
    %581 = arith.addf %578, %580 : vector<8x512xf32>
    %582 = vector.extract_strided_slice %581 {offsets = [0, 0], sizes = [8, 384], strides = [1, 1]} : vector<8x512xf32> to vector<8x384xf32>
    %583 = arith.negf %582 : vector<8x384xf32>
    %584 = math.exp %583 : vector<8x384xf32>
    %cst_202 = arith.constant 1.000000e+00 : f32
    %585 = vector.broadcast %cst_202 : f32 to vector<8x384xf32>
    %586 = arith.addf %585, %584 : vector<8x384xf32>
    %587 = arith.divf %585, %586 : vector<8x384xf32>
    %588 = vector.extract_strided_slice %587 {offsets = [0, 0], sizes = [8, 128], strides = [1, 1]} : vector<8x384xf32> to vector<8x128xf32>
    %589 = vector.extract_strided_slice %587 {offsets = [0, 128], sizes = [8, 128], strides = [1, 1]} : vector<8x384xf32> to vector<8x128xf32>
    %590 = vector.extract_strided_slice %587 {offsets = [0, 256], sizes = [8, 128], strides = [1, 1]} : vector<8x384xf32> to vector<8x128xf32>
    %591 = vector.extract_strided_slice %581 {offsets = [0, 384], sizes = [8, 128], strides = [1, 1]} : vector<8x512xf32> to vector<8x128xf32>
    %592 = math.tanh %591 : vector<8x128xf32>
    %593 = arith.mulf %589, %574 : vector<8x128xf32>
    %594 = arith.mulf %588, %592 : vector<8x128xf32>
    %595 = arith.addf %593, %594 : vector<8x128xf32>
    %596 = math.tanh %595 : vector<8x128xf32>
    %597 = arith.mulf %590, %596 : vector<8x128xf32>
    %c216_203 = arith.constant 216 : index
    %c0_204 = arith.constant 0 : index
    %598 = vector.load %arg8[%c216_203, %c0_204] : memref<280x128xf32, #tpu.memory_space<vmem>>, vector<8x128xf32>
    tpu.vector_store %arg8[%c216_203, %c0_204], %597 {strides = array<i32>} : memref<280x128xf32, #tpu.memory_space<vmem>>, vector<8x128xf32>,
    %c224 = arith.constant 224 : index
    %c0_205 = arith.constant 0 : index
    %599 = vector.load %arg7[%c224, %c0_205] : memref<280x512xf32, #tpu.memory_space<vmem>>, vector<8x512xf32>
    %c0_206 = arith.constant 0 : index
    %c0_207 = arith.constant 0 : index
    %600 = vector.load %arg2[%c0_206, %c0_207] : memref<128x512xf32, #tpu.memory_space<vmem>>, vector<128x512xf32>
    %cst_208 = arith.constant dense<0.000000e+00> : vector<8x512xf32>
    %601 = tpu.matmul %597, %600, %cst_208 {dimension_numbers = #tpu.dot_dimension_numbers<[1], [0], [0], [1], [0, 0, 1, 1], [], []>} : vector<8x128xf32>, vector<128x512xf32>, vector<8x512xf32> -> vector<8x512xf32>
    %602 = arith.addf %599, %601 : vector<8x512xf32>
    %603 = vector.extract_strided_slice %602 {offsets = [0, 0], sizes = [8, 384], strides = [1, 1]} : vector<8x512xf32> to vector<8x384xf32>
    %604 = arith.negf %603 : vector<8x384xf32>
    %605 = math.exp %604 : vector<8x384xf32>
    %cst_209 = arith.constant 1.000000e+00 : f32
    %606 = vector.broadcast %cst_209 : f32 to vector<8x384xf32>
    %607 = arith.addf %606, %605 : vector<8x384xf32>
    %608 = arith.divf %606, %607 : vector<8x384xf32>
    %609 = vector.extract_strided_slice %608 {offsets = [0, 0], sizes = [8, 128], strides = [1, 1]} : vector<8x384xf32> to vector<8x128xf32>
    %610 = vector.extract_strided_slice %608 {offsets = [0, 128], sizes = [8, 128], strides = [1, 1]} : vector<8x384xf32> to vector<8x128xf32>
    %611 = vector.extract_strided_slice %608 {offsets = [0, 256], sizes = [8, 128], strides = [1, 1]} : vector<8x384xf32> to vector<8x128xf32>
    %612 = vector.extract_strided_slice %602 {offsets = [0, 384], sizes = [8, 128], strides = [1, 1]} : vector<8x512xf32> to vector<8x128xf32>
    %613 = math.tanh %612 : vector<8x128xf32>
    %614 = arith.mulf %610, %595 : vector<8x128xf32>
    %615 = arith.mulf %609, %613 : vector<8x128xf32>
    %616 = arith.addf %614, %615 : vector<8x128xf32>
    %617 = math.tanh %616 : vector<8x128xf32>
    %618 = arith.mulf %611, %617 : vector<8x128xf32>
    %c224_210 = arith.constant 224 : index
    %c0_211 = arith.constant 0 : index
    %619 = vector.load %arg8[%c224_210, %c0_211] : memref<280x128xf32, #tpu.memory_space<vmem>>, vector<8x128xf32>
    tpu.vector_store %arg8[%c224_210, %c0_211], %618 {strides = array<i32>} : memref<280x128xf32, #tpu.memory_space<vmem>>, vector<8x128xf32>,
    %c232 = arith.constant 232 : index
    %c0_212 = arith.constant 0 : index
    %620 = vector.load %arg7[%c232, %c0_212] : memref<280x512xf32, #tpu.memory_space<vmem>>, vector<8x512xf32>
    %c0_213 = arith.constant 0 : index
    %c0_214 = arith.constant 0 : index
    %621 = vector.load %arg2[%c0_213, %c0_214] : memref<128x512xf32, #tpu.memory_space<vmem>>, vector<128x512xf32>
    %cst_215 = arith.constant dense<0.000000e+00> : vector<8x512xf32>
    %622 = tpu.matmul %618, %621, %cst_215 {dimension_numbers = #tpu.dot_dimension_numbers<[1], [0], [0], [1], [0, 0, 1, 1], [], []>} : vector<8x128xf32>, vector<128x512xf32>, vector<8x512xf32> -> vector<8x512xf32>
    %623 = arith.addf %620, %622 : vector<8x512xf32>
    %624 = vector.extract_strided_slice %623 {offsets = [0, 0], sizes = [8, 384], strides = [1, 1]} : vector<8x512xf32> to vector<8x384xf32>
    %625 = arith.negf %624 : vector<8x384xf32>
    %626 = math.exp %625 : vector<8x384xf32>
    %cst_216 = arith.constant 1.000000e+00 : f32
    %627 = vector.broadcast %cst_216 : f32 to vector<8x384xf32>
    %628 = arith.addf %627, %626 : vector<8x384xf32>
    %629 = arith.divf %627, %628 : vector<8x384xf32>
    %630 = vector.extract_strided_slice %629 {offsets = [0, 0], sizes = [8, 128], strides = [1, 1]} : vector<8x384xf32> to vector<8x128xf32>
    %631 = vector.extract_strided_slice %629 {offsets = [0, 128], sizes = [8, 128], strides = [1, 1]} : vector<8x384xf32> to vector<8x128xf32>
    %632 = vector.extract_strided_slice %629 {offsets = [0, 256], sizes = [8, 128], strides = [1, 1]} : vector<8x384xf32> to vector<8x128xf32>
    %633 = vector.extract_strided_slice %623 {offsets = [0, 384], sizes = [8, 128], strides = [1, 1]} : vector<8x512xf32> to vector<8x128xf32>
    %634 = math.tanh %633 : vector<8x128xf32>
    %635 = arith.mulf %631, %616 : vector<8x128xf32>
    %636 = arith.mulf %630, %634 : vector<8x128xf32>
    %637 = arith.addf %635, %636 : vector<8x128xf32>
    %638 = math.tanh %637 : vector<8x128xf32>
    %639 = arith.mulf %632, %638 : vector<8x128xf32>
    %c232_217 = arith.constant 232 : index
    %c0_218 = arith.constant 0 : index
    %640 = vector.load %arg8[%c232_217, %c0_218] : memref<280x128xf32, #tpu.memory_space<vmem>>, vector<8x128xf32>
    tpu.vector_store %arg8[%c232_217, %c0_218], %639 {strides = array<i32>} : memref<280x128xf32, #tpu.memory_space<vmem>>, vector<8x128xf32>,
    %c240 = arith.constant 240 : index
    %c0_219 = arith.constant 0 : index
    %641 = vector.load %arg7[%c240, %c0_219] : memref<280x512xf32, #tpu.memory_space<vmem>>, vector<8x512xf32>
    %c0_220 = arith.constant 0 : index
    %c0_221 = arith.constant 0 : index
    %642 = vector.load %arg2[%c0_220, %c0_221] : memref<128x512xf32, #tpu.memory_space<vmem>>, vector<128x512xf32>
    %cst_222 = arith.constant dense<0.000000e+00> : vector<8x512xf32>
    %643 = tpu.matmul %639, %642, %cst_222 {dimension_numbers = #tpu.dot_dimension_numbers<[1], [0], [0], [1], [0, 0, 1, 1], [], []>} : vector<8x128xf32>, vector<128x512xf32>, vector<8x512xf32> -> vector<8x512xf32>
    %644 = arith.addf %641, %643 : vector<8x512xf32>
    %645 = vector.extract_strided_slice %644 {offsets = [0, 0], sizes = [8, 384], strides = [1, 1]} : vector<8x512xf32> to vector<8x384xf32>
    %646 = arith.negf %645 : vector<8x384xf32>
    %647 = math.exp %646 : vector<8x384xf32>
    %cst_223 = arith.constant 1.000000e+00 : f32
    %648 = vector.broadcast %cst_223 : f32 to vector<8x384xf32>
    %649 = arith.addf %648, %647 : vector<8x384xf32>
    %650 = arith.divf %648, %649 : vector<8x384xf32>
    %651 = vector.extract_strided_slice %650 {offsets = [0, 0], sizes = [8, 128], strides = [1, 1]} : vector<8x384xf32> to vector<8x128xf32>
    %652 = vector.extract_strided_slice %650 {offsets = [0, 128], sizes = [8, 128], strides = [1, 1]} : vector<8x384xf32> to vector<8x128xf32>
    %653 = vector.extract_strided_slice %650 {offsets = [0, 256], sizes = [8, 128], strides = [1, 1]} : vector<8x384xf32> to vector<8x128xf32>
    %654 = vector.extract_strided_slice %644 {offsets = [0, 384], sizes = [8, 128], strides = [1, 1]} : vector<8x512xf32> to vector<8x128xf32>
    %655 = math.tanh %654 : vector<8x128xf32>
    %656 = arith.mulf %652, %637 : vector<8x128xf32>
    %657 = arith.mulf %651, %655 : vector<8x128xf32>
    %658 = arith.addf %656, %657 : vector<8x128xf32>
    %659 = math.tanh %658 : vector<8x128xf32>
    %660 = arith.mulf %653, %659 : vector<8x128xf32>
    %c240_224 = arith.constant 240 : index
    %c0_225 = arith.constant 0 : index
    %661 = vector.load %arg8[%c240_224, %c0_225] : memref<280x128xf32, #tpu.memory_space<vmem>>, vector<8x128xf32>
    tpu.vector_store %arg8[%c240_224, %c0_225], %660 {strides = array<i32>} : memref<280x128xf32, #tpu.memory_space<vmem>>, vector<8x128xf32>,
    %c248 = arith.constant 248 : index
    %c0_226 = arith.constant 0 : index
    %662 = vector.load %arg7[%c248, %c0_226] : memref<280x512xf32, #tpu.memory_space<vmem>>, vector<8x512xf32>
    %c0_227 = arith.constant 0 : index
    %c0_228 = arith.constant 0 : index
    %663 = vector.load %arg2[%c0_227, %c0_228] : memref<128x512xf32, #tpu.memory_space<vmem>>, vector<128x512xf32>
    %cst_229 = arith.constant dense<0.000000e+00> : vector<8x512xf32>
    %664 = tpu.matmul %660, %663, %cst_229 {dimension_numbers = #tpu.dot_dimension_numbers<[1], [0], [0], [1], [0, 0, 1, 1], [], []>} : vector<8x128xf32>, vector<128x512xf32>, vector<8x512xf32> -> vector<8x512xf32>
    %665 = arith.addf %662, %664 : vector<8x512xf32>
    %666 = vector.extract_strided_slice %665 {offsets = [0, 0], sizes = [8, 384], strides = [1, 1]} : vector<8x512xf32> to vector<8x384xf32>
    %667 = arith.negf %666 : vector<8x384xf32>
    %668 = math.exp %667 : vector<8x384xf32>
    %cst_230 = arith.constant 1.000000e+00 : f32
    %669 = vector.broadcast %cst_230 : f32 to vector<8x384xf32>
    %670 = arith.addf %669, %668 : vector<8x384xf32>
    %671 = arith.divf %669, %670 : vector<8x384xf32>
    %672 = vector.extract_strided_slice %671 {offsets = [0, 0], sizes = [8, 128], strides = [1, 1]} : vector<8x384xf32> to vector<8x128xf32>
    %673 = vector.extract_strided_slice %671 {offsets = [0, 128], sizes = [8, 128], strides = [1, 1]} : vector<8x384xf32> to vector<8x128xf32>
    %674 = vector.extract_strided_slice %671 {offsets = [0, 256], sizes = [8, 128], strides = [1, 1]} : vector<8x384xf32> to vector<8x128xf32>
    %675 = vector.extract_strided_slice %665 {offsets = [0, 384], sizes = [8, 128], strides = [1, 1]} : vector<8x512xf32> to vector<8x128xf32>
    %676 = math.tanh %675 : vector<8x128xf32>
    %677 = arith.mulf %673, %658 : vector<8x128xf32>
    %678 = arith.mulf %672, %676 : vector<8x128xf32>
    %679 = arith.addf %677, %678 : vector<8x128xf32>
    %680 = math.tanh %679 : vector<8x128xf32>
    %681 = arith.mulf %674, %680 : vector<8x128xf32>
    %c248_231 = arith.constant 248 : index
    %c0_232 = arith.constant 0 : index
    %682 = vector.load %arg8[%c248_231, %c0_232] : memref<280x128xf32, #tpu.memory_space<vmem>>, vector<8x128xf32>
    tpu.vector_store %arg8[%c248_231, %c0_232], %681 {strides = array<i32>} : memref<280x128xf32, #tpu.memory_space<vmem>>, vector<8x128xf32>,
    %c256 = arith.constant 256 : index
    %c0_233 = arith.constant 0 : index
    %683 = vector.load %arg7[%c256, %c0_233] : memref<280x512xf32, #tpu.memory_space<vmem>>, vector<8x512xf32>
    %c0_234 = arith.constant 0 : index
    %c0_235 = arith.constant 0 : index
    %684 = vector.load %arg2[%c0_234, %c0_235] : memref<128x512xf32, #tpu.memory_space<vmem>>, vector<128x512xf32>
    %cst_236 = arith.constant dense<0.000000e+00> : vector<8x512xf32>
    %685 = tpu.matmul %681, %684, %cst_236 {dimension_numbers = #tpu.dot_dimension_numbers<[1], [0], [0], [1], [0, 0, 1, 1], [], []>} : vector<8x128xf32>, vector<128x512xf32>, vector<8x512xf32> -> vector<8x512xf32>
    %686 = arith.addf %683, %685 : vector<8x512xf32>
    %687 = vector.extract_strided_slice %686 {offsets = [0, 0], sizes = [8, 384], strides = [1, 1]} : vector<8x512xf32> to vector<8x384xf32>
    %688 = arith.negf %687 : vector<8x384xf32>
    %689 = math.exp %688 : vector<8x384xf32>
    %cst_237 = arith.constant 1.000000e+00 : f32
    %690 = vector.broadcast %cst_237 : f32 to vector<8x384xf32>
    %691 = arith.addf %690, %689 : vector<8x384xf32>
    %692 = arith.divf %690, %691 : vector<8x384xf32>
    %693 = vector.extract_strided_slice %692 {offsets = [0, 0], sizes = [8, 128], strides = [1, 1]} : vector<8x384xf32> to vector<8x128xf32>
    %694 = vector.extract_strided_slice %692 {offsets = [0, 128], sizes = [8, 128], strides = [1, 1]} : vector<8x384xf32> to vector<8x128xf32>
    %695 = vector.extract_strided_slice %692 {offsets = [0, 256], sizes = [8, 128], strides = [1, 1]} : vector<8x384xf32> to vector<8x128xf32>
    %696 = vector.extract_strided_slice %686 {offsets = [0, 384], sizes = [8, 128], strides = [1, 1]} : vector<8x512xf32> to vector<8x128xf32>
    %697 = math.tanh %696 : vector<8x128xf32>
    %698 = arith.mulf %694, %679 : vector<8x128xf32>
    %699 = arith.mulf %693, %697 : vector<8x128xf32>
    %700 = arith.addf %698, %699 : vector<8x128xf32>
    %701 = math.tanh %700 : vector<8x128xf32>
    %702 = arith.mulf %695, %701 : vector<8x128xf32>
    %c256_238 = arith.constant 256 : index
    %c0_239 = arith.constant 0 : index
    %703 = vector.load %arg8[%c256_238, %c0_239] : memref<280x128xf32, #tpu.memory_space<vmem>>, vector<8x128xf32>
    tpu.vector_store %arg8[%c256_238, %c0_239], %702 {strides = array<i32>} : memref<280x128xf32, #tpu.memory_space<vmem>>, vector<8x128xf32>,
    %c264 = arith.constant 264 : index
    %c0_240 = arith.constant 0 : index
    %704 = vector.load %arg7[%c264, %c0_240] : memref<280x512xf32, #tpu.memory_space<vmem>>, vector<8x512xf32>
    %c0_241 = arith.constant 0 : index
    %c0_242 = arith.constant 0 : index
    %705 = vector.load %arg2[%c0_241, %c0_242] : memref<128x512xf32, #tpu.memory_space<vmem>>, vector<128x512xf32>
    %cst_243 = arith.constant dense<0.000000e+00> : vector<8x512xf32>
    %706 = tpu.matmul %702, %705, %cst_243 {dimension_numbers = #tpu.dot_dimension_numbers<[1], [0], [0], [1], [0, 0, 1, 1], [], []>} : vector<8x128xf32>, vector<128x512xf32>, vector<8x512xf32> -> vector<8x512xf32>
    %707 = arith.addf %704, %706 : vector<8x512xf32>
    %708 = vector.extract_strided_slice %707 {offsets = [0, 0], sizes = [8, 384], strides = [1, 1]} : vector<8x512xf32> to vector<8x384xf32>
    %709 = arith.negf %708 : vector<8x384xf32>
    %710 = math.exp %709 : vector<8x384xf32>
    %cst_244 = arith.constant 1.000000e+00 : f32
    %711 = vector.broadcast %cst_244 : f32 to vector<8x384xf32>
    %712 = arith.addf %711, %710 : vector<8x384xf32>
    %713 = arith.divf %711, %712 : vector<8x384xf32>
    %714 = vector.extract_strided_slice %713 {offsets = [0, 0], sizes = [8, 128], strides = [1, 1]} : vector<8x384xf32> to vector<8x128xf32>
    %715 = vector.extract_strided_slice %713 {offsets = [0, 128], sizes = [8, 128], strides = [1, 1]} : vector<8x384xf32> to vector<8x128xf32>
    %716 = vector.extract_strided_slice %713 {offsets = [0, 256], sizes = [8, 128], strides = [1, 1]} : vector<8x384xf32> to vector<8x128xf32>
    %717 = vector.extract_strided_slice %707 {offsets = [0, 384], sizes = [8, 128], strides = [1, 1]} : vector<8x512xf32> to vector<8x128xf32>
    %718 = math.tanh %717 : vector<8x128xf32>
    %719 = arith.mulf %715, %700 : vector<8x128xf32>
    %720 = arith.mulf %714, %718 : vector<8x128xf32>
    %721 = arith.addf %719, %720 : vector<8x128xf32>
    %722 = math.tanh %721 : vector<8x128xf32>
    %723 = arith.mulf %716, %722 : vector<8x128xf32>
    %c264_245 = arith.constant 264 : index
    %c0_246 = arith.constant 0 : index
    %724 = vector.load %arg8[%c264_245, %c0_246] : memref<280x128xf32, #tpu.memory_space<vmem>>, vector<8x128xf32>
    tpu.vector_store %arg8[%c264_245, %c0_246], %723 {strides = array<i32>} : memref<280x128xf32, #tpu.memory_space<vmem>>, vector<8x128xf32>,
    %c272 = arith.constant 272 : index
    %c0_247 = arith.constant 0 : index
    %725 = vector.load %arg7[%c272, %c0_247] : memref<280x512xf32, #tpu.memory_space<vmem>>, vector<8x512xf32>
    %c0_248 = arith.constant 0 : index
    %c0_249 = arith.constant 0 : index
    %726 = vector.load %arg2[%c0_248, %c0_249] : memref<128x512xf32, #tpu.memory_space<vmem>>, vector<128x512xf32>
    %cst_250 = arith.constant dense<0.000000e+00> : vector<8x512xf32>
    %727 = tpu.matmul %723, %726, %cst_250 {dimension_numbers = #tpu.dot_dimension_numbers<[1], [0], [0], [1], [0, 0, 1, 1], [], []>} : vector<8x128xf32>, vector<128x512xf32>, vector<8x512xf32> -> vector<8x512xf32>
    %728 = arith.addf %725, %727 : vector<8x512xf32>
    %729 = vector.extract_strided_slice %728 {offsets = [0, 0], sizes = [8, 384], strides = [1, 1]} : vector<8x512xf32> to vector<8x384xf32>
    %730 = arith.negf %729 : vector<8x384xf32>
    %731 = math.exp %730 : vector<8x384xf32>
    %cst_251 = arith.constant 1.000000e+00 : f32
    %732 = vector.broadcast %cst_251 : f32 to vector<8x384xf32>
    %733 = arith.addf %732, %731 : vector<8x384xf32>
    %734 = arith.divf %732, %733 : vector<8x384xf32>
    %735 = vector.extract_strided_slice %734 {offsets = [0, 0], sizes = [8, 128], strides = [1, 1]} : vector<8x384xf32> to vector<8x128xf32>
    %736 = vector.extract_strided_slice %734 {offsets = [0, 128], sizes = [8, 128], strides = [1, 1]} : vector<8x384xf32> to vector<8x128xf32>
    %737 = vector.extract_strided_slice %734 {offsets = [0, 256], sizes = [8, 128], strides = [1, 1]} : vector<8x384xf32> to vector<8x128xf32>
    %738 = vector.extract_strided_slice %728 {offsets = [0, 384], sizes = [8, 128], strides = [1, 1]} : vector<8x512xf32> to vector<8x128xf32>
    %739 = math.tanh %738 : vector<8x128xf32>
    %740 = arith.mulf %736, %721 : vector<8x128xf32>
    %741 = arith.mulf %735, %739 : vector<8x128xf32>
    %742 = arith.addf %740, %741 : vector<8x128xf32>
    %743 = math.tanh %742 : vector<8x128xf32>
    %744 = arith.mulf %737, %743 : vector<8x128xf32>
    %c272_252 = arith.constant 272 : index
    %c0_253 = arith.constant 0 : index
    %745 = vector.load %arg8[%c272_252, %c0_253] : memref<280x128xf32, #tpu.memory_space<vmem>>, vector<8x128xf32>
    tpu.vector_store %arg8[%c272_252, %c0_253], %744 {strides = array<i32>} : memref<280x128xf32, #tpu.memory_space<vmem>>, vector<8x128xf32>,
    %c40_254 = arith.constant 40 : index
    %c0_255 = arith.constant 0 : index
    %746 = vector.load %arg8[%c40_254, %c0_255] : memref<280x128xf32, #tpu.memory_space<vmem>>, vector<240x128xf32>
    %c0_256 = arith.constant 0 : index
    %c0_257 = arith.constant 0 : index
    %747 = vector.load %arg4[%c0_256, %c0_257] : memref<128x128xf32, #tpu.memory_space<vmem>>, vector<128x128xf32>
    %cst_258 = arith.constant dense<0.000000e+00> : vector<240x128xf32>
    %748 = tpu.matmul %746, %747, %cst_258 {dimension_numbers = #tpu.dot_dimension_numbers<[1], [0], [0], [1], [0, 0, 1, 1], [], []>} : vector<240x128xf32>, vector<128x128xf32>, vector<240x128xf32> -> vector<240x128xf32>
    %c0_259 = arith.constant 0 : index
    %c0_260 = arith.constant 0 : index
    %749 = vector.load %arg5[%c0_259, %c0_260] : memref<1x128xf32, #tpu.memory_space<vmem>>, vector<1x128xf32>
    %750 = vector.broadcast %749 : vector<1x128xf32> to vector<240x128xf32>
    %751 = arith.addf %748, %750 : vector<240x128xf32>
    %c0_261 = arith.constant 0 : index
    %c0_262 = arith.constant 0 : index
    %752 = vector.load %arg6[%c0_261, %c0_262] : memref<240x128xf32, #tpu.memory_space<vmem>>, vector<240x128xf32>
    tpu.vector_store %arg6[%c0_261, %c0_262], %751 {strides = array<i32>} : memref<240x128xf32, #tpu.memory_space<vmem>>, vector<240x128xf32>,
    return
  }
}

</mosaic_0001>

<llo_original>
// kernel: tpu_custom_call.1
$region0: #{tpu_custom_call.1}
  #allocation0 [shape = 'u32[]', space=smem, size = 0x4, offset = 0x4, fixed_abs, tag = 'smem constant byte address 0x4 - core index']
  #allocation1 [shape = 'u32[72,128]{1,0:T(1,128)}', space=vmem, size = 0x9000, scoped, tag = 'internal scratch']
  #allocation2 [shape = 'f32[280,512]{1,0:T(8,128)}', space=vmem, size = 0x8c000, scoped, tag = 'scratch operand']
  #allocation3 [shape = 'f32[280,128]{1,0:T(8,128)}', space=vmem, size = 0x23000, scoped, tag = 'scratch operand']
  %s0 = inlined_call_operand.vmem [shape: f32[280,1], index: 0, kind: input, shape index: {}]
  %s1 = inlined_call_operand.vmem [shape: f32[1,512], index: 1, kind: input, shape index: {}]
  %s2 = inlined_call_operand.hbm [shape: f32[128,512], index: 2, kind: input, shape index: {}]
  %s3 = inlined_call_operand.vmem [shape: f32[1,512], index: 3, kind: input, shape index: {}]
  %s4 = inlined_call_operand.vmem [shape: f32[128,128], index: 4, kind: input, shape index: {}]
  %s5 = inlined_call_operand.vmem [shape: f32[1,128], index: 5, kind: input, shape index: {}]
  %s6 = inlined_call_operand.hbm [shape: f32[240,128], index: 6, kind: output, shape index: {}]
  %s7 = sld [smem:[#allocation0]]
  $region38: #{tpu_custom_call.1} parent=0
    _
  %s9 = ssub.s32 1, %s7
  %s10 = scalar_select 0, %s9, %s7
  $region1: #{tpu_custom_call.1} parent=0
    #allocation4 [shape = 'u8[262144]{0}', space=vmem, size = 0x40000, scoped, tag = 'input window, operand 2, single buffered']
    #allocation5 [shape = 's32[1]{0}', space=sflag, size = 0x4, scoped, tag = 'scoped memory for tpu_custom_call.1']
    #allocation6 [shape = 's32[1]{0}', space=sflag, size = 0x4, scoped, tag = 'scoped memory for tpu_custom_call.1']
    #allocation7 [shape = 'u8[122880]{0}', space=vmem, size = 0x1e000, scoped, tag = 'output window, operand 0, single buffered']
    %11 = vsyncpa [#allocation5], 0
    %12 = vsyncpa [#allocation6], 0
    // Predicated region
    $region2: #{tpu_custom_call.1} parent=1 // pred_check
      _
    $region3: #{tpu_custom_call.1} parent=1 // pred_check_branch
      %14 = sbr.rel (0) target = $region5
    $region4: #{tpu_custom_call.1} parent=1 // pred_region
      _
    $region5: #{tpu_custom_call.1} parent=1 // pred_fallthru
      _
    // Predicated region
    $region6: #{tpu_custom_call.1} parent=1 // pred_check
      _
    $region7: #{tpu_custom_call.1} parent=1 // pred_check_branch
      %16 = sbr.rel (0) target = $region9
    $region8: #{tpu_custom_call.1} parent=1 // pred_region
      _
    $region9: #{tpu_custom_call.1} parent=1 // pred_fallthru
      _
    // Predicated region
    $region10: #{tpu_custom_call.1} parent=1 // pred_check
      _
    $region11: #{tpu_custom_call.1} parent=1 // pred_check_branch
      %18 = sbr.rel (0) target = $region13
    $region12: #{tpu_custom_call.1} parent=1 // pred_region
      %20 = vsyncadd [#allocation5], 0
      %s21 = sshll.u32 %s2, 4
      %s22 = int_to_ptr.hbm [resolvable:$true] %s21
      %s23 = sshll.u32 [#allocation4], 4
      %s24 = int_to_ptr.vmem [resolvable:$true] %s23
      %29 = dma.hbm_to_vmem [thread:$0]  %s22, 8192, %s24, [#allocation5], 512, 512, 32
    $region13: #{tpu_custom_call.1} parent=1 // pred_fallthru
      _
    // Predicated region
    $region14: #{tpu_custom_call.1} parent=1 // pred_check
      _
    $region15: #{tpu_custom_call.1} parent=1 // pred_check_branch
      %31 = sbr.rel (0) target = $region17
    $region16: #{tpu_custom_call.1} parent=1 // pred_region
      _
    $region17: #{tpu_custom_call.1} parent=1 // pred_fallthru
      _
    // Predicated region
    $region18: #{tpu_custom_call.1} parent=1 // pred_check
      _
    $region19: #{tpu_custom_call.1} parent=1 // pred_check_branch
      %33 = sbr.rel (0) target = $region21
    $region20: #{tpu_custom_call.1} parent=1 // pred_region
      _
    $region21: #{tpu_custom_call.1} parent=1 // pred_fallthru
      _
    // Predicated region
    $region22: #{tpu_custom_call.1} parent=1 // pred_check
      _
    $region23: #{tpu_custom_call.1} parent=1 // pred_check_branch
      %35 = sbr.rel (0) target = $region25
    $region24: #{tpu_custom_call.1} parent=1 // pred_region
      _
    $region25: #{tpu_custom_call.1} parent=1 // pred_fallthru
      _
    // Predicated region
    $region26: #{tpu_custom_call.1} parent=1 // pred_check
      _
    $region27: #{tpu_custom_call.1} parent=1 // pred_check_branch
      %37 = sbr.rel (0) target = $region29
    $region28: #{tpu_custom_call.1} parent=1 // pred_region
      %39 = dma.done [#allocation5], 8192
    $region29: #{tpu_custom_call.1} parent=1 // pred_fallthru
      _
    %v40 = vld [vmem:[%s0] sm:$0xff]
    %v41 = vld [vmem:[%s0 + $0x8] sm:$0xff]
    %v42 = vld [vmem:[%s0 + $0x10] sm:$0xff]
    %v43 = vld [vmem:[%s0 + $0x18] sm:$0xff]
    %v44 = vld [vmem:[%s0 + $0x20] sm:$0xff]
    %v45 = vld [vmem:[%s0 + $0x28] sm:$0xff]
    %v46 = vld [vmem:[%s0 + $0x30] sm:$0xff]
    %v47 = vld [vmem:[%s0 + $0x38] sm:$0xff]
    %v48 = vld [vmem:[%s0 + $0x40] sm:$0xff]
    %v49 = vld [vmem:[%s0 + $0x48] sm:$0xff]
    %v50 = vld [vmem:[%s0 + $0x50] sm:$0xff]
    %v51 = vld [vmem:[%s0 + $0x58] sm:$0xff]
    %v52 = vld [vmem:[%s0 + $0x60] sm:$0xff]
    %v53 = vld [vmem:[%s0 + $0x68] sm:$0xff]
    %v54 = vld [vmem:[%s0 + $0x70] sm:$0xff]
    %v55 = vld [vmem:[%s0 + $0x78] sm:$0xff]
    %v56 = vld [vmem:[%s0 + $0x80] sm:$0xff]
    %v57 = vld [vmem:[%s0 + $0x88] sm:$0xff]
    %v58 = vld [vmem:[%s0 + $0x90] sm:$0xff]
    %v59 = vld [vmem:[%s0 + $0x98] sm:$0xff]
    %v60 = vld [vmem:[%s0 + $0xa0] sm:$0xff]
    %v61 = vld [vmem:[%s0 + $0xa8] sm:$0xff]
    %v62 = vld [vmem:[%s0 + $0xb0] sm:$0xff]
    %v63 = vld [vmem:[%s0 + $0xb8] sm:$0xff]
    %v64 = vld [vmem:[%s0 + $0xc0] sm:$0xff]
    %v65 = vld [vmem:[%s0 + $0xc8] sm:$0xff]
    %v66 = vld [vmem:[%s0 + $0xd0] sm:$0xff]
    %v67 = vld [vmem:[%s0 + $0xd8] sm:$0xff]
    %v68 = vld [vmem:[%s0 + $0xe0] sm:$0xff]
    %v69 = vld [vmem:[%s0 + $0xe8] sm:$0xff]
    %v70 = vld [vmem:[%s0 + $0xf0] sm:$0xff]
    %v71 = vld [vmem:[%s0 + $0xf8] sm:$0xff]
    %v72 = vld [vmem:[%s0 + $0x100] sm:$0xff]
    %v73 = vld [vmem:[%s0 + $0x108] sm:$0xff]
    %v74 = vld [vmem:[%s0 + $0x110] sm:$0xff]
    %v75 = vld [vmem:[%s1] sm:$0xf]
    %77 = vset.pattern.permute.xlu0 0
    %78 = vperm.xlu0 %77, %v40
    %v79 = vpop.permute.xlu0 %78
    %82 = vset.pattern.permute.xlu0 0
    %83 = vperm.xlu0 %82, %v41
    %v84 = vpop.permute.xlu0 %83
    %87 = vset.pattern.permute.xlu0 0
    %88 = vperm.xlu0 %87, %v42
    %v89 = vpop.permute.xlu0 %88
    %92 = vset.pattern.permute.xlu0 0
    %93 = vperm.xlu0 %92, %v43
    %v94 = vpop.permute.xlu0 %93
    %97 = vset.pattern.permute.xlu0 0
    %98 = vperm.xlu0 %97, %v44
    %v99 = vpop.permute.xlu0 %98
    %102 = vset.pattern.permute.xlu0 0
    %103 = vperm.xlu0 %102, %v45
    %v104 = vpop.permute.xlu0 %103
    %107 = vset.pattern.permute.xlu0 0
    %108 = vperm.xlu0 %107, %v46
    %v109 = vpop.permute.xlu0 %108
    %112 = vset.pattern.permute.xlu0 0
    %113 = vperm.xlu0 %112, %v47
    %v114 = vpop.permute.xlu0 %113
    %117 = vset.pattern.permute.xlu0 0
    %118 = vperm.xlu0 %117, %v48
    %v119 = vpop.permute.xlu0 %118
    %122 = vset.pattern.permute.xlu0 0
    %123 = vperm.xlu0 %122, %v49
    %v124 = vpop.permute.xlu0 %123
    %127 = vset.pattern.permute.xlu0 0
    %128 = vperm.xlu0 %127, %v50
    %v129 = vpop.permute.xlu0 %128
    %132 = vset.pattern.permute.xlu0 0
    %133 = vperm.xlu0 %132, %v51
    %v134 = vpop.permute.xlu0 %133
    %137 = vset.pattern.permute.xlu0 0
    %138 = vperm.xlu0 %137, %v52
    %v139 = vpop.permute.xlu0 %138
    %142 = vset.pattern.permute.xlu0 0
    %143 = vperm.xlu0 %142, %v53
    %v144 = vpop.permute.xlu0 %143
    %147 = vset.pattern.permute.xlu0 0
    %148 = vperm.xlu0 %147, %v54
    %v149 = vpop.permute.xlu0 %148
    %152 = vset.pattern.permute.xlu0 0
    %153 = vperm.xlu0 %152, %v55
    %v154 = vpop.permute.xlu0 %153
    %157 = vset.pattern.permute.xlu0 0
    %158 = vperm.xlu0 %157, %v56
    %v159 = vpop.permute.xlu0 %158
    %162 = vset.pattern.permute.xlu0 0
    %163 = vperm.xlu0 %162, %v57
    %v164 = vpop.permute.xlu0 %163
    %167 = vset.pattern.permute.xlu0 0
    %168 = vperm.xlu0 %167, %v58
    %v169 = vpop.permute.xlu0 %168
    %172 = vset.pattern.permute.xlu0 0
    %173 = vperm.xlu0 %172, %v59
    %v174 = vpop.permute.xlu0 %173
    %177 = vset.pattern.permute.xlu0 0
    %178 = vperm.xlu0 %177, %v60
    %v179 = vpop.permute.xlu0 %178
    %182 = vset.pattern.permute.xlu0 0
    %183 = vperm.xlu0 %182, %v61
    %v184 = vpop.permute.xlu0 %183
    %187 = vset.pattern.permute.xlu0 0
    %188 = vperm.xlu0 %187, %v62
    %v189 = vpop.permute.xlu0 %188
    %192 = vset.pattern.permute.xlu0 0
    %193 = vperm.xlu0 %192, %v63
    %v194 = vpop.permute.xlu0 %193
    %197 = vset.pattern.permute.xlu0 0
    %198 = vperm.xlu0 %197, %v64
    %v199 = vpop.permute.xlu0 %198
    %202 = vset.pattern.permute.xlu0 0
    %203 = vperm.xlu0 %202, %v65
    %v204 = vpop.permute.xlu0 %203
    %207 = vset.pattern.permute.xlu0 0
    %208 = vperm.xlu0 %207, %v66
    %v209 = vpop.permute.xlu0 %208
    %212 = vset.pattern.permute.xlu0 0
    %213 = vperm.xlu0 %212, %v67
    %v214 = vpop.permute.xlu0 %213
    %217 = vset.pattern.permute.xlu0 0
    %218 = vperm.xlu0 %217, %v68
    %v219 = vpop.permute.xlu0 %218
    %222 = vset.pattern.permute.xlu0 0
    %223 = vperm.xlu0 %222, %v69
    %v224 = vpop.permute.xlu0 %223
    %227 = vset.pattern.permute.xlu0 0
    %228 = vperm.xlu0 %227, %v70
    %v229 = vpop.permute.xlu0 %228
    %232 = vset.pattern.permute.xlu0 0
    %233 = vperm.xlu0 %232, %v71
    %v234 = vpop.permute.xlu0 %233
    %237 = vset.pattern.permute.xlu0 0
    %238 = vperm.xlu0 %237, %v72
    %v239 = vpop.permute.xlu0 %238
    %242 = vset.pattern.permute.xlu0 0
    %243 = vperm.xlu0 %242, %v73
    %v244 = vpop.permute.xlu0 %243
    %247 = vset.pattern.permute.xlu0 0
    %248 = vperm.xlu0 %247, %v74
    %v249 = vpop.permute.xlu0 %248
    %v252 = vperm.slane %v75, 0
    %v253 = vperm.slane %v75, 1
    %v254 = vperm.slane %v75, 2
    %v255 = vperm.slane %v75, 3
    %v260 = vmul.f32 %v79, %v252
    %v261 = vmul.f32 %v79, %v253
    %v262 = vmul.f32 %v79, %v254
    %v263 = vmul.f32 %v79, %v255
    %v264 = vmul.f32 %v84, %v252
    %v265 = vmul.f32 %v84, %v253
    %v266 = vmul.f32 %v84, %v254
    %v267 = vmul.f32 %v84, %v255
    %v268 = vmul.f32 %v89, %v252
    %v269 = vmul.f32 %v89, %v253
    %v270 = vmul.f32 %v89, %v254
    %v271 = vmul.f32 %v89, %v255
    %v272 = vmul.f32 %v94, %v252
    %v273 = vmul.f32 %v94, %v253
    %v274 = vmul.f32 %v94, %v254
    %v275 = vmul.f32 %v94, %v255
    %v276 = vmul.f32 %v99, %v252
    %v277 = vmul.f32 %v99, %v253
    %v278 = vmul.f32 %v99, %v254
    %v279 = vmul.f32 %v99, %v255
    %v280 = vmul.f32 %v104, %v252
    %v281 = vmul.f32 %v104, %v253
    %v282 = vmul.f32 %v104, %v254
    %v283 = vmul.f32 %v104, %v255
    %v284 = vmul.f32 %v109, %v252
    %v285 = vmul.f32 %v109, %v253
    %v286 = vmul.f32 %v109, %v254
    %v287 = vmul.f32 %v109, %v255
    %v288 = vmul.f32 %v114, %v252
    %v289 = vmul.f32 %v114, %v253
    %v290 = vmul.f32 %v114, %v254
    %v291 = vmul.f32 %v114, %v255
    %v292 = vmul.f32 %v119, %v252
    %v293 = vmul.f32 %v119, %v253
    %v294 = vmul.f32 %v119, %v254
    %v295 = vmul.f32 %v119, %v255
    %v296 = vmul.f32 %v124, %v252
    %v297 = vmul.f32 %v124, %v253
    %v298 = vmul.f32 %v124, %v254
    %v299 = vmul.f32 %v124, %v255
    %v300 = vmul.f32 %v129, %v252
    %v301 = vmul.f32 %v129, %v253
    %v302 = vmul.f32 %v129, %v254
    %v303 = vmul.f32 %v129, %v255
    %v304 = vmul.f32 %v134, %v252
    %v305 = vmul.f32 %v134, %v253
    %v306 = vmul.f32 %v134, %v254
    %v307 = vmul.f32 %v134, %v255
    %v308 = vmul.f32 %v139, %v252
    %v309 = vmul.f32 %v139, %v253
    %v310 = vmul.f32 %v139, %v254
    %v311 = vmul.f32 %v139, %v255
    %v312 = vmul.f32 %v144, %v252
    %v313 = vmul.f32 %v144, %v253
    %v314 = vmul.f32 %v144, %v254
    %v315 = vmul.f32 %v144, %v255
    %v316 = vmul.f32 %v149, %v252
    %v317 = vmul.f32 %v149, %v253
    %v318 = vmul.f32 %v149, %v254
    %v319 = vmul.f32 %v149, %v255
    %v320 = vmul.f32 %v154, %v252
    %v321 = vmul.f32 %v154, %v253
    %v322 = vmul.f32 %v154, %v254
    %v323 = vmul.f32 %v154, %v255
    %v324 = vmul.f32 %v159, %v252
    %v325 = vmul.f32 %v159, %v253
    %v326 = vmul.f32 %v159, %v254
    %v327 = vmul.f32 %v159, %v255
    %v328 = vmul.f32 %v164, %v252
    %v329 = vmul.f32 %v164, %v253
    %v330 = vmul.f32 %v164, %v254
    %v331 = vmul.f32 %v164, %v255
    %v332 = vmul.f32 %v169, %v252
    %v333 = vmul.f32 %v169, %v253
    %v334 = vmul.f32 %v169, %v254
    %v335 = vmul.f32 %v169, %v255
    %v336 = vmul.f32 %v174, %v252
    %v337 = vmul.f32 %v174, %v253
    %v338 = vmul.f32 %v174, %v254
    %v339 = vmul.f32 %v174, %v255
    %v340 = vmul.f32 %v179, %v252
    %v341 = vmul.f32 %v179, %v253
    %v342 = vmul.f32 %v179, %v254
    %v343 = vmul.f32 %v179, %v255
    %v344 = vmul.f32 %v184, %v252
    %v345 = vmul.f32 %v184, %v253
    %v346 = vmul.f32 %v184, %v254
    %v347 = vmul.f32 %v184, %v255
    %v348 = vmul.f32 %v189, %v252
    %v349 = vmul.f32 %v189, %v253
    %v350 = vmul.f32 %v189, %v254
    %v351 = vmul.f32 %v189, %v255
    %v352 = vmul.f32 %v194, %v252
    %v353 = vmul.f32 %v194, %v253
    %v354 = vmul.f32 %v194, %v254
    %v355 = vmul.f32 %v194, %v255
    %v356 = vmul.f32 %v199, %v252
    %v357 = vmul.f32 %v199, %v253
    %v358 = vmul.f32 %v199, %v254
    %v359 = vmul.f32 %v199, %v255
    %v360 = vmul.f32 %v204, %v252
    %v361 = vmul.f32 %v204, %v253
    %v362 = vmul.f32 %v204, %v254
    %v363 = vmul.f32 %v204, %v255
    %v364 = vmul.f32 %v209, %v252
    %v365 = vmul.f32 %v209, %v253
    %v366 = vmul.f32 %v209, %v254
    %v367 = vmul.f32 %v209, %v255
    %v368 = vmul.f32 %v214, %v252
    %v369 = vmul.f32 %v214, %v253
    %v370 = vmul.f32 %v214, %v254
    %v371 = vmul.f32 %v214, %v255
    %v372 = vmul.f32 %v219, %v252
    %v373 = vmul.f32 %v219, %v253
    %v374 = vmul.f32 %v219, %v254
    %v375 = vmul.f32 %v219, %v255
    %v376 = vmul.f32 %v224, %v252
    %v377 = vmul.f32 %v224, %v253
    %v378 = vmul.f32 %v224, %v254
    %v379 = vmul.f32 %v224, %v255
    %v380 = vmul.f32 %v229, %v252
    %v381 = vmul.f32 %v229, %v253
    %v382 = vmul.f32 %v229, %v254
    %v383 = vmul.f32 %v229, %v255
    %v384 = vmul.f32 %v234, %v252
    %v385 = vmul.f32 %v234, %v253
    %v386 = vmul.f32 %v234, %v254
    %v387 = vmul.f32 %v234, %v255
    %v388 = vmul.f32 %v239, %v252
    %v389 = vmul.f32 %v239, %v253
    %v390 = vmul.f32 %v239, %v254
    %v391 = vmul.f32 %v239, %v255
    %v392 = vmul.f32 %v244, %v252
    %v393 = vmul.f32 %v244, %v253
    %v394 = vmul.f32 %v244, %v254
    %v395 = vmul.f32 %v244, %v255
    %v396 = vmul.f32 %v249, %v252
    %v397 = vmul.f32 %v249, %v253
    %v398 = vmul.f32 %v249, %v254
    %v399 = vmul.f32 %v249, %v255
    %v400 = vld [vmem:[%s3] sm:$0xf]
    %v402 = vperm.slane %v400, 0
    %v403 = vperm.slane %v400, 1
    %v404 = vperm.slane %v400, 2
    %v405 = vperm.slane %v400, 3
    %v410 = vadd.f32 %v260, %v402
    %v411 = vadd.f32 %v261, %v403
    %v412 = vadd.f32 %v262, %v404
    %v413 = vadd.f32 %v263, %v405
    %v414 = vadd.f32 %v264, %v402
    %v415 = vadd.f32 %v265, %v403
    %v416 = vadd.f32 %v266, %v404
    %v417 = vadd.f32 %v267, %v405
    %v418 = vadd.f32 %v268, %v402
    %v419 = vadd.f32 %v269, %v403
    %v420 = vadd.f32 %v270, %v404
    %v421 = vadd.f32 %v271, %v405
    %v422 = vadd.f32 %v272, %v402
    %v423 = vadd.f32 %v273, %v403
    %v424 = vadd.f32 %v274, %v404
    %v425 = vadd.f32 %v275, %v405
    %v426 = vadd.f32 %v276, %v402
    %v427 = vadd.f32 %v277, %v403
    %v428 = vadd.f32 %v278, %v404
    %v429 = vadd.f32 %v279, %v405
    %v430 = vadd.f32 %v280, %v402
    %v431 = vadd.f32 %v281, %v403
    %v432 = vadd.f32 %v282, %v404
    %v433 = vadd.f32 %v283, %v405
    %v434 = vadd.f32 %v284, %v402
    %v435 = vadd.f32 %v285, %v403
    %v436 = vadd.f32 %v286, %v404
    %v437 = vadd.f32 %v287, %v405
    %v438 = vadd.f32 %v288, %v402
    %v439 = vadd.f32 %v289, %v403
    %v440 = vadd.f32 %v290, %v404
    %v441 = vadd.f32 %v291, %v405
    %v442 = vadd.f32 %v292, %v402
    %v443 = vadd.f32 %v293, %v403
    %v444 = vadd.f32 %v294, %v404
    %v445 = vadd.f32 %v295, %v405
    %v446 = vadd.f32 %v296, %v402
    %v447 = vadd.f32 %v297, %v403
    %v448 = vadd.f32 %v298, %v404
    %v449 = vadd.f32 %v299, %v405
    %v450 = vadd.f32 %v300, %v402
    %v451 = vadd.f32 %v301, %v403
    %v452 = vadd.f32 %v302, %v404
    %v453 = vadd.f32 %v303, %v405
    %v454 = vadd.f32 %v304, %v402
    %v455 = vadd.f32 %v305, %v403
    %v456 = vadd.f32 %v306, %v404
    %v457 = vadd.f32 %v307, %v405
    %v458 = vadd.f32 %v308, %v402
    %v459 = vadd.f32 %v309, %v403
    %v460 = vadd.f32 %v310, %v404
    %v461 = vadd.f32 %v311, %v405
    %v462 = vadd.f32 %v312, %v402
    %v463 = vadd.f32 %v313, %v403
    %v464 = vadd.f32 %v314, %v404
    %v465 = vadd.f32 %v315, %v405
    %v466 = vadd.f32 %v316, %v402
    %v467 = vadd.f32 %v317, %v403
    %v468 = vadd.f32 %v318, %v404
    %v469 = vadd.f32 %v319, %v405
    %v470 = vadd.f32 %v320, %v402
    %v471 = vadd.f32 %v321, %v403
    %v472 = vadd.f32 %v322, %v404
    %v473 = vadd.f32 %v323, %v405
    %v474 = vadd.f32 %v324, %v402
    %v475 = vadd.f32 %v325, %v403
    %v476 = vadd.f32 %v326, %v404
    %v477 = vadd.f32 %v327, %v405
    %v478 = vadd.f32 %v328, %v402
    %v479 = vadd.f32 %v329, %v403
    %v480 = vadd.f32 %v330, %v404
    %v481 = vadd.f32 %v331, %v405
    %v482 = vadd.f32 %v332, %v402
    %v483 = vadd.f32 %v333, %v403
    %v484 = vadd.f32 %v334, %v404
    %v485 = vadd.f32 %v335, %v405
    %v486 = vadd.f32 %v336, %v402
    %v487 = vadd.f32 %v337, %v403
    %v488 = vadd.f32 %v338, %v404
    %v489 = vadd.f32 %v339, %v405
    %v490 = vadd.f32 %v340, %v402
    %v491 = vadd.f32 %v341, %v403
    %v492 = vadd.f32 %v342, %v404
    %v493 = vadd.f32 %v343, %v405
    %v494 = vadd.f32 %v344, %v402
    %v495 = vadd.f32 %v345, %v403
    %v496 = vadd.f32 %v346, %v404
    %v497 = vadd.f32 %v347, %v405
    %v498 = vadd.f32 %v348, %v402
    %v499 = vadd.f32 %v349, %v403
    %v500 = vadd.f32 %v350, %v404
    %v501 = vadd.f32 %v351, %v405
    %v502 = vadd.f32 %v352, %v402
    %v503 = vadd.f32 %v353, %v403
    %v504 = vadd.f32 %v354, %v404
    %v505 = vadd.f32 %v355, %v405
    %v506 = vadd.f32 %v356, %v402
    %v507 = vadd.f32 %v357, %v403
    %v508 = vadd.f32 %v358, %v404
    %v509 = vadd.f32 %v359, %v405
    %v510 = vadd.f32 %v360, %v402
    %v511 = vadd.f32 %v361, %v403
    %v512 = vadd.f32 %v362, %v404
    %v513 = vadd.f32 %v363, %v405
    %v514 = vadd.f32 %v364, %v402
    %v515 = vadd.f32 %v365, %v403
    %v516 = vadd.f32 %v366, %v404
    %v517 = vadd.f32 %v367, %v405
    %v518 = vadd.f32 %v368, %v402
    %v519 = vadd.f32 %v369, %v403
    %v520 = vadd.f32 %v370, %v404
    %v521 = vadd.f32 %v371, %v405
    %v522 = vadd.f32 %v372, %v402
    %v523 = vadd.f32 %v373, %v403
    %v524 = vadd.f32 %v374, %v404
    %v525 = vadd.f32 %v375, %v405
    %v526 = vadd.f32 %v376, %v402
    %v527 = vadd.f32 %v377, %v403
    %v528 = vadd.f32 %v378, %v404
    %v529 = vadd.f32 %v379, %v405
    %v530 = vadd.f32 %v380, %v402
    %v531 = vadd.f32 %v381, %v403
    %v532 = vadd.f32 %v382, %v404
    %v533 = vadd.f32 %v383, %v405
    %v534 = vadd.f32 %v384, %v402
    %v535 = vadd.f32 %v385, %v403
    %v536 = vadd.f32 %v386, %v404
    %v537 = vadd.f32 %v387, %v405
    %v538 = vadd.f32 %v388, %v402
    %v539 = vadd.f32 %v389, %v403
    %v540 = vadd.f32 %v390, %v404
    %v541 = vadd.f32 %v391, %v405
    %v542 = vadd.f32 %v392, %v402
    %v543 = vadd.f32 %v393, %v403
    %v544 = vadd.f32 %v394, %v404
    %v545 = vadd.f32 %v395, %v405
    %v546 = vadd.f32 %v396, %v402
    %v547 = vadd.f32 %v397, %v403
    %v548 = vadd.f32 %v398, %v404
    %v549 = vadd.f32 %v399, %v405
    %550 = vst [vmem:[#allocation2] sm:$0xff] %v410
    %551 = vst [vmem:[#allocation2 + $0x8] sm:$0xff] %v411
    %552 = vst [vmem:[#allocation2 + $0x10] sm:$0xff] %v412
    %553 = vst [vmem:[#allocation2 + $0x18] sm:$0xff] %v413
    %554 = vst [vmem:[#allocation2 + $0x20] sm:$0xff] %v414
    %555 = vst [vmem:[#allocation2 + $0x28] sm:$0xff] %v415
    %556 = vst [vmem:[#allocation2 + $0x30] sm:$0xff] %v416
    %557 = vst [vmem:[#allocation2 + $0x38] sm:$0xff] %v417
    %558 = vst [vmem:[#allocation2 + $0x40] sm:$0xff] %v418
    %559 = vst [vmem:[#allocation2 + $0x48] sm:$0xff] %v419
    %560 = vst [vmem:[#allocation2 + $0x50] sm:$0xff] %v420
    %561 = vst [vmem:[#allocation2 + $0x58] sm:$0xff] %v421
    %562 = vst [vmem:[#allocation2 + $0x60] sm:$0xff] %v422
    %563 = vst [vmem:[#allocation2 + $0x68] sm:$0xff] %v423
    %564 = vst [vmem:[#allocation2 + $0x70] sm:$0xff] %v424
    %565 = vst [vmem:[#allocation2 + $0x78] sm:$0xff] %v425
    %566 = vst [vmem:[#allocation2 + $0x80] sm:$0xff] %v426
    %567 = vst [vmem:[#allocation2 + $0x88] sm:$0xff] %v427
    %568 = vst [vmem:[#allocation2 + $0x90] sm:$0xff] %v428
    %569 = vst [vmem:[#allocation2 + $0x98] sm:$0xff] %v429
    %570 = vst [vmem:[#allocation2 + $0xa0] sm:$0xff] %v430
    %571 = vst [vmem:[#allocation2 + $0xa8] sm:$0xff] %v431
    %572 = vst [vmem:[#allocation2 + $0xb0] sm:$0xff] %v432
    %573 = vst [vmem:[#allocation2 + $0xb8] sm:$0xff] %v433
    %574 = vst [vmem:[#allocation2 + $0xc0] sm:$0xff] %v434
    %575 = vst [vmem:[#allocation2 + $0xc8] sm:$0xff] %v435
    %576 = vst [vmem:[#allocation2 + $0xd0] sm:$0xff] %v436
    %577 = vst [vmem:[#allocation2 + $0xd8] sm:$0xff] %v437
    %578 = vst [vmem:[#allocation2 + $0xe0] sm:$0xff] %v438
    %579 = vst [vmem:[#allocation2 + $0xe8] sm:$0xff] %v439
    %580 = vst [vmem:[#allocation2 + $0xf0] sm:$0xff] %v440
    %581 = vst [vmem:[#allocation2 + $0xf8] sm:$0xff] %v441
    %582 = vst [vmem:[#allocation2 + $0x100] sm:$0xff] %v442
    %583 = vst [vmem:[#allocation2 + $0x108] sm:$0xff] %v443
    %584 = vst [vmem:[#allocation2 + $0x110] sm:$0xff] %v444
    %585 = vst [vmem:[#allocation2 + $0x118] sm:$0xff] %v445
    %586 = vst [vmem:[#allocation2 + $0x120] sm:$0xff] %v446
    %587 = vst [vmem:[#allocation2 + $0x128] sm:$0xff] %v447
    %588 = vst [vmem:[#allocation2 + $0x130] sm:$0xff] %v448
    %589 = vst [vmem:[#allocation2 + $0x138] sm:$0xff] %v449
    %590 = vst [vmem:[#allocation2 + $0x140] sm:$0xff] %v450
    %591 = vst [vmem:[#allocation2 + $0x148] sm:$0xff] %v451
    %592 = vst [vmem:[#allocation2 + $0x150] sm:$0xff] %v452
    %593 = vst [vmem:[#allocation2 + $0x158] sm:$0xff] %v453
    %594 = vst [vmem:[#allocation2 + $0x160] sm:$0xff] %v454
    %595 = vst [vmem:[#allocation2 + $0x168] sm:$0xff] %v455
    %596 = vst [vmem:[#allocation2 + $0x170] sm:$0xff] %v456
    %597 = vst [vmem:[#allocation2 + $0x178] sm:$0xff] %v457
    %598 = vst [vmem:[#allocation2 + $0x180] sm:$0xff] %v458
    %599 = vst [vmem:[#allocation2 + $0x188] sm:$0xff] %v459
    %600 = vst [vmem:[#allocation2 + $0x190] sm:$0xff] %v460
    %601 = vst [vmem:[#allocation2 + $0x198] sm:$0xff] %v461
    %602 = vst [vmem:[#allocation2 + $0x1a0] sm:$0xff] %v462
    %603 = vst [vmem:[#allocation2 + $0x1a8] sm:$0xff] %v463
    %604 = vst [vmem:[#allocation2 + $0x1b0] sm:$0xff] %v464
    %605 = vst [vmem:[#allocation2 + $0x1b8] sm:$0xff] %v465
    %606 = vst [vmem:[#allocation2 + $0x1c0] sm:$0xff] %v466
    %607 = vst [vmem:[#allocation2 + $0x1c8] sm:$0xff] %v467
    %608 = vst [vmem:[#allocation2 + $0x1d0] sm:$0xff] %v468
    %609 = vst [vmem:[#allocation2 + $0x1d8] sm:$0xff] %v469
    %610 = vst [vmem:[#allocation2 + $0x1e0] sm:$0xff] %v470
    %611 = vst [vmem:[#allocation2 + $0x1e8] sm:$0xff] %v471
    %612 = vst [vmem:[#allocation2 + $0x1f0] sm:$0xff] %v472
    %613 = vst [vmem:[#allocation2 + $0x1f8] sm:$0xff] %v473
    %614 = vst [vmem:[#allocation2 + $0x200] sm:$0xff] %v474
    %615 = vst [vmem:[#allocation2 + $0x208] sm:$0xff] %v475
    %616 = vst [vmem:[#allocation2 + $0x210] sm:$0xff] %v476
    %617 = vst [vmem:[#allocation2 + $0x218] sm:$0xff] %v477
    %618 = vst [vmem:[#allocation2 + $0x220] sm:$0xff] %v478
    %619 = vst [vmem:[#allocation2 + $0x228] sm:$0xff] %v479
    %620 = vst [vmem:[#allocation2 + $0x230] sm:$0xff] %v480
    %621 = vst [vmem:[#allocation2 + $0x238] sm:$0xff] %v481
    %622 = vst [vmem:[#allocation2 + $0x240] sm:$0xff] %v482
    %623 = vst [vmem:[#allocation2 + $0x248] sm:$0xff] %v483
    %624 = vst [vmem:[#allocation2 + $0x250] sm:$0xff] %v484
    %625 = vst [vmem:[#allocation2 + $0x258] sm:$0xff] %v485
    %626 = vst [vmem:[#allocation2 + $0x260] sm:$0xff] %v486
    %627 = vst [vmem:[#allocation2 + $0x268] sm:$0xff] %v487
    %628 = vst [vmem:[#allocation2 + $0x270] sm:$0xff] %v488
    %629 = vst [vmem:[#allocation2 + $0x278] sm:$0xff] %v489
    %630 = vst [vmem:[#allocation2 + $0x280] sm:$0xff] %v490
    %631 = vst [vmem:[#allocation2 + $0x288] sm:$0xff] %v491
    %632 = vst [vmem:[#allocation2 + $0x290] sm:$0xff] %v492
    %633 = vst [vmem:[#allocation2 + $0x298] sm:$0xff] %v493
    %634 = vst [vmem:[#allocation2 + $0x2a0] sm:$0xff] %v494
    %635 = vst [vmem:[#allocation2 + $0x2a8] sm:$0xff] %v495
    %636 = vst [vmem:[#allocation2 + $0x2b0] sm:$0xff] %v496
    %637 = vst [vmem:[#allocation2 + $0x2b8] sm:$0xff] %v497
    %638 = vst [vmem:[#allocation2 + $0x2c0] sm:$0xff] %v498
    %639 = vst [vmem:[#allocation2 + $0x2c8] sm:$0xff] %v499
    %640 = vst [vmem:[#allocation2 + $0x2d0] sm:$0xff] %v500
    %641 = vst [vmem:[#allocation2 + $0x2d8] sm:$0xff] %v501
    %642 = vst [vmem:[#allocation2 + $0x2e0] sm:$0xff] %v502
    %643 = vst [vmem:[#allocation2 + $0x2e8] sm:$0xff] %v503
    %644 = vst [vmem:[#allocation2 + $0x2f0] sm:$0xff] %v504
    %645 = vst [vmem:[#allocation2 + $0x2f8] sm:$0xff] %v505
    %646 = vst [vmem:[#allocation2 + $0x300] sm:$0xff] %v506
    %647 = vst [vmem:[#allocation2 + $0x308] sm:$0xff] %v507
    %648 = vst [vmem:[#allocation2 + $0x310] sm:$0xff] %v508
    %649 = vst [vmem:[#allocation2 + $0x318] sm:$0xff] %v509
    %650 = vst [vmem:[#allocation2 + $0x320] sm:$0xff] %v510
    %651 = vst [vmem:[#allocation2 + $0x328] sm:$0xff] %v511
    %652 = vst [vmem:[#allocation2 + $0x330] sm:$0xff] %v512
    %653 = vst [vmem:[#allocation2 + $0x338] sm:$0xff] %v513
    %654 = vst [vmem:[#allocation2 + $0x340] sm:$0xff] %v514
    %655 = vst [vmem:[#allocation2 + $0x348] sm:$0xff] %v515
    %656 = vst [vmem:[#allocation2 + $0x350] sm:$0xff] %v516
    %657 = vst [vmem:[#allocation2 + $0x358] sm:$0xff] %v517
    %658 = vst [vmem:[#allocation2 + $0x360] sm:$0xff] %v518
    %659 = vst [vmem:[#allocation2 + $0x368] sm:$0xff] %v519
    %660 = vst [vmem:[#allocation2 + $0x370] sm:$0xff] %v520
    %661 = vst [vmem:[#allocation2 + $0x378] sm:$0xff] %v521
    %662 = vst [vmem:[#allocation2 + $0x380] sm:$0xff] %v522
    %663 = vst [vmem:[#allocation2 + $0x388] sm:$0xff] %v523
    %664 = vst [vmem:[#allocation2 + $0x390] sm:$0xff] %v524
    %665 = vst [vmem:[#allocation2 + $0x398] sm:$0xff] %v525
    %666 = vst [vmem:[#allocation2 + $0x3a0] sm:$0xff] %v526
    %667 = vst [vmem:[#allocation2 + $0x3a8] sm:$0xff] %v527
    %668 = vst [vmem:[#allocation2 + $0x3b0] sm:$0xff] %v528
    %669 = vst [vmem:[#allocation2 + $0x3b8] sm:$0xff] %v529
    %670 = vst [vmem:[#allocation2 + $0x3c0] sm:$0xff] %v530
    %671 = vst [vmem:[#allocation2 + $0x3c8] sm:$0xff] %v531
    %672 = vst [vmem:[#allocation2 + $0x3d0] sm:$0xff] %v532
    %673 = vst [vmem:[#allocation2 + $0x3d8] sm:$0xff] %v533
    %674 = vst [vmem:[#allocation2 + $0x3e0] sm:$0xff] %v534
    %675 = vst [vmem:[#allocation2 + $0x3e8] sm:$0xff] %v535
    %676 = vst [vmem:[#allocation2 + $0x3f0] sm:$0xff] %v536
    %677 = vst [vmem:[#allocation2 + $0x3f8] sm:$0xff] %v537
    %678 = vst [vmem:[#allocation2 + $0x400] sm:$0xff] %v538
    %679 = vst [vmem:[#allocation2 + $0x408] sm:$0xff] %v539
    %680 = vst [vmem:[#allocation2 + $0x410] sm:$0xff] %v540
    %681 = vst [vmem:[#allocation2 + $0x418] sm:$0xff] %v541
    %682 = vst [vmem:[#allocation2 + $0x420] sm:$0xff] %v542
    %683 = vst [vmem:[#allocation2 + $0x428] sm:$0xff] %v543
    %684 = vst [vmem:[#allocation2 + $0x430] sm:$0xff] %v544
    %685 = vst [vmem:[#allocation2 + $0x438] sm:$0xff] %v545
    %686 = vst [vmem:[#allocation2 + $0x440] sm:$0xff] %v546
    %687 = vst [vmem:[#allocation2 + $0x448] sm:$0xff] %v547
    %688 = vst [vmem:[#allocation2 + $0x450] sm:$0xff] %v548
    %689 = vst [vmem:[#allocation2 + $0x458] sm:$0xff] %v549
    %v690 = vld [vmem:[#allocation2] sm:$0xff]
    %v691 = vld [vmem:[#allocation2 + $0x8] sm:$0xff]
    %v692 = vld [vmem:[#allocation2 + $0x10] sm:$0xff]
    %v693 = vld [vmem:[#allocation2 + $0x18] sm:$0xff]
    %v694 = vld [vmem:[#allocation4] sm:$0xff]
    %v695 = vld [vmem:[#allocation4 + $0x8] sm:$0xff]
    %v696 = vld [vmem:[#allocation4 + $0x10] sm:$0xff]
    %v697 = vld [vmem:[#allocation4 + $0x18] sm:$0xff]
    %v698 = vld [vmem:[#allocation4 + $0x20] sm:$0xff]
    %v699 = vld [vmem:[#allocation4 + $0x28] sm:$0xff]
    %v700 = vld [vmem:[#allocation4 + $0x30] sm:$0xff]
    %v701 = vld [vmem:[#allocation4 + $0x38] sm:$0xff]
    %v702 = vld [vmem:[#allocation4 + $0x40] sm:$0xff]
    %v703 = vld [vmem:[#allocation4 + $0x48] sm:$0xff]
    %v704 = vld [vmem:[#allocation4 + $0x50] sm:$0xff]
    %v705 = vld [vmem:[#allocation4 + $0x58] sm:$0xff]
    %v706 = vld [vmem:[#allocation4 + $0x60] sm:$0xff]
    %v707 = vld [vmem:[#allocation4 + $0x68] sm:$0xff]
    %v708 = vld [vmem:[#allocation4 + $0x70] sm:$0xff]
    %v709 = vld [vmem:[#allocation4 + $0x78] sm:$0xff]
    %v710 = vld [vmem:[#allocation4 + $0x80] sm:$0xff]
    %v711 = vld [vmem:[#allocation4 + $0x88] sm:$0xff]
    %v712 = vld [vmem:[#allocation4 + $0x90] sm:$0xff]
    %v713 = vld [vmem:[#allocation4 + $0x98] sm:$0xff]
    %v714 = vld [vmem:[#allocation4 + $0xa0] sm:$0xff]
    %v715 = vld [vmem:[#allocation4 + $0xa8] sm:$0xff]
    %v716 = vld [vmem:[#allocation4 + $0xb0] sm:$0xff]
    %v717 = vld [vmem:[#allocation4 + $0xb8] sm:$0xff]
    %v718 = vld [vmem:[#allocation4 + $0xc0] sm:$0xff]
    %v719 = vld [vmem:[#allocation4 + $0xc8] sm:$0xff]
    %v720 = vld [vmem:[#allocation4 + $0xd0] sm:$0xff]
    %v721 = vld [vmem:[#allocation4 + $0xd8] sm:$0xff]
    %v722 = vld [vmem:[#allocation4 + $0xe0] sm:$0xff]
    %v723 = vld [vmem:[#allocation4 + $0xe8] sm:$0xff]
    %v724 = vld [vmem:[#allocation4 + $0xf0] sm:$0xff]
    %v725 = vld [vmem:[#allocation4 + $0xf8] sm:$0xff]
    %v726 = vld [vmem:[#allocation4 + $0x100] sm:$0xff]
    %v727 = vld [vmem:[#allocation4 + $0x108] sm:$0xff]
    %v728 = vld [vmem:[#allocation4 + $0x110] sm:$0xff]
    %v729 = vld [vmem:[#allocation4 + $0x118] sm:$0xff]
    %v730 = vld [vmem:[#allocation4 + $0x120] sm:$0xff]
    %v731 = vld [vmem:[#allocation4 + $0x128] sm:$0xff]
    %v732 = vld [vmem:[#allocation4 + $0x130] sm:$0xff]
    %v733 = vld [vmem:[#allocation4 + $0x138] sm:$0xff]
    %v734 = vld [vmem:[#allocation4 + $0x140] sm:$0xff]
    %v735 = vld [vmem:[#allocation4 + $0x148] sm:$0xff]
    %v736 = vld [vmem:[#allocation4 + $0x150] sm:$0xff]
    %v737 = vld [vmem:[#allocation4 + $0x158] sm:$0xff]
    %v738 = vld [vmem:[#allocation4 + $0x160] sm:$0xff]
    %v739 = vld [vmem:[#allocation4 + $0x168] sm:$0xff]
    %v740 = vld [vmem:[#allocation4 + $0x170] sm:$0xff]
    %v741 = vld [vmem:[#allocation4 + $0x178] sm:$0xff]
    %v742 = vld [vmem:[#allocation4 + $0x180] sm:$0xff]
    %v743 = vld [vmem:[#allocation4 + $0x188] sm:$0xff]
    %v744 = vld [vmem:[#allocation4 + $0x190] sm:$0xff]
    %v745 = vld [vmem:[#allocation4 + $0x198] sm:$0xff]
    %v746 = vld [vmem:[#allocation4 + $0x1a0] sm:$0xff]
    %v747 = vld [vmem:[#allocation4 + $0x1a8] sm:$0xff]
    %v748 = vld [vmem:[#allocation4 + $0x1b0] sm:$0xff]
    %v749 = vld [vmem:[#allocation4 + $0x1b8] sm:$0xff]
    %v750 = vld [vmem:[#allocation4 + $0x1c0] sm:$0xff]
    %v751 = vld [vmem:[#allocation4 + $0x1c8] sm:$0xff]
    %v752 = vld [vmem:[#allocation4 + $0x1d0] sm:$0xff]
    %v753 = vld [vmem:[#allocation4 + $0x1d8] sm:$0xff]
    %v754 = vld [vmem:[#allocation4 + $0x1e0] sm:$0xff]
    %v755 = vld [vmem:[#allocation4 + $0x1e8] sm:$0xff]
    %v756 = vld [vmem:[#allocation4 + $0x1f0] sm:$0xff]
    %v757 = vld [vmem:[#allocation4 + $0x1f8] sm:$0xff]
    %758 = vmatpush.msra.mxu0 %v754
    %759 = vmatpush.msra.mxu0 %v750
    %760 = vmatpush.msra.mxu0 %v746
    %761 = vmatpush.msra.mxu0 %v742
    %762 = vmatpush.msra.mxu0 %v738
    %763 = vmatpush.msra.mxu0 %v734
    %764 = vmatpush.msra.mxu0 %v730
    %765 = vmatpush.msra.mxu0 %v726
    %766 = vmatpush.msra.mxu0 %v722
    %767 = vmatpush.msra.mxu0 %v718
    %768 = vmatpush.msra.mxu0 %v714
    %769 = vmatpush.msra.mxu0 %v710
    %770 = vmatpush.msra.mxu0 %v706
    %771 = vmatpush.msra.mxu0 %v702
    %772 = vmatpush.msra.mxu0 %v698
    %773 = vmatpush.msra.mxu0 %v694
    %774 = vmatmul.f32.gmra.mxu0 0.0
    %v775 = vpop.f32.mrf.mxu0
    %v776 = vadd.f32 0.0, %v775
    %777 = vdwg.mxu0
    %778 = vmatpush.msra.mxu0 %v755
    %779 = vmatpush.msra.mxu0 %v751
    %780 = vmatpush.msra.mxu0 %v747
    %781 = vmatpush.msra.mxu0 %v743
    %782 = vmatpush.msra.mxu0 %v739
    %783 = vmatpush.msra.mxu0 %v735
    %784 = vmatpush.msra.mxu0 %v731
    %785 = vmatpush.msra.mxu0 %v727
    %786 = vmatpush.msra.mxu0 %v723
    %787 = vmatpush.msra.mxu0 %v719
    %788 = vmatpush.msra.mxu0 %v715
    %789 = vmatpush.msra.mxu0 %v711
    %790 = vmatpush.msra.mxu0 %v707
    %791 = vmatpush.msra.mxu0 %v703
    %792 = vmatpush.msra.mxu0 %v699
    %793 = vmatpush.msra.mxu0 %v695
    %794 = vmatmul.f32.gmra.mxu0 0.0
    %v795 = vpop.f32.mrf.mxu0
    %v796 = vadd.f32 0.0, %v795
    %797 = vdwg.mxu0
    %798 = vmatpush.msra.mxu0 %v756
    %799 = vmatpush.msra.mxu0 %v752
    %800 = vmatpush.msra.mxu0 %v748
    %801 = vmatpush.msra.mxu0 %v744
    %802 = vmatpush.msra.mxu0 %v740
    %803 = vmatpush.msra.mxu0 %v736
    %804 = vmatpush.msra.mxu0 %v732
    %805 = vmatpush.msra.mxu0 %v728
    %806 = vmatpush.msra.mxu0 %v724
    %807 = vmatpush.msra.mxu0 %v720
    %808 = vmatpush.msra.mxu0 %v716
    %809 = vmatpush.msra.mxu0 %v712
    %810 = vmatpush.msra.mxu0 %v708
    %811 = vmatpush.msra.mxu0 %v704
    %812 = vmatpush.msra.mxu0 %v700
    %813 = vmatpush.msra.mxu0 %v696
    %814 = vmatmul.f32.gmra.mxu0 0.0
    %v815 = vpop.f32.mrf.mxu0
    %v816 = vadd.f32 0.0, %v815
    %817 = vdwg.mxu0
    %818 = vmatpush.msra.mxu0 %v757
    %819 = vmatpush.msra.mxu0 %v753
    %820 = vmatpush.msra.mxu0 %v749
    %821 = vmatpush.msra.mxu0 %v745
    %822 = vmatpush.msra.mxu0 %v741
    %823 = vmatpush.msra.mxu0 %v737
    %824 = vmatpush.msra.mxu0 %v733
    %825 = vmatpush.msra.mxu0 %v729
    %826 = vmatpush.msra.mxu0 %v725
    %827 = vmatpush.msra.mxu0 %v721
    %828 = vmatpush.msra.mxu0 %v717
    %829 = vmatpush.msra.mxu0 %v713
    %830 = vmatpush.msra.mxu0 %v709
    %831 = vmatpush.msra.mxu0 %v705
    %832 = vmatpush.msra.mxu0 %v701
    %833 = vmatpush.msra.mxu0 %v697
    %834 = vmatmul.f32.gmra.mxu0 0.0
    %v835 = vpop.f32.mrf.mxu0
    %v836 = vadd.f32 0.0, %v835
    %837 = vdwg.mxu0
    %v838 = vadd.f32 %v690, %v776
    %v839 = vadd.f32 %v691, %v796
    %v840 = vadd.f32 %v692, %v816
    %v841 = vadd.f32 %v693, %v836
    %v842 = vxor.u32 %v838, 2147483648
    %v843 = vxor.u32 %v839, 2147483648
    %v844 = vxor.u32 %v840, 2147483648
    %v845 = vmul.f32 %v842, 1.442695
    %v846 = vpow.pop %v845
    %v847 = vmul.f32 %v843, 1.442695
    %v848 = vpow.pop %v847
    %v849 = vmul.f32 %v844, 1.442695
    %v850 = vpow.pop %v849
    %v851 = vadd.f32 %v846, 1.0
    %v852 = vadd.f32 %v848, 1.0
    %v853 = vadd.f32 %v850, 1.0
    %v854 = vrcp.pop %v851
    %v855 = vmul.f32 %v851, %v854
    %v856 = vsub.f32 1.0, %v855
    %v857 = vmul.f32 %v854, %v856
    %v858 = vadd.f32 %v854, %v857
    %vm859 = vweird.f32 %v851
    %vm860 = vweird.f32 %v854
    %vm861 = vmor %vm859, %vm860
    %v862 = vsel %vm861, %v854, %v858
    %v863 = vand.u32 2147483647, %v851
    %vm864 = vcmp.eq.f32.partialorder %v863, 8.507059e+37
    %v865 = vand.u32 %v851, 2147483648
    %v866 = vor.u32 1.1754944e-38, %v865
    %v867 = vsel %vm864, %v866, %v862
    %v868 = vmul.f32 1.0, %v867
    %v869 = vrcp.pop %v852
    %v870 = vmul.f32 %v852, %v869
    %v871 = vsub.f32 1.0, %v870
    %v872 = vmul.f32 %v869, %v871
    %v873 = vadd.f32 %v869, %v872
    %vm874 = vweird.f32 %v852
    %vm875 = vweird.f32 %v869
    %vm876 = vmor %vm874, %vm875
    %v877 = vsel %vm876, %v869, %v873
    %v878 = vand.u32 2147483647, %v852
    %vm879 = vcmp.eq.f32.partialorder %v878, 8.507059e+37
    %v880 = vand.u32 %v852, 2147483648
    %v881 = vor.u32 1.1754944e-38, %v880
    %v882 = vsel %vm879, %v881, %v877
    %v883 = vmul.f32 1.0, %v882
    %v884 = vrcp.pop %v853
    %v885 = vmul.f32 %v853, %v884
    %v886 = vsub.f32 1.0, %v885
    %v887 = vmul.f32 %v884, %v886
    %v888 = vadd.f32 %v884, %v887
    %vm889 = vweird.f32 %v853
    %vm890 = vweird.f32 %v884
    %vm891 = vmor %vm889, %vm890
    %v892 = vsel %vm891, %v884, %v888
    %v893 = vand.u32 2147483647, %v853
    %vm894 = vcmp.eq.f32.partialorder %v893, 8.507059e+37
    %v895 = vand.u32 %v853, 2147483648
    %v896 = vor.u32 1.1754944e-38, %v895
    %v897 = vsel %vm894, %v896, %v892
    %v898 = vmul.f32 1.0, %v897
    %v899 = vtanh.pop %v841
    %v900 = vmul.f32 %v883, 0.0
    %v901 = vmul.f32 %v868, %v899
    %v902 = vadd.f32 %v900, %v901
    %v903 = vtanh.pop %v902
    %v904 = vmul.f32 %v898, %v903
    %905 = vst [vmem:[#allocation3] sm:$0xff] %v904
    %v906 = vld [vmem:[#allocation2 + $0x20] sm:$0xff]
    %v907 = vld [vmem:[#allocation2 + $0x28] sm:$0xff]
    %v908 = vld [vmem:[#allocation2 + $0x30] sm:$0xff]
    %v909 = vld [vmem:[#allocation2 + $0x38] sm:$0xff]
    %v910 = vld [vmem:[#allocation4] sm:$0xff]
    %v911 = vld [vmem:[#allocation4 + $0x8] sm:$0xff]
    %v912 = vld [vmem:[#allocation4 + $0x10] sm:$0xff]
    %v913 = vld [vmem:[#allocation4 + $0x18] sm:$0xff]
    %v914 = vld [vmem:[#allocation4 + $0x20] sm:$0xff]
    %v915 = vld [vmem:[#allocation4 + $0x28] sm:$0xff]
    %v916 = vld [vmem:[#allocation4 + $0x30] sm:$0xff]
    %v917 = vld [vmem:[#allocation4 + $0x38] sm:$0xff]
    %v918 = vld [vmem:[#allocation4 + $0x40] sm:$0xff]
    %v919 = vld [vmem:[#allocation4 + $0x48] sm:$0xff]
    %v920 = vld [vmem:[#allocation4 + $0x50] sm:$0xff]
    %v921 = vld [vmem:[#allocation4 + $0x58] sm:$0xff]
    %v922 = vld [vmem:[#allocation4 + $0x60] sm:$0xff]
    %v923 = vld [vmem:[#allocation4 + $0x68] sm:$0xff]
    %v924 = vld [vmem:[#allocation4 + $0x70] sm:$0xff]
    %v925 = vld [vmem:[#allocation4 + $0x78] sm:$0xff]
    %v926 = vld [vmem:[#allocation4 + $0x80] sm:$0xff]
    %v927 = vld [vmem:[#allocation4 + $0x88] sm:$0xff]
    %v928 = vld [vmem:[#allocation4 + $0x90] sm:$0xff]
    %v929 = vld [vmem:[#allocation4 + $0x98] sm:$0xff]
    %v930 = vld [vmem:[#allocation4 + $0xa0] sm:$0xff]
    %v931 = vld [vmem:[#allocation4 + $0xa8] sm:$0xff]
    %v932 = vld [vmem:[#allocation4 + $0xb0] sm:$0xff]
    %v933 = vld [vmem:[#allocation4 + $0xb8] sm:$0xff]
    %v934 = vld [vmem:[#allocation4 + $0xc0] sm:$0xff]
    %v935 = vld [vmem:[#allocation4 + $0xc8] sm:$0xff]
    %v936 = vld [vmem:[#allocation4 + $0xd0] sm:$0xff]
    %v937 = vld [vmem:[#allocation4 + $0xd8] sm:$0xff]
    %v938 = vld [vmem:[#allocation4 + $0xe0] sm:$0xff]
    %v939 = vld [vmem:[#allocation4 + $0xe8] sm:$0xff]
    %v940 = vld [vmem:[#allocation4 + $0xf0] sm:$0xff]
    %v941 = vld [vmem:[#allocation4 + $0xf8] sm:$0xff]
    %v942 = vld [vmem:[#allocation4 + $0x100] sm:$0xff]
    %v943 = vld [vmem:[#allocation4 + $0x108] sm:$0xff]
    %v944 = vld [vmem:[#allocation4 + $0x110] sm:$0xff]
    %v945 = vld [vmem:[#allocation4 + $0x118] sm:$0xff]
    %v946 = vld [vmem:[#allocation4 + $0x120] sm:$0xff]
    %v947 = vld [vmem:[#allocation4 + $0x128] sm:$0xff]
    %v948 = vld [vmem:[#allocation4 + $0x130] sm:$0xff]
    %v949 = vld [vmem:[#allocation4 + $0x138] sm:$0xff]
    %v950 = vld [vmem:[#allocation4 + $0x140] sm:$0xff]
    %v951 = vld [vmem:[#allocation4 + $0x148] sm:$0xff]
    %v952 = vld [vmem:[#allocation4 + $0x150] sm:$0xff]
    %v953 = vld [vmem:[#allocation4 + $0x158] sm:$0xff]
    %v954 = vld [vmem:[#allocation4 + $0x160] sm:$0xff]
    %v955 = vld [vmem:[#allocation4 + $0x168] sm:$0xff]
    %v956 = vld [vmem:[#allocation4 + $0x170] sm:$0xff]
    %v957 = vld [vmem:[#allocation4 + $0x178] sm:$0xff]
    %v958 = vld [vmem:[#allocation4 + $0x180] sm:$0xff]
    %v959 = vld [vmem:[#allocation4 + $0x188] sm:$0xff]
    %v960 = vld [vmem:[#allocation4 + $0x190] sm:$0xff]
    %v961 = vld [vmem:[#allocation4 + $0x198] sm:$0xff]
    %v962 = vld [vmem:[#allocation4 + $0x1a0] sm:$0xff]
    %v963 = vld [vmem:[#allocation4 + $0x1a8] sm:$0xff]
    %v964 = vld [vmem:[#allocation4 + $0x1b0] sm:$0xff]
    %v965 = vld [vmem:[#allocation4 + $0x1b8] sm:$0xff]
    %v966 = vld [vmem:[#allocation4 + $0x1c0] sm:$0xff]
    %v967 = vld [vmem:[#allocation4 + $0x1c8] sm:$0xff]
    %v968 = vld [vmem:[#allocation4 + $0x1d0] sm:$0xff]
    %v969 = vld [vmem:[#allocation4 + $0x1d8] sm:$0xff]
    %v970 = vld [vmem:[#allocation4 + $0x1e0] sm:$0xff]
    %v971 = vld [vmem:[#allocation4 + $0x1e8] sm:$0xff]
    %v972 = vld [vmem:[#allocation4 + $0x1f0] sm:$0xff]
    %v973 = vld [vmem:[#allocation4 + $0x1f8] sm:$0xff]
    %974 = vmatpush.msra.mxu0 %v970
    %975 = vmatpush.msra.mxu0 %v966
    %976 = vmatpush.msra.mxu0 %v962
    %977 = vmatpush.msra.mxu0 %v958
    %978 = vmatpush.msra.mxu0 %v954
    %979 = vmatpush.msra.mxu0 %v950
    %980 = vmatpush.msra.mxu0 %v946
    %981 = vmatpush.msra.mxu0 %v942
    %982 = vmatpush.msra.mxu0 %v938
    %983 = vmatpush.msra.mxu0 %v934
    %984 = vmatpush.msra.mxu0 %v930
    %985 = vmatpush.msra.mxu0 %v926
    %986 = vmatpush.msra.mxu0 %v922
    %987 = vmatpush.msra.mxu0 %v918
    %988 = vmatpush.msra.mxu0 %v914
    %989 = vmatpush.msra.mxu0 %v910
    %990 = vmatmul.f32.gmra.mxu0 %v904
    %v991 = vpop.f32.mrf.mxu0
    %v992 = vadd.f32 0.0, %v991
    %993 = vdwg.mxu0
    %994 = vmatpush.msra.mxu0 %v971
    %995 = vmatpush.msra.mxu0 %v967
    %996 = vmatpush.msra.mxu0 %v963
    %997 = vmatpush.msra.mxu0 %v959
    %998 = vmatpush.msra.mxu0 %v955
    %999 = vmatpush.msra.mxu0 %v951
    %1000 = vmatpush.msra.mxu0 %v947
    %1001 = vmatpush.msra.mxu0 %v943
    %1002 = vmatpush.msra.mxu0 %v939
    %1003 = vmatpush.msra.mxu0 %v935
    %1004 = vmatpush.msra.mxu0 %v931
    %1005 = vmatpush.msra.mxu0 %v927
    %1006 = vmatpush.msra.mxu0 %v923
    %1007 = vmatpush.msra.mxu0 %v919
    %1008 = vmatpush.msra.mxu0 %v915
    %1009 = vmatpush.msra.mxu0 %v911
    %1010 = vmatmul.f32.gmra.mxu0 %v904
    %v1011 = vpop.f32.mrf.mxu0
    %v1012 = vadd.f32 0.0, %v1011
    %1013 = vdwg.mxu0
    %1014 = vmatpush.msra.mxu0 %v972
    %1015 = vmatpush.msra.mxu0 %v968
    %1016 = vmatpush.msra.mxu0 %v964
    %1017 = vmatpush.msra.mxu0 %v960
    %1018 = vmatpush.msra.mxu0 %v956
    %1019 = vmatpush.msra.mxu0 %v952
    %1020 = vmatpush.msra.mxu0 %v948
    %1021 = vmatpush.msra.mxu0 %v944
    %1022 = vmatpush.msra.mxu0 %v940
    %1023 = vmatpush.msra.mxu0 %v936
    %1024 = vmatpush.msra.mxu0 %v932
    %1025 = vmatpush.msra.mxu0 %v928
    %1026 = vmatpush.msra.mxu0 %v924
    %1027 = vmatpush.msra.mxu0 %v920
    %1028 = vmatpush.msra.mxu0 %v916
    %1029 = vmatpush.msra.mxu0 %v912
    %1030 = vmatmul.f32.gmra.mxu0 %v904
    %v1031 = vpop.f32.mrf.mxu0
    %v1032 = vadd.f32 0.0, %v1031
    %1033 = vdwg.mxu0
    %1034 = vmatpush.msra.mxu0 %v973
    %1035 = vmatpush.msra.mxu0 %v969
    %1036 = vmatpush.msra.mxu0 %v965
    %1037 = vmatpush.msra.mxu0 %v961
    %1038 = vmatpush.msra.mxu0 %v957
    %1039 = vmatpush.msra.mxu0 %v953
    %1040 = vmatpush.msra.mxu0 %v949
    %1041 = vmatpush.msra.mxu0 %v945
    %1042 = vmatpush.msra.mxu0 %v941
    %1043 = vmatpush.msra.mxu0 %v937
    %1044 = vmatpush.msra.mxu0 %v933
    %1045 = vmatpush.msra.mxu0 %v929
    %1046 = vmatpush.msra.mxu0 %v925
    %1047 = vmatpush.msra.mxu0 %v921
    %1048 = vmatpush.msra.mxu0 %v917
    %1049 = vmatpush.msra.mxu0 %v913
    %1050 = vmatmul.f32.gmra.mxu0 %v904
    %v1051 = vpop.f32.mrf.mxu0
    %v1052 = vadd.f32 0.0, %v1051
    %1053 = vdwg.mxu0
    %v1054 = vadd.f32 %v906, %v992
    %v1055 = vadd.f32 %v907, %v1012
    %v1056 = vadd.f32 %v908, %v1032
    %v1057 = vadd.f32 %v909, %v1052
    %v1058 = vxor.u32 %v1054, 2147483648
    %v1059 = vxor.u32 %v1055, 2147483648
    %v1060 = vxor.u32 %v1056, 2147483648
    %v1061 = vmul.f32 %v1058, 1.442695
    %v1062 = vpow.pop %v1061
    %v1063 = vmul.f32 %v1059, 1.442695
    %v1064 = vpow.pop %v1063
    %v1065 = vmul.f32 %v1060, 1.442695
    %v1066 = vpow.pop %v1065
    %v1067 = vadd.f32 %v1062, 1.0
    %v1068 = vadd.f32 %v1064, 1.0
    %v1069 = vadd.f32 %v1066, 1.0
    %v1070 = vrcp.pop %v1067
    %v1071 = vmul.f32 %v1067, %v1070
    %v1072 = vsub.f32 1.0, %v1071
    %v1073 = vmul.f32 %v1070, %v1072
    %v1074 = vadd.f32 %v1070, %v1073
    %vm1075 = vweird.f32 %v1067
    %vm1076 = vweird.f32 %v1070
    %vm1077 = vmor %vm1075, %vm1076
    %v1078 = vsel %vm1077, %v1070, %v1074
    %v1079 = vand.u32 2147483647, %v1067
    %vm1080 = vcmp.eq.f32.partialorder %v1079, 8.507059e+37
    %v1081 = vand.u32 %v1067, 2147483648
    %v1082 = vor.u32 1.1754944e-38, %v1081
    %v1083 = vsel %vm1080, %v1082, %v1078
    %v1084 = vmul.f32 1.0, %v1083
    %v1085 = vrcp.pop %v1068
    %v1086 = vmul.f32 %v1068, %v1085
    %v1087 = vsub.f32 1.0, %v1086
    %v1088 = vmul.f32 %v1085, %v1087
    %v1089 = vadd.f32 %v1085, %v1088
    %vm1090 = vweird.f32 %v1068
    %vm1091 = vweird.f32 %v1085
    %vm1092 = vmor %vm1090, %vm1091
    %v1093 = vsel %vm1092, %v1085, %v1089
    %v1094 = vand.u32 2147483647, %v1068
    %vm1095 = vcmp.eq.f32.partialorder %v1094, 8.507059e+37
    %v1096 = vand.u32 %v1068, 2147483648
    %v1097 = vor.u32 1.1754944e-38, %v1096
    %v1098 = vsel %vm1095, %v1097, %v1093
    %v1099 = vmul.f32 1.0, %v1098
    %v1100 = vrcp.pop %v1069
    %v1101 = vmul.f32 %v1069, %v1100
    %v1102 = vsub.f32 1.0, %v1101
    %v1103 = vmul.f32 %v1100, %v1102
    %v1104 = vadd.f32 %v1100, %v1103
    %vm1105 = vweird.f32 %v1069
    %vm1106 = vweird.f32 %v1100
    %vm1107 = vmor %vm1105, %vm1106
    %v1108 = vsel %vm1107, %v1100, %v1104
    %v1109 = vand.u32 2147483647, %v1069
    %vm1110 = vcmp.eq.f32.partialorder %v1109, 8.507059e+37
    %v1111 = vand.u32 %v1069, 2147483648
    %v1112 = vor.u32 1.1754944e-38, %v1111
    %v1113 = vsel %vm1110, %v1112, %v1108
    %v1114 = vmul.f32 1.0, %v1113
    %v1115 = vtanh.pop %v1057
    %v1116 = vmul.f32 %v1099, %v902
    %v1117 = vmul.f32 %v1084, %v1115
    %v1118 = vadd.f32 %v1116, %v1117
    %v1119 = vtanh.pop %v1118
    %v1120 = vmul.f32 %v1114, %v1119
    %1121 = vst [vmem:[#allocation3 + $0x8] sm:$0xff] %v1120
    %v1122 = vld [vmem:[#allocation2 + $0x40] sm:$0xff]
    %v1123 = vld [vmem:[#allocation2 + $0x48] sm:$0xff]
    %v1124 = vld [vmem:[#allocation2 + $0x50] sm:$0xff]
    %v1125 = vld [vmem:[#allocation2 + $0x58] sm:$0xff]
    %v1126 = vld [vmem:[#allocation4] sm:$0xff]
    %v1127 = vld [vmem:[#allocation4 + $0x8] sm:$0xff]
    %v1128 = vld [vmem:[#allocation4 + $0x10] sm:$0xff]
    %v1129 = vld [vmem:[#allocation4 + $0x18] sm:$0xff]
    %v1130 = vld [vmem:[#allocation4 + $0x20] sm:$0xff]
    %v1131 = vld [vmem:[#allocation4 + $0x28] sm:$0xff]
    %v1132 = vld [vmem:[#allocation4 + $0x30] sm:$0xff]
    %v1133 = vld [vmem:[#allocation4 + $0x38] sm:$0xff]
    %v1134 = vld [vmem:[#allocation4 + $0x40] sm:$0xff]
    %v1135 = vld [vmem:[#allocation4 + $0x48] sm:$0xff]
    %v1136 = vld [vmem:[#allocation4 + $0x50] sm:$0xff]
    %v1137 = vld [vmem:[#allocation4 + $0x58] sm:$0xff]
    %v1138 = vld [vmem:[#allocation4 + $0x60] sm:$0xff]
    %v1139 = vld [vmem:[#allocation4 + $0x68] sm:$0xff]
    %v1140 = vld [vmem:[#allocation4 + $0x70] sm:$0xff]
    %v1141 = vld [vmem:[#allocation4 + $0x78] sm:$0xff]
    %v1142 = vld [vmem:[#allocation4 + $0x80] sm:$0xff]
    %v1143 = vld [vmem:[#allocation4 + $0x88] sm:$0xff]
    %v1144 = vld [vmem:[#allocation4 + $0x90] sm:$0xff]
    %v1145 = vld [vmem:[#allocation4 + $0x98] sm:$0xff]
    %v1146 = vld [vmem:[#allocation4 + $0xa0] sm:$0xff]
    %v1147 = vld [vmem:[#allocation4 + $0xa8] sm:$0xff]
    %v1148 = vld [vmem:[#allocation4 + $0xb0] sm:$0xff]
    %v1149 = vld [vmem:[#allocation4 + $0xb8] sm:$0xff]
    %v1150 = vld [vmem:[#allocation4 + $0xc0] sm:$0xff]
    %v1151 = vld [vmem:[#allocation4 + $0xc8] sm:$0xff]
    %v1152 = vld [vmem:[#allocation4 + $0xd0] sm:$0xff]
    %v1153 = vld [vmem:[#allocation4 + $0xd8] sm:$0xff]
    %v1154 = vld [vmem:[#allocation4 + $0xe0] sm:$0xff]
    %v1155 = vld [vmem:[#allocation4 + $0xe8] sm:$0xff]
    %v1156 = vld [vmem:[#allocation4 + $0xf0] sm:$0xff]
    %v1157 = vld [vmem:[#allocation4 + $0xf8] sm:$0xff]
    %v1158 = vld [vmem:[#allocation4 + $0x100] sm:$0xff]
    %v1159 = vld [vmem:[#allocation4 + $0x108] sm:$0xff]
    %v1160 = vld [vmem:[#allocation4 + $0x110] sm:$0xff]
    %v1161 = vld [vmem:[#allocation4 + $0x118] sm:$0xff]
    %v1162 = vld [vmem:[#allocation4 + $0x120] sm:$0xff]
    %v1163 = vld [vmem:[#allocation4 + $0x128] sm:$0xff]
    %v1164 = vld [vmem:[#allocation4 + $0x130] sm:$0xff]
    %v1165 = vld [vmem:[#allocation4 + $0x138] sm:$0xff]
    %v1166 = vld [vmem:[#allocation4 + $0x140] sm:$0xff]
    %v1167 = vld [vmem:[#allocation4 + $0x148] sm:$0xff]
    %v1168 = vld [vmem:[#allocation4 + $0x150] sm:$0xff]
    %v1169 = vld [vmem:[#allocation4 + $0x158] sm:$0xff]
    %v1170 = vld [vmem:[#allocation4 + $0x160] sm:$0xff]
    %v1171 = vld [vmem:[#allocation4 + $0x168] sm:$0xff]
    %v1172 = vld [vmem:[#allocation4 + $0x170] sm:$0xff]
    %v1173 = vld [vmem:[#allocation4 + $0x178] sm:$0xff]
    %v1174 = vld [vmem:[#allocation4 + $0x180] sm:$0xff]
    %v1175 = vld [vmem:[#allocation4 + $0x188] sm:$0xff]
    %v1176 = vld [vmem:[#allocation4 + $0x190] sm:$0xff]
    %v1177 = vld [vmem:[#allocation4 + $0x198] sm:$0xff]
    %v1178 = vld [vmem:[#allocation4 + $0x1a0] sm:$0xff]
    %v1179 = vld [vmem:[#allocation4 + $0x1a8] sm:$0xff]
    %v1180 = vld [vmem:[#allocation4 + $0x1b0] sm:$0xff]
    %v1181 = vld [vmem:[#allocation4 + $0x1b8] sm:$0xff]
    %v1182 = vld [vmem:[#allocation4 + $0x1c0] sm:$0xff]
    %v1183 = vld [vmem:[#allocation4 + $0x1c8] sm:$0xff]
    %v1184 = vld [vmem:[#allocation4 + $0x1d0] sm:$0xff]
    %v1185 = vld [vmem:[#allocation4 + $0x1d8] sm:$0xff]
    %v1186 = vld [vmem:[#allocation4 + $0x1e0] sm:$0xff]
    %v1187 = vld [vmem:[#allocation4 + $0x1e8] sm:$0xff]
    %v1188 = vld [vmem:[#allocation4 + $0x1f0] sm:$0xff]
    %v1189 = vld [vmem:[#allocation4 + $0x1f8] sm:$0xff]
    %1190 = vmatpush.msra.mxu0 %v1186
    %1191 = vmatpush.msra.mxu0 %v1182
    %1192 = vmatpush.msra.mxu0 %v1178
    %1193 = vmatpush.msra.mxu0 %v1174
    %1194 = vmatpush.msra.mxu0 %v1170
    %1195 = vmatpush.msra.mxu0 %v1166
    %1196 = vmatpush.msra.mxu0 %v1162
    %1197 = vmatpush.msra.mxu0 %v1158
    %1198 = vmatpush.msra.mxu0 %v1154
    %1199 = vmatpush.msra.mxu0 %v1150
    %1200 = vmatpush.msra.mxu0 %v1146
    %1201 = vmatpush.msra.mxu0 %v1142
    %1202 = vmatpush.msra.mxu0 %v1138
    %1203 = vmatpush.msra.mxu0 %v1134
    %1204 = vmatpush.msra.mxu0 %v1130
    %1205 = vmatpush.msra.mxu0 %v1126
    %1206 = vmatmul.f32.gmra.mxu0 %v1120
    %v1207 = vpop.f32.mrf.mxu0
    %v1208 = vadd.f32 0.0, %v1207
    %1209 = vdwg.mxu0
    %1210 = vmatpush.msra.mxu0 %v1187
    %1211 = vmatpush.msra.mxu0 %v1183
    %1212 = vmatpush.msra.mxu0 %v1179
    %1213 = vmatpush.msra.mxu0 %v1175
    %1214 = vmatpush.msra.mxu0 %v1171
    %1215 = vmatpush.msra.mxu0 %v1167
    %1216 = vmatpush.msra.mxu0 %v1163
    %1217 = vmatpush.msra.mxu0 %v1159
    %1218 = vmatpush.msra.mxu0 %v1155
    %1219 = vmatpush.msra.mxu0 %v1151
    %1220 = vmatpush.msra.mxu0 %v1147
    %1221 = vmatpush.msra.mxu0 %v1143
    %1222 = vmatpush.msra.mxu0 %v1139
    %1223 = vmatpush.msra.mxu0 %v1135
    %1224 = vmatpush.msra.mxu0 %v1131
    %1225 = vmatpush.msra.mxu0 %v1127
    %1226 = vmatmul.f32.gmra.mxu0 %v1120
    %v1227 = vpop.f32.mrf.mxu0
    %v1228 = vadd.f32 0.0, %v1227
    %1229 = vdwg.mxu0
    %1230 = vmatpush.msra.mxu0 %v1188
    %1231 = vmatpush.msra.mxu0 %v1184
    %1232 = vmatpush.msra.mxu0 %v1180
    %1233 = vmatpush.msra.mxu0 %v1176
    %1234 = vmatpush.msra.mxu0 %v1172
    %1235 = vmatpush.msra.mxu0 %v1168
    %1236 = vmatpush.msra.mxu0 %v1164
    %1237 = vmatpush.msra.mxu0 %v1160
    %1238 = vmatpush.msra.mxu0 %v1156
    %1239 = vmatpush.msra.mxu0 %v1152
    %1240 = vmatpush.msra.mxu0 %v1148
    %1241 = vmatpush.msra.mxu0 %v1144
    %1242 = vmatpush.msra.mxu0 %v1140
    %1243 = vmatpush.msra.mxu0 %v1136
    %1244 = vmatpush.msra.mxu0 %v1132
    %1245 = vmatpush.msra.mxu0 %v1128
    %1246 = vmatmul.f32.gmra.mxu0 %v1120
    %v1247 = vpop.f32.mrf.mxu0
    %v1248 = vadd.f32 0.0, %v1247
    %1249 = vdwg.mxu0
    %1250 = vmatpush.msra.mxu0 %v1189
    %1251 = vmatpush.msra.mxu0 %v1185
    %1252 = vmatpush.msra.mxu0 %v1181
    %1253 = vmatpush.msra.mxu0 %v1177
    %1254 = vmatpush.msra.mxu0 %v1173
    %1255 = vmatpush.msra.mxu0 %v1169
    %1256 = vmatpush.msra.mxu0 %v1165
    %1257 = vmatpush.msra.mxu0 %v1161
    %1258 = vmatpush.msra.mxu0 %v1157
    %1259 = vmatpush.msra.mxu0 %v1153
    %1260 = vmatpush.msra.mxu0 %v1149
    %1261 = vmatpush.msra.mxu0 %v1145
    %1262 = vmatpush.msra.mxu0 %v1141
    %1263 = vmatpush.msra.mxu0 %v1137
    %1264 = vmatpush.msra.mxu0 %v1133
    %1265 = vmatpush.msra.mxu0 %v1129
    %1266 = vmatmul.f32.gmra.mxu0 %v1120
    %v1267 = vpop.f32.mrf.mxu0
    %v1268 = vadd.f32 0.0, %v1267
    %1269 = vdwg.mxu0
    %v1270 = vadd.f32 %v1122, %v1208
    %v1271 = vadd.f32 %v1123, %v1228
    %v1272 = vadd.f32 %v1124, %v1248
    %v1273 = vadd.f32 %v1125, %v1268
    %v1274 = vxor.u32 %v1270, 2147483648
    %v1275 = vxor.u32 %v1271, 2147483648
    %v1276 = vxor.u32 %v1272, 2147483648
    %v1277 = vmul.f32 %v1274, 1.442695
    %v1278 = vpow.pop %v1277
    %v1279 = vmul.f32 %v1275, 1.442695
    %v1280 = vpow.pop %v1279
    %v1281 = vmul.f32 %v1276, 1.442695
    %v1282 = vpow.pop %v1281
    %v1283 = vadd.f32 %v1278, 1.0
    %v1284 = vadd.f32 %v1280, 1.0
    %v1285 = vadd.f32 %v1282, 1.0
    %v1286 = vrcp.pop %v1283
    %v1287 = vmul.f32 %v1283, %v1286
    %v1288 = vsub.f32 1.0, %v1287
    %v1289 = vmul.f32 %v1286, %v1288
    %v1290 = vadd.f32 %v1286, %v1289
    %vm1291 = vweird.f32 %v1283
    %vm1292 = vweird.f32 %v1286
    %vm1293 = vmor %vm1291, %vm1292
    %v1294 = vsel %vm1293, %v1286, %v1290
    %v1295 = vand.u32 2147483647, %v1283
    %vm1296 = vcmp.eq.f32.partialorder %v1295, 8.507059e+37
    %v1297 = vand.u32 %v1283, 2147483648
    %v1298 = vor.u32 1.1754944e-38, %v1297
    %v1299 = vsel %vm1296, %v1298, %v1294
    %v1300 = vmul.f32 1.0, %v1299
    %v1301 = vrcp.pop %v1284
    %v1302 = vmul.f32 %v1284, %v1301
    %v1303 = vsub.f32 1.0, %v1302
    %v1304 = vmul.f32 %v1301, %v1303
    %v1305 = vadd.f32 %v1301, %v1304
    %vm1306 = vweird.f32 %v1284
    %vm1307 = vweird.f32 %v1301
    %vm1308 = vmor %vm1306, %vm1307
    %v1309 = vsel %vm1308, %v1301, %v1305
    %v1310 = vand.u32 2147483647, %v1284
    %vm1311 = vcmp.eq.f32.partialorder %v1310, 8.507059e+37
    %v1312 = vand.u32 %v1284, 2147483648
    %v1313 = vor.u32 1.1754944e-38, %v1312
    %v1314 = vsel %vm1311, %v1313, %v1309
    %v1315 = vmul.f32 1.0, %v1314
    %v1316 = vrcp.pop %v1285
    %v1317 = vmul.f32 %v1285, %v1316
    %v1318 = vsub.f32 1.0, %v1317
    %v1319 = vmul.f32 %v1316, %v1318
    %v1320 = vadd.f32 %v1316, %v1319
    %vm1321 = vweird.f32 %v1285
    %vm1322 = vweird.f32 %v1316
    %vm1323 = vmor %vm1321, %vm1322
    %v1324 = vsel %vm1323, %v1316, %v1320
    %v1325 = vand.u32 2147483647, %v1285
    %vm1326 = vcmp.eq.f32.partialorder %v1325, 8.507059e+37
    %v1327 = vand.u32 %v1285, 2147483648
    %v1328 = vor.u32 1.1754944e-38, %v1327
    %v1329 = vsel %vm1326, %v1328, %v1324
    %v1330 = vmul.f32 1.0, %v1329
    %v1331 = vtanh.pop %v1273
    %v1332 = vmul.f32 %v1315, %v1118
    %v1333 = vmul.f32 %v1300, %v1331
    %v1334 = vadd.f32 %v1332, %v1333
    %v1335 = vtanh.pop %v1334
    %v1336 = vmul.f32 %v1330, %v1335
    %1337 = vst [vmem:[#allocation3 + $0x10] sm:$0xff] %v1336
    %v1338 = vld [vmem:[#allocation2 + $0x60] sm:$0xff]
    %v1339 = vld [vmem:[#allocation2 + $0x68] sm:$0xff]
    %v1340 = vld [vmem:[#allocation2 + $0x70] sm:$0xff]
    %v1341 = vld [vmem:[#allocation2 + $0x78] sm:$0xff]
    %v1342 = vld [vmem:[#allocation4] sm:$0xff]
    %v1343 = vld [vmem:[#allocation4 + $0x8] sm:$0xff]
    %v1344 = vld [vmem:[#allocation4 + $0x10] sm:$0xff]
    %v1345 = vld [vmem:[#allocation4 + $0x18] sm:$0xff]
    %v1346 = vld [vmem:[#allocation4 + $0x20] sm:$0xff]
    %v1347 = vld [vmem:[#allocation4 + $0x28] sm:$0xff]
    %v1348 = vld [vmem:[#allocation4 + $0x30] sm:$0xff]
    %v1349 = vld [vmem:[#allocation4 + $0x38] sm:$0xff]
    %v1350 = vld [vmem:[#allocation4 + $0x40] sm:$0xff]
    %v1351 = vld [vmem:[#allocation4 + $0x48] sm:$0xff]
    %v1352 = vld [vmem:[#allocation4 + $0x50] sm:$0xff]
    %v1353 = vld [vmem:[#allocation4 + $0x58] sm:$0xff]
    %v1354 = vld [vmem:[#allocation4 + $0x60] sm:$0xff]
    %v1355 = vld [vmem:[#allocation4 + $0x68] sm:$0xff]
    %v1356 = vld [vmem:[#allocation4 + $0x70] sm:$0xff]
    %v1357 = vld [vmem:[#allocation4 + $0x78] sm:$0xff]
    %v1358 = vld [vmem:[#allocation4 + $0x80] sm:$0xff]
    %v1359 = vld [vmem:[#allocation4 + $0x88] sm:$0xff]
    %v1360 = vld [vmem:[#allocation4 + $0x90] sm:$0xff]
    %v1361 = vld [vmem:[#allocation4 + $0x98] sm:$0xff]
    %v1362 = vld [vmem:[#allocation4 + $0xa0] sm:$0xff]
    %v1363 = vld [vmem:[#allocation4 + $0xa8] sm:$0xff]
    %v1364 = vld [vmem:[#allocation4 + $0xb0] sm:$0xff]
    %v1365 = vld [vmem:[#allocation4 + $0xb8] sm:$0xff]
    %v1366 = vld [vmem:[#allocation4 + $0xc0] sm:$0xff]
    %v1367 = vld [vmem:[#allocation4 + $0xc8] sm:$0xff]
    %v1368 = vld [vmem:[#allocation4 + $0xd0] sm:$0xff]
    %v1369 = vld [vmem:[#allocation4 + $0xd8] sm:$0xff]
    %v1370 = vld [vmem:[#allocation4 + $0xe0] sm:$0xff]
    %v1371 = vld [vmem:[#allocation4 + $0xe8] sm:$0xff]
    %v1372 = vld [vmem:[#allocation4 + $0xf0] sm:$0xff]
    %v1373 = vld [vmem:[#allocation4 + $0xf8] sm:$0xff]
    %v1374 = vld [vmem:[#allocation4 + $0x100] sm:$0xff]
    %v1375 = vld [vmem:[#allocation4 + $0x108] sm:$0xff]
    %v1376 = vld [vmem:[#allocation4 + $0x110] sm:$0xff]
    %v1377 = vld [vmem:[#allocation4 + $0x118] sm:$0xff]
    %v1378 = vld [vmem:[#allocation4 + $0x120] sm:$0xff]
    %v1379 = vld [vmem:[#allocation4 + $0x128] sm:$0xff]
    %v1380 = vld [vmem:[#allocation4 + $0x130] sm:$0xff]
    %v1381 = vld [vmem:[#allocation4 + $0x138] sm:$0xff]
    %v1382 = vld [vmem:[#allocation4 + $0x140] sm:$0xff]
    %v1383 = vld [vmem:[#allocation4 + $0x148] sm:$0xff]
    %v1384 = vld [vmem:[#allocation4 + $0x150] sm:$0xff]
    %v1385 = vld [vmem:[#allocation4 + $0x158] sm:$0xff]
    %v1386 = vld [vmem:[#allocation4 + $0x160] sm:$0xff]
    %v1387 = vld [vmem:[#allocation4 + $0x168] sm:$0xff]
    %v1388 = vld [vmem:[#allocation4 + $0x170] sm:$0xff]
    %v1389 = vld [vmem:[#allocation4 + $0x178] sm:$0xff]
    %v1390 = vld [vmem:[#allocation4 + $0x180] sm:$0xff]
    %v1391 = vld [vmem:[#allocation4 + $0x188] sm:$0xff]
    %v1392 = vld [vmem:[#allocation4 + $0x190] sm:$0xff]
    %v1393 = vld [vmem:[#allocation4 + $0x198] sm:$0xff]
    %v1394 = vld [vmem:[#allocation4 + $0x1a0] sm:$0xff]
    %v1395 = vld [vmem:[#allocation4 + $0x1a8] sm:$0xff]
    %v1396 = vld [vmem:[#allocation4 + $0x1b0] sm:$0xff]
    %v1397 = vld [vmem:[#allocation4 + $0x1b8] sm:$0xff]
    %v1398 = vld [vmem:[#allocation4 + $0x1c0] sm:$0xff]
    %v1399 = vld [vmem:[#allocation4 + $0x1c8] sm:$0xff]
    %v1400 = vld [vmem:[#allocation4 + $0x1d0] sm:$0xff]
    %v1401 = vld [vmem:[#allocation4 + $0x1d8] sm:$0xff]
    %v1402 = vld [vmem:[#allocation4 + $0x1e0] sm:$0xff]
    %v1403 = vld [vmem:[#allocation4 + $0x1e8] sm:$0xff]
    %v1404 = vld [vmem:[#allocation4 + $0x1f0] sm:$0xff]
    %v1405 = vld [vmem:[#allocation4 + $0x1f8] sm:$0xff]
    %1406 = vmatpush.msra.mxu0 %v1402
    %1407 = vmatpush.msra.mxu0 %v1398
    %1408 = vmatpush.msra.mxu0 %v1394
    %1409 = vmatpush.msra.mxu0 %v1390
    %1410 = vmatpush.msra.mxu0 %v1386
    %1411 = vmatpush.msra.mxu0 %v1382
    %1412 = vmatpush.msra.mxu0 %v1378
    %1413 = vmatpush.msra.mxu0 %v1374
    %1414 = vmatpush.msra.mxu0 %v1370
    %1415 = vmatpush.msra.mxu0 %v1366
    %1416 = vmatpush.msra.mxu0 %v1362
    %1417 = vmatpush.msra.mxu0 %v1358
    %1418 = vmatpush.msra.mxu0 %v1354
    %1419 = vmatpush.msra.mxu0 %v1350
    %1420 = vmatpush.msra.mxu0 %v1346
    %1421 = vmatpush.msra.mxu0 %v1342
    %1422 = vmatmul.f32.gmra.mxu0 %v1336
    %v1423 = vpop.f32.mrf.mxu0
    %v1424 = vadd.f32 0.0, %v1423
    %1425 = vdwg.mxu0
    %1426 = vmatpush.msra.mxu0 %v1403
    %1427 = vmatpush.msra.mxu0 %v1399
    %1428 = vmatpush.msra.mxu0 %v1395
    %1429 = vmatpush.msra.mxu0 %v1391
    %1430 = vmatpush.msra.mxu0 %v1387
    %1431 = vmatpush.msra.mxu0 %v1383
    %1432 = vmatpush.msra.mxu0 %v1379
    %1433 = vmatpush.msra.mxu0 %v1375
    %1434 = vmatpush.msra.mxu0 %v1371
    %1435 = vmatpush.msra.mxu0 %v1367
    %1436 = vmatpush.msra.mxu0 %v1363
    %1437 = vmatpush.msra.mxu0 %v1359
    %1438 = vmatpush.msra.mxu0 %v1355
    %1439 = vmatpush.msra.mxu0 %v1351
    %1440 = vmatpush.msra.mxu0 %v1347
    %1441 = vmatpush.msra.mxu0 %v1343
    %1442 = vmatmul.f32.gmra.mxu0 %v1336
    %v1443 = vpop.f32.mrf.mxu0
    %v1444 = vadd.f32 0.0, %v1443
    %1445 = vdwg.mxu0
    %1446 = vmatpush.msra.mxu0 %v1404
    %1447 = vmatpush.msra.mxu0 %v1400
    %1448 = vmatpush.msra.mxu0 %v1396
    %1449 = vmatpush.msra.mxu0 %v1392
    %1450 = vmatpush.msra.mxu0 %v1388
    %1451 = vmatpush.msra.mxu0 %v1384
    %1452 = vmatpush.msra.mxu0 %v1380
    %1453 = vmatpush.msra.mxu0 %v1376
    %1454 = vmatpush.msra.mxu0 %v1372
    %1455 = vmatpush.msra.mxu0 %v1368
    %1456 = vmatpush.msra.mxu0 %v1364
    %1457 = vmatpush.msra.mxu0 %v1360
    %1458 = vmatpush.msra.mxu0 %v1356
    %1459 = vmatpush.msra.mxu0 %v1352
    %1460 = vmatpush.msra.mxu0 %v1348
    %1461 = vmatpush.msra.mxu0 %v1344
    %1462 = vmatmul.f32.gmra.mxu0 %v1336
    %v1463 = vpop.f32.mrf.mxu0
    %v1464 = vadd.f32 0.0, %v1463
    %1465 = vdwg.mxu0
    %1466 = vmatpush.msra.mxu0 %v1405
    %1467 = vmatpush.msra.mxu0 %v1401
    %1468 = vmatpush.msra.mxu0 %v1397
    %1469 = vmatpush.msra.mxu0 %v1393
    %1470 = vmatpush.msra.mxu0 %v1389
    %1471 = vmatpush.msra.mxu0 %v1385
    %1472 = vmatpush.msra.mxu0 %v1381
    %1473 = vmatpush.msra.mxu0 %v1377
    %1474 = vmatpush.msra.mxu0 %v1373
    %1475 = vmatpush.msra.mxu0 %v1369
    %1476 = vmatpush.msra.mxu0 %v1365
    %1477 = vmatpush.msra.mxu0 %v1361
    %1478 = vmatpush.msra.mxu0 %v1357
    %1479 = vmatpush.msra.mxu0 %v1353
    %1480 = vmatpush.msra.mxu0 %v1349
    %1481 = vmatpush.msra.mxu0 %v1345
    %1482 = vmatmul.f32.gmra.mxu0 %v1336
    %v1483 = vpop.f32.mrf.mxu0
    %v1484 = vadd.f32 0.0, %v1483
    %1485 = vdwg.mxu0
    %v1486 = vadd.f32 %v1338, %v1424
    %v1487 = vadd.f32 %v1339, %v1444
    %v1488 = vadd.f32 %v1340, %v1464
    %v1489 = vadd.f32 %v1341, %v1484
    %v1490 = vxor.u32 %v1486, 2147483648
    %v1491 = vxor.u32 %v1487, 2147483648
    %v1492 = vxor.u32 %v1488, 2147483648
    %v1493 = vmul.f32 %v1490, 1.442695
    %v1494 = vpow.pop %v1493
    %v1495 = vmul.f32 %v1491, 1.442695
    %v1496 = vpow.pop %v1495
    %v1497 = vmul.f32 %v1492, 1.442695
    %v1498 = vpow.pop %v1497
    %v1499 = vadd.f32 %v1494, 1.0
    %v1500 = vadd.f32 %v1496, 1.0
    %v1501 = vadd.f32 %v1498, 1.0
    %v1502 = vrcp.pop %v1499
    %v1503 = vmul.f32 %v1499, %v1502
    %v1504 = vsub.f32 1.0, %v1503
    %v1505 = vmul.f32 %v1502, %v1504
    %v1506 = vadd.f32 %v1502, %v1505
    %vm1507 = vweird.f32 %v1499
    %vm1508 = vweird.f32 %v1502
    %vm1509 = vmor %vm1507, %vm1508
    %v1510 = vsel %vm1509, %v1502, %v1506
    %v1511 = vand.u32 2147483647, %v1499
    %vm1512 = vcmp.eq.f32.partialorder %v1511, 8.507059e+37
    %v1513 = vand.u32 %v1499, 2147483648
    %v1514 = vor.u32 1.1754944e-38, %v1513
    %v1515 = vsel %vm1512, %v1514, %v1510
    %v1516 = vmul.f32 1.0, %v1515
    %v1517 = vrcp.pop %v1500
    %v1518 = vmul.f32 %v1500, %v1517
    %v1519 = vsub.f32 1.0, %v1518
    %v1520 = vmul.f32 %v1517, %v1519
    %v1521 = vadd.f32 %v1517, %v1520
    %vm1522 = vweird.f32 %v1500
    %vm1523 = vweird.f32 %v1517
    %vm1524 = vmor %vm1522, %vm1523
    %v1525 = vsel %vm1524, %v1517, %v1521
    %v1526 = vand.u32 2147483647, %v1500
    %vm1527 = vcmp.eq.f32.partialorder %v1526, 8.507059e+37
    %v1528 = vand.u32 %v1500, 2147483648
    %v1529 = vor.u32 1.1754944e-38, %v1528
    %v1530 = vsel %vm1527, %v1529, %v1525
    %v1531 = vmul.f32 1.0, %v1530
    %v1532 = vrcp.pop %v1501
    %v1533 = vmul.f32 %v1501, %v1532
    %v1534 = vsub.f32 1.0, %v1533
    %v1535 = vmul.f32 %v1532, %v1534
    %v1536 = vadd.f32 %v1532, %v1535
    %vm1537 = vweird.f32 %v1501
    %vm1538 = vweird.f32 %v1532
    %vm1539 = vmor %vm1537, %vm1538
    %v1540 = vsel %vm1539, %v1532, %v1536
    %v1541 = vand.u32 2147483647, %v1501
    %vm1542 = vcmp.eq.f32.partialorder %v1541, 8.507059e+37
    %v1543 = vand.u32 %v1501, 2147483648
    %v1544 = vor.u32 1.1754944e-38, %v1543
    %v1545 = vsel %vm1542, %v1544, %v1540
    %v1546 = vmul.f32 1.0, %v1545
    %v1547 = vtanh.pop %v1489
    %v1548 = vmul.f32 %v1531, %v1334
    %v1549 = vmul.f32 %v1516, %v1547
    %v1550 = vadd.f32 %v1548, %v1549
    %v1551 = vtanh.pop %v1550
    %v1552 = vmul.f32 %v1546, %v1551
    %1553 = vst [vmem:[#allocation3 + $0x18] sm:$0xff] %v1552
    %v1554 = vld [vmem:[#allocation2 + $0x80] sm:$0xff]
    %v1555 = vld [vmem:[#allocation2 + $0x88] sm:$0xff]
    %v1556 = vld [vmem:[#allocation2 + $0x90] sm:$0xff]
    %v1557 = vld [vmem:[#allocation2 + $0x98] sm:$0xff]
    %v1558 = vld [vmem:[#allocation4] sm:$0xff]
    %v1559 = vld [vmem:[#allocation4 + $0x8] sm:$0xff]
    %v1560 = vld [vmem:[#allocation4 + $0x10] sm:$0xff]
    %v1561 = vld [vmem:[#allocation4 + $0x18] sm:$0xff]
    %v1562 = vld [vmem:[#allocation4 + $0x20] sm:$0xff]
    %v1563 = vld [vmem:[#allocation4 + $0x28] sm:$0xff]
    %v1564 = vld [vmem:[#allocation4 + $0x30] sm:$0xff]
    %v1565 = vld [vmem:[#allocation4 + $0x38] sm:$0xff]
    %v1566 = vld [vmem:[#allocation4 + $0x40] sm:$0xff]
    %v1567 = vld [vmem:[#allocation4 + $0x48] sm:$0xff]
    %v1568 = vld [vmem:[#allocation4 + $0x50] sm:$0xff]
    %v1569 = vld [vmem:[#allocation4 + $0x58] sm:$0xff]
    %v1570 = vld [vmem:[#allocation4 + $0x60] sm:$0xff]
    %v1571 = vld [vmem:[#allocation4 + $0x68] sm:$0xff]
    %v1572 = vld [vmem:[#allocation4 + $0x70] sm:$0xff]
    %v1573 = vld [vmem:[#allocation4 + $0x78] sm:$0xff]
    %v1574 = vld [vmem:[#allocation4 + $0x80] sm:$0xff]
    %v1575 = vld [vmem:[#allocation4 + $0x88] sm:$0xff]
    %v1576 = vld [vmem:[#allocation4 + $0x90] sm:$0xff]
    %v1577 = vld [vmem:[#allocation4 + $0x98] sm:$0xff]
    %v1578 = vld [vmem:[#allocation4 + $0xa0] sm:$0xff]
    %v1579 = vld [vmem:[#allocation4 + $0xa8] sm:$0xff]
    %v1580 = vld [vmem:[#allocation4 + $0xb0] sm:$0xff]
    %v1581 = vld [vmem:[#allocation4 + $0xb8] sm:$0xff]
    %v1582 = vld [vmem:[#allocation4 + $0xc0] sm:$0xff]
    %v1583 = vld [vmem:[#allocation4 + $0xc8] sm:$0xff]
    %v1584 = vld [vmem:[#allocation4 + $0xd0] sm:$0xff]
    %v1585 = vld [vmem:[#allocation4 + $0xd8] sm:$0xff]
    %v1586 = vld [vmem:[#allocation4 + $0xe0] sm:$0xff]
    %v1587 = vld [vmem:[#allocation4 + $0xe8] sm:$0xff]
    %v1588 = vld [vmem:[#allocation4 + $0xf0] sm:$0xff]
    %v1589 = vld [vmem:[#allocation4 + $0xf8] sm:$0xff]
    %v1590 = vld [vmem:[#allocation4 + $0x100] sm:$0xff]
    %v1591 = vld [vmem:[#allocation4 + $0x108] sm:$0xff]
    %v1592 = vld [vmem:[#allocation4 + $0x110] sm:$0xff]
    %v1593 = vld [vmem:[#allocation4 + $0x118] sm:$0xff]
    %v1594 = vld [vmem:[#allocation4 + $0x120] sm:$0xff]
    %v1595 = vld [vmem:[#allocation4 + $0x128] sm:$0xff]
    %v1596 = vld [vmem:[#allocation4 + $0x130] sm:$0xff]
    %v1597 = vld [vmem:[#allocation4 + $0x138] sm:$0xff]
    %v1598 = vld [vmem:[#allocation4 + $0x140] sm:$0xff]
    %v1599 = vld [vmem:[#allocation4 + $0x148] sm:$0xff]
    %v1600 = vld [vmem:[#allocation4 + $0x150] sm:$0xff]
    %v1601 = vld [vmem:[#allocation4 + $0x158] sm:$0xff]
    %v1602 = vld [vmem:[#allocation4 + $0x160] sm:$0xff]
    %v1603 = vld [vmem:[#allocation4 + $0x168] sm:$0xff]
    %v1604 = vld [vmem:[#allocation4 + $0x170] sm:$0xff]
    %v1605 = vld [vmem:[#allocation4 + $0x178] sm:$0xff]
    %v1606 = vld [vmem:[#allocation4 + $0x180] sm:$0xff]
    %v1607 = vld [vmem:[#allocation4 + $0x188] sm:$0xff]
    %v1608 = vld [vmem:[#allocation4 + $0x190] sm:$0xff]
    %v1609 = vld [vmem:[#allocation4 + $0x198] sm:$0xff]
    %v1610 = vld [vmem:[#allocation4 + $0x1a0] sm:$0xff]
    %v1611 = vld [vmem:[#allocation4 + $0x1a8] sm:$0xff]
    %v1612 = vld [vmem:[#allocation4 + $0x1b0] sm:$0xff]
    %v1613 = vld [vmem:[#allocation4 + $0x1b8] sm:$0xff]
    %v1614 = vld [vmem:[#allocation4 + $0x1c0] sm:$0xff]
    %v1615 = vld [vmem:[#allocation4 + $0x1c8] sm:$0xff]
    %v1616 = vld [vmem:[#allocation4 + $0x1d0] sm:$0xff]
    %v1617 = vld [vmem:[#allocation4 + $0x1d8] sm:$0xff]
    %v1618 = vld [vmem:[#allocation4 + $0x1e0] sm:$0xff]
    %v1619 = vld [vmem:[#allocation4 + $0x1e8] sm:$0xff]
    %v1620 = vld [vmem:[#allocation4 + $0x1f0] sm:$0xff]
    %v1621 = vld [vmem:[#allocation4 + $0x1f8] sm:$0xff]
    %1622 = vmatpush.msra.mxu0 %v1618
    %1623 = vmatpush.msra.mxu0 %v1614
    %1624 = vmatpush.msra.mxu0 %v1610
    %1625 = vmatpush.msra.mxu0 %v1606
    %1626 = vmatpush.msra.mxu0 %v1602
    %1627 = vmatpush.msra.mxu0 %v1598
    %1628 = vmatpush.msra.mxu0 %v1594
    %1629 = vmatpush.msra.mxu0 %v1590
    %1630 = vmatpush.msra.mxu0 %v1586
    %1631 = vmatpush.msra.mxu0 %v1582
    %1632 = vmatpush.msra.mxu0 %v1578
    %1633 = vmatpush.msra.mxu0 %v1574
    %1634 = vmatpush.msra.mxu0 %v1570
    %1635 = vmatpush.msra.mxu0 %v1566
    %1636 = vmatpush.msra.mxu0 %v1562
    %1637 = vmatpush.msra.mxu0 %v1558
    %1638 = vmatmul.f32.gmra.mxu0 %v1552
    %v1639 = vpop.f32.mrf.mxu0
    %v1640 = vadd.f32 0.0, %v1639
    %1641 = vdwg.mxu0
    %1642 = vmatpush.msra.mxu0 %v1619
    %1643 = vmatpush.msra.mxu0 %v1615
    %1644 = vmatpush.msra.mxu0 %v1611
    %1645 = vmatpush.msra.mxu0 %v1607
    %1646 = vmatpush.msra.mxu0 %v1603
    %1647 = vmatpush.msra.mxu0 %v1599
    %1648 = vmatpush.msra.mxu0 %v1595
    %1649 = vmatpush.msra.mxu0 %v1591
    %1650 = vmatpush.msra.mxu0 %v1587
    %1651 = vmatpush.msra.mxu0 %v1583
    %1652 = vmatpush.msra.mxu0 %v1579
    %1653 = vmatpush.msra.mxu0 %v1575
    %1654 = vmatpush.msra.mxu0 %v1571
    %1655 = vmatpush.msra.mxu0 %v1567
    %1656 = vmatpush.msra.mxu0 %v1563
    %1657 = vmatpush.msra.mxu0 %v1559
    %1658 = vmatmul.f32.gmra.mxu0 %v1552
    %v1659 = vpop.f32.mrf.mxu0
    %v1660 = vadd.f32 0.0, %v1659
    %1661 = vdwg.mxu0
    %1662 = vmatpush.msra.mxu0 %v1620
    %1663 = vmatpush.msra.mxu0 %v1616
    %1664 = vmatpush.msra.mxu0 %v1612
    %1665 = vmatpush.msra.mxu0 %v1608
    %1666 = vmatpush.msra.mxu0 %v1604
    %1667 = vmatpush.msra.mxu0 %v1600
    %1668 = vmatpush.msra.mxu0 %v1596
    %1669 = vmatpush.msra.mxu0 %v1592
    %1670 = vmatpush.msra.mxu0 %v1588
    %1671 = vmatpush.msra.mxu0 %v1584
    %1672 = vmatpush.msra.mxu0 %v1580
    %1673 = vmatpush.msra.mxu0 %v1576
    %1674 = vmatpush.msra.mxu0 %v1572
    %1675 = vmatpush.msra.mxu0 %v1568
    %1676 = vmatpush.msra.mxu0 %v1564
    %1677 = vmatpush.msra.mxu0 %v1560
    %1678 = vmatmul.f32.gmra.mxu0 %v1552
    %v1679 = vpop.f32.mrf.mxu0
    %v1680 = vadd.f32 0.0, %v1679
    %1681 = vdwg.mxu0
    %1682 = vmatpush.msra.mxu0 %v1621
    %1683 = vmatpush.msra.mxu0 %v1617
    %1684 = vmatpush.msra.mxu0 %v1613
    %1685 = vmatpush.msra.mxu0 %v1609
    %1686 = vmatpush.msra.mxu0 %v1605
    %1687 = vmatpush.msra.mxu0 %v1601
    %1688 = vmatpush.msra.mxu0 %v1597
    %1689 = vmatpush.msra.mxu0 %v1593
    %1690 = vmatpush.msra.mxu0 %v1589
    %1691 = vmatpush.msra.mxu0 %v1585
    %1692 = vmatpush.msra.mxu0 %v1581
    %1693 = vmatpush.msra.mxu0 %v1577
    %1694 = vmatpush.msra.mxu0 %v1573
    %1695 = vmatpush.msra.mxu0 %v1569
    %1696 = vmatpush.msra.mxu0 %v1565
    %1697 = vmatpush.msra.mxu0 %v1561
    %1698 = vmatmul.f32.gmra.mxu0 %v1552
    %v1699 = vpop.f32.mrf.mxu0
    %v1700 = vadd.f32 0.0, %v1699
    %1701 = vdwg.mxu0
    %v1702 = vadd.f32 %v1554, %v1640
    %v1703 = vadd.f32 %v1555, %v1660
    %v1704 = vadd.f32 %v1556, %v1680
    %v1705 = vadd.f32 %v1557, %v1700
    %v1706 = vxor.u32 %v1702, 2147483648
    %v1707 = vxor.u32 %v1703, 2147483648
    %v1708 = vxor.u32 %v1704, 2147483648
    %v1709 = vmul.f32 %v1706, 1.442695
    %v1710 = vpow.pop %v1709
    %v1711 = vmul.f32 %v1707, 1.442695
    %v1712 = vpow.pop %v1711
    %v1713 = vmul.f32 %v1708, 1.442695
    %v1714 = vpow.pop %v1713
    %v1715 = vadd.f32 %v1710, 1.0
    %v1716 = vadd.f32 %v1712, 1.0
    %v1717 = vadd.f32 %v1714, 1.0
    %v1718 = vrcp.pop %v1715
    %v1719 = vmul.f32 %v1715, %v1718
    %v1720 = vsub.f32 1.0, %v1719
    %v1721 = vmul.f32 %v1718, %v1720
    %v1722 = vadd.f32 %v1718, %v1721
    %vm1723 = vweird.f32 %v1715
    %vm1724 = vweird.f32 %v1718
    %vm1725 = vmor %vm1723, %vm1724
    %v1726 = vsel %vm1725, %v1718, %v1722
    %v1727 = vand.u32 2147483647, %v1715
    %vm1728 = vcmp.eq.f32.partialorder %v1727, 8.507059e+37
    %v1729 = vand.u32 %v1715, 2147483648
    %v1730 = vor.u32 1.1754944e-38, %v1729
    %v1731 = vsel %vm1728, %v1730, %v1726
    %v1732 = vmul.f32 1.0, %v1731
    %v1733 = vrcp.pop %v1716
    %v1734 = vmul.f32 %v1716, %v1733
    %v1735 = vsub.f32 1.0, %v1734
    %v1736 = vmul.f32 %v1733, %v1735
    %v1737 = vadd.f32 %v1733, %v1736
    %vm1738 = vweird.f32 %v1716
    %vm1739 = vweird.f32 %v1733
    %vm1740 = vmor %vm1738, %vm1739
    %v1741 = vsel %vm1740, %v1733, %v1737
    %v1742 = vand.u32 2147483647, %v1716
    %vm1743 = vcmp.eq.f32.partialorder %v1742, 8.507059e+37
    %v1744 = vand.u32 %v1716, 2147483648
    %v1745 = vor.u32 1.1754944e-38, %v1744
    %v1746 = vsel %vm1743, %v1745, %v1741
    %v1747 = vmul.f32 1.0, %v1746
    %v1748 = vrcp.pop %v1717
    %v1749 = vmul.f32 %v1717, %v1748
    %v1750 = vsub.f32 1.0, %v1749
    %v1751 = vmul.f32 %v1748, %v1750
    %v1752 = vadd.f32 %v1748, %v1751
    %vm1753 = vweird.f32 %v1717
    %vm1754 = vweird.f32 %v1748
    %vm1755 = vmor %vm1753, %vm1754
    %v1756 = vsel %vm1755, %v1748, %v1752
    %v1757 = vand.u32 2147483647, %v1717
    %vm1758 = vcmp.eq.f32.partialorder %v1757, 8.507059e+37
    %v1759 = vand.u32 %v1717, 2147483648
    %v1760 = vor.u32 1.1754944e-38, %v1759
    %v1761 = vsel %vm1758, %v1760, %v1756
    %v1762 = vmul.f32 1.0, %v1761
    %v1763 = vtanh.pop %v1705
    %v1764 = vmul.f32 %v1747, %v1550
    %v1765 = vmul.f32 %v1732, %v1763
    %v1766 = vadd.f32 %v1764, %v1765
    %v1767 = vtanh.pop %v1766
    %v1768 = vmul.f32 %v1762, %v1767
    %1769 = vst [vmem:[#allocation3 + $0x20] sm:$0xff] %v1768
    %v1770 = vld [vmem:[#allocation2 + $0xa0] sm:$0xff]
    %v1771 = vld [vmem:[#allocation2 + $0xa8] sm:$0xff]
    %v1772 = vld [vmem:[#allocation2 + $0xb0] sm:$0xff]
    %v1773 = vld [vmem:[#allocation2 + $0xb8] sm:$0xff]
    %v1774 = vld [vmem:[#allocation4] sm:$0xff]
    %v1775 = vld [vmem:[#allocation4 + $0x8] sm:$0xff]
    %v1776 = vld [vmem:[#allocation4 + $0x10] sm:$0xff]
    %v1777 = vld [vmem:[#allocation4 + $0x18] sm:$0xff]
    %v1778 = vld [vmem:[#allocation4 + $0x20] sm:$0xff]
    %v1779 = vld [vmem:[#allocation4 + $0x28] sm:$0xff]
    %v1780 = vld [vmem:[#allocation4 + $0x30] sm:$0xff]
    %v1781 = vld [vmem:[#allocation4 + $0x38] sm:$0xff]
    %v1782 = vld [vmem:[#allocation4 + $0x40] sm:$0xff]
    %v1783 = vld [vmem:[#allocation4 + $0x48] sm:$0xff]
    %v1784 = vld [vmem:[#allocation4 + $0x50] sm:$0xff]
    %v1785 = vld [vmem:[#allocation4 + $0x58] sm:$0xff]
    %v1786 = vld [vmem:[#allocation4 + $0x60] sm:$0xff]
    %v1787 = vld [vmem:[#allocation4 + $0x68] sm:$0xff]
    %v1788 = vld [vmem:[#allocation4 + $0x70] sm:$0xff]
    %v1789 = vld [vmem:[#allocation4 + $0x78] sm:$0xff]
    %v1790 = vld [vmem:[#allocation4 + $0x80] sm:$0xff]
    %v1791 = vld [vmem:[#allocation4 + $0x88] sm:$0xff]
    %v1792 = vld [vmem:[#allocation4 + $0x90] sm:$0xff]
    %v1793 = vld [vmem:[#allocation4 + $0x98] sm:$0xff]
    %v1794 = vld [vmem:[#allocation4 + $0xa0] sm:$0xff]
    %v1795 = vld [vmem:[#allocation4 + $0xa8] sm:$0xff]
    %v1796 = vld [vmem:[#allocation4 + $0xb0] sm:$0xff]
    %v1797 = vld [vmem:[#allocation4 + $0xb8] sm:$0xff]
    %v1798 = vld [vmem:[#allocation4 + $0xc0] sm:$0xff]
    %v1799 = vld [vmem:[#allocation4 + $0xc8] sm:$0xff]
    %v1800 = vld [vmem:[#allocation4 + $0xd0] sm:$0xff]
    %v1801 = vld [vmem:[#allocation4 + $0xd8] sm:$0xff]
    %v1802 = vld [vmem:[#allocation4 + $0xe0] sm:$0xff]
    %v1803 = vld [vmem:[#allocation4 + $0xe8] sm:$0xff]
    %v1804 = vld [vmem:[#allocation4 + $0xf0] sm:$0xff]
    %v1805 = vld [vmem:[#allocation4 + $0xf8] sm:$0xff]
    %v1806 = vld [vmem:[#allocation4 + $0x100] sm:$0xff]
    %v1807 = vld [vmem:[#allocation4 + $0x108] sm:$0xff]
    %v1808 = vld [vmem:[#allocation4 + $0x110] sm:$0xff]
    %v1809 = vld [vmem:[#allocation4 + $0x118] sm:$0xff]
    %v1810 = vld [vmem:[#allocation4 + $0x120] sm:$0xff]
    %v1811 = vld [vmem:[#allocation4 + $0x128] sm:$0xff]
    %v1812 = vld [vmem:[#allocation4 + $0x130] sm:$0xff]
    %v1813 = vld [vmem:[#allocation4 + $0x138] sm:$0xff]
    %v1814 = vld [vmem:[#allocation4 + $0x140] sm:$0xff]
    %v1815 = vld [vmem:[#allocation4 + $0x148] sm:$0xff]
    %v1816 = vld [vmem:[#allocation4 + $0x150] sm:$0xff]
    %v1817 = vld [vmem:[#allocation4 + $0x158] sm:$0xff]
    %v1818 = vld [vmem:[#allocation4 + $0x160] sm:$0xff]
    %v1819 = vld [vmem:[#allocation4 + $0x168] sm:$0xff]
    %v1820 = vld [vmem:[#allocation4 + $0x170] sm:$0xff]
    %v1821 = vld [vmem:[#allocation4 + $0x178] sm:$0xff]
    %v1822 = vld [vmem:[#allocation4 + $0x180] sm:$0xff]
    %v1823 = vld [vmem:[#allocation4 + $0x188] sm:$0xff]
    %v1824 = vld [vmem:[#allocation4 + $0x190] sm:$0xff]
    %v1825 = vld [vmem:[#allocation4 + $0x198] sm:$0xff]
    %v1826 = vld [vmem:[#allocation4 + $0x1a0] sm:$0xff]
    %v1827 = vld [vmem:[#allocation4 + $0x1a8] sm:$0xff]
    %v1828 = vld [vmem:[#allocation4 + $0x1b0] sm:$0xff]
    %v1829 = vld [vmem:[#allocation4 + $0x1b8] sm:$0xff]
    %v1830 = vld [vmem:[#allocation4 + $0x1c0] sm:$0xff]
    %v1831 = vld [vmem:[#allocation4 + $0x1c8] sm:$0xff]
    %v1832 = vld [vmem:[#allocation4 + $0x1d0] sm:$0xff]
    %v1833 = vld [vmem:[#allocation4 + $0x1d8] sm:$0xff]
    %v1834 = vld [vmem:[#allocation4 + $0x1e0] sm:$0xff]
    %v1835 = vld [vmem:[#allocation4 + $0x1e8] sm:$0xff]
    %v1836 = vld [vmem:[#allocation4 + $0x1f0] sm:$0xff]
    %v1837 = vld [vmem:[#allocation4 + $0x1f8] sm:$0xff]
    %1838 = vmatpush.msra.mxu0 %v1834
    %1839 = vmatpush.msra.mxu0 %v1830
    %1840 = vmatpush.msra.mxu0 %v1826
    %1841 = vmatpush.msra.mxu0 %v1822
    %1842 = vmatpush.msra.mxu0 %v1818
    %1843 = vmatpush.msra.mxu0 %v1814
    %1844 = vmatpush.msra.mxu0 %v1810
    %1845 = vmatpush.msra.mxu0 %v1806
    %1846 = vmatpush.msra.mxu0 %v1802
    %1847 = vmatpush.msra.mxu0 %v1798
    %1848 = vmatpush.msra.mxu0 %v1794
    %1849 = vmatpush.msra.mxu0 %v1790
    %1850 = vmatpush.msra.mxu0 %v1786
    %1851 = vmatpush.msra.mxu0 %v1782
    %1852 = vmatpush.msra.mxu0 %v1778
    %1853 = vmatpush.msra.mxu0 %v1774
    %1854 = vmatmul.f32.gmra.mxu0 %v1768
    %v1855 = vpop.f32.mrf.mxu0
    %v1856 = vadd.f32 0.0, %v1855
    %1857 = vdwg.mxu0
    %1858 = vmatpush.msra.mxu0 %v1835
    %1859 = vmatpush.msra.mxu0 %v1831
    %1860 = vmatpush.msra.mxu0 %v1827
    %1861 = vmatpush.msra.mxu0 %v1823
    %1862 = vmatpush.msra.mxu0 %v1819
    %1863 = vmatpush.msra.mxu0 %v1815
    %1864 = vmatpush.msra.mxu0 %v1811
    %1865 = vmatpush.msra.mxu0 %v1807
    %1866 = vmatpush.msra.mxu0 %v1803
    %1867 = vmatpush.msra.mxu0 %v1799
    %1868 = vmatpush.msra.mxu0 %v1795
    %1869 = vmatpush.msra.mxu0 %v1791
    %1870 = vmatpush.msra.mxu0 %v1787
    %1871 = vmatpush.msra.mxu0 %v1783
    %1872 = vmatpush.msra.mxu0 %v1779
    %1873 = vmatpush.msra.mxu0 %v1775
    %1874 = vmatmul.f32.gmra.mxu0 %v1768
    %v1875 = vpop.f32.mrf.mxu0
    %v1876 = vadd.f32 0.0, %v1875
    %1877 = vdwg.mxu0
    %1878 = vmatpush.msra.mxu0 %v1836
    %1879 = vmatpush.msra.mxu0 %v1832
    %1880 = vmatpush.msra.mxu0 %v1828
    %1881 = vmatpush.msra.mxu0 %v1824
    %1882 = vmatpush.msra.mxu0 %v1820
    %1883 = vmatpush.msra.mxu0 %v1816
    %1884 = vmatpush.msra.mxu0 %v1812
    %1885 = vmatpush.msra.mxu0 %v1808
    %1886 = vmatpush.msra.mxu0 %v1804
    %1887 = vmatpush.msra.mxu0 %v1800
    %1888 = vmatpush.msra.mxu0 %v1796
    %1889 = vmatpush.msra.mxu0 %v1792
    %1890 = vmatpush.msra.mxu0 %v1788
    %1891 = vmatpush.msra.mxu0 %v1784
    %1892 = vmatpush.msra.mxu0 %v1780
    %1893 = vmatpush.msra.mxu0 %v1776
    %1894 = vmatmul.f32.gmra.mxu0 %v1768
    %v1895 = vpop.f32.mrf.mxu0
    %v1896 = vadd.f32 0.0, %v1895
    %1897 = vdwg.mxu0
    %1898 = vmatpush.msra.mxu0 %v1837
    %1899 = vmatpush.msra.mxu0 %v1833
    %1900 = vmatpush.msra.mxu0 %v1829
    %1901 = vmatpush.msra.mxu0 %v1825
    %1902 = vmatpush.msra.mxu0 %v1821
    %1903 = vmatpush.msra.mxu0 %v1817
    %1904 = vmatpush.msra.mxu0 %v1813
    %1905 = vmatpush.msra.mxu0 %v1809
    %1906 = vmatpush.msra.mxu0 %v1805
    %1907 = vmatpush.msra.mxu0 %v1801
    %1908 = vmatpush.msra.mxu0 %v1797
    %1909 = vmatpush.msra.mxu0 %v1793
    %1910 = vmatpush.msra.mxu0 %v1789
    %1911 = vmatpush.msra.mxu0 %v1785
    %1912 = vmatpush.msra.mxu0 %v1781
    %1913 = vmatpush.msra.mxu0 %v1777
    %1914 = vmatmul.f32.gmra.mxu0 %v1768
    %v1915 = vpop.f32.mrf.mxu0
    %v1916 = vadd.f32 0.0, %v1915
    %1917 = vdwg.mxu0
    %v1918 = vadd.f32 %v1770, %v1856
    %v1919 = vadd.f32 %v1771, %v1876
    %v1920 = vadd.f32 %v1772, %v1896
    %v1921 = vadd.f32 %v1773, %v1916
    %v1922 = vxor.u32 %v1918, 2147483648
    %v1923 = vxor.u32 %v1919, 2147483648
    %v1924 = vxor.u32 %v1920, 2147483648
    %v1925 = vmul.f32 %v1922, 1.442695
    %v1926 = vpow.pop %v1925
    %v1927 = vmul.f32 %v1923, 1.442695
    %v1928 = vpow.pop %v1927
    %v1929 = vmul.f32 %v1924, 1.442695
    %v1930 = vpow.pop %v1929
    %v1931 = vadd.f32 %v1926, 1.0
    %v1932 = vadd.f32 %v1928, 1.0
    %v1933 = vadd.f32 %v1930, 1.0
    %v1934 = vrcp.pop %v1931
    %v1935 = vmul.f32 %v1931, %v1934
    %v1936 = vsub.f32 1.0, %v1935
    %v1937 = vmul.f32 %v1934, %v1936
    %v1938 = vadd.f32 %v1934, %v1937
    %vm1939 = vweird.f32 %v1931
    %vm1940 = vweird.f32 %v1934
    %vm1941 = vmor %vm1939, %vm1940
    %v1942 = vsel %vm1941, %v1934, %v1938
    %v1943 = vand.u32 2147483647, %v1931
    %vm1944 = vcmp.eq.f32.partialorder %v1943, 8.507059e+37
    %v1945 = vand.u32 %v1931, 2147483648
    %v1946 = vor.u32 1.1754944e-38, %v1945
    %v1947 = vsel %vm1944, %v1946, %v1942
    %v1948 = vmul.f32 1.0, %v1947
    %v1949 = vrcp.pop %v1932
    %v1950 = vmul.f32 %v1932, %v1949
    %v1951 = vsub.f32 1.0, %v1950
    %v1952 = vmul.f32 %v1949, %v1951
    %v1953 = vadd.f32 %v1949, %v1952
    %vm1954 = vweird.f32 %v1932
    %vm1955 = vweird.f32 %v1949
    %vm1956 = vmor %vm1954, %vm1955
    %v1957 = vsel %vm1956, %v1949, %v1953
    %v1958 = vand.u32 2147483647, %v1932
    %vm1959 = vcmp.eq.f32.partialorder %v1958, 8.507059e+37
    %v1960 = vand.u32 %v1932, 2147483648
    %v1961 = vor.u32 1.1754944e-38, %v1960
    %v1962 = vsel %vm1959, %v1961, %v1957
    %v1963 = vmul.f32 1.0, %v1962
    %v1964 = vrcp.pop %v1933
    %v1965 = vmul.f32 %v1933, %v1964
    %v1966 = vsub.f32 1.0, %v1965
    %v1967 = vmul.f32 %v1964, %v1966
    %v1968 = vadd.f32 %v1964, %v1967
    %vm1969 = vweird.f32 %v1933
    %vm1970 = vweird.f32 %v1964
    %vm1971 = vmor %vm1969, %vm1970
    %v1972 = vsel %vm1971, %v1964, %v1968
    %v1973 = vand.u32 2147483647, %v1933
    %vm1974 = vcmp.eq.f32.partialorder %v1973, 8.507059e+37
    %v1975 = vand.u32 %v1933, 2147483648
    %v1976 = vor.u32 1.1754944e-38, %v1975
    %v1977 = vsel %vm1974, %v1976, %v1972
    %v1978 = vmul.f32 1.0, %v1977
    %v1979 = vtanh.pop %v1921
    %v1980 = vmul.f32 %v1963, %v1766
    %v1981 = vmul.f32 %v1948, %v1979
    %v1982 = vadd.f32 %v1980, %v1981
    %v1983 = vtanh.pop %v1982
    %v1984 = vmul.f32 %v1978, %v1983
    %1985 = vst [vmem:[#allocation3 + $0x28] sm:$0xff] %v1984
    %v1986 = vld [vmem:[#allocation2 + $0xc0] sm:$0xff]
    %v1987 = vld [vmem:[#allocation2 + $0xc8] sm:$0xff]
    %v1988 = vld [vmem:[#allocation2 + $0xd0] sm:$0xff]
    %v1989 = vld [vmem:[#allocation2 + $0xd8] sm:$0xff]
    %v1990 = vld [vmem:[#allocation4] sm:$0xff]
    %v1991 = vld [vmem:[#allocation4 + $0x8] sm:$0xff]
    %v1992 = vld [vmem:[#allocation4 + $0x10] sm:$0xff]
    %v1993 = vld [vmem:[#allocation4 + $0x18] sm:$0xff]
    %v1994 = vld [vmem:[#allocation4 + $0x20] sm:$0xff]
    %v1995 = vld [vmem:[#allocation4 + $0x28] sm:$0xff]
    %v1996 = vld [vmem:[#allocation4 + $0x30] sm:$0xff]
    %v1997 = vld [vmem:[#allocation4 + $0x38] sm:$0xff]
    %v1998 = vld [vmem:[#allocation4 + $0x40] sm:$0xff]
    %v1999 = vld [vmem:[#allocation4 + $0x48] sm:$0xff]
    %v2000 = vld [vmem:[#allocation4 + $0x50] sm:$0xff]
    %v2001 = vld [vmem:[#allocation4 + $0x58] sm:$0xff]
    %v2002 = vld [vmem:[#allocation4 + $0x60] sm:$0xff]
    %v2003 = vld [vmem:[#allocation4 + $0x68] sm:$0xff]
    %v2004 = vld [vmem:[#allocation4 + $0x70] sm:$0xff]
    %v2005 = vld [vmem:[#allocation4 + $0x78] sm:$0xff]
    %v2006 = vld [vmem:[#allocation4 + $0x80] sm:$0xff]
    %v2007 = vld [vmem:[#allocation4 + $0x88] sm:$0xff]
    %v2008 = vld [vmem:[#allocation4 + $0x90] sm:$0xff]
    %v2009 = vld [vmem:[#allocation4 + $0x98] sm:$0xff]
    %v2010 = vld [vmem:[#allocation4 + $0xa0] sm:$0xff]
    %v2011 = vld [vmem:[#allocation4 + $0xa8] sm:$0xff]
    %v2012 = vld [vmem:[#allocation4 + $0xb0] sm:$0xff]
    %v2013 = vld [vmem:[#allocation4 + $0xb8] sm:$0xff]
    %v2014 = vld [vmem:[#allocation4 + $0xc0] sm:$0xff]
    %v2015 = vld [vmem:[#allocation4 + $0xc8] sm:$0xff]
    %v2016 = vld [vmem:[#allocation4 + $0xd0] sm:$0xff]
    %v2017 = vld [vmem:[#allocation4 + $0xd8] sm:$0xff]
    %v2018 = vld [vmem:[#allocation4 + $0xe0] sm:$0xff]
    %v2019 = vld [vmem:[#allocation4 + $0xe8] sm:$0xff]
    %v2020 = vld [vmem:[#allocation4 + $0xf0] sm:$0xff]
    %v2021 = vld [vmem:[#allocation4 + $0xf8] sm:$0xff]
    %v2022 = vld [vmem:[#allocation4 + $0x100] sm:$0xff]
    %v2023 = vld [vmem:[#allocation4 + $0x108] sm:$0xff]
    %v2024 = vld [vmem:[#allocation4 + $0x110] sm:$0xff]
    %v2025 = vld [vmem:[#allocation4 + $0x118] sm:$0xff]
    %v2026 = vld [vmem:[#allocation4 + $0x120] sm:$0xff]
    %v2027 = vld [vmem:[#allocation4 + $0x128] sm:$0xff]
    %v2028 = vld [vmem:[#allocation4 + $0x130] sm:$0xff]
    %v2029 = vld [vmem:[#allocation4 + $0x138] sm:$0xff]
    %v2030 = vld [vmem:[#allocation4 + $0x140] sm:$0xff]
    %v2031 = vld [vmem:[#allocation4 + $0x148] sm:$0xff]
    %v2032 = vld [vmem:[#allocation4 + $0x150] sm:$0xff]
    %v2033 = vld [vmem:[#allocation4 + $0x158] sm:$0xff]
    %v2034 = vld [vmem:[#allocation4 + $0x160] sm:$0xff]
    %v2035 = vld [vmem:[#allocation4 + $0x168] sm:$0xff]
    %v2036 = vld [vmem:[#allocation4 + $0x170] sm:$0xff]
    %v2037 = vld [vmem:[#allocation4 + $0x178] sm:$0xff]
    %v2038 = vld [vmem:[#allocation4 + $0x180] sm:$0xff]
    %v2039 = vld [vmem:[#allocation4 + $0x188] sm:$0xff]
    %v2040 = vld [vmem:[#allocation4 + $0x190] sm:$0xff]
    %v2041 = vld [vmem:[#allocation4 + $0x198] sm:$0xff]
    %v2042 = vld [vmem:[#allocation4 + $0x1a0] sm:$0xff]
    %v2043 = vld [vmem:[#allocation4 + $0x1a8] sm:$0xff]
    %v2044 = vld [vmem:[#allocation4 + $0x1b0] sm:$0xff]
    %v2045 = vld [vmem:[#allocation4 + $0x1b8] sm:$0xff]
    %v2046 = vld [vmem:[#allocation4 + $0x1c0] sm:$0xff]
    %v2047 = vld [vmem:[#allocation4 + $0x1c8] sm:$0xff]
    %v2048 = vld [vmem:[#allocation4 + $0x1d0] sm:$0xff]
    %v2049 = vld [vmem:[#allocation4 + $0x1d8] sm:$0xff]
    %v2050 = vld [vmem:[#allocation4 + $0x1e0] sm:$0xff]
    %v2051 = vld [vmem:[#allocation4 + $0x1e8] sm:$0xff]
    %v2052 = vld [vmem:[#allocation4 + $0x1f0] sm:$0xff]
    %v2053 = vld [vmem:[#allocation4 + $0x1f8] sm:$0xff]
    %2054 = vmatpush.msra.mxu0 %v2050
    %2055 = vmatpush.msra.mxu0 %v2046
    %2056 = vmatpush.msra.mxu0 %v2042
    %2057 = vmatpush.msra.mxu0 %v2038
    %2058 = vmatpush.msra.mxu0 %v2034
    %2059 = vmatpush.msra.mxu0 %v2030
    %2060 = vmatpush.msra.mxu0 %v2026
    %2061 = vmatpush.msra.mxu0 %v2022
    %2062 = vmatpush.msra.mxu0 %v2018
    %2063 = vmatpush.msra.mxu0 %v2014
    %2064 = vmatpush.msra.mxu0 %v2010
    %2065 = vmatpush.msra.mxu0 %v2006
    %2066 = vmatpush.msra.mxu0 %v2002
    %2067 = vmatpush.msra.mxu0 %v1998
    %2068 = vmatpush.msra.mxu0 %v1994
    %2069 = vmatpush.msra.mxu0 %v1990
    %2070 = vmatmul.f32.gmra.mxu0 %v1984
    %v2071 = vpop.f32.mrf.mxu0
    %v2072 = vadd.f32 0.0, %v2071
    %2073 = vdwg.mxu0
    %2074 = vmatpush.msra.mxu0 %v2051
    %2075 = vmatpush.msra.mxu0 %v2047
    %2076 = vmatpush.msra.mxu0 %v2043
    %2077 = vmatpush.msra.mxu0 %v2039
    %2078 = vmatpush.msra.mxu0 %v2035
    %2079 = vmatpush.msra.mxu0 %v2031
    %2080 = vmatpush.msra.mxu0 %v2027
    %2081 = vmatpush.msra.mxu0 %v2023
    %2082 = vmatpush.msra.mxu0 %v2019
    %2083 = vmatpush.msra.mxu0 %v2015
    %2084 = vmatpush.msra.mxu0 %v2011
    %2085 = vmatpush.msra.mxu0 %v2007
    %2086 = vmatpush.msra.mxu0 %v2003
    %2087 = vmatpush.msra.mxu0 %v1999
    %2088 = vmatpush.msra.mxu0 %v1995
    %2089 = vmatpush.msra.mxu0 %v1991
    %2090 = vmatmul.f32.gmra.mxu0 %v1984
    %v2091 = vpop.f32.mrf.mxu0
    %v2092 = vadd.f32 0.0, %v2091
    %2093 = vdwg.mxu0
    %2094 = vmatpush.msra.mxu0 %v2052
    %2095 = vmatpush.msra.mxu0 %v2048
    %2096 = vmatpush.msra.mxu0 %v2044
    %2097 = vmatpush.msra.mxu0 %v2040
    %2098 = vmatpush.msra.mxu0 %v2036
    %2099 = vmatpush.msra.mxu0 %v2032
    %2100 = vmatpush.msra.mxu0 %v2028
    %2101 = vmatpush.msra.mxu0 %v2024
    %2102 = vmatpush.msra.mxu0 %v2020
    %2103 = vmatpush.msra.mxu0 %v2016
    %2104 = vmatpush.msra.mxu0 %v2012
    %2105 = vmatpush.msra.mxu0 %v2008
    %2106 = vmatpush.msra.mxu0 %v2004
    %2107 = vmatpush.msra.mxu0 %v2000
    %2108 = vmatpush.msra.mxu0 %v1996
    %2109 = vmatpush.msra.mxu0 %v1992
    %2110 = vmatmul.f32.gmra.mxu0 %v1984
    %v2111 = vpop.f32.mrf.mxu0
    %v2112 = vadd.f32 0.0, %v2111
    %2113 = vdwg.mxu0
    %2114 = vmatpush.msra.mxu0 %v2053
    %2115 = vmatpush.msra.mxu0 %v2049
    %2116 = vmatpush.msra.mxu0 %v2045
    %2117 = vmatpush.msra.mxu0 %v2041
    %2118 = vmatpush.msra.mxu0 %v2037
    %2119 = vmatpush.msra.mxu0 %v2033
    %2120 = vmatpush.msra.mxu0 %v2029
    %2121 = vmatpush.msra.mxu0 %v2025
    %2122 = vmatpush.msra.mxu0 %v2021
    %2123 = vmatpush.msra.mxu0 %v2017
    %2124 = vmatpush.msra.mxu0 %v2013
    %2125 = vmatpush.msra.mxu0 %v2009
    %2126 = vmatpush.msra.mxu0 %v2005
    %2127 = vmatpush.msra.mxu0 %v2001
    %2128 = vmatpush.msra.mxu0 %v1997
    %2129 = vmatpush.msra.mxu0 %v1993
    %2130 = vmatmul.f32.gmra.mxu0 %v1984
    %v2131 = vpop.f32.mrf.mxu0
    %v2132 = vadd.f32 0.0, %v2131
    %2133 = vdwg.mxu0
    %v2134 = vadd.f32 %v1986, %v2072
    %v2135 = vadd.f32 %v1987, %v2092
    %v2136 = vadd.f32 %v1988, %v2112
    %v2137 = vadd.f32 %v1989, %v2132
    %v2138 = vxor.u32 %v2134, 2147483648
    %v2139 = vxor.u32 %v2135, 2147483648
    %v2140 = vxor.u32 %v2136, 2147483648
    %v2141 = vmul.f32 %v2138, 1.442695
    %v2142 = vpow.pop %v2141
    %v2143 = vmul.f32 %v2139, 1.442695
    %v2144 = vpow.pop %v2143
    %v2145 = vmul.f32 %v2140, 1.442695
    %v2146 = vpow.pop %v2145
    %v2147 = vadd.f32 %v2142, 1.0
    %v2148 = vadd.f32 %v2144, 1.0
    %v2149 = vadd.f32 %v2146, 1.0
    %v2150 = vrcp.pop %v2147
    %v2151 = vmul.f32 %v2147, %v2150
    %v2152 = vsub.f32 1.0, %v2151
    %v2153 = vmul.f32 %v2150, %v2152
    %v2154 = vadd.f32 %v2150, %v2153
    %vm2155 = vweird.f32 %v2147
    %vm2156 = vweird.f32 %v2150
    %vm2157 = vmor %vm2155, %vm2156
    %v2158 = vsel %vm2157, %v2150, %v2154
    %v2159 = vand.u32 2147483647, %v2147
    %vm2160 = vcmp.eq.f32.partialorder %v2159, 8.507059e+37
    %v2161 = vand.u32 %v2147, 2147483648
    %v2162 = vor.u32 1.1754944e-38, %v2161
    %v2163 = vsel %vm2160, %v2162, %v2158
    %v2164 = vmul.f32 1.0, %v2163
    %v2165 = vrcp.pop %v2148
    %v2166 = vmul.f32 %v2148, %v2165
    %v2167 = vsub.f32 1.0, %v2166
    %v2168 = vmul.f32 %v2165, %v2167
    %v2169 = vadd.f32 %v2165, %v2168
    %vm2170 = vweird.f32 %v2148
    %vm2171 = vweird.f32 %v2165
    %vm2172 = vmor %vm2170, %vm2171
    %v2173 = vsel %vm2172, %v2165, %v2169
    %v2174 = vand.u32 2147483647, %v2148
    %vm2175 = vcmp.eq.f32.partialorder %v2174, 8.507059e+37
    %v2176 = vand.u32 %v2148, 2147483648
    %v2177 = vor.u32 1.1754944e-38, %v2176
    %v2178 = vsel %vm2175, %v2177, %v2173
    %v2179 = vmul.f32 1.0, %v2178
    %v2180 = vrcp.pop %v2149
    %v2181 = vmul.f32 %v2149, %v2180
    %v2182 = vsub.f32 1.0, %v2181
    %v2183 = vmul.f32 %v2180, %v2182
    %v2184 = vadd.f32 %v2180, %v2183
    %vm2185 = vweird.f32 %v2149
    %vm2186 = vweird.f32 %v2180
    %vm2187 = vmor %vm2185, %vm2186
    %v2188 = vsel %vm2187, %v2180, %v2184
    %v2189 = vand.u32 2147483647, %v2149
    %vm2190 = vcmp.eq.f32.partialorder %v2189, 8.507059e+37
    %v2191 = vand.u32 %v2149, 2147483648
    %v2192 = vor.u32 1.1754944e-38, %v2191
    %v2193 = vsel %vm2190, %v2192, %v2188
    %v2194 = vmul.f32 1.0, %v2193
    %v2195 = vtanh.pop %v2137
    %v2196 = vmul.f32 %v2179, %v1982
    %v2197 = vmul.f32 %v2164, %v2195
    %v2198 = vadd.f32 %v2196, %v2197
    %v2199 = vtanh.pop %v2198
    %v2200 = vmul.f32 %v2194, %v2199
    %2201 = vst [vmem:[#allocation3 + $0x30] sm:$0xff] %v2200
    %v2202 = vld [vmem:[#allocation2 + $0xe0] sm:$0xff]
    %v2203 = vld [vmem:[#allocation2 + $0xe8] sm:$0xff]
    %v2204 = vld [vmem:[#allocation2 + $0xf0] sm:$0xff]
    %v2205 = vld [vmem:[#allocation2 + $0xf8] sm:$0xff]
    %v2206 = vld [vmem:[#allocation4] sm:$0xff]
    %v2207 = vld [vmem:[#allocation4 + $0x8] sm:$0xff]
    %v2208 = vld [vmem:[#allocation4 + $0x10] sm:$0xff]
    %v2209 = vld [vmem:[#allocation4 + $0x18] sm:$0xff]
    %v2210 = vld [vmem:[#allocation4 + $0x20] sm:$0xff]
    %v2211 = vld [vmem:[#allocation4 + $0x28] sm:$0xff]
    %v2212 = vld [vmem:[#allocation4 + $0x30] sm:$0xff]
    %v2213 = vld [vmem:[#allocation4 + $0x38] sm:$0xff]
    %v2214 = vld [vmem:[#allocation4 + $0x40] sm:$0xff]
    %v2215 = vld [vmem:[#allocation4 + $0x48] sm:$0xff]
    %v2216 = vld [vmem:[#allocation4 + $0x50] sm:$0xff]
    %v2217 = vld [vmem:[#allocation4 + $0x58] sm:$0xff]
    %v2218 = vld [vmem:[#allocation4 + $0x60] sm:$0xff]
    %v2219 = vld [vmem:[#allocation4 + $0x68] sm:$0xff]
    %v2220 = vld [vmem:[#allocation4 + $0x70] sm:$0xff]
    %v2221 = vld [vmem:[#allocation4 + $0x78] sm:$0xff]
    %v2222 = vld [vmem:[#allocation4 + $0x80] sm:$0xff]
    %v2223 = vld [vmem:[#allocation4 + $0x88] sm:$0xff]
    %v2224 = vld [vmem:[#allocation4 + $0x90] sm:$0xff]
    %v2225 = vld [vmem:[#allocation4 + $0x98] sm:$0xff]
    %v2226 = vld [vmem:[#allocation4 + $0xa0] sm:$0xff]
    %v2227 = vld [vmem:[#allocation4 + $0xa8] sm:$0xff]
    %v2228 = vld [vmem:[#allocation4 + $0xb0] sm:$0xff]
    %v2229 = vld [vmem:[#allocation4 + $0xb8] sm:$0xff]
    %v2230 = vld [vmem:[#allocation4 + $0xc0] sm:$0xff]
    %v2231 = vld [vmem:[#allocation4 + $0xc8] sm:$0xff]
    %v2232 = vld [vmem:[#allocation4 + $0xd0] sm:$0xff]
    %v2233 = vld [vmem:[#allocation4 + $0xd8] sm:$0xff]
    %v2234 = vld [vmem:[#allocation4 + $0xe0] sm:$0xff]
    %v2235 = vld [vmem:[#allocation4 + $0xe8] sm:$0xff]
    %v2236 = vld [vmem:[#allocation4 + $0xf0] sm:$0xff]
    %v2237 = vld [vmem:[#allocation4 + $0xf8] sm:$0xff]
    %v2238 = vld [vmem:[#allocation4 + $0x100] sm:$0xff]
    %v2239 = vld [vmem:[#allocation4 + $0x108] sm:$0xff]
    %v2240 = vld [vmem:[#allocation4 + $0x110] sm:$0xff]
    %v2241 = vld [vmem:[#allocation4 + $0x118] sm:$0xff]
    %v2242 = vld [vmem:[#allocation4 + $0x120] sm:$0xff]
    %v2243 = vld [vmem:[#allocation4 + $0x128] sm:$0xff]
    %v2244 = vld [vmem:[#allocation4 + $0x130] sm:$0xff]
    %v2245 = vld [vmem:[#allocation4 + $0x138] sm:$0xff]
    %v2246 = vld [vmem:[#allocation4 + $0x140] sm:$0xff]
    %v2247 = vld [vmem:[#allocation4 + $0x148] sm:$0xff]
    %v2248 = vld [vmem:[#allocation4 + $0x150] sm:$0xff]
    %v2249 = vld [vmem:[#allocation4 + $0x158] sm:$0xff]
    %v2250 = vld [vmem:[#allocation4 + $0x160] sm:$0xff]
    %v2251 = vld [vmem:[#allocation4 + $0x168] sm:$0xff]
    %v2252 = vld [vmem:[#allocation4 + $0x170] sm:$0xff]
    %v2253 = vld [vmem:[#allocation4 + $0x178] sm:$0xff]
    %v2254 = vld [vmem:[#allocation4 + $0x180] sm:$0xff]
    %v2255 = vld [vmem:[#allocation4 + $0x188] sm:$0xff]
    %v2256 = vld [vmem:[#allocation4 + $0x190] sm:$0xff]
    %v2257 = vld [vmem:[#allocation4 + $0x198] sm:$0xff]
    %v2258 = vld [vmem:[#allocation4 + $0x1a0] sm:$0xff]
    %v2259 = vld [vmem:[#allocation4 + $0x1a8] sm:$0xff]
    %v2260 = vld [vmem:[#allocation4 + $0x1b0] sm:$0xff]
    %v2261 = vld [vmem:[#allocation4 + $0x1b8] sm:$0xff]
    %v2262 = vld [vmem:[#allocation4 + $0x1c0] sm:$0xff]
    %v2263 = vld [vmem:[#allocation4 + $0x1c8] sm:$0xff]
    %v2264 = vld [vmem:[#allocation4 + $0x1d0] sm:$0xff]
    %v2265 = vld [vmem:[#allocation4 + $0x1d8] sm:$0xff]
    %v2266 = vld [vmem:[#allocation4 + $0x1e0] sm:$0xff]
    %v2267 = vld [vmem:[#allocation4 + $0x1e8] sm:$0xff]
    %v2268 = vld [vmem:[#allocation4 + $0x1f0] sm:$0xff]
    %v2269 = vld [vmem:[#allocation4 + $0x1f8] sm:$0xff]
    %2270 = vmatpush.msra.mxu0 %v2266
    %2271 = vmatpush.msra.mxu0 %v2262
    %2272 = vmatpush.msra.mxu0 %v2258
    %2273 = vmatpush.msra.mxu0 %v2254
    %2274 = vmatpush.msra.mxu0 %v2250
    %2275 = vmatpush.msra.mxu0 %v2246
    %2276 = vmatpush.msra.mxu0 %v2242
    %2277 = vmatpush.msra.mxu0 %v2238
    %2278 = vmatpush.msra.mxu0 %v2234
    %2279 = vmatpush.msra.mxu0 %v2230
    %2280 = vmatpush.msra.mxu0 %v2226
    %2281 = vmatpush.msra.mxu0 %v2222
    %2282 = vmatpush.msra.mxu0 %v2218
    %2283 = vmatpush.msra.mxu0 %v2214
    %2284 = vmatpush.msra.mxu0 %v2210
    %2285 = vmatpush.msra.mxu0 %v2206
    %2286 = vmatmul.f32.gmra.mxu0 %v2200
    %v2287 = vpop.f32.mrf.mxu0
    %v2288 = vadd.f32 0.0, %v2287
    %2289 = vdwg.mxu0
    %2290 = vmatpush.msra.mxu0 %v2267
    %2291 = vmatpush.msra.mxu0 %v2263
    %2292 = vmatpush.msra.mxu0 %v2259
    %2293 = vmatpush.msra.mxu0 %v2255
    %2294 = vmatpush.msra.mxu0 %v2251
    %2295 = vmatpush.msra.mxu0 %v2247
    %2296 = vmatpush.msra.mxu0 %v2243
    %2297 = vmatpush.msra.mxu0 %v2239
    %2298 = vmatpush.msra.mxu0 %v2235
    %2299 = vmatpush.msra.mxu0 %v2231
    %2300 = vmatpush.msra.mxu0 %v2227
    %2301 = vmatpush.msra.mxu0 %v2223
    %2302 = vmatpush.msra.mxu0 %v2219
    %2303 = vmatpush.msra.mxu0 %v2215
    %2304 = vmatpush.msra.mxu0 %v2211
    %2305 = vmatpush.msra.mxu0 %v2207
    %2306 = vmatmul.f32.gmra.mxu0 %v2200
    %v2307 = vpop.f32.mrf.mxu0
    %v2308 = vadd.f32 0.0, %v2307
    %2309 = vdwg.mxu0
    %2310 = vmatpush.msra.mxu0 %v2268
    %2311 = vmatpush.msra.mxu0 %v2264
    %2312 = vmatpush.msra.mxu0 %v2260
    %2313 = vmatpush.msra.mxu0 %v2256
    %2314 = vmatpush.msra.mxu0 %v2252
    %2315 = vmatpush.msra.mxu0 %v2248
    %2316 = vmatpush.msra.mxu0 %v2244
    %2317 = vmatpush.msra.mxu0 %v2240
    %2318 = vmatpush.msra.mxu0 %v2236
    %2319 = vmatpush.msra.mxu0 %v2232
    %2320 = vmatpush.msra.mxu0 %v2228
    %2321 = vmatpush.msra.mxu0 %v2224
    %2322 = vmatpush.msra.mxu0 %v2220
    %2323 = vmatpush.msra.mxu0 %v2216
    %2324 = vmatpush.msra.mxu0 %v2212
    %2325 = vmatpush.msra.mxu0 %v2208
    %2326 = vmatmul.f32.gmra.mxu0 %v2200
    %v2327 = vpop.f32.mrf.mxu0
    %v2328 = vadd.f32 0.0, %v2327
    %2329 = vdwg.mxu0
    %2330 = vmatpush.msra.mxu0 %v2269
    %2331 = vmatpush.msra.mxu0 %v2265
    %2332 = vmatpush.msra.mxu0 %v2261
    %2333 = vmatpush.msra.mxu0 %v2257
    %2334 = vmatpush.msra.mxu0 %v2253
    %2335 = vmatpush.msra.mxu0 %v2249
    %2336 = vmatpush.msra.mxu0 %v2245
    %2337 = vmatpush.msra.mxu0 %v2241
    %2338 = vmatpush.msra.mxu0 %v2237
    %2339 = vmatpush.msra.mxu0 %v2233
    %2340 = vmatpush.msra.mxu0 %v2229
    %2341 = vmatpush.msra.mxu0 %v2225
    %2342 = vmatpush.msra.mxu0 %v2221
    %2343 = vmatpush.msra.mxu0 %v2217
    %2344 = vmatpush.msra.mxu0 %v2213
    %2345 = vmatpush.msra.mxu0 %v2209
    %2346 = vmatmul.f32.gmra.mxu0 %v2200
    %v2347 = vpop.f32.mrf.mxu0
    %v2348 = vadd.f32 0.0, %v2347
    %2349 = vdwg.mxu0
    %v2350 = vadd.f32 %v2202, %v2288
    %v2351 = vadd.f32 %v2203, %v2308
    %v2352 = vadd.f32 %v2204, %v2328
    %v2353 = vadd.f32 %v2205, %v2348
    %v2354 = vxor.u32 %v2350, 2147483648
    %v2355 = vxor.u32 %v2351, 2147483648
    %v2356 = vxor.u32 %v2352, 2147483648
    %v2357 = vmul.f32 %v2354, 1.442695
    %v2358 = vpow.pop %v2357
    %v2359 = vmul.f32 %v2355, 1.442695
    %v2360 = vpow.pop %v2359
    %v2361 = vmul.f32 %v2356, 1.442695
    %v2362 = vpow.pop %v2361
    %v2363 = vadd.f32 %v2358, 1.0
    %v2364 = vadd.f32 %v2360, 1.0
    %v2365 = vadd.f32 %v2362, 1.0
    %v2366 = vrcp.pop %v2363
    %v2367 = vmul.f32 %v2363, %v2366
    %v2368 = vsub.f32 1.0, %v2367
    %v2369 = vmul.f32 %v2366, %v2368
    %v2370 = vadd.f32 %v2366, %v2369
    %vm2371 = vweird.f32 %v2363
    %vm2372 = vweird.f32 %v2366
    %vm2373 = vmor %vm2371, %vm2372
    %v2374 = vsel %vm2373, %v2366, %v2370
    %v2375 = vand.u32 2147483647, %v2363
    %vm2376 = vcmp.eq.f32.partialorder %v2375, 8.507059e+37
    %v2377 = vand.u32 %v2363, 2147483648
    %v2378 = vor.u32 1.1754944e-38, %v2377
    %v2379 = vsel %vm2376, %v2378, %v2374
    %v2380 = vmul.f32 1.0, %v2379
    %v2381 = vrcp.pop %v2364
    %v2382 = vmul.f32 %v2364, %v2381
    %v2383 = vsub.f32 1.0, %v2382
    %v2384 = vmul.f32 %v2381, %v2383
    %v2385 = vadd.f32 %v2381, %v2384
    %vm2386 = vweird.f32 %v2364
    %vm2387 = vweird.f32 %v2381
    %vm2388 = vmor %vm2386, %vm2387
    %v2389 = vsel %vm2388, %v2381, %v2385
    %v2390 = vand.u32 2147483647, %v2364
    %vm2391 = vcmp.eq.f32.partialorder %v2390, 8.507059e+37
    %v2392 = vand.u32 %v2364, 2147483648
    %v2393 = vor.u32 1.1754944e-38, %v2392
    %v2394 = vsel %vm2391, %v2393, %v2389
    %v2395 = vmul.f32 1.0, %v2394
    %v2396 = vrcp.pop %v2365
    %v2397 = vmul.f32 %v2365, %v2396
    %v2398 = vsub.f32 1.0, %v2397
    %v2399 = vmul.f32 %v2396, %v2398
    %v2400 = vadd.f32 %v2396, %v2399
    %vm2401 = vweird.f32 %v2365
    %vm2402 = vweird.f32 %v2396
    %vm2403 = vmor %vm2401, %vm2402
    %v2404 = vsel %vm2403, %v2396, %v2400
    %v2405 = vand.u32 2147483647, %v2365
    %vm2406 = vcmp.eq.f32.partialorder %v2405, 8.507059e+37
    %v2407 = vand.u32 %v2365, 2147483648
    %v2408 = vor.u32 1.1754944e-38, %v2407
    %v2409 = vsel %vm2406, %v2408, %v2404
    %v2410 = vmul.f32 1.0, %v2409
    %v2411 = vtanh.pop %v2353
    %v2412 = vmul.f32 %v2395, %v2198
    %v2413 = vmul.f32 %v2380, %v2411
    %v2414 = vadd.f32 %v2412, %v2413
    %v2415 = vtanh.pop %v2414
    %v2416 = vmul.f32 %v2410, %v2415
    %2417 = vst [vmem:[#allocation3 + $0x38] sm:$0xff] %v2416
    %v2418 = vld [vmem:[#allocation2 + $0x100] sm:$0xff]
    %v2419 = vld [vmem:[#allocation2 + $0x108] sm:$0xff]
    %v2420 = vld [vmem:[#allocation2 + $0x110] sm:$0xff]
    %v2421 = vld [vmem:[#allocation2 + $0x118] sm:$0xff]
    %v2422 = vld [vmem:[#allocation4] sm:$0xff]
    %v2423 = vld [vmem:[#allocation4 + $0x8] sm:$0xff]
    %v2424 = vld [vmem:[#allocation4 + $0x10] sm:$0xff]
    %v2425 = vld [vmem:[#allocation4 + $0x18] sm:$0xff]
    %v2426 = vld [vmem:[#allocation4 + $0x20] sm:$0xff]
    %v2427 = vld [vmem:[#allocation4 + $0x28] sm:$0xff]
    %v2428 = vld [vmem:[#allocation4 + $0x30] sm:$0xff]
    %v2429 = vld [vmem:[#allocation4 + $0x38] sm:$0xff]
    %v2430 = vld [vmem:[#allocation4 + $0x40] sm:$0xff]
    %v2431 = vld [vmem:[#allocation4 + $0x48] sm:$0xff]
    %v2432 = vld [vmem:[#allocation4 + $0x50] sm:$0xff]
    %v2433 = vld [vmem:[#allocation4 + $0x58] sm:$0xff]
    %v2434 = vld [vmem:[#allocation4 + $0x60] sm:$0xff]
    %v2435 = vld [vmem:[#allocation4 + $0x68] sm:$0xff]
    %v2436 = vld [vmem:[#allocation4 + $0x70] sm:$0xff]
    %v2437 = vld [vmem:[#allocation4 + $0x78] sm:$0xff]
    %v2438 = vld [vmem:[#allocation4 + $0x80] sm:$0xff]
    %v2439 = vld [vmem:[#allocation4 + $0x88] sm:$0xff]
    %v2440 = vld [vmem:[#allocation4 + $0x90] sm:$0xff]
    %v2441 = vld [vmem:[#allocation4 + $0x98] sm:$0xff]
    %v2442 = vld [vmem:[#allocation4 + $0xa0] sm:$0xff]
    %v2443 = vld [vmem:[#allocation4 + $0xa8] sm:$0xff]
    %v2444 = vld [vmem:[#allocation4 + $0xb0] sm:$0xff]
    %v2445 = vld [vmem:[#allocation4 + $0xb8] sm:$0xff]
    %v2446 = vld [vmem:[#allocation4 + $0xc0] sm:$0xff]
    %v2447 = vld [vmem:[#allocation4 + $0xc8] sm:$0xff]
    %v2448 = vld [vmem:[#allocation4 + $0xd0] sm:$0xff]
    %v2449 = vld [vmem:[#allocation4 + $0xd8] sm:$0xff]
    %v2450 = vld [vmem:[#allocation4 + $0xe0] sm:$0xff]
    %v2451 = vld [vmem:[#allocation4 + $0xe8] sm:$0xff]
    %v2452 = vld [vmem:[#allocation4 + $0xf0] sm:$0xff]
    %v2453 = vld [vmem:[#allocation4 + $0xf8] sm:$0xff]
    %v2454 = vld [vmem:[#allocation4 + $0x100] sm:$0xff]
    %v2455 = vld [vmem:[#allocation4 + $0x108] sm:$0xff]
    %v2456 = vld [vmem:[#allocation4 + $0x110] sm:$0xff]
    %v2457 = vld [vmem:[#allocation4 + $0x118] sm:$0xff]
    %v2458 = vld [vmem:[#allocation4 + $0x120] sm:$0xff]
    %v2459 = vld [vmem:[#allocation4 + $0x128] sm:$0xff]
    %v2460 = vld [vmem:[#allocation4 + $0x130] sm:$0xff]
    %v2461 = vld [vmem:[#allocation4 + $0x138] sm:$0xff]
    %v2462 = vld [vmem:[#allocation4 + $0x140] sm:$0xff]
    %v2463 = vld [vmem:[#allocation4 + $0x148] sm:$0xff]
    %v2464 = vld [vmem:[#allocation4 + $0x150] sm:$0xff]
    %v2465 = vld [vmem:[#allocation4 + $0x158] sm:$0xff]
    %v2466 = vld [vmem:[#allocation4 + $0x160] sm:$0xff]
    %v2467 = vld [vmem:[#allocation4 + $0x168] sm:$0xff]
    %v2468 = vld [vmem:[#allocation4 + $0x170] sm:$0xff]
    %v2469 = vld [vmem:[#allocation4 + $0x178] sm:$0xff]
    %v2470 = vld [vmem:[#allocation4 + $0x180] sm:$0xff]
    %v2471 = vld [vmem:[#allocation4 + $0x188] sm:$0xff]
    %v2472 = vld [vmem:[#allocation4 + $0x190] sm:$0xff]
    %v2473 = vld [vmem:[#allocation4 + $0x198] sm:$0xff]
    %v2474 = vld [vmem:[#allocation4 + $0x1a0] sm:$0xff]
    %v2475 = vld [vmem:[#allocation4 + $0x1a8] sm:$0xff]
    %v2476 = vld [vmem:[#allocation4 + $0x1b0] sm:$0xff]
    %v2477 = vld [vmem:[#allocation4 + $0x1b8] sm:$0xff]
    %v2478 = vld [vmem:[#allocation4 + $0x1c0] sm:$0xff]
    %v2479 = vld [vmem:[#allocation4 + $0x1c8] sm:$0xff]
    %v2480 = vld [vmem:[#allocation4 + $0x1d0] sm:$0xff]
    %v2481 = vld [vmem:[#allocation4 + $0x1d8] sm:$0xff]
    %v2482 = vld [vmem:[#allocation4 + $0x1e0] sm:$0xff]
    %v2483 = vld [vmem:[#allocation4 + $0x1e8] sm:$0xff]
    %v2484 = vld [vmem:[#allocation4 + $0x1f0] sm:$0xff]
    %v2485 = vld [vmem:[#allocation4 + $0x1f8] sm:$0xff]
    %2486 = vmatpush.msra.mxu0 %v2482
    %2487 = vmatpush.msra.mxu0 %v2478
    %2488 = vmatpush.msra.mxu0 %v2474
    %2489 = vmatpush.msra.mxu0 %v2470
    %2490 = vmatpush.msra.mxu0 %v2466
    %2491 = vmatpush.msra.mxu0 %v2462
    %2492 = vmatpush.msra.mxu0 %v2458
    %2493 = vmatpush.msra.mxu0 %v2454
    %2494 = vmatpush.msra.mxu0 %v2450
    %2495 = vmatpush.msra.mxu0 %v2446
    %2496 = vmatpush.msra.mxu0 %v2442
    %2497 = vmatpush.msra.mxu0 %v2438
    %2498 = vmatpush.msra.mxu0 %v2434
    %2499 = vmatpush.msra.mxu0 %v2430
    %2500 = vmatpush.msra.mxu0 %v2426
    %2501 = vmatpush.msra.mxu0 %v2422
    %2502 = vmatmul.f32.gmra.mxu0 %v2416
    %v2503 = vpop.f32.mrf.mxu0
    %v2504 = vadd.f32 0.0, %v2503
    %2505 = vdwg.mxu0
    %2506 = vmatpush.msra.mxu0 %v2483
    %2507 = vmatpush.msra.mxu0 %v2479
    %2508 = vmatpush.msra.mxu0 %v2475
    %2509 = vmatpush.msra.mxu0 %v2471
    %2510 = vmatpush.msra.mxu0 %v2467
    %2511 = vmatpush.msra.mxu0 %v2463
    %2512 = vmatpush.msra.mxu0 %v2459
    %2513 = vmatpush.msra.mxu0 %v2455
    %2514 = vmatpush.msra.mxu0 %v2451
    %2515 = vmatpush.msra.mxu0 %v2447
    %2516 = vmatpush.msra.mxu0 %v2443
    %2517 = vmatpush.msra.mxu0 %v2439
    %2518 = vmatpush.msra.mxu0 %v2435
    %2519 = vmatpush.msra.mxu0 %v2431
    %2520 = vmatpush.msra.mxu0 %v2427
    %2521 = vmatpush.msra.mxu0 %v2423
    %2522 = vmatmul.f32.gmra.mxu0 %v2416
    %v2523 = vpop.f32.mrf.mxu0
    %v2524 = vadd.f32 0.0, %v2523
    %2525 = vdwg.mxu0
    %2526 = vmatpush.msra.mxu0 %v2484
    %2527 = vmatpush.msra.mxu0 %v2480
    %2528 = vmatpush.msra.mxu0 %v2476
    %2529 = vmatpush.msra.mxu0 %v2472
    %2530 = vmatpush.msra.mxu0 %v2468
    %2531 = vmatpush.msra.mxu0 %v2464
    %2532 = vmatpush.msra.mxu0 %v2460
    %2533 = vmatpush.msra.mxu0 %v2456
    %2534 = vmatpush.msra.mxu0 %v2452
    %2535 = vmatpush.msra.mxu0 %v2448
    %2536 = vmatpush.msra.mxu0 %v2444
    %2537 = vmatpush.msra.mxu0 %v2440
    %2538 = vmatpush.msra.mxu0 %v2436
    %2539 = vmatpush.msra.mxu0 %v2432
    %2540 = vmatpush.msra.mxu0 %v2428
    %2541 = vmatpush.msra.mxu0 %v2424
    %2542 = vmatmul.f32.gmra.mxu0 %v2416
    %v2543 = vpop.f32.mrf.mxu0
    %v2544 = vadd.f32 0.0, %v2543
    %2545 = vdwg.mxu0
    %2546 = vmatpush.msra.mxu0 %v2485
    %2547 = vmatpush.msra.mxu0 %v2481
    %2548 = vmatpush.msra.mxu0 %v2477
    %2549 = vmatpush.msra.mxu0 %v2473
    %2550 = vmatpush.msra.mxu0 %v2469
    %2551 = vmatpush.msra.mxu0 %v2465
    %2552 = vmatpush.msra.mxu0 %v2461
    %2553 = vmatpush.msra.mxu0 %v2457
    %2554 = vmatpush.msra.mxu0 %v2453
    %2555 = vmatpush.msra.mxu0 %v2449
    %2556 = vmatpush.msra.mxu0 %v2445
    %2557 = vmatpush.msra.mxu0 %v2441
    %2558 = vmatpush.msra.mxu0 %v2437
    %2559 = vmatpush.msra.mxu0 %v2433
    %2560 = vmatpush.msra.mxu0 %v2429
    %2561 = vmatpush.msra.mxu0 %v2425
    %2562 = vmatmul.f32.gmra.mxu0 %v2416
    %v2563 = vpop.f32.mrf.mxu0
    %v2564 = vadd.f32 0.0, %v2563
    %2565 = vdwg.mxu0
    %v2566 = vadd.f32 %v2418, %v2504
    %v2567 = vadd.f32 %v2419, %v2524
    %v2568 = vadd.f32 %v2420, %v2544
    %v2569 = vadd.f32 %v2421, %v2564
    %v2570 = vxor.u32 %v2566, 2147483648
    %v2571 = vxor.u32 %v2567, 2147483648
    %v2572 = vxor.u32 %v2568, 2147483648
    %v2573 = vmul.f32 %v2570, 1.442695
    %v2574 = vpow.pop %v2573
    %v2575 = vmul.f32 %v2571, 1.442695
    %v2576 = vpow.pop %v2575
    %v2577 = vmul.f32 %v2572, 1.442695
    %v2578 = vpow.pop %v2577
    %v2579 = vadd.f32 %v2574, 1.0
    %v2580 = vadd.f32 %v2576, 1.0
    %v2581 = vadd.f32 %v2578, 1.0
    %v2582 = vrcp.pop %v2579
    %v2583 = vmul.f32 %v2579, %v2582
    %v2584 = vsub.f32 1.0, %v2583
    %v2585 = vmul.f32 %v2582, %v2584
    %v2586 = vadd.f32 %v2582, %v2585
    %vm2587 = vweird.f32 %v2579
    %vm2588 = vweird.f32 %v2582
    %vm2589 = vmor %vm2587, %vm2588
    %v2590 = vsel %vm2589, %v2582, %v2586
    %v2591 = vand.u32 2147483647, %v2579
    %vm2592 = vcmp.eq.f32.partialorder %v2591, 8.507059e+37
    %v2593 = vand.u32 %v2579, 2147483648
    %v2594 = vor.u32 1.1754944e-38, %v2593
    %v2595 = vsel %vm2592, %v2594, %v2590
    %v2596 = vmul.f32 1.0, %v2595
    %v2597 = vrcp.pop %v2580
    %v2598 = vmul.f32 %v2580, %v2597
    %v2599 = vsub.f32 1.0, %v2598
    %v2600 = vmul.f32 %v2597, %v2599
    %v2601 = vadd.f32 %v2597, %v2600
    %vm2602 = vweird.f32 %v2580
    %vm2603 = vweird.f32 %v2597
    %vm2604 = vmor %vm2602, %vm2603
    %v2605 = vsel %vm2604, %v2597, %v2601
    %v2606 = vand.u32 2147483647, %v2580
    %vm2607 = vcmp.eq.f32.partialorder %v2606, 8.507059e+37
    %v2608 = vand.u32 %v2580, 2147483648
    %v2609 = vor.u32 1.1754944e-38, %v2608
    %v2610 = vsel %vm2607, %v2609, %v2605
    %v2611 = vmul.f32 1.0, %v2610
    %v2612 = vrcp.pop %v2581
    %v2613 = vmul.f32 %v2581, %v2612
    %v2614 = vsub.f32 1.0, %v2613
    %v2615 = vmul.f32 %v2612, %v2614
    %v2616 = vadd.f32 %v2612, %v2615
    %vm2617 = vweird.f32 %v2581
    %vm2618 = vweird.f32 %v2612
    %vm2619 = vmor %vm2617, %vm2618
    %v2620 = vsel %vm2619, %v2612, %v2616
    %v2621 = vand.u32 2147483647, %v2581
    %vm2622 = vcmp.eq.f32.partialorder %v2621, 8.507059e+37
    %v2623 = vand.u32 %v2581, 2147483648
    %v2624 = vor.u32 1.1754944e-38, %v2623
    %v2625 = vsel %vm2622, %v2624, %v2620
    %v2626 = vmul.f32 1.0, %v2625
    %v2627 = vtanh.pop %v2569
    %v2628 = vmul.f32 %v2611, %v2414
    %v2629 = vmul.f32 %v2596, %v2627
    %v2630 = vadd.f32 %v2628, %v2629
    %v2631 = vtanh.pop %v2630
    %v2632 = vmul.f32 %v2626, %v2631
    %2633 = vst [vmem:[#allocation3 + $0x40] sm:$0xff] %v2632
    %v2634 = vld [vmem:[#allocation2 + $0x120] sm:$0xff]
    %v2635 = vld [vmem:[#allocation2 + $0x128] sm:$0xff]
    %v2636 = vld [vmem:[#allocation2 + $0x130] sm:$0xff]
    %v2637 = vld [vmem:[#allocation2 + $0x138] sm:$0xff]
    %v2638 = vld [vmem:[#allocation4] sm:$0xff]
    %v2639 = vld [vmem:[#allocation4 + $0x8] sm:$0xff]
    %v2640 = vld [vmem:[#allocation4 + $0x10] sm:$0xff]
    %v2641 = vld [vmem:[#allocation4 + $0x18] sm:$0xff]
    %v2642 = vld [vmem:[#allocation4 + $0x20] sm:$0xff]
    %v2643 = vld [vmem:[#allocation4 + $0x28] sm:$0xff]
    %v2644 = vld [vmem:[#allocation4 + $0x30] sm:$0xff]
    %v2645 = vld [vmem:[#allocation4 + $0x38] sm:$0xff]
    %v2646 = vld [vmem:[#allocation4 + $0x40] sm:$0xff]
    %v2647 = vld [vmem:[#allocation4 + $0x48] sm:$0xff]
    %v2648 = vld [vmem:[#allocation4 + $0x50] sm:$0xff]
    %v2649 = vld [vmem:[#allocation4 + $0x58] sm:$0xff]
    %v2650 = vld [vmem:[#allocation4 + $0x60] sm:$0xff]
    %v2651 = vld [vmem:[#allocation4 + $0x68] sm:$0xff]
    %v2652 = vld [vmem:[#allocation4 + $0x70] sm:$0xff]
    %v2653 = vld [vmem:[#allocation4 + $0x78] sm:$0xff]
    %v2654 = vld [vmem:[#allocation4 + $0x80] sm:$0xff]
    %v2655 = vld [vmem:[#allocation4 + $0x88] sm:$0xff]
    %v2656 = vld [vmem:[#allocation4 + $0x90] sm:$0xff]
    %v2657 = vld [vmem:[#allocation4 + $0x98] sm:$0xff]
    %v2658 = vld [vmem:[#allocation4 + $0xa0] sm:$0xff]
    %v2659 = vld [vmem:[#allocation4 + $0xa8] sm:$0xff]
    %v2660 = vld [vmem:[#allocation4 + $0xb0] sm:$0xff]
    %v2661 = vld [vmem:[#allocation4 + $0xb8] sm:$0xff]
    %v2662 = vld [vmem:[#allocation4 + $0xc0] sm:$0xff]
    %v2663 = vld [vmem:[#allocation4 + $0xc8] sm:$0xff]
    %v2664 = vld [vmem:[#allocation4 + $0xd0] sm:$0xff]
    %v2665 = vld [vmem:[#allocation4 + $0xd8] sm:$0xff]
    %v2666 = vld [vmem:[#allocation4 + $0xe0] sm:$0xff]
    %v2667 = vld [vmem:[#allocation4 + $0xe8] sm:$0xff]
    %v2668 = vld [vmem:[#allocation4 + $0xf0] sm:$0xff]
    %v2669 = vld [vmem:[#allocation4 + $0xf8] sm:$0xff]
    %v2670 = vld [vmem:[#allocation4 + $0x100] sm:$0xff]
    %v2671 = vld [vmem:[#allocation4 + $0x108] sm:$0xff]
    %v2672 = vld [vmem:[#allocation4 + $0x110] sm:$0xff]
    %v2673 = vld [vmem:[#allocation4 + $0x118] sm:$0xff]
    %v2674 = vld [vmem:[#allocation4 + $0x120] sm:$0xff]
    %v2675 = vld [vmem:[#allocation4 + $0x128] sm:$0xff]
    %v2676 = vld [vmem:[#allocation4 + $0x130] sm:$0xff]
    %v2677 = vld [vmem:[#allocation4 + $0x138] sm:$0xff]
    %v2678 = vld [vmem:[#allocation4 + $0x140] sm:$0xff]
    %v2679 = vld [vmem:[#allocation4 + $0x148] sm:$0xff]
    %v2680 = vld [vmem:[#allocation4 + $0x150] sm:$0xff]
    %v2681 = vld [vmem:[#allocation4 + $0x158] sm:$0xff]
    %v2682 = vld [vmem:[#allocation4 + $0x160] sm:$0xff]
    %v2683 = vld [vmem:[#allocation4 + $0x168] sm:$0xff]
    %v2684 = vld [vmem:[#allocation4 + $0x170] sm:$0xff]
    %v2685 = vld [vmem:[#allocation4 + $0x178] sm:$0xff]
    %v2686 = vld [vmem:[#allocation4 + $0x180] sm:$0xff]
    %v2687 = vld [vmem:[#allocation4 + $0x188] sm:$0xff]
    %v2688 = vld [vmem:[#allocation4 + $0x190] sm:$0xff]
    %v2689 = vld [vmem:[#allocation4 + $0x198] sm:$0xff]
    %v2690 = vld [vmem:[#allocation4 + $0x1a0] sm:$0xff]
    %v2691 = vld [vmem:[#allocation4 + $0x1a8] sm:$0xff]
    %v2692 = vld [vmem:[#allocation4 + $0x1b0] sm:$0xff]
    %v2693 = vld [vmem:[#allocation4 + $0x1b8] sm:$0xff]
    %v2694 = vld [vmem:[#allocation4 + $0x1c0] sm:$0xff]
    %v2695 = vld [vmem:[#allocation4 + $0x1c8] sm:$0xff]
    %v2696 = vld [vmem:[#allocation4 + $0x1d0] sm:$0xff]
    %v2697 = vld [vmem:[#allocation4 + $0x1d8] sm:$0xff]
    %v2698 = vld [vmem:[#allocation4 + $0x1e0] sm:$0xff]
    %v2699 = vld [vmem:[#allocation4 + $0x1e8] sm:$0xff]
    %v2700 = vld [vmem:[#allocation4 + $0x1f0] sm:$0xff]
    %v2701 = vld [vmem:[#allocation4 + $0x1f8] sm:$0xff]
    %2702 = vmatpush.msra.mxu0 %v2698
    %2703 = vmatpush.msra.mxu0 %v2694
    %2704 = vmatpush.msra.mxu0 %v2690
    %2705 = vmatpush.msra.mxu0 %v2686
    %2706 = vmatpush.msra.mxu0 %v2682
    %2707 = vmatpush.msra.mxu0 %v2678
    %2708 = vmatpush.msra.mxu0 %v2674
    %2709 = vmatpush.msra.mxu0 %v2670
    %2710 = vmatpush.msra.mxu0 %v2666
    %2711 = vmatpush.msra.mxu0 %v2662
    %2712 = vmatpush.msra.mxu0 %v2658
    %2713 = vmatpush.msra.mxu0 %v2654
    %2714 = vmatpush.msra.mxu0 %v2650
    %2715 = vmatpush.msra.mxu0 %v2646
    %2716 = vmatpush.msra.mxu0 %v2642
    %2717 = vmatpush.msra.mxu0 %v2638
    %2718 = vmatmul.f32.gmra.mxu0 %v2632
    %v2719 = vpop.f32.mrf.mxu0
    %v2720 = vadd.f32 0.0, %v2719
    %2721 = vdwg.mxu0
    %2722 = vmatpush.msra.mxu0 %v2699
    %2723 = vmatpush.msra.mxu0 %v2695
    %2724 = vmatpush.msra.mxu0 %v2691
    %2725 = vmatpush.msra.mxu0 %v2687
    %2726 = vmatpush.msra.mxu0 %v2683
    %2727 = vmatpush.msra.mxu0 %v2679
    %2728 = vmatpush.msra.mxu0 %v2675
    %2729 = vmatpush.msra.mxu0 %v2671
    %2730 = vmatpush.msra.mxu0 %v2667
    %2731 = vmatpush.msra.mxu0 %v2663
    %2732 = vmatpush.msra.mxu0 %v2659
    %2733 = vmatpush.msra.mxu0 %v2655
    %2734 = vmatpush.msra.mxu0 %v2651
    %2735 = vmatpush.msra.mxu0 %v2647
    %2736 = vmatpush.msra.mxu0 %v2643
    %2737 = vmatpush.msra.mxu0 %v2639
    %2738 = vmatmul.f32.gmra.mxu0 %v2632
    %v2739 = vpop.f32.mrf.mxu0
    %v2740 = vadd.f32 0.0, %v2739
    %2741 = vdwg.mxu0
    %2742 = vmatpush.msra.mxu0 %v2700
    %2743 = vmatpush.msra.mxu0 %v2696
    %2744 = vmatpush.msra.mxu0 %v2692
    %2745 = vmatpush.msra.mxu0 %v2688
    %2746 = vmatpush.msra.mxu0 %v2684
    %2747 = vmatpush.msra.mxu0 %v2680
    %2748 = vmatpush.msra.mxu0 %v2676
    %2749 = vmatpush.msra.mxu0 %v2672
    %2750 = vmatpush.msra.mxu0 %v2668
    %2751 = vmatpush.msra.mxu0 %v2664
    %2752 = vmatpush.msra.mxu0 %v2660
    %2753 = vmatpush.msra.mxu0 %v2656
    %2754 = vmatpush.msra.mxu0 %v2652
    %2755 = vmatpush.msra.mxu0 %v2648
    %2756 = vmatpush.msra.mxu0 %v2644
    %2757 = vmatpush.msra.mxu0 %v2640
    %2758 = vmatmul.f32.gmra.mxu0 %v2632
    %v2759 = vpop.f32.mrf.mxu0
    %v2760 = vadd.f32 0.0, %v2759
    %2761 = vdwg.mxu0
    %2762 = vmatpush.msra.mxu0 %v2701
    %2763 = vmatpush.msra.mxu0 %v2697
    %2764 = vmatpush.msra.mxu0 %v2693
    %2765 = vmatpush.msra.mxu0 %v2689
    %2766 = vmatpush.msra.mxu0 %v2685
    %2767 = vmatpush.msra.mxu0 %v2681
    %2768 = vmatpush.msra.mxu0 %v2677
    %2769 = vmatpush.msra.mxu0 %v2673
    %2770 = vmatpush.msra.mxu0 %v2669
    %2771 = vmatpush.msra.mxu0 %v2665
    %2772 = vmatpush.msra.mxu0 %v2661
    %2773 = vmatpush.msra.mxu0 %v2657
    %2774 = vmatpush.msra.mxu0 %v2653
    %2775 = vmatpush.msra.mxu0 %v2649
    %2776 = vmatpush.msra.mxu0 %v2645
    %2777 = vmatpush.msra.mxu0 %v2641
    %2778 = vmatmul.f32.gmra.mxu0 %v2632
    %v2779 = vpop.f32.mrf.mxu0
    %v2780 = vadd.f32 0.0, %v2779
    %2781 = vdwg.mxu0
    %v2782 = vadd.f32 %v2634, %v2720
    %v2783 = vadd.f32 %v2635, %v2740
    %v2784 = vadd.f32 %v2636, %v2760
    %v2785 = vadd.f32 %v2637, %v2780
    %v2786 = vxor.u32 %v2782, 2147483648
    %v2787 = vxor.u32 %v2783, 2147483648
    %v2788 = vxor.u32 %v2784, 2147483648
    %v2789 = vmul.f32 %v2786, 1.442695
    %v2790 = vpow.pop %v2789
    %v2791 = vmul.f32 %v2787, 1.442695
    %v2792 = vpow.pop %v2791
    %v2793 = vmul.f32 %v2788, 1.442695
    %v2794 = vpow.pop %v2793
    %v2795 = vadd.f32 %v2790, 1.0
    %v2796 = vadd.f32 %v2792, 1.0
    %v2797 = vadd.f32 %v2794, 1.0
    %v2798 = vrcp.pop %v2795
    %v2799 = vmul.f32 %v2795, %v2798
    %v2800 = vsub.f32 1.0, %v2799
    %v2801 = vmul.f32 %v2798, %v2800
    %v2802 = vadd.f32 %v2798, %v2801
    %vm2803 = vweird.f32 %v2795
    %vm2804 = vweird.f32 %v2798
    %vm2805 = vmor %vm2803, %vm2804
    %v2806 = vsel %vm2805, %v2798, %v2802
    %v2807 = vand.u32 2147483647, %v2795
    %vm2808 = vcmp.eq.f32.partialorder %v2807, 8.507059e+37
    %v2809 = vand.u32 %v2795, 2147483648
    %v2810 = vor.u32 1.1754944e-38, %v2809
    %v2811 = vsel %vm2808, %v2810, %v2806
    %v2812 = vmul.f32 1.0, %v2811
    %v2813 = vrcp.pop %v2796
    %v2814 = vmul.f32 %v2796, %v2813
    %v2815 = vsub.f32 1.0, %v2814
    %v2816 = vmul.f32 %v2813, %v2815
    %v2817 = vadd.f32 %v2813, %v2816
    %vm2818 = vweird.f32 %v2796
    %vm2819 = vweird.f32 %v2813
    %vm2820 = vmor %vm2818, %vm2819
    %v2821 = vsel %vm2820, %v2813, %v2817
    %v2822 = vand.u32 2147483647, %v2796
    %vm2823 = vcmp.eq.f32.partialorder %v2822, 8.507059e+37
    %v2824 = vand.u32 %v2796, 2147483648
    %v2825 = vor.u32 1.1754944e-38, %v2824
    %v2826 = vsel %vm2823, %v2825, %v2821
    %v2827 = vmul.f32 1.0, %v2826
    %v2828 = vrcp.pop %v2797
    %v2829 = vmul.f32 %v2797, %v2828
    %v2830 = vsub.f32 1.0, %v2829
    %v2831 = vmul.f32 %v2828, %v2830
    %v2832 = vadd.f32 %v2828, %v2831
    %vm2833 = vweird.f32 %v2797
    %vm2834 = vweird.f32 %v2828
    %vm2835 = vmor %vm2833, %vm2834
    %v2836 = vsel %vm2835, %v2828, %v2832
    %v2837 = vand.u32 2147483647, %v2797
    %vm2838 = vcmp.eq.f32.partialorder %v2837, 8.507059e+37
    %v2839 = vand.u32 %v2797, 2147483648
    %v2840 = vor.u32 1.1754944e-38, %v2839
    %v2841 = vsel %vm2838, %v2840, %v2836
    %v2842 = vmul.f32 1.0, %v2841
    %v2843 = vtanh.pop %v2785
    %v2844 = vmul.f32 %v2827, %v2630
    %v2845 = vmul.f32 %v2812, %v2843
    %v2846 = vadd.f32 %v2844, %v2845
    %v2847 = vtanh.pop %v2846
    %v2848 = vmul.f32 %v2842, %v2847
    %2849 = vst [vmem:[#allocation3 + $0x48] sm:$0xff] %v2848
    %v2850 = vld [vmem:[#allocation2 + $0x140] sm:$0xff]
    %v2851 = vld [vmem:[#allocation2 + $0x148] sm:$0xff]
    %v2852 = vld [vmem:[#allocation2 + $0x150] sm:$0xff]
    %v2853 = vld [vmem:[#allocation2 + $0x158] sm:$0xff]
    %v2854 = vld [vmem:[#allocation4] sm:$0xff]
    %v2855 = vld [vmem:[#allocation4 + $0x8] sm:$0xff]
    %v2856 = vld [vmem:[#allocation4 + $0x10] sm:$0xff]
    %v2857 = vld [vmem:[#allocation4 + $0x18] sm:$0xff]
    %v2858 = vld [vmem:[#allocation4 + $0x20] sm:$0xff]
    %v2859 = vld [vmem:[#allocation4 + $0x28] sm:$0xff]
    %v2860 = vld [vmem:[#allocation4 + $0x30] sm:$0xff]
    %v2861 = vld [vmem:[#allocation4 + $0x38] sm:$0xff]
    %v2862 = vld [vmem:[#allocation4 + $0x40] sm:$0xff]
    %v2863 = vld [vmem:[#allocation4 + $0x48] sm:$0xff]
    %v2864 = vld [vmem:[#allocation4 + $0x50] sm:$0xff]
    %v2865 = vld [vmem:[#allocation4 + $0x58] sm:$0xff]
    %v2866 = vld [vmem:[#allocation4 + $0x60] sm:$0xff]
    %v2867 = vld [vmem:[#allocation4 + $0x68] sm:$0xff]
    %v2868 = vld [vmem:[#allocation4 + $0x70] sm:$0xff]
    %v2869 = vld [vmem:[#allocation4 + $0x78] sm:$0xff]
    %v2870 = vld [vmem:[#allocation4 + $0x80] sm:$0xff]
    %v2871 = vld [vmem:[#allocation4 + $0x88] sm:$0xff]
    %v2872 = vld [vmem:[#allocation4 + $0x90] sm:$0xff]
    %v2873 = vld [vmem:[#allocation4 + $0x98] sm:$0xff]
    %v2874 = vld [vmem:[#allocation4 + $0xa0] sm:$0xff]
    %v2875 = vld [vmem:[#allocation4 + $0xa8] sm:$0xff]
    %v2876 = vld [vmem:[#allocation4 + $0xb0] sm:$0xff]
    %v2877 = vld [vmem:[#allocation4 + $0xb8] sm:$0xff]
    %v2878 = vld [vmem:[#allocation4 + $0xc0] sm:$0xff]
    %v2879 = vld [vmem:[#allocation4 + $0xc8] sm:$0xff]
    %v2880 = vld [vmem:[#allocation4 + $0xd0] sm:$0xff]
    %v2881 = vld [vmem:[#allocation4 + $0xd8] sm:$0xff]
    %v2882 = vld [vmem:[#allocation4 + $0xe0] sm:$0xff]
    %v2883 = vld [vmem:[#allocation4 + $0xe8] sm:$0xff]
    %v2884 = vld [vmem:[#allocation4 + $0xf0] sm:$0xff]
    %v2885 = vld [vmem:[#allocation4 + $0xf8] sm:$0xff]
    %v2886 = vld [vmem:[#allocation4 + $0x100] sm:$0xff]
    %v2887 = vld [vmem:[#allocation4 + $0x108] sm:$0xff]
    %v2888 = vld [vmem:[#allocation4 + $0x110] sm:$0xff]
    %v2889 = vld [vmem:[#allocation4 + $0x118] sm:$0xff]
    %v2890 = vld [vmem:[#allocation4 + $0x120] sm:$0xff]
    %v2891 = vld [vmem:[#allocation4 + $0x128] sm:$0xff]
    %v2892 = vld [vmem:[#allocation4 + $0x130] sm:$0xff]
    %v2893 = vld [vmem:[#allocation4 + $0x138] sm:$0xff]
    %v2894 = vld [vmem:[#allocation4 + $0x140] sm:$0xff]
    %v2895 = vld [vmem:[#allocation4 + $0x148] sm:$0xff]
    %v2896 = vld [vmem:[#allocation4 + $0x150] sm:$0xff]
    %v2897 = vld [vmem:[#allocation4 + $0x158] sm:$0xff]
    %v2898 = vld [vmem:[#allocation4 + $0x160] sm:$0xff]
    %v2899 = vld [vmem:[#allocation4 + $0x168] sm:$0xff]
    %v2900 = vld [vmem:[#allocation4 + $0x170] sm:$0xff]
    %v2901 = vld [vmem:[#allocation4 + $0x178] sm:$0xff]
    %v2902 = vld [vmem:[#allocation4 + $0x180] sm:$0xff]
    %v2903 = vld [vmem:[#allocation4 + $0x188] sm:$0xff]
    %v2904 = vld [vmem:[#allocation4 + $0x190] sm:$0xff]
    %v2905 = vld [vmem:[#allocation4 + $0x198] sm:$0xff]
    %v2906 = vld [vmem:[#allocation4 + $0x1a0] sm:$0xff]
    %v2907 = vld [vmem:[#allocation4 + $0x1a8] sm:$0xff]
    %v2908 = vld [vmem:[#allocation4 + $0x1b0] sm:$0xff]
    %v2909 = vld [vmem:[#allocation4 + $0x1b8] sm:$0xff]
    %v2910 = vld [vmem:[#allocation4 + $0x1c0] sm:$0xff]
    %v2911 = vld [vmem:[#allocation4 + $0x1c8] sm:$0xff]
    %v2912 = vld [vmem:[#allocation4 + $0x1d0] sm:$0xff]
    %v2913 = vld [vmem:[#allocation4 + $0x1d8] sm:$0xff]
    %v2914 = vld [vmem:[#allocation4 + $0x1e0] sm:$0xff]
    %v2915 = vld [vmem:[#allocation4 + $0x1e8] sm:$0xff]
    %v2916 = vld [vmem:[#allocation4 + $0x1f0] sm:$0xff]
    %v2917 = vld [vmem:[#allocation4 + $0x1f8] sm:$0xff]
    %2918 = vmatpush.msra.mxu0 %v2914
    %2919 = vmatpush.msra.mxu0 %v2910
    %2920 = vmatpush.msra.mxu0 %v2906
    %2921 = vmatpush.msra.mxu0 %v2902
    %2922 = vmatpush.msra.mxu0 %v2898
    %2923 = vmatpush.msra.mxu0 %v2894
    %2924 = vmatpush.msra.mxu0 %v2890
    %2925 = vmatpush.msra.mxu0 %v2886
    %2926 = vmatpush.msra.mxu0 %v2882
    %2927 = vmatpush.msra.mxu0 %v2878
    %2928 = vmatpush.msra.mxu0 %v2874
    %2929 = vmatpush.msra.mxu0 %v2870
    %2930 = vmatpush.msra.mxu0 %v2866
    %2931 = vmatpush.msra.mxu0 %v2862
    %2932 = vmatpush.msra.mxu0 %v2858
    %2933 = vmatpush.msra.mxu0 %v2854
    %2934 = vmatmul.f32.gmra.mxu0 %v2848
    %v2935 = vpop.f32.mrf.mxu0
    %v2936 = vadd.f32 0.0, %v2935
    %2937 = vdwg.mxu0
    %2938 = vmatpush.msra.mxu0 %v2915
    %2939 = vmatpush.msra.mxu0 %v2911
    %2940 = vmatpush.msra.mxu0 %v2907
    %2941 = vmatpush.msra.mxu0 %v2903
    %2942 = vmatpush.msra.mxu0 %v2899
    %2943 = vmatpush.msra.mxu0 %v2895
    %2944 = vmatpush.msra.mxu0 %v2891
    %2945 = vmatpush.msra.mxu0 %v2887
    %2946 = vmatpush.msra.mxu0 %v2883
    %2947 = vmatpush.msra.mxu0 %v2879
    %2948 = vmatpush.msra.mxu0 %v2875
    %2949 = vmatpush.msra.mxu0 %v2871
    %2950 = vmatpush.msra.mxu0 %v2867
    %2951 = vmatpush.msra.mxu0 %v2863
    %2952 = vmatpush.msra.mxu0 %v2859
    %2953 = vmatpush.msra.mxu0 %v2855
    %2954 = vmatmul.f32.gmra.mxu0 %v2848
    %v2955 = vpop.f32.mrf.mxu0
    %v2956 = vadd.f32 0.0, %v2955
    %2957 = vdwg.mxu0
    %2958 = vmatpush.msra.mxu0 %v2916
    %2959 = vmatpush.msra.mxu0 %v2912
    %2960 = vmatpush.msra.mxu0 %v2908
    %2961 = vmatpush.msra.mxu0 %v2904
    %2962 = vmatpush.msra.mxu0 %v2900
    %2963 = vmatpush.msra.mxu0 %v2896
    %2964 = vmatpush.msra.mxu0 %v2892
    %2965 = vmatpush.msra.mxu0 %v2888
    %2966 = vmatpush.msra.mxu0 %v2884
    %2967 = vmatpush.msra.mxu0 %v2880
    %2968 = vmatpush.msra.mxu0 %v2876
    %2969 = vmatpush.msra.mxu0 %v2872
    %2970 = vmatpush.msra.mxu0 %v2868
    %2971 = vmatpush.msra.mxu0 %v2864
    %2972 = vmatpush.msra.mxu0 %v2860
    %2973 = vmatpush.msra.mxu0 %v2856
    %2974 = vmatmul.f32.gmra.mxu0 %v2848
    %v2975 = vpop.f32.mrf.mxu0
    %v2976 = vadd.f32 0.0, %v2975
    %2977 = vdwg.mxu0
    %2978 = vmatpush.msra.mxu0 %v2917
    %2979 = vmatpush.msra.mxu0 %v2913
    %2980 = vmatpush.msra.mxu0 %v2909
    %2981 = vmatpush.msra.mxu0 %v2905
    %2982 = vmatpush.msra.mxu0 %v2901
    %2983 = vmatpush.msra.mxu0 %v2897
    %2984 = vmatpush.msra.mxu0 %v2893
    %2985 = vmatpush.msra.mxu0 %v2889
    %2986 = vmatpush.msra.mxu0 %v2885
    %2987 = vmatpush.msra.mxu0 %v2881
    %2988 = vmatpush.msra.mxu0 %v2877
    %2989 = vmatpush.msra.mxu0 %v2873
    %2990 = vmatpush.msra.mxu0 %v2869
    %2991 = vmatpush.msra.mxu0 %v2865
    %2992 = vmatpush.msra.mxu0 %v2861
    %2993 = vmatpush.msra.mxu0 %v2857
    %2994 = vmatmul.f32.gmra.mxu0 %v2848
    %v2995 = vpop.f32.mrf.mxu0
    %v2996 = vadd.f32 0.0, %v2995
    %2997 = vdwg.mxu0
    %v2998 = vadd.f32 %v2850, %v2936
    %v2999 = vadd.f32 %v2851, %v2956
    %v3000 = vadd.f32 %v2852, %v2976
    %v3001 = vadd.f32 %v2853, %v2996
    %v3002 = vxor.u32 %v2998, 2147483648
    %v3003 = vxor.u32 %v2999, 2147483648
    %v3004 = vxor.u32 %v3000, 2147483648
    %v3005 = vmul.f32 %v3002, 1.442695
    %v3006 = vpow.pop %v3005
    %v3007 = vmul.f32 %v3003, 1.442695
    %v3008 = vpow.pop %v3007
    %v3009 = vmul.f32 %v3004, 1.442695
    %v3010 = vpow.pop %v3009
    %v3011 = vadd.f32 %v3006, 1.0
    %v3012 = vadd.f32 %v3008, 1.0
    %v3013 = vadd.f32 %v3010, 1.0
    %v3014 = vrcp.pop %v3011
    %v3015 = vmul.f32 %v3011, %v3014
    %v3016 = vsub.f32 1.0, %v3015
    %v3017 = vmul.f32 %v3014, %v3016
    %v3018 = vadd.f32 %v3014, %v3017
    %vm3019 = vweird.f32 %v3011
    %vm3020 = vweird.f32 %v3014
    %vm3021 = vmor %vm3019, %vm3020
    %v3022 = vsel %vm3021, %v3014, %v3018
    %v3023 = vand.u32 2147483647, %v3011
    %vm3024 = vcmp.eq.f32.partialorder %v3023, 8.507059e+37
    %v3025 = vand.u32 %v3011, 2147483648
    %v3026 = vor.u32 1.1754944e-38, %v3025
    %v3027 = vsel %vm3024, %v3026, %v3022
    %v3028 = vmul.f32 1.0, %v3027
    %v3029 = vrcp.pop %v3012
    %v3030 = vmul.f32 %v3012, %v3029
    %v3031 = vsub.f32 1.0, %v3030
    %v3032 = vmul.f32 %v3029, %v3031
    %v3033 = vadd.f32 %v3029, %v3032
    %vm3034 = vweird.f32 %v3012
    %vm3035 = vweird.f32 %v3029
    %vm3036 = vmor %vm3034, %vm3035
    %v3037 = vsel %vm3036, %v3029, %v3033
    %v3038 = vand.u32 2147483647, %v3012
    %vm3039 = vcmp.eq.f32.partialorder %v3038, 8.507059e+37
    %v3040 = vand.u32 %v3012, 2147483648
    %v3041 = vor.u32 1.1754944e-38, %v3040
    %v3042 = vsel %vm3039, %v3041, %v3037
    %v3043 = vmul.f32 1.0, %v3042
    %v3044 = vrcp.pop %v3013
    %v3045 = vmul.f32 %v3013, %v3044
    %v3046 = vsub.f32 1.0, %v3045
    %v3047 = vmul.f32 %v3044, %v3046
    %v3048 = vadd.f32 %v3044, %v3047
    %vm3049 = vweird.f32 %v3013
    %vm3050 = vweird.f32 %v3044
    %vm3051 = vmor %vm3049, %vm3050
    %v3052 = vsel %vm3051, %v3044, %v3048
    %v3053 = vand.u32 2147483647, %v3013
    %vm3054 = vcmp.eq.f32.partialorder %v3053, 8.507059e+37
    %v3055 = vand.u32 %v3013, 2147483648
    %v3056 = vor.u32 1.1754944e-38, %v3055
    %v3057 = vsel %vm3054, %v3056, %v3052
    %v3058 = vmul.f32 1.0, %v3057
    %v3059 = vtanh.pop %v3001
    %v3060 = vmul.f32 %v3043, %v2846
    %v3061 = vmul.f32 %v3028, %v3059
    %v3062 = vadd.f32 %v3060, %v3061
    %v3063 = vtanh.pop %v3062
    %v3064 = vmul.f32 %v3058, %v3063
    %3065 = vst [vmem:[#allocation3 + $0x50] sm:$0xff] %v3064
    %v3066 = vld [vmem:[#allocation2 + $0x160] sm:$0xff]
    %v3067 = vld [vmem:[#allocation2 + $0x168] sm:$0xff]
    %v3068 = vld [vmem:[#allocation2 + $0x170] sm:$0xff]
    %v3069 = vld [vmem:[#allocation2 + $0x178] sm:$0xff]
    %v3070 = vld [vmem:[#allocation4] sm:$0xff]
    %v3071 = vld [vmem:[#allocation4 + $0x8] sm:$0xff]
    %v3072 = vld [vmem:[#allocation4 + $0x10] sm:$0xff]
    %v3073 = vld [vmem:[#allocation4 + $0x18] sm:$0xff]
    %v3074 = vld [vmem:[#allocation4 + $0x20] sm:$0xff]
    %v3075 = vld [vmem:[#allocation4 + $0x28] sm:$0xff]
    %v3076 = vld [vmem:[#allocation4 + $0x30] sm:$0xff]
    %v3077 = vld [vmem:[#allocation4 + $0x38] sm:$0xff]
    %v3078 = vld [vmem:[#allocation4 + $0x40] sm:$0xff]
    %v3079 = vld [vmem:[#allocation4 + $0x48] sm:$0xff]
    %v3080 = vld [vmem:[#allocation4 + $0x50] sm:$0xff]
    %v3081 = vld [vmem:[#allocation4 + $0x58] sm:$0xff]
    %v3082 = vld [vmem:[#allocation4 + $0x60] sm:$0xff]
    %v3083 = vld [vmem:[#allocation4 + $0x68] sm:$0xff]
    %v3084 = vld [vmem:[#allocation4 + $0x70] sm:$0xff]
    %v3085 = vld [vmem:[#allocation4 + $0x78] sm:$0xff]
    %v3086 = vld [vmem:[#allocation4 + $0x80] sm:$0xff]
    %v3087 = vld [vmem:[#allocation4 + $0x88] sm:$0xff]
    %v3088 = vld [vmem:[#allocation4 + $0x90] sm:$0xff]
    %v3089 = vld [vmem:[#allocation4 + $0x98] sm:$0xff]
    %v3090 = vld [vmem:[#allocation4 + $0xa0] sm:$0xff]
    %v3091 = vld [vmem:[#allocation4 + $0xa8] sm:$0xff]
    %v3092 = vld [vmem:[#allocation4 + $0xb0] sm:$0xff]
    %v3093 = vld [vmem:[#allocation4 + $0xb8] sm:$0xff]
    %v3094 = vld [vmem:[#allocation4 + $0xc0] sm:$0xff]
    %v3095 = vld [vmem:[#allocation4 + $0xc8] sm:$0xff]
    %v3096 = vld [vmem:[#allocation4 + $0xd0] sm:$0xff]
    %v3097 = vld [vmem:[#allocation4 + $0xd8] sm:$0xff]
    %v3098 = vld [vmem:[#allocation4 + $0xe0] sm:$0xff]
    %v3099 = vld [vmem:[#allocation4 + $0xe8] sm:$0xff]
    %v3100 = vld [vmem:[#allocation4 + $0xf0] sm:$0xff]
    %v3101 = vld [vmem:[#allocation4 + $0xf8] sm:$0xff]
    %v3102 = vld [vmem:[#allocation4 + $0x100] sm:$0xff]
    %v3103 = vld [vmem:[#allocation4 + $0x108] sm:$0xff]
    %v3104 = vld [vmem:[#allocation4 + $0x110] sm:$0xff]
    %v3105 = vld [vmem:[#allocation4 + $0x118] sm:$0xff]
    %v3106 = vld [vmem:[#allocation4 + $0x120] sm:$0xff]
    %v3107 = vld [vmem:[#allocation4 + $0x128] sm:$0xff]
    %v3108 = vld [vmem:[#allocation4 + $0x130] sm:$0xff]
    %v3109 = vld [vmem:[#allocation4 + $0x138] sm:$0xff]
    %v3110 = vld [vmem:[#allocation4 + $0x140] sm:$0xff]
    %v3111 = vld [vmem:[#allocation4 + $0x148] sm:$0xff]
    %v3112 = vld [vmem:[#allocation4 + $0x150] sm:$0xff]
    %v3113 = vld [vmem:[#allocation4 + $0x158] sm:$0xff]
    %v3114 = vld [vmem:[#allocation4 + $0x160] sm:$0xff]
    %v3115 = vld [vmem:[#allocation4 + $0x168] sm:$0xff]
    %v3116 = vld [vmem:[#allocation4 + $0x170] sm:$0xff]
    %v3117 = vld [vmem:[#allocation4 + $0x178] sm:$0xff]
    %v3118 = vld [vmem:[#allocation4 + $0x180] sm:$0xff]
    %v3119 = vld [vmem:[#allocation4 + $0x188] sm:$0xff]
    %v3120 = vld [vmem:[#allocation4 + $0x190] sm:$0xff]
    %v3121 = vld [vmem:[#allocation4 + $0x198] sm:$0xff]
    %v3122 = vld [vmem:[#allocation4 + $0x1a0] sm:$0xff]
    %v3123 = vld [vmem:[#allocation4 + $0x1a8] sm:$0xff]
    %v3124 = vld [vmem:[#allocation4 + $0x1b0] sm:$0xff]
    %v3125 = vld [vmem:[#allocation4 + $0x1b8] sm:$0xff]
    %v3126 = vld [vmem:[#allocation4 + $0x1c0] sm:$0xff]
    %v3127 = vld [vmem:[#allocation4 + $0x1c8] sm:$0xff]
    %v3128 = vld [vmem:[#allocation4 + $0x1d0] sm:$0xff]
    %v3129 = vld [vmem:[#allocation4 + $0x1d8] sm:$0xff]
    %v3130 = vld [vmem:[#allocation4 + $0x1e0] sm:$0xff]
    %v3131 = vld [vmem:[#allocation4 + $0x1e8] sm:$0xff]
    %v3132 = vld [vmem:[#allocation4 + $0x1f0] sm:$0xff]
    %v3133 = vld [vmem:[#allocation4 + $0x1f8] sm:$0xff]
    %3134 = vmatpush.msra.mxu0 %v3130
    %3135 = vmatpush.msra.mxu0 %v3126
    %3136 = vmatpush.msra.mxu0 %v3122
    %3137 = vmatpush.msra.mxu0 %v3118
    %3138 = vmatpush.msra.mxu0 %v3114
    %3139 = vmatpush.msra.mxu0 %v3110
    %3140 = vmatpush.msra.mxu0 %v3106
    %3141 = vmatpush.msra.mxu0 %v3102
    %3142 = vmatpush.msra.mxu0 %v3098
    %3143 = vmatpush.msra.mxu0 %v3094
    %3144 = vmatpush.msra.mxu0 %v3090
    %3145 = vmatpush.msra.mxu0 %v3086
    %3146 = vmatpush.msra.mxu0 %v3082
    %3147 = vmatpush.msra.mxu0 %v3078
    %3148 = vmatpush.msra.mxu0 %v3074
    %3149 = vmatpush.msra.mxu0 %v3070
    %3150 = vmatmul.f32.gmra.mxu0 %v3064
    %v3151 = vpop.f32.mrf.mxu0
    %v3152 = vadd.f32 0.0, %v3151
    %3153 = vdwg.mxu0
    %3154 = vmatpush.msra.mxu0 %v3131
    %3155 = vmatpush.msra.mxu0 %v3127
    %3156 = vmatpush.msra.mxu0 %v3123
    %3157 = vmatpush.msra.mxu0 %v3119
    %3158 = vmatpush.msra.mxu0 %v3115
    %3159 = vmatpush.msra.mxu0 %v3111
    %3160 = vmatpush.msra.mxu0 %v3107
    %3161 = vmatpush.msra.mxu0 %v3103
    %3162 = vmatpush.msra.mxu0 %v3099
    %3163 = vmatpush.msra.mxu0 %v3095
    %3164 = vmatpush.msra.mxu0 %v3091
    %3165 = vmatpush.msra.mxu0 %v3087
    %3166 = vmatpush.msra.mxu0 %v3083
    %3167 = vmatpush.msra.mxu0 %v3079
    %3168 = vmatpush.msra.mxu0 %v3075
    %3169 = vmatpush.msra.mxu0 %v3071
    %3170 = vmatmul.f32.gmra.mxu0 %v3064
    %v3171 = vpop.f32.mrf.mxu0
    %v3172 = vadd.f32 0.0, %v3171
    %3173 = vdwg.mxu0
    %3174 = vmatpush.msra.mxu0 %v3132
    %3175 = vmatpush.msra.mxu0 %v3128
    %3176 = vmatpush.msra.mxu0 %v3124
    %3177 = vmatpush.msra.mxu0 %v3120
    %3178 = vmatpush.msra.mxu0 %v3116
    %3179 = vmatpush.msra.mxu0 %v3112
    %3180 = vmatpush.msra.mxu0 %v3108
    %3181 = vmatpush.msra.mxu0 %v3104
    %3182 = vmatpush.msra.mxu0 %v3100
    %3183 = vmatpush.msra.mxu0 %v3096
    %3184 = vmatpush.msra.mxu0 %v3092
    %3185 = vmatpush.msra.mxu0 %v3088
    %3186 = vmatpush.msra.mxu0 %v3084
    %3187 = vmatpush.msra.mxu0 %v3080
    %3188 = vmatpush.msra.mxu0 %v3076
    %3189 = vmatpush.msra.mxu0 %v3072
    %3190 = vmatmul.f32.gmra.mxu0 %v3064
    %v3191 = vpop.f32.mrf.mxu0
    %v3192 = vadd.f32 0.0, %v3191
    %3193 = vdwg.mxu0
    %3194 = vmatpush.msra.mxu0 %v3133
    %3195 = vmatpush.msra.mxu0 %v3129
    %3196 = vmatpush.msra.mxu0 %v3125
    %3197 = vmatpush.msra.mxu0 %v3121
    %3198 = vmatpush.msra.mxu0 %v3117
    %3199 = vmatpush.msra.mxu0 %v3113
    %3200 = vmatpush.msra.mxu0 %v3109
    %3201 = vmatpush.msra.mxu0 %v3105
    %3202 = vmatpush.msra.mxu0 %v3101
    %3203 = vmatpush.msra.mxu0 %v3097
    %3204 = vmatpush.msra.mxu0 %v3093
    %3205 = vmatpush.msra.mxu0 %v3089
    %3206 = vmatpush.msra.mxu0 %v3085
    %3207 = vmatpush.msra.mxu0 %v3081
    %3208 = vmatpush.msra.mxu0 %v3077
    %3209 = vmatpush.msra.mxu0 %v3073
    %3210 = vmatmul.f32.gmra.mxu0 %v3064
    %v3211 = vpop.f32.mrf.mxu0
    %v3212 = vadd.f32 0.0, %v3211
    %3213 = vdwg.mxu0
    %v3214 = vadd.f32 %v3066, %v3152
    %v3215 = vadd.f32 %v3067, %v3172
    %v3216 = vadd.f32 %v3068, %v3192
    %v3217 = vadd.f32 %v3069, %v3212
    %v3218 = vxor.u32 %v3214, 2147483648
    %v3219 = vxor.u32 %v3215, 2147483648
    %v3220 = vxor.u32 %v3216, 2147483648
    %v3221 = vmul.f32 %v3218, 1.442695
    %v3222 = vpow.pop %v3221
    %v3223 = vmul.f32 %v3219, 1.442695
    %v3224 = vpow.pop %v3223
    %v3225 = vmul.f32 %v3220, 1.442695
    %v3226 = vpow.pop %v3225
    %v3227 = vadd.f32 %v3222, 1.0
    %v3228 = vadd.f32 %v3224, 1.0
    %v3229 = vadd.f32 %v3226, 1.0
    %v3230 = vrcp.pop %v3227
    %v3231 = vmul.f32 %v3227, %v3230
    %v3232 = vsub.f32 1.0, %v3231
    %v3233 = vmul.f32 %v3230, %v3232
    %v3234 = vadd.f32 %v3230, %v3233
    %vm3235 = vweird.f32 %v3227
    %vm3236 = vweird.f32 %v3230
    %vm3237 = vmor %vm3235, %vm3236
    %v3238 = vsel %vm3237, %v3230, %v3234
    %v3239 = vand.u32 2147483647, %v3227
    %vm3240 = vcmp.eq.f32.partialorder %v3239, 8.507059e+37
    %v3241 = vand.u32 %v3227, 2147483648
    %v3242 = vor.u32 1.1754944e-38, %v3241
    %v3243 = vsel %vm3240, %v3242, %v3238
    %v3244 = vmul.f32 1.0, %v3243
    %v3245 = vrcp.pop %v3228
    %v3246 = vmul.f32 %v3228, %v3245
    %v3247 = vsub.f32 1.0, %v3246
    %v3248 = vmul.f32 %v3245, %v3247
    %v3249 = vadd.f32 %v3245, %v3248
    %vm3250 = vweird.f32 %v3228
    %vm3251 = vweird.f32 %v3245
    %vm3252 = vmor %vm3250, %vm3251
    %v3253 = vsel %vm3252, %v3245, %v3249
    %v3254 = vand.u32 2147483647, %v3228
    %vm3255 = vcmp.eq.f32.partialorder %v3254, 8.507059e+37
    %v3256 = vand.u32 %v3228, 2147483648
    %v3257 = vor.u32 1.1754944e-38, %v3256
    %v3258 = vsel %vm3255, %v3257, %v3253
    %v3259 = vmul.f32 1.0, %v3258
    %v3260 = vrcp.pop %v3229
    %v3261 = vmul.f32 %v3229, %v3260
    %v3262 = vsub.f32 1.0, %v3261
    %v3263 = vmul.f32 %v3260, %v3262
    %v3264 = vadd.f32 %v3260, %v3263
    %vm3265 = vweird.f32 %v3229
    %vm3266 = vweird.f32 %v3260
    %vm3267 = vmor %vm3265, %vm3266
    %v3268 = vsel %vm3267, %v3260, %v3264
    %v3269 = vand.u32 2147483647, %v3229
    %vm3270 = vcmp.eq.f32.partialorder %v3269, 8.507059e+37
    %v3271 = vand.u32 %v3229, 2147483648
    %v3272 = vor.u32 1.1754944e-38, %v3271
    %v3273 = vsel %vm3270, %v3272, %v3268
    %v3274 = vmul.f32 1.0, %v3273
    %v3275 = vtanh.pop %v3217
    %v3276 = vmul.f32 %v3259, %v3062
    %v3277 = vmul.f32 %v3244, %v3275
    %v3278 = vadd.f32 %v3276, %v3277
    %v3279 = vtanh.pop %v3278
    %v3280 = vmul.f32 %v3274, %v3279
    %3281 = vst [vmem:[#allocation3 + $0x58] sm:$0xff] %v3280
    %v3282 = vld [vmem:[#allocation2 + $0x180] sm:$0xff]
    %v3283 = vld [vmem:[#allocation2 + $0x188] sm:$0xff]
    %v3284 = vld [vmem:[#allocation2 + $0x190] sm:$0xff]
    %v3285 = vld [vmem:[#allocation2 + $0x198] sm:$0xff]
    %v3286 = vld [vmem:[#allocation4] sm:$0xff]
    %v3287 = vld [vmem:[#allocation4 + $0x8] sm:$0xff]
    %v3288 = vld [vmem:[#allocation4 + $0x10] sm:$0xff]
    %v3289 = vld [vmem:[#allocation4 + $0x18] sm:$0xff]
    %v3290 = vld [vmem:[#allocation4 + $0x20] sm:$0xff]
    %v3291 = vld [vmem:[#allocation4 + $0x28] sm:$0xff]
    %v3292 = vld [vmem:[#allocation4 + $0x30] sm:$0xff]
    %v3293 = vld [vmem:[#allocation4 + $0x38] sm:$0xff]
    %v3294 = vld [vmem:[#allocation4 + $0x40] sm:$0xff]
    %v3295 = vld [vmem:[#allocation4 + $0x48] sm:$0xff]
    %v3296 = vld [vmem:[#allocation4 + $0x50] sm:$0xff]
    %v3297 = vld [vmem:[#allocation4 + $0x58] sm:$0xff]
    %v3298 = vld [vmem:[#allocation4 + $0x60] sm:$0xff]
    %v3299 = vld [vmem:[#allocation4 + $0x68] sm:$0xff]
    %v3300 = vld [vmem:[#allocation4 + $0x70] sm:$0xff]
    %v3301 = vld [vmem:[#allocation4 + $0x78] sm:$0xff]
    %v3302 = vld [vmem:[#allocation4 + $0x80] sm:$0xff]
    %v3303 = vld [vmem:[#allocation4 + $0x88] sm:$0xff]
    %v3304 = vld [vmem:[#allocation4 + $0x90] sm:$0xff]
    %v3305 = vld [vmem:[#allocation4 + $0x98] sm:$0xff]
    %v3306 = vld [vmem:[#allocation4 + $0xa0] sm:$0xff]
    %v3307 = vld [vmem:[#allocation4 + $0xa8] sm:$0xff]
    %v3308 = vld [vmem:[#allocation4 + $0xb0] sm:$0xff]
    %v3309 = vld [vmem:[#allocation4 + $0xb8] sm:$0xff]
    %v3310 = vld [vmem:[#allocation4 + $0xc0] sm:$0xff]
    %v3311 = vld [vmem:[#allocation4 + $0xc8] sm:$0xff]
    %v3312 = vld [vmem:[#allocation4 + $0xd0] sm:$0xff]
    %v3313 = vld [vmem:[#allocation4 + $0xd8] sm:$0xff]
    %v3314 = vld [vmem:[#allocation4 + $0xe0] sm:$0xff]
    %v3315 = vld [vmem:[#allocation4 + $0xe8] sm:$0xff]
    %v3316 = vld [vmem:[#allocation4 + $0xf0] sm:$0xff]
    %v3317 = vld [vmem:[#allocation4 + $0xf8] sm:$0xff]
    %v3318 = vld [vmem:[#allocation4 + $0x100] sm:$0xff]
    %v3319 = vld [vmem:[#allocation4 + $0x108] sm:$0xff]
    %v3320 = vld [vmem:[#allocation4 + $0x110] sm:$0xff]
    %v3321 = vld [vmem:[#allocation4 + $0x118] sm:$0xff]
    %v3322 = vld [vmem:[#allocation4 + $0x120] sm:$0xff]
    %v3323 = vld [vmem:[#allocation4 + $0x128] sm:$0xff]
    %v3324 = vld [vmem:[#allocation4 + $0x130] sm:$0xff]
    %v3325 = vld [vmem:[#allocation4 + $0x138] sm:$0xff]
    %v3326 = vld [vmem:[#allocation4 + $0x140] sm:$0xff]
    %v3327 = vld [vmem:[#allocation4 + $0x148] sm:$0xff]
    %v3328 = vld [vmem:[#allocation4 + $0x150] sm:$0xff]
    %v3329 = vld [vmem:[#allocation4 + $0x158] sm:$0xff]
    %v3330 = vld [vmem:[#allocation4 + $0x160] sm:$0xff]
    %v3331 = vld [vmem:[#allocation4 + $0x168] sm:$0xff]
    %v3332 = vld [vmem:[#allocation4 + $0x170] sm:$0xff]
    %v3333 = vld [vmem:[#allocation4 + $0x178] sm:$0xff]
    %v3334 = vld [vmem:[#allocation4 + $0x180] sm:$0xff]
    %v3335 = vld [vmem:[#allocation4 + $0x188] sm:$0xff]
    %v3336 = vld [vmem:[#allocation4 + $0x190] sm:$0xff]
    %v3337 = vld [vmem:[#allocation4 + $0x198] sm:$0xff]
    %v3338 = vld [vmem:[#allocation4 + $0x1a0] sm:$0xff]
    %v3339 = vld [vmem:[#allocation4 + $0x1a8] sm:$0xff]
    %v3340 = vld [vmem:[#allocation4 + $0x1b0] sm:$0xff]
    %v3341 = vld [vmem:[#allocation4 + $0x1b8] sm:$0xff]
    %v3342 = vld [vmem:[#allocation4 + $0x1c0] sm:$0xff]
    %v3343 = vld [vmem:[#allocation4 + $0x1c8] sm:$0xff]
    %v3344 = vld [vmem:[#allocation4 + $0x1d0] sm:$0xff]
    %v3345 = vld [vmem:[#allocation4 + $0x1d8] sm:$0xff]
    %v3346 = vld [vmem:[#allocation4 + $0x1e0] sm:$0xff]
    %v3347 = vld [vmem:[#allocation4 + $0x1e8] sm:$0xff]
    %v3348 = vld [vmem:[#allocation4 + $0x1f0] sm:$0xff]
    %v3349 = vld [vmem:[#allocation4 + $0x1f8] sm:$0xff]
    %3350 = vmatpush.msra.mxu0 %v3346
    %3351 = vmatpush.msra.mxu0 %v3342
    %3352 = vmatpush.msra.mxu0 %v3338
    %3353 = vmatpush.msra.mxu0 %v3334
    %3354 = vmatpush.msra.mxu0 %v3330
    %3355 = vmatpush.msra.mxu0 %v3326
    %3356 = vmatpush.msra.mxu0 %v3322
    %3357 = vmatpush.msra.mxu0 %v3318
    %3358 = vmatpush.msra.mxu0 %v3314
    %3359 = vmatpush.msra.mxu0 %v3310
    %3360 = vmatpush.msra.mxu0 %v3306
    %3361 = vmatpush.msra.mxu0 %v3302
    %3362 = vmatpush.msra.mxu0 %v3298
    %3363 = vmatpush.msra.mxu0 %v3294
    %3364 = vmatpush.msra.mxu0 %v3290
    %3365 = vmatpush.msra.mxu0 %v3286
    %3366 = vmatmul.f32.gmra.mxu0 %v3280
    %v3367 = vpop.f32.mrf.mxu0
    %v3368 = vadd.f32 0.0, %v3367
    %3369 = vdwg.mxu0
    %3370 = vmatpush.msra.mxu0 %v3347
    %3371 = vmatpush.msra.mxu0 %v3343
    %3372 = vmatpush.msra.mxu0 %v3339
    %3373 = vmatpush.msra.mxu0 %v3335
    %3374 = vmatpush.msra.mxu0 %v3331
    %3375 = vmatpush.msra.mxu0 %v3327
    %3376 = vmatpush.msra.mxu0 %v3323
    %3377 = vmatpush.msra.mxu0 %v3319
    %3378 = vmatpush.msra.mxu0 %v3315
    %3379 = vmatpush.msra.mxu0 %v3311
    %3380 = vmatpush.msra.mxu0 %v3307
    %3381 = vmatpush.msra.mxu0 %v3303
    %3382 = vmatpush.msra.mxu0 %v3299
    %3383 = vmatpush.msra.mxu0 %v3295
    %3384 = vmatpush.msra.mxu0 %v3291
    %3385 = vmatpush.msra.mxu0 %v3287
    %3386 = vmatmul.f32.gmra.mxu0 %v3280
    %v3387 = vpop.f32.mrf.mxu0
    %v3388 = vadd.f32 0.0, %v3387
    %3389 = vdwg.mxu0
    %3390 = vmatpush.msra.mxu0 %v3348
    %3391 = vmatpush.msra.mxu0 %v3344
    %3392 = vmatpush.msra.mxu0 %v3340
    %3393 = vmatpush.msra.mxu0 %v3336
    %3394 = vmatpush.msra.mxu0 %v3332
    %3395 = vmatpush.msra.mxu0 %v3328
    %3396 = vmatpush.msra.mxu0 %v3324
    %3397 = vmatpush.msra.mxu0 %v3320
    %3398 = vmatpush.msra.mxu0 %v3316
    %3399 = vmatpush.msra.mxu0 %v3312
    %3400 = vmatpush.msra.mxu0 %v3308
    %3401 = vmatpush.msra.mxu0 %v3304
    %3402 = vmatpush.msra.mxu0 %v3300
    %3403 = vmatpush.msra.mxu0 %v3296
    %3404 = vmatpush.msra.mxu0 %v3292
    %3405 = vmatpush.msra.mxu0 %v3288
    %3406 = vmatmul.f32.gmra.mxu0 %v3280
    %v3407 = vpop.f32.mrf.mxu0
    %v3408 = vadd.f32 0.0, %v3407
    %3409 = vdwg.mxu0
    %3410 = vmatpush.msra.mxu0 %v3349
    %3411 = vmatpush.msra.mxu0 %v3345
    %3412 = vmatpush.msra.mxu0 %v3341
    %3413 = vmatpush.msra.mxu0 %v3337
    %3414 = vmatpush.msra.mxu0 %v3333
    %3415 = vmatpush.msra.mxu0 %v3329
    %3416 = vmatpush.msra.mxu0 %v3325
    %3417 = vmatpush.msra.mxu0 %v3321
    %3418 = vmatpush.msra.mxu0 %v3317
    %3419 = vmatpush.msra.mxu0 %v3313
    %3420 = vmatpush.msra.mxu0 %v3309
    %3421 = vmatpush.msra.mxu0 %v3305
    %3422 = vmatpush.msra.mxu0 %v3301
    %3423 = vmatpush.msra.mxu0 %v3297
    %3424 = vmatpush.msra.mxu0 %v3293
    %3425 = vmatpush.msra.mxu0 %v3289
    %3426 = vmatmul.f32.gmra.mxu0 %v3280
    %v3427 = vpop.f32.mrf.mxu0
    %v3428 = vadd.f32 0.0, %v3427
    %3429 = vdwg.mxu0
    %v3430 = vadd.f32 %v3282, %v3368
    %v3431 = vadd.f32 %v3283, %v3388
    %v3432 = vadd.f32 %v3284, %v3408
    %v3433 = vadd.f32 %v3285, %v3428
    %v3434 = vxor.u32 %v3430, 2147483648
    %v3435 = vxor.u32 %v3431, 2147483648
    %v3436 = vxor.u32 %v3432, 2147483648
    %v3437 = vmul.f32 %v3434, 1.442695
    %v3438 = vpow.pop %v3437
    %v3439 = vmul.f32 %v3435, 1.442695
    %v3440 = vpow.pop %v3439
    %v3441 = vmul.f32 %v3436, 1.442695
    %v3442 = vpow.pop %v3441
    %v3443 = vadd.f32 %v3438, 1.0
    %v3444 = vadd.f32 %v3440, 1.0
    %v3445 = vadd.f32 %v3442, 1.0
    %v3446 = vrcp.pop %v3443
    %v3447 = vmul.f32 %v3443, %v3446
    %v3448 = vsub.f32 1.0, %v3447
    %v3449 = vmul.f32 %v3446, %v3448
    %v3450 = vadd.f32 %v3446, %v3449
    %vm3451 = vweird.f32 %v3443
    %vm3452 = vweird.f32 %v3446
    %vm3453 = vmor %vm3451, %vm3452
    %v3454 = vsel %vm3453, %v3446, %v3450
    %v3455 = vand.u32 2147483647, %v3443
    %vm3456 = vcmp.eq.f32.partialorder %v3455, 8.507059e+37
    %v3457 = vand.u32 %v3443, 2147483648
    %v3458 = vor.u32 1.1754944e-38, %v3457
    %v3459 = vsel %vm3456, %v3458, %v3454
    %v3460 = vmul.f32 1.0, %v3459
    %v3461 = vrcp.pop %v3444
    %v3462 = vmul.f32 %v3444, %v3461
    %v3463 = vsub.f32 1.0, %v3462
    %v3464 = vmul.f32 %v3461, %v3463
    %v3465 = vadd.f32 %v3461, %v3464
    %vm3466 = vweird.f32 %v3444
    %vm3467 = vweird.f32 %v3461
    %vm3468 = vmor %vm3466, %vm3467
    %v3469 = vsel %vm3468, %v3461, %v3465
    %v3470 = vand.u32 2147483647, %v3444
    %vm3471 = vcmp.eq.f32.partialorder %v3470, 8.507059e+37
    %v3472 = vand.u32 %v3444, 2147483648
    %v3473 = vor.u32 1.1754944e-38, %v3472
    %v3474 = vsel %vm3471, %v3473, %v3469
    %v3475 = vmul.f32 1.0, %v3474
    %v3476 = vrcp.pop %v3445
    %v3477 = vmul.f32 %v3445, %v3476
    %v3478 = vsub.f32 1.0, %v3477
    %v3479 = vmul.f32 %v3476, %v3478
    %v3480 = vadd.f32 %v3476, %v3479
    %vm3481 = vweird.f32 %v3445
    %vm3482 = vweird.f32 %v3476
    %vm3483 = vmor %vm3481, %vm3482
    %v3484 = vsel %vm3483, %v3476, %v3480
    %v3485 = vand.u32 2147483647, %v3445
    %vm3486 = vcmp.eq.f32.partialorder %v3485, 8.507059e+37
    %v3487 = vand.u32 %v3445, 2147483648
    %v3488 = vor.u32 1.1754944e-38, %v3487
    %v3489 = vsel %vm3486, %v3488, %v3484
    %v3490 = vmul.f32 1.0, %v3489
    %v3491 = vtanh.pop %v3433
    %v3492 = vmul.f32 %v3475, %v3278
    %v3493 = vmul.f32 %v3460, %v3491
    %v3494 = vadd.f32 %v3492, %v3493
    %v3495 = vtanh.pop %v3494
    %v3496 = vmul.f32 %v3490, %v3495
    %3497 = vst [vmem:[#allocation3 + $0x60] sm:$0xff] %v3496
    %v3498 = vld [vmem:[#allocation2 + $0x1a0] sm:$0xff]
    %v3499 = vld [vmem:[#allocation2 + $0x1a8] sm:$0xff]
    %v3500 = vld [vmem:[#allocation2 + $0x1b0] sm:$0xff]
    %v3501 = vld [vmem:[#allocation2 + $0x1b8] sm:$0xff]
    %v3502 = vld [vmem:[#allocation4] sm:$0xff]
    %v3503 = vld [vmem:[#allocation4 + $0x8] sm:$0xff]
    %v3504 = vld [vmem:[#allocation4 + $0x10] sm:$0xff]
    %v3505 = vld [vmem:[#allocation4 + $0x18] sm:$0xff]
    %v3506 = vld [vmem:[#allocation4 + $0x20] sm:$0xff]
    %v3507 = vld [vmem:[#allocation4 + $0x28] sm:$0xff]
    %v3508 = vld [vmem:[#allocation4 + $0x30] sm:$0xff]
    %v3509 = vld [vmem:[#allocation4 + $0x38] sm:$0xff]
    %v3510 = vld [vmem:[#allocation4 + $0x40] sm:$0xff]
    %v3511 = vld [vmem:[#allocation4 + $0x48] sm:$0xff]
    %v3512 = vld [vmem:[#allocation4 + $0x50] sm:$0xff]
    %v3513 = vld [vmem:[#allocation4 + $0x58] sm:$0xff]
    %v3514 = vld [vmem:[#allocation4 + $0x60] sm:$0xff]
    %v3515 = vld [vmem:[#allocation4 + $0x68] sm:$0xff]
    %v3516 = vld [vmem:[#allocation4 + $0x70] sm:$0xff]
    %v3517 = vld [vmem:[#allocation4 + $0x78] sm:$0xff]
    %v3518 = vld [vmem:[#allocation4 + $0x80] sm:$0xff]
    %v3519 = vld [vmem:[#allocation4 + $0x88] sm:$0xff]
    %v3520 = vld [vmem:[#allocation4 + $0x90] sm:$0xff]
    %v3521 = vld [vmem:[#allocation4 + $0x98] sm:$0xff]
    %v3522 = vld [vmem:[#allocation4 + $0xa0] sm:$0xff]
    %v3523 = vld [vmem:[#allocation4 + $0xa8] sm:$0xff]
    %v3524 = vld [vmem:[#allocation4 + $0xb0] sm:$0xff]
    %v3525 = vld [vmem:[#allocation4 + $0xb8] sm:$0xff]
    %v3526 = vld [vmem:[#allocation4 + $0xc0] sm:$0xff]
    %v3527 = vld [vmem:[#allocation4 + $0xc8] sm:$0xff]
    %v3528 = vld [vmem:[#allocation4 + $0xd0] sm:$0xff]
    %v3529 = vld [vmem:[#allocation4 + $0xd8] sm:$0xff]
    %v3530 = vld [vmem:[#allocation4 + $0xe0] sm:$0xff]
    %v3531 = vld [vmem:[#allocation4 + $0xe8] sm:$0xff]
    %v3532 = vld [vmem:[#allocation4 + $0xf0] sm:$0xff]
    %v3533 = vld [vmem:[#allocation4 + $0xf8] sm:$0xff]
    %v3534 = vld [vmem:[#allocation4 + $0x100] sm:$0xff]
    %v3535 = vld [vmem:[#allocation4 + $0x108] sm:$0xff]
    %v3536 = vld [vmem:[#allocation4 + $0x110] sm:$0xff]
    %v3537 = vld [vmem:[#allocation4 + $0x118] sm:$0xff]
    %v3538 = vld [vmem:[#allocation4 + $0x120] sm:$0xff]
    %v3539 = vld [vmem:[#allocation4 + $0x128] sm:$0xff]
    %v3540 = vld [vmem:[#allocation4 + $0x130] sm:$0xff]
    %v3541 = vld [vmem:[#allocation4 + $0x138] sm:$0xff]
    %v3542 = vld [vmem:[#allocation4 + $0x140] sm:$0xff]
    %v3543 = vld [vmem:[#allocation4 + $0x148] sm:$0xff]
    %v3544 = vld [vmem:[#allocation4 + $0x150] sm:$0xff]
    %v3545 = vld [vmem:[#allocation4 + $0x158] sm:$0xff]
    %v3546 = vld [vmem:[#allocation4 + $0x160] sm:$0xff]
    %v3547 = vld [vmem:[#allocation4 + $0x168] sm:$0xff]
    %v3548 = vld [vmem:[#allocation4 + $0x170] sm:$0xff]
    %v3549 = vld [vmem:[#allocation4 + $0x178] sm:$0xff]
    %v3550 = vld [vmem:[#allocation4 + $0x180] sm:$0xff]
    %v3551 = vld [vmem:[#allocation4 + $0x188] sm:$0xff]
    %v3552 = vld [vmem:[#allocation4 + $0x190] sm:$0xff]
    %v3553 = vld [vmem:[#allocation4 + $0x198] sm:$0xff]
    %v3554 = vld [vmem:[#allocation4 + $0x1a0] sm:$0xff]
    %v3555 = vld [vmem:[#allocation4 + $0x1a8] sm:$0xff]
    %v3556 = vld [vmem:[#allocation4 + $0x1b0] sm:$0xff]
    %v3557 = vld [vmem:[#allocation4 + $0x1b8] sm:$0xff]
    %v3558 = vld [vmem:[#allocation4 + $0x1c0] sm:$0xff]
    %v3559 = vld [vmem:[#allocation4 + $0x1c8] sm:$0xff]
    %v3560 = vld [vmem:[#allocation4 + $0x1d0] sm:$0xff]
    %v3561 = vld [vmem:[#allocation4 + $0x1d8] sm:$0xff]
    %v3562 = vld [vmem:[#allocation4 + $0x1e0] sm:$0xff]
    %v3563 = vld [vmem:[#allocation4 + $0x1e8] sm:$0xff]
    %v3564 = vld [vmem:[#allocation4 + $0x1f0] sm:$0xff]
    %v3565 = vld [vmem:[#allocation4 + $0x1f8] sm:$0xff]
    %3566 = vmatpush.msra.mxu0 %v3562
    %3567 = vmatpush.msra.mxu0 %v3558
    %3568 = vmatpush.msra.mxu0 %v3554
    %3569 = vmatpush.msra.mxu0 %v3550
    %3570 = vmatpush.msra.mxu0 %v3546
    %3571 = vmatpush.msra.mxu0 %v3542
    %3572 = vmatpush.msra.mxu0 %v3538
    %3573 = vmatpush.msra.mxu0 %v3534
    %3574 = vmatpush.msra.mxu0 %v3530
    %3575 = vmatpush.msra.mxu0 %v3526
    %3576 = vmatpush.msra.mxu0 %v3522
    %3577 = vmatpush.msra.mxu0 %v3518
    %3578 = vmatpush.msra.mxu0 %v3514
    %3579 = vmatpush.msra.mxu0 %v3510
    %3580 = vmatpush.msra.mxu0 %v3506
    %3581 = vmatpush.msra.mxu0 %v3502
    %3582 = vmatmul.f32.gmra.mxu0 %v3496
    %v3583 = vpop.f32.mrf.mxu0
    %v3584 = vadd.f32 0.0, %v3583
    %3585 = vdwg.mxu0
    %3586 = vmatpush.msra.mxu0 %v3563
    %3587 = vmatpush.msra.mxu0 %v3559
    %3588 = vmatpush.msra.mxu0 %v3555
    %3589 = vmatpush.msra.mxu0 %v3551
    %3590 = vmatpush.msra.mxu0 %v3547
    %3591 = vmatpush.msra.mxu0 %v3543
    %3592 = vmatpush.msra.mxu0 %v3539
    %3593 = vmatpush.msra.mxu0 %v3535
    %3594 = vmatpush.msra.mxu0 %v3531
    %3595 = vmatpush.msra.mxu0 %v3527
    %3596 = vmatpush.msra.mxu0 %v3523
    %3597 = vmatpush.msra.mxu0 %v3519
    %3598 = vmatpush.msra.mxu0 %v3515
    %3599 = vmatpush.msra.mxu0 %v3511
    %3600 = vmatpush.msra.mxu0 %v3507
    %3601 = vmatpush.msra.mxu0 %v3503
    %3602 = vmatmul.f32.gmra.mxu0 %v3496
    %v3603 = vpop.f32.mrf.mxu0
    %v3604 = vadd.f32 0.0, %v3603
    %3605 = vdwg.mxu0
    %3606 = vmatpush.msra.mxu0 %v3564
    %3607 = vmatpush.msra.mxu0 %v3560
    %3608 = vmatpush.msra.mxu0 %v3556
    %3609 = vmatpush.msra.mxu0 %v3552
    %3610 = vmatpush.msra.mxu0 %v3548
    %3611 = vmatpush.msra.mxu0 %v3544
    %3612 = vmatpush.msra.mxu0 %v3540
    %3613 = vmatpush.msra.mxu0 %v3536
    %3614 = vmatpush.msra.mxu0 %v3532
    %3615 = vmatpush.msra.mxu0 %v3528
    %3616 = vmatpush.msra.mxu0 %v3524
    %3617 = vmatpush.msra.mxu0 %v3520
    %3618 = vmatpush.msra.mxu0 %v3516
    %3619 = vmatpush.msra.mxu0 %v3512
    %3620 = vmatpush.msra.mxu0 %v3508
    %3621 = vmatpush.msra.mxu0 %v3504
    %3622 = vmatmul.f32.gmra.mxu0 %v3496
    %v3623 = vpop.f32.mrf.mxu0
    %v3624 = vadd.f32 0.0, %v3623
    %3625 = vdwg.mxu0
    %3626 = vmatpush.msra.mxu0 %v3565
    %3627 = vmatpush.msra.mxu0 %v3561
    %3628 = vmatpush.msra.mxu0 %v3557
    %3629 = vmatpush.msra.mxu0 %v3553
    %3630 = vmatpush.msra.mxu0 %v3549
    %3631 = vmatpush.msra.mxu0 %v3545
    %3632 = vmatpush.msra.mxu0 %v3541
    %3633 = vmatpush.msra.mxu0 %v3537
    %3634 = vmatpush.msra.mxu0 %v3533
    %3635 = vmatpush.msra.mxu0 %v3529
    %3636 = vmatpush.msra.mxu0 %v3525
    %3637 = vmatpush.msra.mxu0 %v3521
    %3638 = vmatpush.msra.mxu0 %v3517
    %3639 = vmatpush.msra.mxu0 %v3513
    %3640 = vmatpush.msra.mxu0 %v3509
    %3641 = vmatpush.msra.mxu0 %v3505
    %3642 = vmatmul.f32.gmra.mxu0 %v3496
    %v3643 = vpop.f32.mrf.mxu0
    %v3644 = vadd.f32 0.0, %v3643
    %3645 = vdwg.mxu0
    %v3646 = vadd.f32 %v3498, %v3584
    %v3647 = vadd.f32 %v3499, %v3604
    %v3648 = vadd.f32 %v3500, %v3624
    %v3649 = vadd.f32 %v3501, %v3644
    %v3650 = vxor.u32 %v3646, 2147483648
    %v3651 = vxor.u32 %v3647, 2147483648
    %v3652 = vxor.u32 %v3648, 2147483648
    %v3653 = vmul.f32 %v3650, 1.442695
    %v3654 = vpow.pop %v3653
    %v3655 = vmul.f32 %v3651, 1.442695
    %v3656 = vpow.pop %v3655
    %v3657 = vmul.f32 %v3652, 1.442695
    %v3658 = vpow.pop %v3657
    %v3659 = vadd.f32 %v3654, 1.0
    %v3660 = vadd.f32 %v3656, 1.0
    %v3661 = vadd.f32 %v3658, 1.0
    %v3662 = vrcp.pop %v3659
    %v3663 = vmul.f32 %v3659, %v3662
    %v3664 = vsub.f32 1.0, %v3663
    %v3665 = vmul.f32 %v3662, %v3664
    %v3666 = vadd.f32 %v3662, %v3665
    %vm3667 = vweird.f32 %v3659
    %vm3668 = vweird.f32 %v3662
    %vm3669 = vmor %vm3667, %vm3668
    %v3670 = vsel %vm3669, %v3662, %v3666
    %v3671 = vand.u32 2147483647, %v3659
    %vm3672 = vcmp.eq.f32.partialorder %v3671, 8.507059e+37
    %v3673 = vand.u32 %v3659, 2147483648
    %v3674 = vor.u32 1.1754944e-38, %v3673
    %v3675 = vsel %vm3672, %v3674, %v3670
    %v3676 = vmul.f32 1.0, %v3675
    %v3677 = vrcp.pop %v3660
    %v3678 = vmul.f32 %v3660, %v3677
    %v3679 = vsub.f32 1.0, %v3678
    %v3680 = vmul.f32 %v3677, %v3679
    %v3681 = vadd.f32 %v3677, %v3680
    %vm3682 = vweird.f32 %v3660
    %vm3683 = vweird.f32 %v3677
    %vm3684 = vmor %vm3682, %vm3683
    %v3685 = vsel %vm3684, %v3677, %v3681
    %v3686 = vand.u32 2147483647, %v3660
    %vm3687 = vcmp.eq.f32.partialorder %v3686, 8.507059e+37
    %v3688 = vand.u32 %v3660, 2147483648
    %v3689 = vor.u32 1.1754944e-38, %v3688
    %v3690 = vsel %vm3687, %v3689, %v3685
    %v3691 = vmul.f32 1.0, %v3690
    %v3692 = vrcp.pop %v3661
    %v3693 = vmul.f32 %v3661, %v3692
    %v3694 = vsub.f32 1.0, %v3693
    %v3695 = vmul.f32 %v3692, %v3694
    %v3696 = vadd.f32 %v3692, %v3695
    %vm3697 = vweird.f32 %v3661
    %vm3698 = vweird.f32 %v3692
    %vm3699 = vmor %vm3697, %vm3698
    %v3700 = vsel %vm3699, %v3692, %v3696
    %v3701 = vand.u32 2147483647, %v3661
    %vm3702 = vcmp.eq.f32.partialorder %v3701, 8.507059e+37
    %v3703 = vand.u32 %v3661, 2147483648
    %v3704 = vor.u32 1.1754944e-38, %v3703
    %v3705 = vsel %vm3702, %v3704, %v3700
    %v3706 = vmul.f32 1.0, %v3705
    %v3707 = vtanh.pop %v3649
    %v3708 = vmul.f32 %v3691, %v3494
    %v3709 = vmul.f32 %v3676, %v3707
    %v3710 = vadd.f32 %v3708, %v3709
    %v3711 = vtanh.pop %v3710
    %v3712 = vmul.f32 %v3706, %v3711
    %3713 = vst [vmem:[#allocation3 + $0x68] sm:$0xff] %v3712
    %v3714 = vld [vmem:[#allocation2 + $0x1c0] sm:$0xff]
    %v3715 = vld [vmem:[#allocation2 + $0x1c8] sm:$0xff]
    %v3716 = vld [vmem:[#allocation2 + $0x1d0] sm:$0xff]
    %v3717 = vld [vmem:[#allocation2 + $0x1d8] sm:$0xff]
    %v3718 = vld [vmem:[#allocation4] sm:$0xff]
    %v3719 = vld [vmem:[#allocation4 + $0x8] sm:$0xff]
    %v3720 = vld [vmem:[#allocation4 + $0x10] sm:$0xff]
    %v3721 = vld [vmem:[#allocation4 + $0x18] sm:$0xff]
    %v3722 = vld [vmem:[#allocation4 + $0x20] sm:$0xff]
    %v3723 = vld [vmem:[#allocation4 + $0x28] sm:$0xff]
    %v3724 = vld [vmem:[#allocation4 + $0x30] sm:$0xff]
    %v3725 = vld [vmem:[#allocation4 + $0x38] sm:$0xff]
    %v3726 = vld [vmem:[#allocation4 + $0x40] sm:$0xff]
    %v3727 = vld [vmem:[#allocation4 + $0x48] sm:$0xff]
    %v3728 = vld [vmem:[#allocation4 + $0x50] sm:$0xff]
    %v3729 = vld [vmem:[#allocation4 + $0x58] sm:$0xff]
    %v3730 = vld [vmem:[#allocation4 + $0x60] sm:$0xff]
    %v3731 = vld [vmem:[#allocation4 + $0x68] sm:$0xff]
    %v3732 = vld [vmem:[#allocation4 + $0x70] sm:$0xff]
    %v3733 = vld [vmem:[#allocation4 + $0x78] sm:$0xff]
    %v3734 = vld [vmem:[#allocation4 + $0x80] sm:$0xff]
    %v3735 = vld [vmem:[#allocation4 + $0x88] sm:$0xff]
    %v3736 = vld [vmem:[#allocation4 + $0x90] sm:$0xff]
    %v3737 = vld [vmem:[#allocation4 + $0x98] sm:$0xff]
    %v3738 = vld [vmem:[#allocation4 + $0xa0] sm:$0xff]
    %v3739 = vld [vmem:[#allocation4 + $0xa8] sm:$0xff]
    %v3740 = vld [vmem:[#allocation4 + $0xb0] sm:$0xff]
    %v3741 = vld [vmem:[#allocation4 + $0xb8] sm:$0xff]
    %v3742 = vld [vmem:[#allocation4 + $0xc0] sm:$0xff]
    %v3743 = vld [vmem:[#allocation4 + $0xc8] sm:$0xff]
    %v3744 = vld [vmem:[#allocation4 + $0xd0] sm:$0xff]
    %v3745 = vld [vmem:[#allocation4 + $0xd8] sm:$0xff]
    %v3746 = vld [vmem:[#allocation4 + $0xe0] sm:$0xff]
    %v3747 = vld [vmem:[#allocation4 + $0xe8] sm:$0xff]
    %v3748 = vld [vmem:[#allocation4 + $0xf0] sm:$0xff]
    %v3749 = vld [vmem:[#allocation4 + $0xf8] sm:$0xff]
    %v3750 = vld [vmem:[#allocation4 + $0x100] sm:$0xff]
    %v3751 = vld [vmem:[#allocation4 + $0x108] sm:$0xff]
    %v3752 = vld [vmem:[#allocation4 + $0x110] sm:$0xff]
    %v3753 = vld [vmem:[#allocation4 + $0x118] sm:$0xff]
    %v3754 = vld [vmem:[#allocation4 + $0x120] sm:$0xff]
    %v3755 = vld [vmem:[#allocation4 + $0x128] sm:$0xff]
    %v3756 = vld [vmem:[#allocation4 + $0x130] sm:$0xff]
    %v3757 = vld [vmem:[#allocation4 + $0x138] sm:$0xff]
    %v3758 = vld [vmem:[#allocation4 + $0x140] sm:$0xff]
    %v3759 = vld [vmem:[#allocation4 + $0x148] sm:$0xff]
    %v3760 = vld [vmem:[#allocation4 + $0x150] sm:$0xff]
    %v3761 = vld [vmem:[#allocation4 + $0x158] sm:$0xff]
    %v3762 = vld [vmem:[#allocation4 + $0x160] sm:$0xff]
    %v3763 = vld [vmem:[#allocation4 + $0x168] sm:$0xff]
    %v3764 = vld [vmem:[#allocation4 + $0x170] sm:$0xff]
    %v3765 = vld [vmem:[#allocation4 + $0x178] sm:$0xff]
    %v3766 = vld [vmem:[#allocation4 + $0x180] sm:$0xff]
    %v3767 = vld [vmem:[#allocation4 + $0x188] sm:$0xff]
    %v3768 = vld [vmem:[#allocation4 + $0x190] sm:$0xff]
    %v3769 = vld [vmem:[#allocation4 + $0x198] sm:$0xff]
    %v3770 = vld [vmem:[#allocation4 + $0x1a0] sm:$0xff]
    %v3771 = vld [vmem:[#allocation4 + $0x1a8] sm:$0xff]
    %v3772 = vld [vmem:[#allocation4 + $0x1b0] sm:$0xff]
    %v3773 = vld [vmem:[#allocation4 + $0x1b8] sm:$0xff]
    %v3774 = vld [vmem:[#allocation4 + $0x1c0] sm:$0xff]
    %v3775 = vld [vmem:[#allocation4 + $0x1c8] sm:$0xff]
    %v3776 = vld [vmem:[#allocation4 + $0x1d0] sm:$0xff]
    %v3777 = vld [vmem:[#allocation4 + $0x1d8] sm:$0xff]
    %v3778 = vld [vmem:[#allocation4 + $0x1e0] sm:$0xff]
    %v3779 = vld [vmem:[#allocation4 + $0x1e8] sm:$0xff]
    %v3780 = vld [vmem:[#allocation4 + $0x1f0] sm:$0xff]
    %v3781 = vld [vmem:[#allocation4 + $0x1f8] sm:$0xff]
    %3782 = vmatpush.msra.mxu0 %v3778
    %3783 = vmatpush.msra.mxu0 %v3774
    %3784 = vmatpush.msra.mxu0 %v3770
    %3785 = vmatpush.msra.mxu0 %v3766
    %3786 = vmatpush.msra.mxu0 %v3762
    %3787 = vmatpush.msra.mxu0 %v3758
    %3788 = vmatpush.msra.mxu0 %v3754
    %3789 = vmatpush.msra.mxu0 %v3750
    %3790 = vmatpush.msra.mxu0 %v3746
    %3791 = vmatpush.msra.mxu0 %v3742
    %3792 = vmatpush.msra.mxu0 %v3738
    %3793 = vmatpush.msra.mxu0 %v3734
    %3794 = vmatpush.msra.mxu0 %v3730
    %3795 = vmatpush.msra.mxu0 %v3726
    %3796 = vmatpush.msra.mxu0 %v3722
    %3797 = vmatpush.msra.mxu0 %v3718
    %3798 = vmatmul.f32.gmra.mxu0 %v3712
    %v3799 = vpop.f32.mrf.mxu0
    %v3800 = vadd.f32 0.0, %v3799
    %3801 = vdwg.mxu0
    %3802 = vmatpush.msra.mxu0 %v3779
    %3803 = vmatpush.msra.mxu0 %v3775
    %3804 = vmatpush.msra.mxu0 %v3771
    %3805 = vmatpush.msra.mxu0 %v3767
    %3806 = vmatpush.msra.mxu0 %v3763
    %3807 = vmatpush.msra.mxu0 %v3759
    %3808 = vmatpush.msra.mxu0 %v3755
    %3809 = vmatpush.msra.mxu0 %v3751
    %3810 = vmatpush.msra.mxu0 %v3747
    %3811 = vmatpush.msra.mxu0 %v3743
    %3812 = vmatpush.msra.mxu0 %v3739
    %3813 = vmatpush.msra.mxu0 %v3735
    %3814 = vmatpush.msra.mxu0 %v3731
    %3815 = vmatpush.msra.mxu0 %v3727
    %3816 = vmatpush.msra.mxu0 %v3723
    %3817 = vmatpush.msra.mxu0 %v3719
    %3818 = vmatmul.f32.gmra.mxu0 %v3712
    %v3819 = vpop.f32.mrf.mxu0
    %v3820 = vadd.f32 0.0, %v3819
    %3821 = vdwg.mxu0
    %3822 = vmatpush.msra.mxu0 %v3780
    %3823 = vmatpush.msra.mxu0 %v3776
    %3824 = vmatpush.msra.mxu0 %v3772
    %3825 = vmatpush.msra.mxu0 %v3768
    %3826 = vmatpush.msra.mxu0 %v3764
    %3827 = vmatpush.msra.mxu0 %v3760
    %3828 = vmatpush.msra.mxu0 %v3756
    %3829 = vmatpush.msra.mxu0 %v3752
    %3830 = vmatpush.msra.mxu0 %v3748
    %3831 = vmatpush.msra.mxu0 %v3744
    %3832 = vmatpush.msra.mxu0 %v3740
    %3833 = vmatpush.msra.mxu0 %v3736
    %3834 = vmatpush.msra.mxu0 %v3732
    %3835 = vmatpush.msra.mxu0 %v3728
    %3836 = vmatpush.msra.mxu0 %v3724
    %3837 = vmatpush.msra.mxu0 %v3720
    %3838 = vmatmul.f32.gmra.mxu0 %v3712
    %v3839 = vpop.f32.mrf.mxu0
    %v3840 = vadd.f32 0.0, %v3839
    %3841 = vdwg.mxu0
    %3842 = vmatpush.msra.mxu0 %v3781
    %3843 = vmatpush.msra.mxu0 %v3777
    %3844 = vmatpush.msra.mxu0 %v3773
    %3845 = vmatpush.msra.mxu0 %v3769
    %3846 = vmatpush.msra.mxu0 %v3765
    %3847 = vmatpush.msra.mxu0 %v3761
    %3848 = vmatpush.msra.mxu0 %v3757
    %3849 = vmatpush.msra.mxu0 %v3753
    %3850 = vmatpush.msra.mxu0 %v3749
    %3851 = vmatpush.msra.mxu0 %v3745
    %3852 = vmatpush.msra.mxu0 %v3741
    %3853 = vmatpush.msra.mxu0 %v3737
    %3854 = vmatpush.msra.mxu0 %v3733
    %3855 = vmatpush.msra.mxu0 %v3729
    %3856 = vmatpush.msra.mxu0 %v3725
    %3857 = vmatpush.msra.mxu0 %v3721
    %3858 = vmatmul.f32.gmra.mxu0 %v3712
    %v3859 = vpop.f32.mrf.mxu0
    %v3860 = vadd.f32 0.0, %v3859
    %3861 = vdwg.mxu0
    %v3862 = vadd.f32 %v3714, %v3800
    %v3863 = vadd.f32 %v3715, %v3820
    %v3864 = vadd.f32 %v3716, %v3840
    %v3865 = vadd.f32 %v3717, %v3860
    %v3866 = vxor.u32 %v3862, 2147483648
    %v3867 = vxor.u32 %v3863, 2147483648
    %v3868 = vxor.u32 %v3864, 2147483648
    %v3869 = vmul.f32 %v3866, 1.442695
    %v3870 = vpow.pop %v3869
    %v3871 = vmul.f32 %v3867, 1.442695
    %v3872 = vpow.pop %v3871
    %v3873 = vmul.f32 %v3868, 1.442695
    %v3874 = vpow.pop %v3873
    %v3875 = vadd.f32 %v3870, 1.0
    %v3876 = vadd.f32 %v3872, 1.0
    %v3877 = vadd.f32 %v3874, 1.0
    %v3878 = vrcp.pop %v3875
    %v3879 = vmul.f32 %v3875, %v3878
    %v3880 = vsub.f32 1.0, %v3879
    %v3881 = vmul.f32 %v3878, %v3880
    %v3882 = vadd.f32 %v3878, %v3881
    %vm3883 = vweird.f32 %v3875
    %vm3884 = vweird.f32 %v3878
    %vm3885 = vmor %vm3883, %vm3884
    %v3886 = vsel %vm3885, %v3878, %v3882
    %v3887 = vand.u32 2147483647, %v3875
    %vm3888 = vcmp.eq.f32.partialorder %v3887, 8.507059e+37
    %v3889 = vand.u32 %v3875, 2147483648
    %v3890 = vor.u32 1.1754944e-38, %v3889
    %v3891 = vsel %vm3888, %v3890, %v3886
    %v3892 = vmul.f32 1.0, %v3891
    %v3893 = vrcp.pop %v3876
    %v3894 = vmul.f32 %v3876, %v3893
    %v3895 = vsub.f32 1.0, %v3894
    %v3896 = vmul.f32 %v3893, %v3895
    %v3897 = vadd.f32 %v3893, %v3896
    %vm3898 = vweird.f32 %v3876
    %vm3899 = vweird.f32 %v3893
    %vm3900 = vmor %vm3898, %vm3899
    %v3901 = vsel %vm3900, %v3893, %v3897
    %v3902 = vand.u32 2147483647, %v3876
    %vm3903 = vcmp.eq.f32.partialorder %v3902, 8.507059e+37
    %v3904 = vand.u32 %v3876, 2147483648
    %v3905 = vor.u32 1.1754944e-38, %v3904
    %v3906 = vsel %vm3903, %v3905, %v3901
    %v3907 = vmul.f32 1.0, %v3906
    %v3908 = vrcp.pop %v3877
    %v3909 = vmul.f32 %v3877, %v3908
    %v3910 = vsub.f32 1.0, %v3909
    %v3911 = vmul.f32 %v3908, %v3910
    %v3912 = vadd.f32 %v3908, %v3911
    %vm3913 = vweird.f32 %v3877
    %vm3914 = vweird.f32 %v3908
    %vm3915 = vmor %vm3913, %vm3914
    %v3916 = vsel %vm3915, %v3908, %v3912
    %v3917 = vand.u32 2147483647, %v3877
    %vm3918 = vcmp.eq.f32.partialorder %v3917, 8.507059e+37
    %v3919 = vand.u32 %v3877, 2147483648
    %v3920 = vor.u32 1.1754944e-38, %v3919
    %v3921 = vsel %vm3918, %v3920, %v3916
    %v3922 = vmul.f32 1.0, %v3921
    %v3923 = vtanh.pop %v3865
    %v3924 = vmul.f32 %v3907, %v3710
    %v3925 = vmul.f32 %v3892, %v3923
    %v3926 = vadd.f32 %v3924, %v3925
    %v3927 = vtanh.pop %v3926
    %v3928 = vmul.f32 %v3922, %v3927
    %3929 = vst [vmem:[#allocation3 + $0x70] sm:$0xff] %v3928
    %v3930 = vld [vmem:[#allocation2 + $0x1e0] sm:$0xff]
    %v3931 = vld [vmem:[#allocation2 + $0x1e8] sm:$0xff]
    %v3932 = vld [vmem:[#allocation2 + $0x1f0] sm:$0xff]
    %v3933 = vld [vmem:[#allocation2 + $0x1f8] sm:$0xff]
    %v3934 = vld [vmem:[#allocation4] sm:$0xff]
    %v3935 = vld [vmem:[#allocation4 + $0x8] sm:$0xff]
    %v3936 = vld [vmem:[#allocation4 + $0x10] sm:$0xff]
    %v3937 = vld [vmem:[#allocation4 + $0x18] sm:$0xff]
    %v3938 = vld [vmem:[#allocation4 + $0x20] sm:$0xff]
    %v3939 = vld [vmem:[#allocation4 + $0x28] sm:$0xff]
    %v3940 = vld [vmem:[#allocation4 + $0x30] sm:$0xff]
    %v3941 = vld [vmem:[#allocation4 + $0x38] sm:$0xff]
    %v3942 = vld [vmem:[#allocation4 + $0x40] sm:$0xff]
    %v3943 = vld [vmem:[#allocation4 + $0x48] sm:$0xff]
    %v3944 = vld [vmem:[#allocation4 + $0x50] sm:$0xff]
    %v3945 = vld [vmem:[#allocation4 + $0x58] sm:$0xff]
    %v3946 = vld [vmem:[#allocation4 + $0x60] sm:$0xff]
    %v3947 = vld [vmem:[#allocation4 + $0x68] sm:$0xff]
    %v3948 = vld [vmem:[#allocation4 + $0x70] sm:$0xff]
    %v3949 = vld [vmem:[#allocation4 + $0x78] sm:$0xff]
    %v3950 = vld [vmem:[#allocation4 + $0x80] sm:$0xff]
    %v3951 = vld [vmem:[#allocation4 + $0x88] sm:$0xff]
    %v3952 = vld [vmem:[#allocation4 + $0x90] sm:$0xff]
    %v3953 = vld [vmem:[#allocation4 + $0x98] sm:$0xff]
    %v3954 = vld [vmem:[#allocation4 + $0xa0] sm:$0xff]
    %v3955 = vld [vmem:[#allocation4 + $0xa8] sm:$0xff]
    %v3956 = vld [vmem:[#allocation4 + $0xb0] sm:$0xff]
    %v3957 = vld [vmem:[#allocation4 + $0xb8] sm:$0xff]
    %v3958 = vld [vmem:[#allocation4 + $0xc0] sm:$0xff]
    %v3959 = vld [vmem:[#allocation4 + $0xc8] sm:$0xff]
    %v3960 = vld [vmem:[#allocation4 + $0xd0] sm:$0xff]
    %v3961 = vld [vmem:[#allocation4 + $0xd8] sm:$0xff]
    %v3962 = vld [vmem:[#allocation4 + $0xe0] sm:$0xff]
    %v3963 = vld [vmem:[#allocation4 + $0xe8] sm:$0xff]
    %v3964 = vld [vmem:[#allocation4 + $0xf0] sm:$0xff]
    %v3965 = vld [vmem:[#allocation4 + $0xf8] sm:$0xff]
    %v3966 = vld [vmem:[#allocation4 + $0x100] sm:$0xff]
    %v3967 = vld [vmem:[#allocation4 + $0x108] sm:$0xff]
    %v3968 = vld [vmem:[#allocation4 + $0x110] sm:$0xff]
    %v3969 = vld [vmem:[#allocation4 + $0x118] sm:$0xff]
    %v3970 = vld [vmem:[#allocation4 + $0x120] sm:$0xff]
    %v3971 = vld [vmem:[#allocation4 + $0x128] sm:$0xff]
    %v3972 = vld [vmem:[#allocation4 + $0x130] sm:$0xff]
    %v3973 = vld [vmem:[#allocation4 + $0x138] sm:$0xff]
    %v3974 = vld [vmem:[#allocation4 + $0x140] sm:$0xff]
    %v3975 = vld [vmem:[#allocation4 + $0x148] sm:$0xff]
    %v3976 = vld [vmem:[#allocation4 + $0x150] sm:$0xff]
    %v3977 = vld [vmem:[#allocation4 + $0x158] sm:$0xff]
    %v3978 = vld [vmem:[#allocation4 + $0x160] sm:$0xff]
    %v3979 = vld [vmem:[#allocation4 + $0x168] sm:$0xff]
    %v3980 = vld [vmem:[#allocation4 + $0x170] sm:$0xff]
    %v3981 = vld [vmem:[#allocation4 + $0x178] sm:$0xff]
    %v3982 = vld [vmem:[#allocation4 + $0x180] sm:$0xff]
    %v3983 = vld [vmem:[#allocation4 + $0x188] sm:$0xff]
    %v3984 = vld [vmem:[#allocation4 + $0x190] sm:$0xff]
    %v3985 = vld [vmem:[#allocation4 + $0x198] sm:$0xff]
    %v3986 = vld [vmem:[#allocation4 + $0x1a0] sm:$0xff]
    %v3987 = vld [vmem:[#allocation4 + $0x1a8] sm:$0xff]
    %v3988 = vld [vmem:[#allocation4 + $0x1b0] sm:$0xff]
    %v3989 = vld [vmem:[#allocation4 + $0x1b8] sm:$0xff]
    %v3990 = vld [vmem:[#allocation4 + $0x1c0] sm:$0xff]
    %v3991 = vld [vmem:[#allocation4 + $0x1c8] sm:$0xff]
    %v3992 = vld [vmem:[#allocation4 + $0x1d0] sm:$0xff]
    %v3993 = vld [vmem:[#allocation4 + $0x1d8] sm:$0xff]
    %v3994 = vld [vmem:[#allocation4 + $0x1e0] sm:$0xff]
    %v3995 = vld [vmem:[#allocation4 + $0x1e8] sm:$0xff]
    %v3996 = vld [vmem:[#allocation4 + $0x1f0] sm:$0xff]
    %v3997 = vld [vmem:[#allocation4 + $0x1f8] sm:$0xff]
    %3998 = vmatpush.msra.mxu0 %v3994
    %3999 = vmatpush.msra.mxu0 %v3990
    %4000 = vmatpush.msra.mxu0 %v3986
    %4001 = vmatpush.msra.mxu0 %v3982
    %4002 = vmatpush.msra.mxu0 %v3978
    %4003 = vmatpush.msra.mxu0 %v3974
    %4004 = vmatpush.msra.mxu0 %v3970
    %4005 = vmatpush.msra.mxu0 %v3966
    %4006 = vmatpush.msra.mxu0 %v3962
    %4007 = vmatpush.msra.mxu0 %v3958
    %4008 = vmatpush.msra.mxu0 %v3954
    %4009 = vmatpush.msra.mxu0 %v3950
    %4010 = vmatpush.msra.mxu0 %v3946
    %4011 = vmatpush.msra.mxu0 %v3942
    %4012 = vmatpush.msra.mxu0 %v3938
    %4013 = vmatpush.msra.mxu0 %v3934
    %4014 = vmatmul.f32.gmra.mxu0 %v3928
    %v4015 = vpop.f32.mrf.mxu0
    %v4016 = vadd.f32 0.0, %v4015
    %4017 = vdwg.mxu0
    %4018 = vmatpush.msra.mxu0 %v3995
    %4019 = vmatpush.msra.mxu0 %v3991
    %4020 = vmatpush.msra.mxu0 %v3987
    %4021 = vmatpush.msra.mxu0 %v3983
    %4022 = vmatpush.msra.mxu0 %v3979
    %4023 = vmatpush.msra.mxu0 %v3975
    %4024 = vmatpush.msra.mxu0 %v3971
    %4025 = vmatpush.msra.mxu0 %v3967
    %4026 = vmatpush.msra.mxu0 %v3963
    %4027 = vmatpush.msra.mxu0 %v3959
    %4028 = vmatpush.msra.mxu0 %v3955
    %4029 = vmatpush.msra.mxu0 %v3951
    %4030 = vmatpush.msra.mxu0 %v3947
    %4031 = vmatpush.msra.mxu0 %v3943
    %4032 = vmatpush.msra.mxu0 %v3939
    %4033 = vmatpush.msra.mxu0 %v3935
    %4034 = vmatmul.f32.gmra.mxu0 %v3928
    %v4035 = vpop.f32.mrf.mxu0
    %v4036 = vadd.f32 0.0, %v4035
    %4037 = vdwg.mxu0
    %4038 = vmatpush.msra.mxu0 %v3996
    %4039 = vmatpush.msra.mxu0 %v3992
    %4040 = vmatpush.msra.mxu0 %v3988
    %4041 = vmatpush.msra.mxu0 %v3984
    %4042 = vmatpush.msra.mxu0 %v3980
    %4043 = vmatpush.msra.mxu0 %v3976
    %4044 = vmatpush.msra.mxu0 %v3972
    %4045 = vmatpush.msra.mxu0 %v3968
    %4046 = vmatpush.msra.mxu0 %v3964
    %4047 = vmatpush.msra.mxu0 %v3960
    %4048 = vmatpush.msra.mxu0 %v3956
    %4049 = vmatpush.msra.mxu0 %v3952
    %4050 = vmatpush.msra.mxu0 %v3948
    %4051 = vmatpush.msra.mxu0 %v3944
    %4052 = vmatpush.msra.mxu0 %v3940
    %4053 = vmatpush.msra.mxu0 %v3936
    %4054 = vmatmul.f32.gmra.mxu0 %v3928
    %v4055 = vpop.f32.mrf.mxu0
    %v4056 = vadd.f32 0.0, %v4055
    %4057 = vdwg.mxu0
    %4058 = vmatpush.msra.mxu0 %v3997
    %4059 = vmatpush.msra.mxu0 %v3993
    %4060 = vmatpush.msra.mxu0 %v3989
    %4061 = vmatpush.msra.mxu0 %v3985
    %4062 = vmatpush.msra.mxu0 %v3981
    %4063 = vmatpush.msra.mxu0 %v3977
    %4064 = vmatpush.msra.mxu0 %v3973
    %4065 = vmatpush.msra.mxu0 %v3969
    %4066 = vmatpush.msra.mxu0 %v3965
    %4067 = vmatpush.msra.mxu0 %v3961
    %4068 = vmatpush.msra.mxu0 %v3957
    %4069 = vmatpush.msra.mxu0 %v3953
    %4070 = vmatpush.msra.mxu0 %v3949
    %4071 = vmatpush.msra.mxu0 %v3945
    %4072 = vmatpush.msra.mxu0 %v3941
    %4073 = vmatpush.msra.mxu0 %v3937
    %4074 = vmatmul.f32.gmra.mxu0 %v3928
    %v4075 = vpop.f32.mrf.mxu0
    %v4076 = vadd.f32 0.0, %v4075
    %4077 = vdwg.mxu0
    %v4078 = vadd.f32 %v3930, %v4016
    %v4079 = vadd.f32 %v3931, %v4036
    %v4080 = vadd.f32 %v3932, %v4056
    %v4081 = vadd.f32 %v3933, %v4076
    %v4082 = vxor.u32 %v4078, 2147483648
    %v4083 = vxor.u32 %v4079, 2147483648
    %v4084 = vxor.u32 %v4080, 2147483648
    %v4085 = vmul.f32 %v4082, 1.442695
    %v4086 = vpow.pop %v4085
    %v4087 = vmul.f32 %v4083, 1.442695
    %v4088 = vpow.pop %v4087
    %v4089 = vmul.f32 %v4084, 1.442695
    %v4090 = vpow.pop %v4089
    %v4091 = vadd.f32 %v4086, 1.0
    %v4092 = vadd.f32 %v4088, 1.0
    %v4093 = vadd.f32 %v4090, 1.0
    %v4094 = vrcp.pop %v4091
    %v4095 = vmul.f32 %v4091, %v4094
    %v4096 = vsub.f32 1.0, %v4095
    %v4097 = vmul.f32 %v4094, %v4096
    %v4098 = vadd.f32 %v4094, %v4097
    %vm4099 = vweird.f32 %v4091
    %vm4100 = vweird.f32 %v4094
    %vm4101 = vmor %vm4099, %vm4100
    %v4102 = vsel %vm4101, %v4094, %v4098
    %v4103 = vand.u32 2147483647, %v4091
    %vm4104 = vcmp.eq.f32.partialorder %v4103, 8.507059e+37
    %v4105 = vand.u32 %v4091, 2147483648
    %v4106 = vor.u32 1.1754944e-38, %v4105
    %v4107 = vsel %vm4104, %v4106, %v4102
    %v4108 = vmul.f32 1.0, %v4107
    %v4109 = vrcp.pop %v4092
    %v4110 = vmul.f32 %v4092, %v4109
    %v4111 = vsub.f32 1.0, %v4110
    %v4112 = vmul.f32 %v4109, %v4111
    %v4113 = vadd.f32 %v4109, %v4112
    %vm4114 = vweird.f32 %v4092
    %vm4115 = vweird.f32 %v4109
    %vm4116 = vmor %vm4114, %vm4115
    %v4117 = vsel %vm4116, %v4109, %v4113
    %v4118 = vand.u32 2147483647, %v4092
    %vm4119 = vcmp.eq.f32.partialorder %v4118, 8.507059e+37
    %v4120 = vand.u32 %v4092, 2147483648
    %v4121 = vor.u32 1.1754944e-38, %v4120
    %v4122 = vsel %vm4119, %v4121, %v4117
    %v4123 = vmul.f32 1.0, %v4122
    %v4124 = vrcp.pop %v4093
    %v4125 = vmul.f32 %v4093, %v4124
    %v4126 = vsub.f32 1.0, %v4125
    %v4127 = vmul.f32 %v4124, %v4126
    %v4128 = vadd.f32 %v4124, %v4127
    %vm4129 = vweird.f32 %v4093
    %vm4130 = vweird.f32 %v4124
    %vm4131 = vmor %vm4129, %vm4130
    %v4132 = vsel %vm4131, %v4124, %v4128
    %v4133 = vand.u32 2147483647, %v4093
    %vm4134 = vcmp.eq.f32.partialorder %v4133, 8.507059e+37
    %v4135 = vand.u32 %v4093, 2147483648
    %v4136 = vor.u32 1.1754944e-38, %v4135
    %v4137 = vsel %vm4134, %v4136, %v4132
    %v4138 = vmul.f32 1.0, %v4137
    %v4139 = vtanh.pop %v4081
    %v4140 = vmul.f32 %v4123, %v3926
    %v4141 = vmul.f32 %v4108, %v4139
    %v4142 = vadd.f32 %v4140, %v4141
    %v4143 = vtanh.pop %v4142
    %v4144 = vmul.f32 %v4138, %v4143
    %4145 = vst [vmem:[#allocation3 + $0x78] sm:$0xff] %v4144
    %v4146 = vld [vmem:[#allocation2 + $0x200] sm:$0xff]
    %v4147 = vld [vmem:[#allocation2 + $0x208] sm:$0xff]
    %v4148 = vld [vmem:[#allocation2 + $0x210] sm:$0xff]
    %v4149 = vld [vmem:[#allocation2 + $0x218] sm:$0xff]
    %v4150 = vld [vmem:[#allocation4] sm:$0xff]
    %v4151 = vld [vmem:[#allocation4 + $0x8] sm:$0xff]
    %v4152 = vld [vmem:[#allocation4 + $0x10] sm:$0xff]
    %v4153 = vld [vmem:[#allocation4 + $0x18] sm:$0xff]
    %v4154 = vld [vmem:[#allocation4 + $0x20] sm:$0xff]
    %v4155 = vld [vmem:[#allocation4 + $0x28] sm:$0xff]
    %v4156 = vld [vmem:[#allocation4 + $0x30] sm:$0xff]
    %v4157 = vld [vmem:[#allocation4 + $0x38] sm:$0xff]
    %v4158 = vld [vmem:[#allocation4 + $0x40] sm:$0xff]
    %v4159 = vld [vmem:[#allocation4 + $0x48] sm:$0xff]
    %v4160 = vld [vmem:[#allocation4 + $0x50] sm:$0xff]
    %v4161 = vld [vmem:[#allocation4 + $0x58] sm:$0xff]
    %v4162 = vld [vmem:[#allocation4 + $0x60] sm:$0xff]
    %v4163 = vld [vmem:[#allocation4 + $0x68] sm:$0xff]
    %v4164 = vld [vmem:[#allocation4 + $0x70] sm:$0xff]
    %v4165 = vld [vmem:[#allocation4 + $0x78] sm:$0xff]
    %v4166 = vld [vmem:[#allocation4 + $0x80] sm:$0xff]
    %v4167 = vld [vmem:[#allocation4 + $0x88] sm:$0xff]
    %v4168 = vld [vmem:[#allocation4 + $0x90] sm:$0xff]
    %v4169 = vld [vmem:[#allocation4 + $0x98] sm:$0xff]
    %v4170 = vld [vmem:[#allocation4 + $0xa0] sm:$0xff]
    %v4171 = vld [vmem:[#allocation4 + $0xa8] sm:$0xff]
    %v4172 = vld [vmem:[#allocation4 + $0xb0] sm:$0xff]
    %v4173 = vld [vmem:[#allocation4 + $0xb8] sm:$0xff]
    %v4174 = vld [vmem:[#allocation4 + $0xc0] sm:$0xff]
    %v4175 = vld [vmem:[#allocation4 + $0xc8] sm:$0xff]
    %v4176 = vld [vmem:[#allocation4 + $0xd0] sm:$0xff]
    %v4177 = vld [vmem:[#allocation4 + $0xd8] sm:$0xff]
    %v4178 = vld [vmem:[#allocation4 + $0xe0] sm:$0xff]
    %v4179 = vld [vmem:[#allocation4 + $0xe8] sm:$0xff]
    %v4180 = vld [vmem:[#allocation4 + $0xf0] sm:$0xff]
    %v4181 = vld [vmem:[#allocation4 + $0xf8] sm:$0xff]
    %v4182 = vld [vmem:[#allocation4 + $0x100] sm:$0xff]
    %v4183 = vld [vmem:[#allocation4 + $0x108] sm:$0xff]
    %v4184 = vld [vmem:[#allocation4 + $0x110] sm:$0xff]
    %v4185 = vld [vmem:[#allocation4 + $0x118] sm:$0xff]
    %v4186 = vld [vmem:[#allocation4 + $0x120] sm:$0xff]
    %v4187 = vld [vmem:[#allocation4 + $0x128] sm:$0xff]
    %v4188 = vld [vmem:[#allocation4 + $0x130] sm:$0xff]
    %v4189 = vld [vmem:[#allocation4 + $0x138] sm:$0xff]
    %v4190 = vld [vmem:[#allocation4 + $0x140] sm:$0xff]
    %v4191 = vld [vmem:[#allocation4 + $0x148] sm:$0xff]
    %v4192 = vld [vmem:[#allocation4 + $0x150] sm:$0xff]
    %v4193 = vld [vmem:[#allocation4 + $0x158] sm:$0xff]
    %v4194 = vld [vmem:[#allocation4 + $0x160] sm:$0xff]
    %v4195 = vld [vmem:[#allocation4 + $0x168] sm:$0xff]
    %v4196 = vld [vmem:[#allocation4 + $0x170] sm:$0xff]
    %v4197 = vld [vmem:[#allocation4 + $0x178] sm:$0xff]
    %v4198 = vld [vmem:[#allocation4 + $0x180] sm:$0xff]
    %v4199 = vld [vmem:[#allocation4 + $0x188] sm:$0xff]
    %v4200 = vld [vmem:[#allocation4 + $0x190] sm:$0xff]
    %v4201 = vld [vmem:[#allocation4 + $0x198] sm:$0xff]
    %v4202 = vld [vmem:[#allocation4 + $0x1a0] sm:$0xff]
    %v4203 = vld [vmem:[#allocation4 + $0x1a8] sm:$0xff]
    %v4204 = vld [vmem:[#allocation4 + $0x1b0] sm:$0xff]
    %v4205 = vld [vmem:[#allocation4 + $0x1b8] sm:$0xff]
    %v4206 = vld [vmem:[#allocation4 + $0x1c0] sm:$0xff]
    %v4207 = vld [vmem:[#allocation4 + $0x1c8] sm:$0xff]
    %v4208 = vld [vmem:[#allocation4 + $0x1d0] sm:$0xff]
    %v4209 = vld [vmem:[#allocation4 + $0x1d8] sm:$0xff]
    %v4210 = vld [vmem:[#allocation4 + $0x1e0] sm:$0xff]
    %v4211 = vld [vmem:[#allocation4 + $0x1e8] sm:$0xff]
    %v4212 = vld [vmem:[#allocation4 + $0x1f0] sm:$0xff]
    %v4213 = vld [vmem:[#allocation4 + $0x1f8] sm:$0xff]
    %4214 = vmatpush.msra.mxu0 %v4210
    %4215 = vmatpush.msra.mxu0 %v4206
    %4216 = vmatpush.msra.mxu0 %v4202
    %4217 = vmatpush.msra.mxu0 %v4198
    %4218 = vmatpush.msra.mxu0 %v4194
    %4219 = vmatpush.msra.mxu0 %v4190
    %4220 = vmatpush.msra.mxu0 %v4186
    %4221 = vmatpush.msra.mxu0 %v4182
    %4222 = vmatpush.msra.mxu0 %v4178
    %4223 = vmatpush.msra.mxu0 %v4174
    %4224 = vmatpush.msra.mxu0 %v4170
    %4225 = vmatpush.msra.mxu0 %v4166
    %4226 = vmatpush.msra.mxu0 %v4162
    %4227 = vmatpush.msra.mxu0 %v4158
    %4228 = vmatpush.msra.mxu0 %v4154
    %4229 = vmatpush.msra.mxu0 %v4150
    %4230 = vmatmul.f32.gmra.mxu0 %v4144
    %v4231 = vpop.f32.mrf.mxu0
    %v4232 = vadd.f32 0.0, %v4231
    %4233 = vdwg.mxu0
    %4234 = vmatpush.msra.mxu0 %v4211
    %4235 = vmatpush.msra.mxu0 %v4207
    %4236 = vmatpush.msra.mxu0 %v4203
    %4237 = vmatpush.msra.mxu0 %v4199
    %4238 = vmatpush.msra.mxu0 %v4195
    %4239 = vmatpush.msra.mxu0 %v4191
    %4240 = vmatpush.msra.mxu0 %v4187
    %4241 = vmatpush.msra.mxu0 %v4183
    %4242 = vmatpush.msra.mxu0 %v4179
    %4243 = vmatpush.msra.mxu0 %v4175
    %4244 = vmatpush.msra.mxu0 %v4171
    %4245 = vmatpush.msra.mxu0 %v4167
    %4246 = vmatpush.msra.mxu0 %v4163
    %4247 = vmatpush.msra.mxu0 %v4159
    %4248 = vmatpush.msra.mxu0 %v4155
    %4249 = vmatpush.msra.mxu0 %v4151
    %4250 = vmatmul.f32.gmra.mxu0 %v4144
    %v4251 = vpop.f32.mrf.mxu0
    %v4252 = vadd.f32 0.0, %v4251
    %4253 = vdwg.mxu0
    %4254 = vmatpush.msra.mxu0 %v4212
    %4255 = vmatpush.msra.mxu0 %v4208
    %4256 = vmatpush.msra.mxu0 %v4204
    %4257 = vmatpush.msra.mxu0 %v4200
    %4258 = vmatpush.msra.mxu0 %v4196
    %4259 = vmatpush.msra.mxu0 %v4192
    %4260 = vmatpush.msra.mxu0 %v4188
    %4261 = vmatpush.msra.mxu0 %v4184
    %4262 = vmatpush.msra.mxu0 %v4180
    %4263 = vmatpush.msra.mxu0 %v4176
    %4264 = vmatpush.msra.mxu0 %v4172
    %4265 = vmatpush.msra.mxu0 %v4168
    %4266 = vmatpush.msra.mxu0 %v4164
    %4267 = vmatpush.msra.mxu0 %v4160
    %4268 = vmatpush.msra.mxu0 %v4156
    %4269 = vmatpush.msra.mxu0 %v4152
    %4270 = vmatmul.f32.gmra.mxu0 %v4144
    %v4271 = vpop.f32.mrf.mxu0
    %v4272 = vadd.f32 0.0, %v4271
    %4273 = vdwg.mxu0
    %4274 = vmatpush.msra.mxu0 %v4213
    %4275 = vmatpush.msra.mxu0 %v4209
    %4276 = vmatpush.msra.mxu0 %v4205
    %4277 = vmatpush.msra.mxu0 %v4201
    %4278 = vmatpush.msra.mxu0 %v4197
    %4279 = vmatpush.msra.mxu0 %v4193
    %4280 = vmatpush.msra.mxu0 %v4189
    %4281 = vmatpush.msra.mxu0 %v4185
    %4282 = vmatpush.msra.mxu0 %v4181
    %4283 = vmatpush.msra.mxu0 %v4177
    %4284 = vmatpush.msra.mxu0 %v4173
    %4285 = vmatpush.msra.mxu0 %v4169
    %4286 = vmatpush.msra.mxu0 %v4165
    %4287 = vmatpush.msra.mxu0 %v4161
    %4288 = vmatpush.msra.mxu0 %v4157
    %4289 = vmatpush.msra.mxu0 %v4153
    %4290 = vmatmul.f32.gmra.mxu0 %v4144
    %v4291 = vpop.f32.mrf.mxu0
    %v4292 = vadd.f32 0.0, %v4291
    %4293 = vdwg.mxu0
    %v4294 = vadd.f32 %v4146, %v4232
    %v4295 = vadd.f32 %v4147, %v4252
    %v4296 = vadd.f32 %v4148, %v4272
    %v4297 = vadd.f32 %v4149, %v4292
    %v4298 = vxor.u32 %v4294, 2147483648
    %v4299 = vxor.u32 %v4295, 2147483648
    %v4300 = vxor.u32 %v4296, 2147483648
    %v4301 = vmul.f32 %v4298, 1.442695
    %v4302 = vpow.pop %v4301
    %v4303 = vmul.f32 %v4299, 1.442695
    %v4304 = vpow.pop %v4303
    %v4305 = vmul.f32 %v4300, 1.442695
    %v4306 = vpow.pop %v4305
    %v4307 = vadd.f32 %v4302, 1.0
    %v4308 = vadd.f32 %v4304, 1.0
    %v4309 = vadd.f32 %v4306, 1.0
    %v4310 = vrcp.pop %v4307
    %v4311 = vmul.f32 %v4307, %v4310
    %v4312 = vsub.f32 1.0, %v4311
    %v4313 = vmul.f32 %v4310, %v4312
    %v4314 = vadd.f32 %v4310, %v4313
    %vm4315 = vweird.f32 %v4307
    %vm4316 = vweird.f32 %v4310
    %vm4317 = vmor %vm4315, %vm4316
    %v4318 = vsel %vm4317, %v4310, %v4314
    %v4319 = vand.u32 2147483647, %v4307
    %vm4320 = vcmp.eq.f32.partialorder %v4319, 8.507059e+37
    %v4321 = vand.u32 %v4307, 2147483648
    %v4322 = vor.u32 1.1754944e-38, %v4321
    %v4323 = vsel %vm4320, %v4322, %v4318
    %v4324 = vmul.f32 1.0, %v4323
    %v4325 = vrcp.pop %v4308
    %v4326 = vmul.f32 %v4308, %v4325
    %v4327 = vsub.f32 1.0, %v4326
    %v4328 = vmul.f32 %v4325, %v4327
    %v4329 = vadd.f32 %v4325, %v4328
    %vm4330 = vweird.f32 %v4308
    %vm4331 = vweird.f32 %v4325
    %vm4332 = vmor %vm4330, %vm4331
    %v4333 = vsel %vm4332, %v4325, %v4329
    %v4334 = vand.u32 2147483647, %v4308
    %vm4335 = vcmp.eq.f32.partialorder %v4334, 8.507059e+37
    %v4336 = vand.u32 %v4308, 2147483648
    %v4337 = vor.u32 1.1754944e-38, %v4336
    %v4338 = vsel %vm4335, %v4337, %v4333
    %v4339 = vmul.f32 1.0, %v4338
    %v4340 = vrcp.pop %v4309
    %v4341 = vmul.f32 %v4309, %v4340
    %v4342 = vsub.f32 1.0, %v4341
    %v4343 = vmul.f32 %v4340, %v4342
    %v4344 = vadd.f32 %v4340, %v4343
    %vm4345 = vweird.f32 %v4309
    %vm4346 = vweird.f32 %v4340
    %vm4347 = vmor %vm4345, %vm4346
    %v4348 = vsel %vm4347, %v4340, %v4344
    %v4349 = vand.u32 2147483647, %v4309
    %vm4350 = vcmp.eq.f32.partialorder %v4349, 8.507059e+37
    %v4351 = vand.u32 %v4309, 2147483648
    %v4352 = vor.u32 1.1754944e-38, %v4351
    %v4353 = vsel %vm4350, %v4352, %v4348
    %v4354 = vmul.f32 1.0, %v4353
    %v4355 = vtanh.pop %v4297
    %v4356 = vmul.f32 %v4339, %v4142
    %v4357 = vmul.f32 %v4324, %v4355
    %v4358 = vadd.f32 %v4356, %v4357
    %v4359 = vtanh.pop %v4358
    %v4360 = vmul.f32 %v4354, %v4359
    %4361 = vst [vmem:[#allocation3 + $0x80] sm:$0xff] %v4360
    %v4362 = vld [vmem:[#allocation2 + $0x220] sm:$0xff]
    %v4363 = vld [vmem:[#allocation2 + $0x228] sm:$0xff]
    %v4364 = vld [vmem:[#allocation2 + $0x230] sm:$0xff]
    %v4365 = vld [vmem:[#allocation2 + $0x238] sm:$0xff]
    %v4366 = vld [vmem:[#allocation4] sm:$0xff]
    %v4367 = vld [vmem:[#allocation4 + $0x8] sm:$0xff]
    %v4368 = vld [vmem:[#allocation4 + $0x10] sm:$0xff]
    %v4369 = vld [vmem:[#allocation4 + $0x18] sm:$0xff]
    %v4370 = vld [vmem:[#allocation4 + $0x20] sm:$0xff]
    %v4371 = vld [vmem:[#allocation4 + $0x28] sm:$0xff]
    %v4372 = vld [vmem:[#allocation4 + $0x30] sm:$0xff]
    %v4373 = vld [vmem:[#allocation4 + $0x38] sm:$0xff]
    %v4374 = vld [vmem:[#allocation4 + $0x40] sm:$0xff]
    %v4375 = vld [vmem:[#allocation4 + $0x48] sm:$0xff]
    %v4376 = vld [vmem:[#allocation4 + $0x50] sm:$0xff]
    %v4377 = vld [vmem:[#allocation4 + $0x58] sm:$0xff]
    %v4378 = vld [vmem:[#allocation4 + $0x60] sm:$0xff]
    %v4379 = vld [vmem:[#allocation4 + $0x68] sm:$0xff]
    %v4380 = vld [vmem:[#allocation4 + $0x70] sm:$0xff]
    %v4381 = vld [vmem:[#allocation4 + $0x78] sm:$0xff]
    %v4382 = vld [vmem:[#allocation4 + $0x80] sm:$0xff]
    %v4383 = vld [vmem:[#allocation4 + $0x88] sm:$0xff]
    %v4384 = vld [vmem:[#allocation4 + $0x90] sm:$0xff]
    %v4385 = vld [vmem:[#allocation4 + $0x98] sm:$0xff]
    %v4386 = vld [vmem:[#allocation4 + $0xa0] sm:$0xff]
    %v4387 = vld [vmem:[#allocation4 + $0xa8] sm:$0xff]
    %v4388 = vld [vmem:[#allocation4 + $0xb0] sm:$0xff]
    %v4389 = vld [vmem:[#allocation4 + $0xb8] sm:$0xff]
    %v4390 = vld [vmem:[#allocation4 + $0xc0] sm:$0xff]
    %v4391 = vld [vmem:[#allocation4 + $0xc8] sm:$0xff]
    %v4392 = vld [vmem:[#allocation4 + $0xd0] sm:$0xff]
    %v4393 = vld [vmem:[#allocation4 + $0xd8] sm:$0xff]
    %v4394 = vld [vmem:[#allocation4 + $0xe0] sm:$0xff]
    %v4395 = vld [vmem:[#allocation4 + $0xe8] sm:$0xff]
    %v4396 = vld [vmem:[#allocation4 + $0xf0] sm:$0xff]
    %v4397 = vld [vmem:[#allocation4 + $0xf8] sm:$0xff]
    %v4398 = vld [vmem:[#allocation4 + $0x100] sm:$0xff]
    %v4399 = vld [vmem:[#allocation4 + $0x108] sm:$0xff]
    %v4400 = vld [vmem:[#allocation4 + $0x110] sm:$0xff]
    %v4401 = vld [vmem:[#allocation4 + $0x118] sm:$0xff]
    %v4402 = vld [vmem:[#allocation4 + $0x120] sm:$0xff]
    %v4403 = vld [vmem:[#allocation4 + $0x128] sm:$0xff]
    %v4404 = vld [vmem:[#allocation4 + $0x130] sm:$0xff]
    %v4405 = vld [vmem:[#allocation4 + $0x138] sm:$0xff]
    %v4406 = vld [vmem:[#allocation4 + $0x140] sm:$0xff]
    %v4407 = vld [vmem:[#allocation4 + $0x148] sm:$0xff]
    %v4408 = vld [vmem:[#allocation4 + $0x150] sm:$0xff]
    %v4409 = vld [vmem:[#allocation4 + $0x158] sm:$0xff]
    %v4410 = vld [vmem:[#allocation4 + $0x160] sm:$0xff]
    %v4411 = vld [vmem:[#allocation4 + $0x168] sm:$0xff]
    %v4412 = vld [vmem:[#allocation4 + $0x170] sm:$0xff]
    %v4413 = vld [vmem:[#allocation4 + $0x178] sm:$0xff]
    %v4414 = vld [vmem:[#allocation4 + $0x180] sm:$0xff]
    %v4415 = vld [vmem:[#allocation4 + $0x188] sm:$0xff]
    %v4416 = vld [vmem:[#allocation4 + $0x190] sm:$0xff]
    %v4417 = vld [vmem:[#allocation4 + $0x198] sm:$0xff]
    %v4418 = vld [vmem:[#allocation4 + $0x1a0] sm:$0xff]
    %v4419 = vld [vmem:[#allocation4 + $0x1a8] sm:$0xff]
    %v4420 = vld [vmem:[#allocation4 + $0x1b0] sm:$0xff]
    %v4421 = vld [vmem:[#allocation4 + $0x1b8] sm:$0xff]
    %v4422 = vld [vmem:[#allocation4 + $0x1c0] sm:$0xff]
    %v4423 = vld [vmem:[#allocation4 + $0x1c8] sm:$0xff]
    %v4424 = vld [vmem:[#allocation4 + $0x1d0] sm:$0xff]
    %v4425 = vld [vmem:[#allocation4 + $0x1d8] sm:$0xff]
    %v4426 = vld [vmem:[#allocation4 + $0x1e0] sm:$0xff]
    %v4427 = vld [vmem:[#allocation4 + $0x1e8] sm:$0xff]
    %v4428 = vld [vmem:[#allocation4 + $0x1f0] sm:$0xff]
    %v4429 = vld [vmem:[#allocation4 + $0x1f8] sm:$0xff]
    %4430 = vmatpush.msra.mxu0 %v4426
    %4431 = vmatpush.msra.mxu0 %v4422
    %4432 = vmatpush.msra.mxu0 %v4418
    %4433 = vmatpush.msra.mxu0 %v4414
    %4434 = vmatpush.msra.mxu0 %v4410
    %4435 = vmatpush.msra.mxu0 %v4406
    %4436 = vmatpush.msra.mxu0 %v4402
    %4437 = vmatpush.msra.mxu0 %v4398
    %4438 = vmatpush.msra.mxu0 %v4394
    %4439 = vmatpush.msra.mxu0 %v4390
    %4440 = vmatpush.msra.mxu0 %v4386
    %4441 = vmatpush.msra.mxu0 %v4382
    %4442 = vmatpush.msra.mxu0 %v4378
    %4443 = vmatpush.msra.mxu0 %v4374
    %4444 = vmatpush.msra.mxu0 %v4370
    %4445 = vmatpush.msra.mxu0 %v4366
    %4446 = vmatmul.f32.gmra.mxu0 %v4360
    %v4447 = vpop.f32.mrf.mxu0
    %v4448 = vadd.f32 0.0, %v4447
    %4449 = vdwg.mxu0
    %4450 = vmatpush.msra.mxu0 %v4427
    %4451 = vmatpush.msra.mxu0 %v4423
    %4452 = vmatpush.msra.mxu0 %v4419
    %4453 = vmatpush.msra.mxu0 %v4415
    %4454 = vmatpush.msra.mxu0 %v4411
    %4455 = vmatpush.msra.mxu0 %v4407
    %4456 = vmatpush.msra.mxu0 %v4403
    %4457 = vmatpush.msra.mxu0 %v4399
    %4458 = vmatpush.msra.mxu0 %v4395
    %4459 = vmatpush.msra.mxu0 %v4391
    %4460 = vmatpush.msra.mxu0 %v4387
    %4461 = vmatpush.msra.mxu0 %v4383
    %4462 = vmatpush.msra.mxu0 %v4379
    %4463 = vmatpush.msra.mxu0 %v4375
    %4464 = vmatpush.msra.mxu0 %v4371
    %4465 = vmatpush.msra.mxu0 %v4367
    %4466 = vmatmul.f32.gmra.mxu0 %v4360
    %v4467 = vpop.f32.mrf.mxu0
    %v4468 = vadd.f32 0.0, %v4467
    %4469 = vdwg.mxu0
    %4470 = vmatpush.msra.mxu0 %v4428
    %4471 = vmatpush.msra.mxu0 %v4424
    %4472 = vmatpush.msra.mxu0 %v4420
    %4473 = vmatpush.msra.mxu0 %v4416
    %4474 = vmatpush.msra.mxu0 %v4412
    %4475 = vmatpush.msra.mxu0 %v4408
    %4476 = vmatpush.msra.mxu0 %v4404
    %4477 = vmatpush.msra.mxu0 %v4400
    %4478 = vmatpush.msra.mxu0 %v4396
    %4479 = vmatpush.msra.mxu0 %v4392
    %4480 = vmatpush.msra.mxu0 %v4388
    %4481 = vmatpush.msra.mxu0 %v4384
    %4482 = vmatpush.msra.mxu0 %v4380
    %4483 = vmatpush.msra.mxu0 %v4376
    %4484 = vmatpush.msra.mxu0 %v4372
    %4485 = vmatpush.msra.mxu0 %v4368
    %4486 = vmatmul.f32.gmra.mxu0 %v4360
    %v4487 = vpop.f32.mrf.mxu0
    %v4488 = vadd.f32 0.0, %v4487
    %4489 = vdwg.mxu0
    %4490 = vmatpush.msra.mxu0 %v4429
    %4491 = vmatpush.msra.mxu0 %v4425
    %4492 = vmatpush.msra.mxu0 %v4421
    %4493 = vmatpush.msra.mxu0 %v4417
    %4494 = vmatpush.msra.mxu0 %v4413
    %4495 = vmatpush.msra.mxu0 %v4409
    %4496 = vmatpush.msra.mxu0 %v4405
    %4497 = vmatpush.msra.mxu0 %v4401
    %4498 = vmatpush.msra.mxu0 %v4397
    %4499 = vmatpush.msra.mxu0 %v4393
    %4500 = vmatpush.msra.mxu0 %v4389
    %4501 = vmatpush.msra.mxu0 %v4385
    %4502 = vmatpush.msra.mxu0 %v4381
    %4503 = vmatpush.msra.mxu0 %v4377
    %4504 = vmatpush.msra.mxu0 %v4373
    %4505 = vmatpush.msra.mxu0 %v4369
    %4506 = vmatmul.f32.gmra.mxu0 %v4360
    %v4507 = vpop.f32.mrf.mxu0
    %v4508 = vadd.f32 0.0, %v4507
    %4509 = vdwg.mxu0
    %v4510 = vadd.f32 %v4362, %v4448
    %v4511 = vadd.f32 %v4363, %v4468
    %v4512 = vadd.f32 %v4364, %v4488
    %v4513 = vadd.f32 %v4365, %v4508
    %v4514 = vxor.u32 %v4510, 2147483648
    %v4515 = vxor.u32 %v4511, 2147483648
    %v4516 = vxor.u32 %v4512, 2147483648
    %v4517 = vmul.f32 %v4514, 1.442695
    %v4518 = vpow.pop %v4517
    %v4519 = vmul.f32 %v4515, 1.442695
    %v4520 = vpow.pop %v4519
    %v4521 = vmul.f32 %v4516, 1.442695
    %v4522 = vpow.pop %v4521
    %v4523 = vadd.f32 %v4518, 1.0
    %v4524 = vadd.f32 %v4520, 1.0
    %v4525 = vadd.f32 %v4522, 1.0
    %v4526 = vrcp.pop %v4523
    %v4527 = vmul.f32 %v4523, %v4526
    %v4528 = vsub.f32 1.0, %v4527
    %v4529 = vmul.f32 %v4526, %v4528
    %v4530 = vadd.f32 %v4526, %v4529
    %vm4531 = vweird.f32 %v4523
    %vm4532 = vweird.f32 %v4526
    %vm4533 = vmor %vm4531, %vm4532
    %v4534 = vsel %vm4533, %v4526, %v4530
    %v4535 = vand.u32 2147483647, %v4523
    %vm4536 = vcmp.eq.f32.partialorder %v4535, 8.507059e+37
    %v4537 = vand.u32 %v4523, 2147483648
    %v4538 = vor.u32 1.1754944e-38, %v4537
    %v4539 = vsel %vm4536, %v4538, %v4534
    %v4540 = vmul.f32 1.0, %v4539
    %v4541 = vrcp.pop %v4524
    %v4542 = vmul.f32 %v4524, %v4541
    %v4543 = vsub.f32 1.0, %v4542
    %v4544 = vmul.f32 %v4541, %v4543
    %v4545 = vadd.f32 %v4541, %v4544
    %vm4546 = vweird.f32 %v4524
    %vm4547 = vweird.f32 %v4541
    %vm4548 = vmor %vm4546, %vm4547
    %v4549 = vsel %vm4548, %v4541, %v4545
    %v4550 = vand.u32 2147483647, %v4524
    %vm4551 = vcmp.eq.f32.partialorder %v4550, 8.507059e+37
    %v4552 = vand.u32 %v4524, 2147483648
    %v4553 = vor.u32 1.1754944e-38, %v4552
    %v4554 = vsel %vm4551, %v4553, %v4549
    %v4555 = vmul.f32 1.0, %v4554
    %v4556 = vrcp.pop %v4525
    %v4557 = vmul.f32 %v4525, %v4556
    %v4558 = vsub.f32 1.0, %v4557
    %v4559 = vmul.f32 %v4556, %v4558
    %v4560 = vadd.f32 %v4556, %v4559
    %vm4561 = vweird.f32 %v4525
    %vm4562 = vweird.f32 %v4556
    %vm4563 = vmor %vm4561, %vm4562
    %v4564 = vsel %vm4563, %v4556, %v4560
    %v4565 = vand.u32 2147483647, %v4525
    %vm4566 = vcmp.eq.f32.partialorder %v4565, 8.507059e+37
    %v4567 = vand.u32 %v4525, 2147483648
    %v4568 = vor.u32 1.1754944e-38, %v4567
    %v4569 = vsel %vm4566, %v4568, %v4564
    %v4570 = vmul.f32 1.0, %v4569
    %v4571 = vtanh.pop %v4513
    %v4572 = vmul.f32 %v4555, %v4358
    %v4573 = vmul.f32 %v4540, %v4571
    %v4574 = vadd.f32 %v4572, %v4573
    %v4575 = vtanh.pop %v4574
    %v4576 = vmul.f32 %v4570, %v4575
    %4577 = vst [vmem:[#allocation3 + $0x88] sm:$0xff] %v4576
    %v4578 = vld [vmem:[#allocation2 + $0x240] sm:$0xff]
    %v4579 = vld [vmem:[#allocation2 + $0x248] sm:$0xff]
    %v4580 = vld [vmem:[#allocation2 + $0x250] sm:$0xff]
    %v4581 = vld [vmem:[#allocation2 + $0x258] sm:$0xff]
    %v4582 = vld [vmem:[#allocation4] sm:$0xff]
    %v4583 = vld [vmem:[#allocation4 + $0x8] sm:$0xff]
    %v4584 = vld [vmem:[#allocation4 + $0x10] sm:$0xff]
    %v4585 = vld [vmem:[#allocation4 + $0x18] sm:$0xff]
    %v4586 = vld [vmem:[#allocation4 + $0x20] sm:$0xff]
    %v4587 = vld [vmem:[#allocation4 + $0x28] sm:$0xff]
    %v4588 = vld [vmem:[#allocation4 + $0x30] sm:$0xff]
    %v4589 = vld [vmem:[#allocation4 + $0x38] sm:$0xff]
    %v4590 = vld [vmem:[#allocation4 + $0x40] sm:$0xff]
    %v4591 = vld [vmem:[#allocation4 + $0x48] sm:$0xff]
    %v4592 = vld [vmem:[#allocation4 + $0x50] sm:$0xff]
    %v4593 = vld [vmem:[#allocation4 + $0x58] sm:$0xff]
    %v4594 = vld [vmem:[#allocation4 + $0x60] sm:$0xff]
    %v4595 = vld [vmem:[#allocation4 + $0x68] sm:$0xff]
    %v4596 = vld [vmem:[#allocation4 + $0x70] sm:$0xff]
    %v4597 = vld [vmem:[#allocation4 + $0x78] sm:$0xff]
    %v4598 = vld [vmem:[#allocation4 + $0x80] sm:$0xff]
    %v4599 = vld [vmem:[#allocation4 + $0x88] sm:$0xff]
    %v4600 = vld [vmem:[#allocation4 + $0x90] sm:$0xff]
    %v4601 = vld [vmem:[#allocation4 + $0x98] sm:$0xff]
    %v4602 = vld [vmem:[#allocation4 + $0xa0] sm:$0xff]
    %v4603 = vld [vmem:[#allocation4 + $0xa8] sm:$0xff]
    %v4604 = vld [vmem:[#allocation4 + $0xb0] sm:$0xff]
    %v4605 = vld [vmem:[#allocation4 + $0xb8] sm:$0xff]
    %v4606 = vld [vmem:[#allocation4 + $0xc0] sm:$0xff]
    %v4607 = vld [vmem:[#allocation4 + $0xc8] sm:$0xff]
    %v4608 = vld [vmem:[#allocation4 + $0xd0] sm:$0xff]
    %v4609 = vld [vmem:[#allocation4 + $0xd8] sm:$0xff]
    %v4610 = vld [vmem:[#allocation4 + $0xe0] sm:$0xff]
    %v4611 = vld [vmem:[#allocation4 + $0xe8] sm:$0xff]
    %v4612 = vld [vmem:[#allocation4 + $0xf0] sm:$0xff]
    %v4613 = vld [vmem:[#allocation4 + $0xf8] sm:$0xff]
    %v4614 = vld [vmem:[#allocation4 + $0x100] sm:$0xff]
    %v4615 = vld [vmem:[#allocation4 + $0x108] sm:$0xff]
    %v4616 = vld [vmem:[#allocation4 + $0x110] sm:$0xff]
    %v4617 = vld [vmem:[#allocation4 + $0x118] sm:$0xff]
    %v4618 = vld [vmem:[#allocation4 + $0x120] sm:$0xff]
    %v4619 = vld [vmem:[#allocation4 + $0x128] sm:$0xff]
    %v4620 = vld [vmem:[#allocation4 + $0x130] sm:$0xff]
    %v4621 = vld [vmem:[#allocation4 + $0x138] sm:$0xff]
    %v4622 = vld [vmem:[#allocation4 + $0x140] sm:$0xff]
    %v4623 = vld [vmem:[#allocation4 + $0x148] sm:$0xff]
    %v4624 = vld [vmem:[#allocation4 + $0x150] sm:$0xff]
    %v4625 = vld [vmem:[#allocation4 + $0x158] sm:$0xff]
    %v4626 = vld [vmem:[#allocation4 + $0x160] sm:$0xff]
    %v4627 = vld [vmem:[#allocation4 + $0x168] sm:$0xff]
    %v4628 = vld [vmem:[#allocation4 + $0x170] sm:$0xff]
    %v4629 = vld [vmem:[#allocation4 + $0x178] sm:$0xff]
    %v4630 = vld [vmem:[#allocation4 + $0x180] sm:$0xff]
    %v4631 = vld [vmem:[#allocation4 + $0x188] sm:$0xff]
    %v4632 = vld [vmem:[#allocation4 + $0x190] sm:$0xff]
    %v4633 = vld [vmem:[#allocation4 + $0x198] sm:$0xff]
    %v4634 = vld [vmem:[#allocation4 + $0x1a0] sm:$0xff]
    %v4635 = vld [vmem:[#allocation4 + $0x1a8] sm:$0xff]
    %v4636 = vld [vmem:[#allocation4 + $0x1b0] sm:$0xff]
    %v4637 = vld [vmem:[#allocation4 + $0x1b8] sm:$0xff]
    %v4638 = vld [vmem:[#allocation4 + $0x1c0] sm:$0xff]
    %v4639 = vld [vmem:[#allocation4 + $0x1c8] sm:$0xff]
    %v4640 = vld [vmem:[#allocation4 + $0x1d0] sm:$0xff]
    %v4641 = vld [vmem:[#allocation4 + $0x1d8] sm:$0xff]
    %v4642 = vld [vmem:[#allocation4 + $0x1e0] sm:$0xff]
    %v4643 = vld [vmem:[#allocation4 + $0x1e8] sm:$0xff]
    %v4644 = vld [vmem:[#allocation4 + $0x1f0] sm:$0xff]
    %v4645 = vld [vmem:[#allocation4 + $0x1f8] sm:$0xff]
    %4646 = vmatpush.msra.mxu0 %v4642
    %4647 = vmatpush.msra.mxu0 %v4638
    %4648 = vmatpush.msra.mxu0 %v4634
    %4649 = vmatpush.msra.mxu0 %v4630
    %4650 = vmatpush.msra.mxu0 %v4626
    %4651 = vmatpush.msra.mxu0 %v4622
    %4652 = vmatpush.msra.mxu0 %v4618
    %4653 = vmatpush.msra.mxu0 %v4614
    %4654 = vmatpush.msra.mxu0 %v4610
    %4655 = vmatpush.msra.mxu0 %v4606
    %4656 = vmatpush.msra.mxu0 %v4602
    %4657 = vmatpush.msra.mxu0 %v4598
    %4658 = vmatpush.msra.mxu0 %v4594
    %4659 = vmatpush.msra.mxu0 %v4590
    %4660 = vmatpush.msra.mxu0 %v4586
    %4661 = vmatpush.msra.mxu0 %v4582
    %4662 = vmatmul.f32.gmra.mxu0 %v4576
    %v4663 = vpop.f32.mrf.mxu0
    %v4664 = vadd.f32 0.0, %v4663
    %4665 = vdwg.mxu0
    %4666 = vmatpush.msra.mxu0 %v4643
    %4667 = vmatpush.msra.mxu0 %v4639
    %4668 = vmatpush.msra.mxu0 %v4635
    %4669 = vmatpush.msra.mxu0 %v4631
    %4670 = vmatpush.msra.mxu0 %v4627
    %4671 = vmatpush.msra.mxu0 %v4623
    %4672 = vmatpush.msra.mxu0 %v4619
    %4673 = vmatpush.msra.mxu0 %v4615
    %4674 = vmatpush.msra.mxu0 %v4611
    %4675 = vmatpush.msra.mxu0 %v4607
    %4676 = vmatpush.msra.mxu0 %v4603
    %4677 = vmatpush.msra.mxu0 %v4599
    %4678 = vmatpush.msra.mxu0 %v4595
    %4679 = vmatpush.msra.mxu0 %v4591
    %4680 = vmatpush.msra.mxu0 %v4587
    %4681 = vmatpush.msra.mxu0 %v4583
    %4682 = vmatmul.f32.gmra.mxu0 %v4576
    %v4683 = vpop.f32.mrf.mxu0
    %v4684 = vadd.f32 0.0, %v4683
    %4685 = vdwg.mxu0
    %4686 = vmatpush.msra.mxu0 %v4644
    %4687 = vmatpush.msra.mxu0 %v4640
    %4688 = vmatpush.msra.mxu0 %v4636
    %4689 = vmatpush.msra.mxu0 %v4632
    %4690 = vmatpush.msra.mxu0 %v4628
    %4691 = vmatpush.msra.mxu0 %v4624
    %4692 = vmatpush.msra.mxu0 %v4620
    %4693 = vmatpush.msra.mxu0 %v4616
    %4694 = vmatpush.msra.mxu0 %v4612
    %4695 = vmatpush.msra.mxu0 %v4608
    %4696 = vmatpush.msra.mxu0 %v4604
    %4697 = vmatpush.msra.mxu0 %v4600
    %4698 = vmatpush.msra.mxu0 %v4596
    %4699 = vmatpush.msra.mxu0 %v4592
    %4700 = vmatpush.msra.mxu0 %v4588
    %4701 = vmatpush.msra.mxu0 %v4584
    %4702 = vmatmul.f32.gmra.mxu0 %v4576
    %v4703 = vpop.f32.mrf.mxu0
    %v4704 = vadd.f32 0.0, %v4703
    %4705 = vdwg.mxu0
    %4706 = vmatpush.msra.mxu0 %v4645
    %4707 = vmatpush.msra.mxu0 %v4641
    %4708 = vmatpush.msra.mxu0 %v4637
    %4709 = vmatpush.msra.mxu0 %v4633
    %4710 = vmatpush.msra.mxu0 %v4629
    %4711 = vmatpush.msra.mxu0 %v4625
    %4712 = vmatpush.msra.mxu0 %v4621
    %4713 = vmatpush.msra.mxu0 %v4617
    %4714 = vmatpush.msra.mxu0 %v4613
    %4715 = vmatpush.msra.mxu0 %v4609
    %4716 = vmatpush.msra.mxu0 %v4605
    %4717 = vmatpush.msra.mxu0 %v4601
    %4718 = vmatpush.msra.mxu0 %v4597
    %4719 = vmatpush.msra.mxu0 %v4593
    %4720 = vmatpush.msra.mxu0 %v4589
    %4721 = vmatpush.msra.mxu0 %v4585
    %4722 = vmatmul.f32.gmra.mxu0 %v4576
    %v4723 = vpop.f32.mrf.mxu0
    %v4724 = vadd.f32 0.0, %v4723
    %4725 = vdwg.mxu0
    %v4726 = vadd.f32 %v4578, %v4664
    %v4727 = vadd.f32 %v4579, %v4684
    %v4728 = vadd.f32 %v4580, %v4704
    %v4729 = vadd.f32 %v4581, %v4724
    %v4730 = vxor.u32 %v4726, 2147483648
    %v4731 = vxor.u32 %v4727, 2147483648
    %v4732 = vxor.u32 %v4728, 2147483648
    %v4733 = vmul.f32 %v4730, 1.442695
    %v4734 = vpow.pop %v4733
    %v4735 = vmul.f32 %v4731, 1.442695
    %v4736 = vpow.pop %v4735
    %v4737 = vmul.f32 %v4732, 1.442695
    %v4738 = vpow.pop %v4737
    %v4739 = vadd.f32 %v4734, 1.0
    %v4740 = vadd.f32 %v4736, 1.0
    %v4741 = vadd.f32 %v4738, 1.0
    %v4742 = vrcp.pop %v4739
    %v4743 = vmul.f32 %v4739, %v4742
    %v4744 = vsub.f32 1.0, %v4743
    %v4745 = vmul.f32 %v4742, %v4744
    %v4746 = vadd.f32 %v4742, %v4745
    %vm4747 = vweird.f32 %v4739
    %vm4748 = vweird.f32 %v4742
    %vm4749 = vmor %vm4747, %vm4748
    %v4750 = vsel %vm4749, %v4742, %v4746
    %v4751 = vand.u32 2147483647, %v4739
    %vm4752 = vcmp.eq.f32.partialorder %v4751, 8.507059e+37
    %v4753 = vand.u32 %v4739, 2147483648
    %v4754 = vor.u32 1.1754944e-38, %v4753
    %v4755 = vsel %vm4752, %v4754, %v4750
    %v4756 = vmul.f32 1.0, %v4755
    %v4757 = vrcp.pop %v4740
    %v4758 = vmul.f32 %v4740, %v4757
    %v4759 = vsub.f32 1.0, %v4758
    %v4760 = vmul.f32 %v4757, %v4759
    %v4761 = vadd.f32 %v4757, %v4760
    %vm4762 = vweird.f32 %v4740
    %vm4763 = vweird.f32 %v4757
    %vm4764 = vmor %vm4762, %vm4763
    %v4765 = vsel %vm4764, %v4757, %v4761
    %v4766 = vand.u32 2147483647, %v4740
    %vm4767 = vcmp.eq.f32.partialorder %v4766, 8.507059e+37
    %v4768 = vand.u32 %v4740, 2147483648
    %v4769 = vor.u32 1.1754944e-38, %v4768
    %v4770 = vsel %vm4767, %v4769, %v4765
    %v4771 = vmul.f32 1.0, %v4770
    %v4772 = vrcp.pop %v4741
    %v4773 = vmul.f32 %v4741, %v4772
    %v4774 = vsub.f32 1.0, %v4773
    %v4775 = vmul.f32 %v4772, %v4774
    %v4776 = vadd.f32 %v4772, %v4775
    %vm4777 = vweird.f32 %v4741
    %vm4778 = vweird.f32 %v4772
    %vm4779 = vmor %vm4777, %vm4778
    %v4780 = vsel %vm4779, %v4772, %v4776
    %v4781 = vand.u32 2147483647, %v4741
    %vm4782 = vcmp.eq.f32.partialorder %v4781, 8.507059e+37
    %v4783 = vand.u32 %v4741, 2147483648
    %v4784 = vor.u32 1.1754944e-38, %v4783
    %v4785 = vsel %vm4782, %v4784, %v4780
    %v4786 = vmul.f32 1.0, %v4785
    %v4787 = vtanh.pop %v4729
    %v4788 = vmul.f32 %v4771, %v4574
    %v4789 = vmul.f32 %v4756, %v4787
    %v4790 = vadd.f32 %v4788, %v4789
    %v4791 = vtanh.pop %v4790
    %v4792 = vmul.f32 %v4786, %v4791
    %4793 = vst [vmem:[#allocation3 + $0x90] sm:$0xff] %v4792
    %v4794 = vld [vmem:[#allocation2 + $0x260] sm:$0xff]
    %v4795 = vld [vmem:[#allocation2 + $0x268] sm:$0xff]
    %v4796 = vld [vmem:[#allocation2 + $0x270] sm:$0xff]
    %v4797 = vld [vmem:[#allocation2 + $0x278] sm:$0xff]
    %v4798 = vld [vmem:[#allocation4] sm:$0xff]
    %v4799 = vld [vmem:[#allocation4 + $0x8] sm:$0xff]
    %v4800 = vld [vmem:[#allocation4 + $0x10] sm:$0xff]
    %v4801 = vld [vmem:[#allocation4 + $0x18] sm:$0xff]
    %v4802 = vld [vmem:[#allocation4 + $0x20] sm:$0xff]
    %v4803 = vld [vmem:[#allocation4 + $0x28] sm:$0xff]
    %v4804 = vld [vmem:[#allocation4 + $0x30] sm:$0xff]
    %v4805 = vld [vmem:[#allocation4 + $0x38] sm:$0xff]
    %v4806 = vld [vmem:[#allocation4 + $0x40] sm:$0xff]
    %v4807 = vld [vmem:[#allocation4 + $0x48] sm:$0xff]
    %v4808 = vld [vmem:[#allocation4 + $0x50] sm:$0xff]
    %v4809 = vld [vmem:[#allocation4 + $0x58] sm:$0xff]
    %v4810 = vld [vmem:[#allocation4 + $0x60] sm:$0xff]
    %v4811 = vld [vmem:[#allocation4 + $0x68] sm:$0xff]
    %v4812 = vld [vmem:[#allocation4 + $0x70] sm:$0xff]
    %v4813 = vld [vmem:[#allocation4 + $0x78] sm:$0xff]
    %v4814 = vld [vmem:[#allocation4 + $0x80] sm:$0xff]
    %v4815 = vld [vmem:[#allocation4 + $0x88] sm:$0xff]
    %v4816 = vld [vmem:[#allocation4 + $0x90] sm:$0xff]
    %v4817 = vld [vmem:[#allocation4 + $0x98] sm:$0xff]
    %v4818 = vld [vmem:[#allocation4 + $0xa0] sm:$0xff]
    %v4819 = vld [vmem:[#allocation4 + $0xa8] sm:$0xff]
    %v4820 = vld [vmem:[#allocation4 + $0xb0] sm:$0xff]
    %v4821 = vld [vmem:[#allocation4 + $0xb8] sm:$0xff]
    %v4822 = vld [vmem:[#allocation4 + $0xc0] sm:$0xff]
    %v4823 = vld [vmem:[#allocation4 + $0xc8] sm:$0xff]
    %v4824 = vld [vmem:[#allocation4 + $0xd0] sm:$0xff]
    %v4825 = vld [vmem:[#allocation4 + $0xd8] sm:$0xff]
    %v4826 = vld [vmem:[#allocation4 + $0xe0] sm:$0xff]
    %v4827 = vld [vmem:[#allocation4 + $0xe8] sm:$0xff]
    %v4828 = vld [vmem:[#allocation4 + $0xf0] sm:$0xff]
    %v4829 = vld [vmem:[#allocation4 + $0xf8] sm:$0xff]
    %v4830 = vld [vmem:[#allocation4 + $0x100] sm:$0xff]
    %v4831 = vld [vmem:[#allocation4 + $0x108] sm:$0xff]
    %v4832 = vld [vmem:[#allocation4 + $0x110] sm:$0xff]
    %v4833 = vld [vmem:[#allocation4 + $0x118] sm:$0xff]
    %v4834 = vld [vmem:[#allocation4 + $0x120] sm:$0xff]
    %v4835 = vld [vmem:[#allocation4 + $0x128] sm:$0xff]
    %v4836 = vld [vmem:[#allocation4 + $0x130] sm:$0xff]
    %v4837 = vld [vmem:[#allocation4 + $0x138] sm:$0xff]
    %v4838 = vld [vmem:[#allocation4 + $0x140] sm:$0xff]
    %v4839 = vld [vmem:[#allocation4 + $0x148] sm:$0xff]
    %v4840 = vld [vmem:[#allocation4 + $0x150] sm:$0xff]
    %v4841 = vld [vmem:[#allocation4 + $0x158] sm:$0xff]
    %v4842 = vld [vmem:[#allocation4 + $0x160] sm:$0xff]
    %v4843 = vld [vmem:[#allocation4 + $0x168] sm:$0xff]
    %v4844 = vld [vmem:[#allocation4 + $0x170] sm:$0xff]
    %v4845 = vld [vmem:[#allocation4 + $0x178] sm:$0xff]
    %v4846 = vld [vmem:[#allocation4 + $0x180] sm:$0xff]
    %v4847 = vld [vmem:[#allocation4 + $0x188] sm:$0xff]
    %v4848 = vld [vmem:[#allocation4 + $0x190] sm:$0xff]
    %v4849 = vld [vmem:[#allocation4 + $0x198] sm:$0xff]
    %v4850 = vld [vmem:[#allocation4 + $0x1a0] sm:$0xff]
    %v4851 = vld [vmem:[#allocation4 + $0x1a8] sm:$0xff]
    %v4852 = vld [vmem:[#allocation4 + $0x1b0] sm:$0xff]
    %v4853 = vld [vmem:[#allocation4 + $0x1b8] sm:$0xff]
    %v4854 = vld [vmem:[#allocation4 + $0x1c0] sm:$0xff]
    %v4855 = vld [vmem:[#allocation4 + $0x1c8] sm:$0xff]
    %v4856 = vld [vmem:[#allocation4 + $0x1d0] sm:$0xff]
    %v4857 = vld [vmem:[#allocation4 + $0x1d8] sm:$0xff]
    %v4858 = vld [vmem:[#allocation4 + $0x1e0] sm:$0xff]
    %v4859 = vld [vmem:[#allocation4 + $0x1e8] sm:$0xff]
    %v4860 = vld [vmem:[#allocation4 + $0x1f0] sm:$0xff]
    %v4861 = vld [vmem:[#allocation4 + $0x1f8] sm:$0xff]
    %4862 = vmatpush.msra.mxu0 %v4858
    %4863 = vmatpush.msra.mxu0 %v4854
    %4864 = vmatpush.msra.mxu0 %v4850
    %4865 = vmatpush.msra.mxu0 %v4846
    %4866 = vmatpush.msra.mxu0 %v4842
    %4867 = vmatpush.msra.mxu0 %v4838
    %4868 = vmatpush.msra.mxu0 %v4834
    %4869 = vmatpush.msra.mxu0 %v4830
    %4870 = vmatpush.msra.mxu0 %v4826
    %4871 = vmatpush.msra.mxu0 %v4822
    %4872 = vmatpush.msra.mxu0 %v4818
    %4873 = vmatpush.msra.mxu0 %v4814
    %4874 = vmatpush.msra.mxu0 %v4810
    %4875 = vmatpush.msra.mxu0 %v4806
    %4876 = vmatpush.msra.mxu0 %v4802
    %4877 = vmatpush.msra.mxu0 %v4798
    %4878 = vmatmul.f32.gmra.mxu0 %v4792
    %v4879 = vpop.f32.mrf.mxu0
    %v4880 = vadd.f32 0.0, %v4879
    %4881 = vdwg.mxu0
    %4882 = vmatpush.msra.mxu0 %v4859
    %4883 = vmatpush.msra.mxu0 %v4855
    %4884 = vmatpush.msra.mxu0 %v4851
    %4885 = vmatpush.msra.mxu0 %v4847
    %4886 = vmatpush.msra.mxu0 %v4843
    %4887 = vmatpush.msra.mxu0 %v4839
    %4888 = vmatpush.msra.mxu0 %v4835
    %4889 = vmatpush.msra.mxu0 %v4831
    %4890 = vmatpush.msra.mxu0 %v4827
    %4891 = vmatpush.msra.mxu0 %v4823
    %4892 = vmatpush.msra.mxu0 %v4819
    %4893 = vmatpush.msra.mxu0 %v4815
    %4894 = vmatpush.msra.mxu0 %v4811
    %4895 = vmatpush.msra.mxu0 %v4807
    %4896 = vmatpush.msra.mxu0 %v4803
    %4897 = vmatpush.msra.mxu0 %v4799
    %4898 = vmatmul.f32.gmra.mxu0 %v4792
    %v4899 = vpop.f32.mrf.mxu0
    %v4900 = vadd.f32 0.0, %v4899
    %4901 = vdwg.mxu0
    %4902 = vmatpush.msra.mxu0 %v4860
    %4903 = vmatpush.msra.mxu0 %v4856
    %4904 = vmatpush.msra.mxu0 %v4852
    %4905 = vmatpush.msra.mxu0 %v4848
    %4906 = vmatpush.msra.mxu0 %v4844
    %4907 = vmatpush.msra.mxu0 %v4840
    %4908 = vmatpush.msra.mxu0 %v4836
    %4909 = vmatpush.msra.mxu0 %v4832
    %4910 = vmatpush.msra.mxu0 %v4828
    %4911 = vmatpush.msra.mxu0 %v4824
    %4912 = vmatpush.msra.mxu0 %v4820
    %4913 = vmatpush.msra.mxu0 %v4816
    %4914 = vmatpush.msra.mxu0 %v4812
    %4915 = vmatpush.msra.mxu0 %v4808
    %4916 = vmatpush.msra.mxu0 %v4804
    %4917 = vmatpush.msra.mxu0 %v4800
    %4918 = vmatmul.f32.gmra.mxu0 %v4792
    %v4919 = vpop.f32.mrf.mxu0
    %v4920 = vadd.f32 0.0, %v4919
    %4921 = vdwg.mxu0
    %4922 = vmatpush.msra.mxu0 %v4861
    %4923 = vmatpush.msra.mxu0 %v4857
    %4924 = vmatpush.msra.mxu0 %v4853
    %4925 = vmatpush.msra.mxu0 %v4849
    %4926 = vmatpush.msra.mxu0 %v4845
    %4927 = vmatpush.msra.mxu0 %v4841
    %4928 = vmatpush.msra.mxu0 %v4837
    %4929 = vmatpush.msra.mxu0 %v4833
    %4930 = vmatpush.msra.mxu0 %v4829
    %4931 = vmatpush.msra.mxu0 %v4825
    %4932 = vmatpush.msra.mxu0 %v4821
    %4933 = vmatpush.msra.mxu0 %v4817
    %4934 = vmatpush.msra.mxu0 %v4813
    %4935 = vmatpush.msra.mxu0 %v4809
    %4936 = vmatpush.msra.mxu0 %v4805
    %4937 = vmatpush.msra.mxu0 %v4801
    %4938 = vmatmul.f32.gmra.mxu0 %v4792
    %v4939 = vpop.f32.mrf.mxu0
    %v4940 = vadd.f32 0.0, %v4939
    %4941 = vdwg.mxu0
    %v4942 = vadd.f32 %v4794, %v4880
    %v4943 = vadd.f32 %v4795, %v4900
    %v4944 = vadd.f32 %v4796, %v4920
    %v4945 = vadd.f32 %v4797, %v4940
    %v4946 = vxor.u32 %v4942, 2147483648
    %v4947 = vxor.u32 %v4943, 2147483648
    %v4948 = vxor.u32 %v4944, 2147483648
    %v4949 = vmul.f32 %v4946, 1.442695
    %v4950 = vpow.pop %v4949
    %v4951 = vmul.f32 %v4947, 1.442695
    %v4952 = vpow.pop %v4951
    %v4953 = vmul.f32 %v4948, 1.442695
    %v4954 = vpow.pop %v4953
    %v4955 = vadd.f32 %v4950, 1.0
    %v4956 = vadd.f32 %v4952, 1.0
    %v4957 = vadd.f32 %v4954, 1.0
    %v4958 = vrcp.pop %v4955
    %v4959 = vmul.f32 %v4955, %v4958
    %v4960 = vsub.f32 1.0, %v4959
    %v4961 = vmul.f32 %v4958, %v4960
    %v4962 = vadd.f32 %v4958, %v4961
    %vm4963 = vweird.f32 %v4955
    %vm4964 = vweird.f32 %v4958
    %vm4965 = vmor %vm4963, %vm4964
    %v4966 = vsel %vm4965, %v4958, %v4962
    %v4967 = vand.u32 2147483647, %v4955
    %vm4968 = vcmp.eq.f32.partialorder %v4967, 8.507059e+37
    %v4969 = vand.u32 %v4955, 2147483648
    %v4970 = vor.u32 1.1754944e-38, %v4969
    %v4971 = vsel %vm4968, %v4970, %v4966
    %v4972 = vmul.f32 1.0, %v4971
    %v4973 = vrcp.pop %v4956
    %v4974 = vmul.f32 %v4956, %v4973
    %v4975 = vsub.f32 1.0, %v4974
    %v4976 = vmul.f32 %v4973, %v4975
    %v4977 = vadd.f32 %v4973, %v4976
    %vm4978 = vweird.f32 %v4956
    %vm4979 = vweird.f32 %v4973
    %vm4980 = vmor %vm4978, %vm4979
    %v4981 = vsel %vm4980, %v4973, %v4977
    %v4982 = vand.u32 2147483647, %v4956
    %vm4983 = vcmp.eq.f32.partialorder %v4982, 8.507059e+37
    %v4984 = vand.u32 %v4956, 2147483648
    %v4985 = vor.u32 1.1754944e-38, %v4984
    %v4986 = vsel %vm4983, %v4985, %v4981
    %v4987 = vmul.f32 1.0, %v4986
    %v4988 = vrcp.pop %v4957
    %v4989 = vmul.f32 %v4957, %v4988
    %v4990 = vsub.f32 1.0, %v4989
    %v4991 = vmul.f32 %v4988, %v4990
    %v4992 = vadd.f32 %v4988, %v4991
    %vm4993 = vweird.f32 %v4957
    %vm4994 = vweird.f32 %v4988
    %vm4995 = vmor %vm4993, %vm4994
    %v4996 = vsel %vm4995, %v4988, %v4992
    %v4997 = vand.u32 2147483647, %v4957
    %vm4998 = vcmp.eq.f32.partialorder %v4997, 8.507059e+37
    %v4999 = vand.u32 %v4957, 2147483648
    %v5000 = vor.u32 1.1754944e-38, %v4999
    %v5001 = vsel %vm4998, %v5000, %v4996
    %v5002 = vmul.f32 1.0, %v5001
    %v5003 = vtanh.pop %v4945
    %v5004 = vmul.f32 %v4987, %v4790
    %v5005 = vmul.f32 %v4972, %v5003
    %v5006 = vadd.f32 %v5004, %v5005
    %v5007 = vtanh.pop %v5006
    %v5008 = vmul.f32 %v5002, %v5007
    %5009 = vst [vmem:[#allocation3 + $0x98] sm:$0xff] %v5008
    %v5010 = vld [vmem:[#allocation2 + $0x280] sm:$0xff]
    %v5011 = vld [vmem:[#allocation2 + $0x288] sm:$0xff]
    %v5012 = vld [vmem:[#allocation2 + $0x290] sm:$0xff]
    %v5013 = vld [vmem:[#allocation2 + $0x298] sm:$0xff]
    %v5014 = vld [vmem:[#allocation4] sm:$0xff]
    %v5015 = vld [vmem:[#allocation4 + $0x8] sm:$0xff]
    %v5016 = vld [vmem:[#allocation4 + $0x10] sm:$0xff]
    %v5017 = vld [vmem:[#allocation4 + $0x18] sm:$0xff]
    %v5018 = vld [vmem:[#allocation4 + $0x20] sm:$0xff]
    %v5019 = vld [vmem:[#allocation4 + $0x28] sm:$0xff]
    %v5020 = vld [vmem:[#allocation4 + $0x30] sm:$0xff]
    %v5021 = vld [vmem:[#allocation4 + $0x38] sm:$0xff]
    %v5022 = vld [vmem:[#allocation4 + $0x40] sm:$0xff]
    %v5023 = vld [vmem:[#allocation4 + $0x48] sm:$0xff]
    %v5024 = vld [vmem:[#allocation4 + $0x50] sm:$0xff]
    %v5025 = vld [vmem:[#allocation4 + $0x58] sm:$0xff]
    %v5026 = vld [vmem:[#allocation4 + $0x60] sm:$0xff]
    %v5027 = vld [vmem:[#allocation4 + $0x68] sm:$0xff]
    %v5028 = vld [vmem:[#allocation4 + $0x70] sm:$0xff]
    %v5029 = vld [vmem:[#allocation4 + $0x78] sm:$0xff]
    %v5030 = vld [vmem:[#allocation4 + $0x80] sm:$0xff]
    %v5031 = vld [vmem:[#allocation4 + $0x88] sm:$0xff]
    %v5032 = vld [vmem:[#allocation4 + $0x90] sm:$0xff]
    %v5033 = vld [vmem:[#allocation4 + $0x98] sm:$0xff]
    %v5034 = vld [vmem:[#allocation4 + $0xa0] sm:$0xff]
    %v5035 = vld [vmem:[#allocation4 + $0xa8] sm:$0xff]
    %v5036 = vld [vmem:[#allocation4 + $0xb0] sm:$0xff]
    %v5037 = vld [vmem:[#allocation4 + $0xb8] sm:$0xff]
    %v5038 = vld [vmem:[#allocation4 + $0xc0] sm:$0xff]
    %v5039 = vld [vmem:[#allocation4 + $0xc8] sm:$0xff]
    %v5040 = vld [vmem:[#allocation4 + $0xd0] sm:$0xff]
    %v5041 = vld [vmem:[#allocation4 + $0xd8] sm:$0xff]
    %v5042 = vld [vmem:[#allocation4 + $0xe0] sm:$0xff]
    %v5043 = vld [vmem:[#allocation4 + $0xe8] sm:$0xff]
    %v5044 = vld [vmem:[#allocation4 + $0xf0] sm:$0xff]
    %v5045 = vld [vmem:[#allocation4 + $0xf8] sm:$0xff]
    %v5046 = vld [vmem:[#allocation4 + $0x100] sm:$0xff]
    %v5047 = vld [vmem:[#allocation4 + $0x108] sm:$0xff]
    %v5048 = vld [vmem:[#allocation4 + $0x110] sm:$0xff]
    %v5049 = vld [vmem:[#allocation4 + $0x118] sm:$0xff]
    %v5050 = vld [vmem:[#allocation4 + $0x120] sm:$0xff]
    %v5051 = vld [vmem:[#allocation4 + $0x128] sm:$0xff]
    %v5052 = vld [vmem:[#allocation4 + $0x130] sm:$0xff]
    %v5053 = vld [vmem:[#allocation4 + $0x138] sm:$0xff]
    %v5054 = vld [vmem:[#allocation4 + $0x140] sm:$0xff]
    %v5055 = vld [vmem:[#allocation4 + $0x148] sm:$0xff]
    %v5056 = vld [vmem:[#allocation4 + $0x150] sm:$0xff]
    %v5057 = vld [vmem:[#allocation4 + $0x158] sm:$0xff]
    %v5058 = vld [vmem:[#allocation4 + $0x160] sm:$0xff]
    %v5059 = vld [vmem:[#allocation4 + $0x168] sm:$0xff]
    %v5060 = vld [vmem:[#allocation4 + $0x170] sm:$0xff]
    %v5061 = vld [vmem:[#allocation4 + $0x178] sm:$0xff]
    %v5062 = vld [vmem:[#allocation4 + $0x180] sm:$0xff]
    %v5063 = vld [vmem:[#allocation4 + $0x188] sm:$0xff]
    %v5064 = vld [vmem:[#allocation4 + $0x190] sm:$0xff]
    %v5065 = vld [vmem:[#allocation4 + $0x198] sm:$0xff]
    %v5066 = vld [vmem:[#allocation4 + $0x1a0] sm:$0xff]
    %v5067 = vld [vmem:[#allocation4 + $0x1a8] sm:$0xff]
    %v5068 = vld [vmem:[#allocation4 + $0x1b0] sm:$0xff]
    %v5069 = vld [vmem:[#allocation4 + $0x1b8] sm:$0xff]
    %v5070 = vld [vmem:[#allocation4 + $0x1c0] sm:$0xff]
    %v5071 = vld [vmem:[#allocation4 + $0x1c8] sm:$0xff]
    %v5072 = vld [vmem:[#allocation4 + $0x1d0] sm:$0xff]
    %v5073 = vld [vmem:[#allocation4 + $0x1d8] sm:$0xff]
    %v5074 = vld [vmem:[#allocation4 + $0x1e0] sm:$0xff]
    %v5075 = vld [vmem:[#allocation4 + $0x1e8] sm:$0xff]
    %v5076 = vld [vmem:[#allocation4 + $0x1f0] sm:$0xff]
    %v5077 = vld [vmem:[#allocation4 + $0x1f8] sm:$0xff]
    %5078 = vmatpush.msra.mxu0 %v5074
    %5079 = vmatpush.msra.mxu0 %v5070
    %5080 = vmatpush.msra.mxu0 %v5066
    %5081 = vmatpush.msra.mxu0 %v5062
    %5082 = vmatpush.msra.mxu0 %v5058
    %5083 = vmatpush.msra.mxu0 %v5054
    %5084 = vmatpush.msra.mxu0 %v5050
    %5085 = vmatpush.msra.mxu0 %v5046
    %5086 = vmatpush.msra.mxu0 %v5042
    %5087 = vmatpush.msra.mxu0 %v5038
    %5088 = vmatpush.msra.mxu0 %v5034
    %5089 = vmatpush.msra.mxu0 %v5030
    %5090 = vmatpush.msra.mxu0 %v5026
    %5091 = vmatpush.msra.mxu0 %v5022
    %5092 = vmatpush.msra.mxu0 %v5018
    %5093 = vmatpush.msra.mxu0 %v5014
    %5094 = vmatmul.f32.gmra.mxu0 %v5008
    %v5095 = vpop.f32.mrf.mxu0
    %v5096 = vadd.f32 0.0, %v5095
    %5097 = vdwg.mxu0
    %5098 = vmatpush.msra.mxu0 %v5075
    %5099 = vmatpush.msra.mxu0 %v5071
    %5100 = vmatpush.msra.mxu0 %v5067
    %5101 = vmatpush.msra.mxu0 %v5063
    %5102 = vmatpush.msra.mxu0 %v5059
    %5103 = vmatpush.msra.mxu0 %v5055
    %5104 = vmatpush.msra.mxu0 %v5051
    %5105 = vmatpush.msra.mxu0 %v5047
    %5106 = vmatpush.msra.mxu0 %v5043
    %5107 = vmatpush.msra.mxu0 %v5039
    %5108 = vmatpush.msra.mxu0 %v5035
    %5109 = vmatpush.msra.mxu0 %v5031
    %5110 = vmatpush.msra.mxu0 %v5027
    %5111 = vmatpush.msra.mxu0 %v5023
    %5112 = vmatpush.msra.mxu0 %v5019
    %5113 = vmatpush.msra.mxu0 %v5015
    %5114 = vmatmul.f32.gmra.mxu0 %v5008
    %v5115 = vpop.f32.mrf.mxu0
    %v5116 = vadd.f32 0.0, %v5115
    %5117 = vdwg.mxu0
    %5118 = vmatpush.msra.mxu0 %v5076
    %5119 = vmatpush.msra.mxu0 %v5072
    %5120 = vmatpush.msra.mxu0 %v5068
    %5121 = vmatpush.msra.mxu0 %v5064
    %5122 = vmatpush.msra.mxu0 %v5060
    %5123 = vmatpush.msra.mxu0 %v5056
    %5124 = vmatpush.msra.mxu0 %v5052
    %5125 = vmatpush.msra.mxu0 %v5048
    %5126 = vmatpush.msra.mxu0 %v5044
    %5127 = vmatpush.msra.mxu0 %v5040
    %5128 = vmatpush.msra.mxu0 %v5036
    %5129 = vmatpush.msra.mxu0 %v5032
    %5130 = vmatpush.msra.mxu0 %v5028
    %5131 = vmatpush.msra.mxu0 %v5024
    %5132 = vmatpush.msra.mxu0 %v5020
    %5133 = vmatpush.msra.mxu0 %v5016
    %5134 = vmatmul.f32.gmra.mxu0 %v5008
    %v5135 = vpop.f32.mrf.mxu0
    %v5136 = vadd.f32 0.0, %v5135
    %5137 = vdwg.mxu0
    %5138 = vmatpush.msra.mxu0 %v5077
    %5139 = vmatpush.msra.mxu0 %v5073
    %5140 = vmatpush.msra.mxu0 %v5069
    %5141 = vmatpush.msra.mxu0 %v5065
    %5142 = vmatpush.msra.mxu0 %v5061
    %5143 = vmatpush.msra.mxu0 %v5057
    %5144 = vmatpush.msra.mxu0 %v5053
    %5145 = vmatpush.msra.mxu0 %v5049
    %5146 = vmatpush.msra.mxu0 %v5045
    %5147 = vmatpush.msra.mxu0 %v5041
    %5148 = vmatpush.msra.mxu0 %v5037
    %5149 = vmatpush.msra.mxu0 %v5033
    %5150 = vmatpush.msra.mxu0 %v5029
    %5151 = vmatpush.msra.mxu0 %v5025
    %5152 = vmatpush.msra.mxu0 %v5021
    %5153 = vmatpush.msra.mxu0 %v5017
    %5154 = vmatmul.f32.gmra.mxu0 %v5008
    %v5155 = vpop.f32.mrf.mxu0
    %v5156 = vadd.f32 0.0, %v5155
    %5157 = vdwg.mxu0
    %v5158 = vadd.f32 %v5010, %v5096
    %v5159 = vadd.f32 %v5011, %v5116
    %v5160 = vadd.f32 %v5012, %v5136
    %v5161 = vadd.f32 %v5013, %v5156
    %v5162 = vxor.u32 %v5158, 2147483648
    %v5163 = vxor.u32 %v5159, 2147483648
    %v5164 = vxor.u32 %v5160, 2147483648
    %v5165 = vmul.f32 %v5162, 1.442695
    %v5166 = vpow.pop %v5165
    %v5167 = vmul.f32 %v5163, 1.442695
    %v5168 = vpow.pop %v5167
    %v5169 = vmul.f32 %v5164, 1.442695
    %v5170 = vpow.pop %v5169
    %v5171 = vadd.f32 %v5166, 1.0
    %v5172 = vadd.f32 %v5168, 1.0
    %v5173 = vadd.f32 %v5170, 1.0
    %v5174 = vrcp.pop %v5171
    %v5175 = vmul.f32 %v5171, %v5174
    %v5176 = vsub.f32 1.0, %v5175
    %v5177 = vmul.f32 %v5174, %v5176
    %v5178 = vadd.f32 %v5174, %v5177
    %vm5179 = vweird.f32 %v5171
    %vm5180 = vweird.f32 %v5174
    %vm5181 = vmor %vm5179, %vm5180
    %v5182 = vsel %vm5181, %v5174, %v5178
    %v5183 = vand.u32 2147483647, %v5171
    %vm5184 = vcmp.eq.f32.partialorder %v5183, 8.507059e+37
    %v5185 = vand.u32 %v5171, 2147483648
    %v5186 = vor.u32 1.1754944e-38, %v5185
    %v5187 = vsel %vm5184, %v5186, %v5182
    %v5188 = vmul.f32 1.0, %v5187
    %v5189 = vrcp.pop %v5172
    %v5190 = vmul.f32 %v5172, %v5189
    %v5191 = vsub.f32 1.0, %v5190
    %v5192 = vmul.f32 %v5189, %v5191
    %v5193 = vadd.f32 %v5189, %v5192
    %vm5194 = vweird.f32 %v5172
    %vm5195 = vweird.f32 %v5189
    %vm5196 = vmor %vm5194, %vm5195
    %v5197 = vsel %vm5196, %v5189, %v5193
    %v5198 = vand.u32 2147483647, %v5172
    %vm5199 = vcmp.eq.f32.partialorder %v5198, 8.507059e+37
    %v5200 = vand.u32 %v5172, 2147483648
    %v5201 = vor.u32 1.1754944e-38, %v5200
    %v5202 = vsel %vm5199, %v5201, %v5197
    %v5203 = vmul.f32 1.0, %v5202
    %v5204 = vrcp.pop %v5173
    %v5205 = vmul.f32 %v5173, %v5204
    %v5206 = vsub.f32 1.0, %v5205
    %v5207 = vmul.f32 %v5204, %v5206
    %v5208 = vadd.f32 %v5204, %v5207
    %vm5209 = vweird.f32 %v5173
    %vm5210 = vweird.f32 %v5204
    %vm5211 = vmor %vm5209, %vm5210
    %v5212 = vsel %vm5211, %v5204, %v5208
    %v5213 = vand.u32 2147483647, %v5173
    %vm5214 = vcmp.eq.f32.partialorder %v5213, 8.507059e+37
    %v5215 = vand.u32 %v5173, 2147483648
    %v5216 = vor.u32 1.1754944e-38, %v5215
    %v5217 = vsel %vm5214, %v5216, %v5212
    %v5218 = vmul.f32 1.0, %v5217
    %v5219 = vtanh.pop %v5161
    %v5220 = vmul.f32 %v5203, %v5006
    %v5221 = vmul.f32 %v5188, %v5219
    %v5222 = vadd.f32 %v5220, %v5221
    %v5223 = vtanh.pop %v5222
    %v5224 = vmul.f32 %v5218, %v5223
    %5225 = vst [vmem:[#allocation3 + $0xa0] sm:$0xff] %v5224
    %v5226 = vld [vmem:[#allocation2 + $0x2a0] sm:$0xff]
    %v5227 = vld [vmem:[#allocation2 + $0x2a8] sm:$0xff]
    %v5228 = vld [vmem:[#allocation2 + $0x2b0] sm:$0xff]
    %v5229 = vld [vmem:[#allocation2 + $0x2b8] sm:$0xff]
    %v5230 = vld [vmem:[#allocation4] sm:$0xff]
    %v5231 = vld [vmem:[#allocation4 + $0x8] sm:$0xff]
    %v5232 = vld [vmem:[#allocation4 + $0x10] sm:$0xff]
    %v5233 = vld [vmem:[#allocation4 + $0x18] sm:$0xff]
    %v5234 = vld [vmem:[#allocation4 + $0x20] sm:$0xff]
    %v5235 = vld [vmem:[#allocation4 + $0x28] sm:$0xff]
    %v5236 = vld [vmem:[#allocation4 + $0x30] sm:$0xff]
    %v5237 = vld [vmem:[#allocation4 + $0x38] sm:$0xff]
    %v5238 = vld [vmem:[#allocation4 + $0x40] sm:$0xff]
    %v5239 = vld [vmem:[#allocation4 + $0x48] sm:$0xff]
    %v5240 = vld [vmem:[#allocation4 + $0x50] sm:$0xff]
    %v5241 = vld [vmem:[#allocation4 + $0x58] sm:$0xff]
    %v5242 = vld [vmem:[#allocation4 + $0x60] sm:$0xff]
    %v5243 = vld [vmem:[#allocation4 + $0x68] sm:$0xff]
    %v5244 = vld [vmem:[#allocation4 + $0x70] sm:$0xff]
    %v5245 = vld [vmem:[#allocation4 + $0x78] sm:$0xff]
    %v5246 = vld [vmem:[#allocation4 + $0x80] sm:$0xff]
    %v5247 = vld [vmem:[#allocation4 + $0x88] sm:$0xff]
    %v5248 = vld [vmem:[#allocation4 + $0x90] sm:$0xff]
    %v5249 = vld [vmem:[#allocation4 + $0x98] sm:$0xff]
    %v5250 = vld [vmem:[#allocation4 + $0xa0] sm:$0xff]
    %v5251 = vld [vmem:[#allocation4 + $0xa8] sm:$0xff]
    %v5252 = vld [vmem:[#allocation4 + $0xb0] sm:$0xff]
    %v5253 = vld [vmem:[#allocation4 + $0xb8] sm:$0xff]
    %v5254 = vld [vmem:[#allocation4 + $0xc0] sm:$0xff]
    %v5255 = vld [vmem:[#allocation4 + $0xc8] sm:$0xff]
    %v5256 = vld [vmem:[#allocation4 + $0xd0] sm:$0xff]
    %v5257 = vld [vmem:[#allocation4 + $0xd8] sm:$0xff]
    %v5258 = vld [vmem:[#allocation4 + $0xe0] sm:$0xff]
    %v5259 = vld [vmem:[#allocation4 + $0xe8] sm:$0xff]
    %v5260 = vld [vmem:[#allocation4 + $0xf0] sm:$0xff]
    %v5261 = vld [vmem:[#allocation4 + $0xf8] sm:$0xff]
    %v5262 = vld [vmem:[#allocation4 + $0x100] sm:$0xff]
    %v5263 = vld [vmem:[#allocation4 + $0x108] sm:$0xff]
    %v5264 = vld [vmem:[#allocation4 + $0x110] sm:$0xff]
    %v5265 = vld [vmem:[#allocation4 + $0x118] sm:$0xff]
    %v5266 = vld [vmem:[#allocation4 + $0x120] sm:$0xff]
    %v5267 = vld [vmem:[#allocation4 + $0x128] sm:$0xff]
    %v5268 = vld [vmem:[#allocation4 + $0x130] sm:$0xff]
    %v5269 = vld [vmem:[#allocation4 + $0x138] sm:$0xff]
    %v5270 = vld [vmem:[#allocation4 + $0x140] sm:$0xff]
    %v5271 = vld [vmem:[#allocation4 + $0x148] sm:$0xff]
    %v5272 = vld [vmem:[#allocation4 + $0x150] sm:$0xff]
    %v5273 = vld [vmem:[#allocation4 + $0x158] sm:$0xff]
    %v5274 = vld [vmem:[#allocation4 + $0x160] sm:$0xff]
    %v5275 = vld [vmem:[#allocation4 + $0x168] sm:$0xff]
    %v5276 = vld [vmem:[#allocation4 + $0x170] sm:$0xff]
    %v5277 = vld [vmem:[#allocation4 + $0x178] sm:$0xff]
    %v5278 = vld [vmem:[#allocation4 + $0x180] sm:$0xff]
    %v5279 = vld [vmem:[#allocation4 + $0x188] sm:$0xff]
    %v5280 = vld [vmem:[#allocation4 + $0x190] sm:$0xff]
    %v5281 = vld [vmem:[#allocation4 + $0x198] sm:$0xff]
    %v5282 = vld [vmem:[#allocation4 + $0x1a0] sm:$0xff]
    %v5283 = vld [vmem:[#allocation4 + $0x1a8] sm:$0xff]
    %v5284 = vld [vmem:[#allocation4 + $0x1b0] sm:$0xff]
    %v5285 = vld [vmem:[#allocation4 + $0x1b8] sm:$0xff]
    %v5286 = vld [vmem:[#allocation4 + $0x1c0] sm:$0xff]
    %v5287 = vld [vmem:[#allocation4 + $0x1c8] sm:$0xff]
    %v5288 = vld [vmem:[#allocation4 + $0x1d0] sm:$0xff]
    %v5289 = vld [vmem:[#allocation4 + $0x1d8] sm:$0xff]
    %v5290 = vld [vmem:[#allocation4 + $0x1e0] sm:$0xff]
    %v5291 = vld [vmem:[#allocation4 + $0x1e8] sm:$0xff]
    %v5292 = vld [vmem:[#allocation4 + $0x1f0] sm:$0xff]
    %v5293 = vld [vmem:[#allocation4 + $0x1f8] sm:$0xff]
    %5294 = vmatpush.msra.mxu0 %v5290
    %5295 = vmatpush.msra.mxu0 %v5286
    %5296 = vmatpush.msra.mxu0 %v5282
    %5297 = vmatpush.msra.mxu0 %v5278
    %5298 = vmatpush.msra.mxu0 %v5274
    %5299 = vmatpush.msra.mxu0 %v5270
    %5300 = vmatpush.msra.mxu0 %v5266
    %5301 = vmatpush.msra.mxu0 %v5262
    %5302 = vmatpush.msra.mxu0 %v5258
    %5303 = vmatpush.msra.mxu0 %v5254
    %5304 = vmatpush.msra.mxu0 %v5250
    %5305 = vmatpush.msra.mxu0 %v5246
    %5306 = vmatpush.msra.mxu0 %v5242
    %5307 = vmatpush.msra.mxu0 %v5238
    %5308 = vmatpush.msra.mxu0 %v5234
    %5309 = vmatpush.msra.mxu0 %v5230
    %5310 = vmatmul.f32.gmra.mxu0 %v5224
    %v5311 = vpop.f32.mrf.mxu0
    %v5312 = vadd.f32 0.0, %v5311
    %5313 = vdwg.mxu0
    %5314 = vmatpush.msra.mxu0 %v5291
    %5315 = vmatpush.msra.mxu0 %v5287
    %5316 = vmatpush.msra.mxu0 %v5283
    %5317 = vmatpush.msra.mxu0 %v5279
    %5318 = vmatpush.msra.mxu0 %v5275
    %5319 = vmatpush.msra.mxu0 %v5271
    %5320 = vmatpush.msra.mxu0 %v5267
    %5321 = vmatpush.msra.mxu0 %v5263
    %5322 = vmatpush.msra.mxu0 %v5259
    %5323 = vmatpush.msra.mxu0 %v5255
    %5324 = vmatpush.msra.mxu0 %v5251
    %5325 = vmatpush.msra.mxu0 %v5247
    %5326 = vmatpush.msra.mxu0 %v5243
    %5327 = vmatpush.msra.mxu0 %v5239
    %5328 = vmatpush.msra.mxu0 %v5235
    %5329 = vmatpush.msra.mxu0 %v5231
    %5330 = vmatmul.f32.gmra.mxu0 %v5224
    %v5331 = vpop.f32.mrf.mxu0
    %v5332 = vadd.f32 0.0, %v5331
    %5333 = vdwg.mxu0
    %5334 = vmatpush.msra.mxu0 %v5292
    %5335 = vmatpush.msra.mxu0 %v5288
    %5336 = vmatpush.msra.mxu0 %v5284
    %5337 = vmatpush.msra.mxu0 %v5280
    %5338 = vmatpush.msra.mxu0 %v5276
    %5339 = vmatpush.msra.mxu0 %v5272
    %5340 = vmatpush.msra.mxu0 %v5268
    %5341 = vmatpush.msra.mxu0 %v5264
    %5342 = vmatpush.msra.mxu0 %v5260
    %5343 = vmatpush.msra.mxu0 %v5256
    %5344 = vmatpush.msra.mxu0 %v5252
    %5345 = vmatpush.msra.mxu0 %v5248
    %5346 = vmatpush.msra.mxu0 %v5244
    %5347 = vmatpush.msra.mxu0 %v5240
    %5348 = vmatpush.msra.mxu0 %v5236
    %5349 = vmatpush.msra.mxu0 %v5232
    %5350 = vmatmul.f32.gmra.mxu0 %v5224
    %v5351 = vpop.f32.mrf.mxu0
    %v5352 = vadd.f32 0.0, %v5351
    %5353 = vdwg.mxu0
    %5354 = vmatpush.msra.mxu0 %v5293
    %5355 = vmatpush.msra.mxu0 %v5289
    %5356 = vmatpush.msra.mxu0 %v5285
    %5357 = vmatpush.msra.mxu0 %v5281
    %5358 = vmatpush.msra.mxu0 %v5277
    %5359 = vmatpush.msra.mxu0 %v5273
    %5360 = vmatpush.msra.mxu0 %v5269
    %5361 = vmatpush.msra.mxu0 %v5265
    %5362 = vmatpush.msra.mxu0 %v5261
    %5363 = vmatpush.msra.mxu0 %v5257
    %5364 = vmatpush.msra.mxu0 %v5253
    %5365 = vmatpush.msra.mxu0 %v5249
    %5366 = vmatpush.msra.mxu0 %v5245
    %5367 = vmatpush.msra.mxu0 %v5241
    %5368 = vmatpush.msra.mxu0 %v5237
    %5369 = vmatpush.msra.mxu0 %v5233
    %5370 = vmatmul.f32.gmra.mxu0 %v5224
    %v5371 = vpop.f32.mrf.mxu0
    %v5372 = vadd.f32 0.0, %v5371
    %5373 = vdwg.mxu0
    %v5374 = vadd.f32 %v5226, %v5312
    %v5375 = vadd.f32 %v5227, %v5332
    %v5376 = vadd.f32 %v5228, %v5352
    %v5377 = vadd.f32 %v5229, %v5372
    %v5378 = vxor.u32 %v5374, 2147483648
    %v5379 = vxor.u32 %v5375, 2147483648
    %v5380 = vxor.u32 %v5376, 2147483648
    %v5381 = vmul.f32 %v5378, 1.442695
    %v5382 = vpow.pop %v5381
    %v5383 = vmul.f32 %v5379, 1.442695
    %v5384 = vpow.pop %v5383
    %v5385 = vmul.f32 %v5380, 1.442695
    %v5386 = vpow.pop %v5385
    %v5387 = vadd.f32 %v5382, 1.0
    %v5388 = vadd.f32 %v5384, 1.0
    %v5389 = vadd.f32 %v5386, 1.0
    %v5390 = vrcp.pop %v5387
    %v5391 = vmul.f32 %v5387, %v5390
    %v5392 = vsub.f32 1.0, %v5391
    %v5393 = vmul.f32 %v5390, %v5392
    %v5394 = vadd.f32 %v5390, %v5393
    %vm5395 = vweird.f32 %v5387
    %vm5396 = vweird.f32 %v5390
    %vm5397 = vmor %vm5395, %vm5396
    %v5398 = vsel %vm5397, %v5390, %v5394
    %v5399 = vand.u32 2147483647, %v5387
    %vm5400 = vcmp.eq.f32.partialorder %v5399, 8.507059e+37
    %v5401 = vand.u32 %v5387, 2147483648
    %v5402 = vor.u32 1.1754944e-38, %v5401
    %v5403 = vsel %vm5400, %v5402, %v5398
    %v5404 = vmul.f32 1.0, %v5403
    %v5405 = vrcp.pop %v5388
    %v5406 = vmul.f32 %v5388, %v5405
    %v5407 = vsub.f32 1.0, %v5406
    %v5408 = vmul.f32 %v5405, %v5407
    %v5409 = vadd.f32 %v5405, %v5408
    %vm5410 = vweird.f32 %v5388
    %vm5411 = vweird.f32 %v5405
    %vm5412 = vmor %vm5410, %vm5411
    %v5413 = vsel %vm5412, %v5405, %v5409
    %v5414 = vand.u32 2147483647, %v5388
    %vm5415 = vcmp.eq.f32.partialorder %v5414, 8.507059e+37
    %v5416 = vand.u32 %v5388, 2147483648
    %v5417 = vor.u32 1.1754944e-38, %v5416
    %v5418 = vsel %vm5415, %v5417, %v5413
    %v5419 = vmul.f32 1.0, %v5418
    %v5420 = vrcp.pop %v5389
    %v5421 = vmul.f32 %v5389, %v5420
    %v5422 = vsub.f32 1.0, %v5421
    %v5423 = vmul.f32 %v5420, %v5422
    %v5424 = vadd.f32 %v5420, %v5423
    %vm5425 = vweird.f32 %v5389
    %vm5426 = vweird.f32 %v5420
    %vm5427 = vmor %vm5425, %vm5426
    %v5428 = vsel %vm5427, %v5420, %v5424
    %v5429 = vand.u32 2147483647, %v5389
    %vm5430 = vcmp.eq.f32.partialorder %v5429, 8.507059e+37
    %v5431 = vand.u32 %v5389, 2147483648
    %v5432 = vor.u32 1.1754944e-38, %v5431
    %v5433 = vsel %vm5430, %v5432, %v5428
    %v5434 = vmul.f32 1.0, %v5433
    %v5435 = vtanh.pop %v5377
    %v5436 = vmul.f32 %v5419, %v5222
    %v5437 = vmul.f32 %v5404, %v5435
    %v5438 = vadd.f32 %v5436, %v5437
    %v5439 = vtanh.pop %v5438
    %v5440 = vmul.f32 %v5434, %v5439
    %5441 = vst [vmem:[#allocation3 + $0xa8] sm:$0xff] %v5440
    %v5442 = vld [vmem:[#allocation2 + $0x2c0] sm:$0xff]
    %v5443 = vld [vmem:[#allocation2 + $0x2c8] sm:$0xff]
    %v5444 = vld [vmem:[#allocation2 + $0x2d0] sm:$0xff]
    %v5445 = vld [vmem:[#allocation2 + $0x2d8] sm:$0xff]
    %v5446 = vld [vmem:[#allocation4] sm:$0xff]
    %v5447 = vld [vmem:[#allocation4 + $0x8] sm:$0xff]
    %v5448 = vld [vmem:[#allocation4 + $0x10] sm:$0xff]
    %v5449 = vld [vmem:[#allocation4 + $0x18] sm:$0xff]
    %v5450 = vld [vmem:[#allocation4 + $0x20] sm:$0xff]
    %v5451 = vld [vmem:[#allocation4 + $0x28] sm:$0xff]
    %v5452 = vld [vmem:[#allocation4 + $0x30] sm:$0xff]
    %v5453 = vld [vmem:[#allocation4 + $0x38] sm:$0xff]
    %v5454 = vld [vmem:[#allocation4 + $0x40] sm:$0xff]
    %v5455 = vld [vmem:[#allocation4 + $0x48] sm:$0xff]
    %v5456 = vld [vmem:[#allocation4 + $0x50] sm:$0xff]
    %v5457 = vld [vmem:[#allocation4 + $0x58] sm:$0xff]
    %v5458 = vld [vmem:[#allocation4 + $0x60] sm:$0xff]
    %v5459 = vld [vmem:[#allocation4 + $0x68] sm:$0xff]
    %v5460 = vld [vmem:[#allocation4 + $0x70] sm:$0xff]
    %v5461 = vld [vmem:[#allocation4 + $0x78] sm:$0xff]
    %v5462 = vld [vmem:[#allocation4 + $0x80] sm:$0xff]
    %v5463 = vld [vmem:[#allocation4 + $0x88] sm:$0xff]
    %v5464 = vld [vmem:[#allocation4 + $0x90] sm:$0xff]
    %v5465 = vld [vmem:[#allocation4 + $0x98] sm:$0xff]
    %v5466 = vld [vmem:[#allocation4 + $0xa0] sm:$0xff]
    %v5467 = vld [vmem:[#allocation4 + $0xa8] sm:$0xff]
    %v5468 = vld [vmem:[#allocation4 + $0xb0] sm:$0xff]
    %v5469 = vld [vmem:[#allocation4 + $0xb8] sm:$0xff]
    %v5470 = vld [vmem:[#allocation4 + $0xc0] sm:$0xff]
    %v5471 = vld [vmem:[#allocation4 + $0xc8] sm:$0xff]
    %v5472 = vld [vmem:[#allocation4 + $0xd0] sm:$0xff]
    %v5473 = vld [vmem:[#allocation4 + $0xd8] sm:$0xff]
    %v5474 = vld [vmem:[#allocation4 + $0xe0] sm:$0xff]
    %v5475 = vld [vmem:[#allocation4 + $0xe8] sm:$0xff]
    %v5476 = vld [vmem:[#allocation4 + $0xf0] sm:$0xff]
    %v5477 = vld [vmem:[#allocation4 + $0xf8] sm:$0xff]
    %v5478 = vld [vmem:[#allocation4 + $0x100] sm:$0xff]
    %v5479 = vld [vmem:[#allocation4 + $0x108] sm:$0xff]
    %v5480 = vld [vmem:[#allocation4 + $0x110] sm:$0xff]
    %v5481 = vld [vmem:[#allocation4 + $0x118] sm:$0xff]
    %v5482 = vld [vmem:[#allocation4 + $0x120] sm:$0xff]
    %v5483 = vld [vmem:[#allocation4 + $0x128] sm:$0xff]
    %v5484 = vld [vmem:[#allocation4 + $0x130] sm:$0xff]
    %v5485 = vld [vmem:[#allocation4 + $0x138] sm:$0xff]
    %v5486 = vld [vmem:[#allocation4 + $0x140] sm:$0xff]
    %v5487 = vld [vmem:[#allocation4 + $0x148] sm:$0xff]
    %v5488 = vld [vmem:[#allocation4 + $0x150] sm:$0xff]
    %v5489 = vld [vmem:[#allocation4 + $0x158] sm:$0xff]
    %v5490 = vld [vmem:[#allocation4 + $0x160] sm:$0xff]
    %v5491 = vld [vmem:[#allocation4 + $0x168] sm:$0xff]
    %v5492 = vld [vmem:[#allocation4 + $0x170] sm:$0xff]
    %v5493 = vld [vmem:[#allocation4 + $0x178] sm:$0xff]
    %v5494 = vld [vmem:[#allocation4 + $0x180] sm:$0xff]
    %v5495 = vld [vmem:[#allocation4 + $0x188] sm:$0xff]
    %v5496 = vld [vmem:[#allocation4 + $0x190] sm:$0xff]
    %v5497 = vld [vmem:[#allocation4 + $0x198] sm:$0xff]
    %v5498 = vld [vmem:[#allocation4 + $0x1a0] sm:$0xff]
    %v5499 = vld [vmem:[#allocation4 + $0x1a8] sm:$0xff]
    %v5500 = vld [vmem:[#allocation4 + $0x1b0] sm:$0xff]
    %v5501 = vld [vmem:[#allocation4 + $0x1b8] sm:$0xff]
    %v5502 = vld [vmem:[#allocation4 + $0x1c0] sm:$0xff]
    %v5503 = vld [vmem:[#allocation4 + $0x1c8] sm:$0xff]
    %v5504 = vld [vmem:[#allocation4 + $0x1d0] sm:$0xff]
    %v5505 = vld [vmem:[#allocation4 + $0x1d8] sm:$0xff]
    %v5506 = vld [vmem:[#allocation4 + $0x1e0] sm:$0xff]
    %v5507 = vld [vmem:[#allocation4 + $0x1e8] sm:$0xff]
    %v5508 = vld [vmem:[#allocation4 + $0x1f0] sm:$0xff]
    %v5509 = vld [vmem:[#allocation4 + $0x1f8] sm:$0xff]
    %5510 = vmatpush.msra.mxu0 %v5506
    %5511 = vmatpush.msra.mxu0 %v5502
    %5512 = vmatpush.msra.mxu0 %v5498
    %5513 = vmatpush.msra.mxu0 %v5494
    %5514 = vmatpush.msra.mxu0 %v5490
    %5515 = vmatpush.msra.mxu0 %v5486
    %5516 = vmatpush.msra.mxu0 %v5482
    %5517 = vmatpush.msra.mxu0 %v5478
    %5518 = vmatpush.msra.mxu0 %v5474
    %5519 = vmatpush.msra.mxu0 %v5470
    %5520 = vmatpush.msra.mxu0 %v5466
    %5521 = vmatpush.msra.mxu0 %v5462
    %5522 = vmatpush.msra.mxu0 %v5458
    %5523 = vmatpush.msra.mxu0 %v5454
    %5524 = vmatpush.msra.mxu0 %v5450
    %5525 = vmatpush.msra.mxu0 %v5446
    %5526 = vmatmul.f32.gmra.mxu0 %v5440
    %v5527 = vpop.f32.mrf.mxu0
    %v5528 = vadd.f32 0.0, %v5527
    %5529 = vdwg.mxu0
    %5530 = vmatpush.msra.mxu0 %v5507
    %5531 = vmatpush.msra.mxu0 %v5503
    %5532 = vmatpush.msra.mxu0 %v5499
    %5533 = vmatpush.msra.mxu0 %v5495
    %5534 = vmatpush.msra.mxu0 %v5491
    %5535 = vmatpush.msra.mxu0 %v5487
    %5536 = vmatpush.msra.mxu0 %v5483
    %5537 = vmatpush.msra.mxu0 %v5479
    %5538 = vmatpush.msra.mxu0 %v5475
    %5539 = vmatpush.msra.mxu0 %v5471
    %5540 = vmatpush.msra.mxu0 %v5467
    %5541 = vmatpush.msra.mxu0 %v5463
    %5542 = vmatpush.msra.mxu0 %v5459
    %5543 = vmatpush.msra.mxu0 %v5455
    %5544 = vmatpush.msra.mxu0 %v5451
    %5545 = vmatpush.msra.mxu0 %v5447
    %5546 = vmatmul.f32.gmra.mxu0 %v5440
    %v5547 = vpop.f32.mrf.mxu0
    %v5548 = vadd.f32 0.0, %v5547
    %5549 = vdwg.mxu0
    %5550 = vmatpush.msra.mxu0 %v5508
    %5551 = vmatpush.msra.mxu0 %v5504
    %5552 = vmatpush.msra.mxu0 %v5500
    %5553 = vmatpush.msra.mxu0 %v5496
    %5554 = vmatpush.msra.mxu0 %v5492
    %5555 = vmatpush.msra.mxu0 %v5488
    %5556 = vmatpush.msra.mxu0 %v5484
    %5557 = vmatpush.msra.mxu0 %v5480
    %5558 = vmatpush.msra.mxu0 %v5476
    %5559 = vmatpush.msra.mxu0 %v5472
    %5560 = vmatpush.msra.mxu0 %v5468
    %5561 = vmatpush.msra.mxu0 %v5464
    %5562 = vmatpush.msra.mxu0 %v5460
    %5563 = vmatpush.msra.mxu0 %v5456
    %5564 = vmatpush.msra.mxu0 %v5452
    %5565 = vmatpush.msra.mxu0 %v5448
    %5566 = vmatmul.f32.gmra.mxu0 %v5440
    %v5567 = vpop.f32.mrf.mxu0
    %v5568 = vadd.f32 0.0, %v5567
    %5569 = vdwg.mxu0
    %5570 = vmatpush.msra.mxu0 %v5509
    %5571 = vmatpush.msra.mxu0 %v5505
    %5572 = vmatpush.msra.mxu0 %v5501
    %5573 = vmatpush.msra.mxu0 %v5497
    %5574 = vmatpush.msra.mxu0 %v5493
    %5575 = vmatpush.msra.mxu0 %v5489
    %5576 = vmatpush.msra.mxu0 %v5485
    %5577 = vmatpush.msra.mxu0 %v5481
    %5578 = vmatpush.msra.mxu0 %v5477
    %5579 = vmatpush.msra.mxu0 %v5473
    %5580 = vmatpush.msra.mxu0 %v5469
    %5581 = vmatpush.msra.mxu0 %v5465
    %5582 = vmatpush.msra.mxu0 %v5461
    %5583 = vmatpush.msra.mxu0 %v5457
    %5584 = vmatpush.msra.mxu0 %v5453
    %5585 = vmatpush.msra.mxu0 %v5449
    %5586 = vmatmul.f32.gmra.mxu0 %v5440
    %v5587 = vpop.f32.mrf.mxu0
    %v5588 = vadd.f32 0.0, %v5587
    %5589 = vdwg.mxu0
    %v5590 = vadd.f32 %v5442, %v5528
    %v5591 = vadd.f32 %v5443, %v5548
    %v5592 = vadd.f32 %v5444, %v5568
    %v5593 = vadd.f32 %v5445, %v5588
    %v5594 = vxor.u32 %v5590, 2147483648
    %v5595 = vxor.u32 %v5591, 2147483648
    %v5596 = vxor.u32 %v5592, 2147483648
    %v5597 = vmul.f32 %v5594, 1.442695
    %v5598 = vpow.pop %v5597
    %v5599 = vmul.f32 %v5595, 1.442695
    %v5600 = vpow.pop %v5599
    %v5601 = vmul.f32 %v5596, 1.442695
    %v5602 = vpow.pop %v5601
    %v5603 = vadd.f32 %v5598, 1.0
    %v5604 = vadd.f32 %v5600, 1.0
    %v5605 = vadd.f32 %v5602, 1.0
    %v5606 = vrcp.pop %v5603
    %v5607 = vmul.f32 %v5603, %v5606
    %v5608 = vsub.f32 1.0, %v5607
    %v5609 = vmul.f32 %v5606, %v5608
    %v5610 = vadd.f32 %v5606, %v5609
    %vm5611 = vweird.f32 %v5603
    %vm5612 = vweird.f32 %v5606
    %vm5613 = vmor %vm5611, %vm5612
    %v5614 = vsel %vm5613, %v5606, %v5610
    %v5615 = vand.u32 2147483647, %v5603
    %vm5616 = vcmp.eq.f32.partialorder %v5615, 8.507059e+37
    %v5617 = vand.u32 %v5603, 2147483648
    %v5618 = vor.u32 1.1754944e-38, %v5617
    %v5619 = vsel %vm5616, %v5618, %v5614
    %v5620 = vmul.f32 1.0, %v5619
    %v5621 = vrcp.pop %v5604
    %v5622 = vmul.f32 %v5604, %v5621
    %v5623 = vsub.f32 1.0, %v5622
    %v5624 = vmul.f32 %v5621, %v5623
    %v5625 = vadd.f32 %v5621, %v5624
    %vm5626 = vweird.f32 %v5604
    %vm5627 = vweird.f32 %v5621
    %vm5628 = vmor %vm5626, %vm5627
    %v5629 = vsel %vm5628, %v5621, %v5625
    %v5630 = vand.u32 2147483647, %v5604
    %vm5631 = vcmp.eq.f32.partialorder %v5630, 8.507059e+37
    %v5632 = vand.u32 %v5604, 2147483648
    %v5633 = vor.u32 1.1754944e-38, %v5632
    %v5634 = vsel %vm5631, %v5633, %v5629
    %v5635 = vmul.f32 1.0, %v5634
    %v5636 = vrcp.pop %v5605
    %v5637 = vmul.f32 %v5605, %v5636
    %v5638 = vsub.f32 1.0, %v5637
    %v5639 = vmul.f32 %v5636, %v5638
    %v5640 = vadd.f32 %v5636, %v5639
    %vm5641 = vweird.f32 %v5605
    %vm5642 = vweird.f32 %v5636
    %vm5643 = vmor %vm5641, %vm5642
    %v5644 = vsel %vm5643, %v5636, %v5640
    %v5645 = vand.u32 2147483647, %v5605
    %vm5646 = vcmp.eq.f32.partialorder %v5645, 8.507059e+37
    %v5647 = vand.u32 %v5605, 2147483648
    %v5648 = vor.u32 1.1754944e-38, %v5647
    %v5649 = vsel %vm5646, %v5648, %v5644
    %v5650 = vmul.f32 1.0, %v5649
    %v5651 = vtanh.pop %v5593
    %v5652 = vmul.f32 %v5635, %v5438
    %v5653 = vmul.f32 %v5620, %v5651
    %v5654 = vadd.f32 %v5652, %v5653
    %v5655 = vtanh.pop %v5654
    %v5656 = vmul.f32 %v5650, %v5655
    %5657 = vst [vmem:[#allocation3 + $0xb0] sm:$0xff] %v5656
    %v5658 = vld [vmem:[#allocation2 + $0x2e0] sm:$0xff]
    %v5659 = vld [vmem:[#allocation2 + $0x2e8] sm:$0xff]
    %v5660 = vld [vmem:[#allocation2 + $0x2f0] sm:$0xff]
    %v5661 = vld [vmem:[#allocation2 + $0x2f8] sm:$0xff]
    %v5662 = vld [vmem:[#allocation4] sm:$0xff]
    %v5663 = vld [vmem:[#allocation4 + $0x8] sm:$0xff]
    %v5664 = vld [vmem:[#allocation4 + $0x10] sm:$0xff]
    %v5665 = vld [vmem:[#allocation4 + $0x18] sm:$0xff]
    %v5666 = vld [vmem:[#allocation4 + $0x20] sm:$0xff]
    %v5667 = vld [vmem:[#allocation4 + $0x28] sm:$0xff]
    %v5668 = vld [vmem:[#allocation4 + $0x30] sm:$0xff]
    %v5669 = vld [vmem:[#allocation4 + $0x38] sm:$0xff]
    %v5670 = vld [vmem:[#allocation4 + $0x40] sm:$0xff]
    %v5671 = vld [vmem:[#allocation4 + $0x48] sm:$0xff]
    %v5672 = vld [vmem:[#allocation4 + $0x50] sm:$0xff]
    %v5673 = vld [vmem:[#allocation4 + $0x58] sm:$0xff]
    %v5674 = vld [vmem:[#allocation4 + $0x60] sm:$0xff]
    %v5675 = vld [vmem:[#allocation4 + $0x68] sm:$0xff]
    %v5676 = vld [vmem:[#allocation4 + $0x70] sm:$0xff]
    %v5677 = vld [vmem:[#allocation4 + $0x78] sm:$0xff]
    %v5678 = vld [vmem:[#allocation4 + $0x80] sm:$0xff]
    %v5679 = vld [vmem:[#allocation4 + $0x88] sm:$0xff]
    %v5680 = vld [vmem:[#allocation4 + $0x90] sm:$0xff]
    %v5681 = vld [vmem:[#allocation4 + $0x98] sm:$0xff]
    %v5682 = vld [vmem:[#allocation4 + $0xa0] sm:$0xff]
    %v5683 = vld [vmem:[#allocation4 + $0xa8] sm:$0xff]
    %v5684 = vld [vmem:[#allocation4 + $0xb0] sm:$0xff]
    %v5685 = vld [vmem:[#allocation4 + $0xb8] sm:$0xff]
    %v5686 = vld [vmem:[#allocation4 + $0xc0] sm:$0xff]
    %v5687 = vld [vmem:[#allocation4 + $0xc8] sm:$0xff]
    %v5688 = vld [vmem:[#allocation4 + $0xd0] sm:$0xff]
    %v5689 = vld [vmem:[#allocation4 + $0xd8] sm:$0xff]
    %v5690 = vld [vmem:[#allocation4 + $0xe0] sm:$0xff]
    %v5691 = vld [vmem:[#allocation4 + $0xe8] sm:$0xff]
    %v5692 = vld [vmem:[#allocation4 + $0xf0] sm:$0xff]
    %v5693 = vld [vmem:[#allocation4 + $0xf8] sm:$0xff]
    %v5694 = vld [vmem:[#allocation4 + $0x100] sm:$0xff]
    %v5695 = vld [vmem:[#allocation4 + $0x108] sm:$0xff]
    %v5696 = vld [vmem:[#allocation4 + $0x110] sm:$0xff]
    %v5697 = vld [vmem:[#allocation4 + $0x118] sm:$0xff]
    %v5698 = vld [vmem:[#allocation4 + $0x120] sm:$0xff]
    %v5699 = vld [vmem:[#allocation4 + $0x128] sm:$0xff]
    %v5700 = vld [vmem:[#allocation4 + $0x130] sm:$0xff]
    %v5701 = vld [vmem:[#allocation4 + $0x138] sm:$0xff]
    %v5702 = vld [vmem:[#allocation4 + $0x140] sm:$0xff]
    %v5703 = vld [vmem:[#allocation4 + $0x148] sm:$0xff]
    %v5704 = vld [vmem:[#allocation4 + $0x150] sm:$0xff]
    %v5705 = vld [vmem:[#allocation4 + $0x158] sm:$0xff]
    %v5706 = vld [vmem:[#allocation4 + $0x160] sm:$0xff]
    %v5707 = vld [vmem:[#allocation4 + $0x168] sm:$0xff]
    %v5708 = vld [vmem:[#allocation4 + $0x170] sm:$0xff]
    %v5709 = vld [vmem:[#allocation4 + $0x178] sm:$0xff]
    %v5710 = vld [vmem:[#allocation4 + $0x180] sm:$0xff]
    %v5711 = vld [vmem:[#allocation4 + $0x188] sm:$0xff]
    %v5712 = vld [vmem:[#allocation4 + $0x190] sm:$0xff]
    %v5713 = vld [vmem:[#allocation4 + $0x198] sm:$0xff]
    %v5714 = vld [vmem:[#allocation4 + $0x1a0] sm:$0xff]
    %v5715 = vld [vmem:[#allocation4 + $0x1a8] sm:$0xff]
    %v5716 = vld [vmem:[#allocation4 + $0x1b0] sm:$0xff]
    %v5717 = vld [vmem:[#allocation4 + $0x1b8] sm:$0xff]
    %v5718 = vld [vmem:[#allocation4 + $0x1c0] sm:$0xff]
    %v5719 = vld [vmem:[#allocation4 + $0x1c8] sm:$0xff]
    %v5720 = vld [vmem:[#allocation4 + $0x1d0] sm:$0xff]
    %v5721 = vld [vmem:[#allocation4 + $0x1d8] sm:$0xff]
    %v5722 = vld [vmem:[#allocation4 + $0x1e0] sm:$0xff]
    %v5723 = vld [vmem:[#allocation4 + $0x1e8] sm:$0xff]
    %v5724 = vld [vmem:[#allocation4 + $0x1f0] sm:$0xff]
    %v5725 = vld [vmem:[#allocation4 + $0x1f8] sm:$0xff]
    %5726 = vmatpush.msra.mxu0 %v5722
    %5727 = vmatpush.msra.mxu0 %v5718
    %5728 = vmatpush.msra.mxu0 %v5714
    %5729 = vmatpush.msra.mxu0 %v5710
    %5730 = vmatpush.msra.mxu0 %v5706
    %5731 = vmatpush.msra.mxu0 %v5702
    %5732 = vmatpush.msra.mxu0 %v5698
    %5733 = vmatpush.msra.mxu0 %v5694
    %5734 = vmatpush.msra.mxu0 %v5690
    %5735 = vmatpush.msra.mxu0 %v5686
    %5736 = vmatpush.msra.mxu0 %v5682
    %5737 = vmatpush.msra.mxu0 %v5678
    %5738 = vmatpush.msra.mxu0 %v5674
    %5739 = vmatpush.msra.mxu0 %v5670
    %5740 = vmatpush.msra.mxu0 %v5666
    %5741 = vmatpush.msra.mxu0 %v5662
    %5742 = vmatmul.f32.gmra.mxu0 %v5656
    %v5743 = vpop.f32.mrf.mxu0
    %v5744 = vadd.f32 0.0, %v5743
    %5745 = vdwg.mxu0
    %5746 = vmatpush.msra.mxu0 %v5723
    %5747 = vmatpush.msra.mxu0 %v5719
    %5748 = vmatpush.msra.mxu0 %v5715
    %5749 = vmatpush.msra.mxu0 %v5711
    %5750 = vmatpush.msra.mxu0 %v5707
    %5751 = vmatpush.msra.mxu0 %v5703
    %5752 = vmatpush.msra.mxu0 %v5699
    %5753 = vmatpush.msra.mxu0 %v5695
    %5754 = vmatpush.msra.mxu0 %v5691
    %5755 = vmatpush.msra.mxu0 %v5687
    %5756 = vmatpush.msra.mxu0 %v5683
    %5757 = vmatpush.msra.mxu0 %v5679
    %5758 = vmatpush.msra.mxu0 %v5675
    %5759 = vmatpush.msra.mxu0 %v5671
    %5760 = vmatpush.msra.mxu0 %v5667
    %5761 = vmatpush.msra.mxu0 %v5663
    %5762 = vmatmul.f32.gmra.mxu0 %v5656
    %v5763 = vpop.f32.mrf.mxu0
    %v5764 = vadd.f32 0.0, %v5763
    %5765 = vdwg.mxu0
    %5766 = vmatpush.msra.mxu0 %v5724
    %5767 = vmatpush.msra.mxu0 %v5720
    %5768 = vmatpush.msra.mxu0 %v5716
    %5769 = vmatpush.msra.mxu0 %v5712
    %5770 = vmatpush.msra.mxu0 %v5708
    %5771 = vmatpush.msra.mxu0 %v5704
    %5772 = vmatpush.msra.mxu0 %v5700
    %5773 = vmatpush.msra.mxu0 %v5696
    %5774 = vmatpush.msra.mxu0 %v5692
    %5775 = vmatpush.msra.mxu0 %v5688
    %5776 = vmatpush.msra.mxu0 %v5684
    %5777 = vmatpush.msra.mxu0 %v5680
    %5778 = vmatpush.msra.mxu0 %v5676
    %5779 = vmatpush.msra.mxu0 %v5672
    %5780 = vmatpush.msra.mxu0 %v5668
    %5781 = vmatpush.msra.mxu0 %v5664
    %5782 = vmatmul.f32.gmra.mxu0 %v5656
    %v5783 = vpop.f32.mrf.mxu0
    %v5784 = vadd.f32 0.0, %v5783
    %5785 = vdwg.mxu0
    %5786 = vmatpush.msra.mxu0 %v5725
    %5787 = vmatpush.msra.mxu0 %v5721
    %5788 = vmatpush.msra.mxu0 %v5717
    %5789 = vmatpush.msra.mxu0 %v5713
    %5790 = vmatpush.msra.mxu0 %v5709
    %5791 = vmatpush.msra.mxu0 %v5705
    %5792 = vmatpush.msra.mxu0 %v5701
    %5793 = vmatpush.msra.mxu0 %v5697
    %5794 = vmatpush.msra.mxu0 %v5693
    %5795 = vmatpush.msra.mxu0 %v5689
    %5796 = vmatpush.msra.mxu0 %v5685
    %5797 = vmatpush.msra.mxu0 %v5681
    %5798 = vmatpush.msra.mxu0 %v5677
    %5799 = vmatpush.msra.mxu0 %v5673
    %5800 = vmatpush.msra.mxu0 %v5669
    %5801 = vmatpush.msra.mxu0 %v5665
    %5802 = vmatmul.f32.gmra.mxu0 %v5656
    %v5803 = vpop.f32.mrf.mxu0
    %v5804 = vadd.f32 0.0, %v5803
    %5805 = vdwg.mxu0
    %v5806 = vadd.f32 %v5658, %v5744
    %v5807 = vadd.f32 %v5659, %v5764
    %v5808 = vadd.f32 %v5660, %v5784
    %v5809 = vadd.f32 %v5661, %v5804
    %v5810 = vxor.u32 %v5806, 2147483648
    %v5811 = vxor.u32 %v5807, 2147483648
    %v5812 = vxor.u32 %v5808, 2147483648
    %v5813 = vmul.f32 %v5810, 1.442695
    %v5814 = vpow.pop %v5813
    %v5815 = vmul.f32 %v5811, 1.442695
    %v5816 = vpow.pop %v5815
    %v5817 = vmul.f32 %v5812, 1.442695
    %v5818 = vpow.pop %v5817
    %v5819 = vadd.f32 %v5814, 1.0
    %v5820 = vadd.f32 %v5816, 1.0
    %v5821 = vadd.f32 %v5818, 1.0
    %v5822 = vrcp.pop %v5819
    %v5823 = vmul.f32 %v5819, %v5822
    %v5824 = vsub.f32 1.0, %v5823
    %v5825 = vmul.f32 %v5822, %v5824
    %v5826 = vadd.f32 %v5822, %v5825
    %vm5827 = vweird.f32 %v5819
    %vm5828 = vweird.f32 %v5822
    %vm5829 = vmor %vm5827, %vm5828
    %v5830 = vsel %vm5829, %v5822, %v5826
    %v5831 = vand.u32 2147483647, %v5819
    %vm5832 = vcmp.eq.f32.partialorder %v5831, 8.507059e+37
    %v5833 = vand.u32 %v5819, 2147483648
    %v5834 = vor.u32 1.1754944e-38, %v5833
    %v5835 = vsel %vm5832, %v5834, %v5830
    %v5836 = vmul.f32 1.0, %v5835
    %v5837 = vrcp.pop %v5820
    %v5838 = vmul.f32 %v5820, %v5837
    %v5839 = vsub.f32 1.0, %v5838
    %v5840 = vmul.f32 %v5837, %v5839
    %v5841 = vadd.f32 %v5837, %v5840
    %vm5842 = vweird.f32 %v5820
    %vm5843 = vweird.f32 %v5837
    %vm5844 = vmor %vm5842, %vm5843
    %v5845 = vsel %vm5844, %v5837, %v5841
    %v5846 = vand.u32 2147483647, %v5820
    %vm5847 = vcmp.eq.f32.partialorder %v5846, 8.507059e+37
    %v5848 = vand.u32 %v5820, 2147483648
    %v5849 = vor.u32 1.1754944e-38, %v5848
    %v5850 = vsel %vm5847, %v5849, %v5845
    %v5851 = vmul.f32 1.0, %v5850
    %v5852 = vrcp.pop %v5821
    %v5853 = vmul.f32 %v5821, %v5852
    %v5854 = vsub.f32 1.0, %v5853
    %v5855 = vmul.f32 %v5852, %v5854
    %v5856 = vadd.f32 %v5852, %v5855
    %vm5857 = vweird.f32 %v5821
    %vm5858 = vweird.f32 %v5852
    %vm5859 = vmor %vm5857, %vm5858
    %v5860 = vsel %vm5859, %v5852, %v5856
    %v5861 = vand.u32 2147483647, %v5821
    %vm5862 = vcmp.eq.f32.partialorder %v5861, 8.507059e+37
    %v5863 = vand.u32 %v5821, 2147483648
    %v5864 = vor.u32 1.1754944e-38, %v5863
    %v5865 = vsel %vm5862, %v5864, %v5860
    %v5866 = vmul.f32 1.0, %v5865
    %v5867 = vtanh.pop %v5809
    %v5868 = vmul.f32 %v5851, %v5654
    %v5869 = vmul.f32 %v5836, %v5867
    %v5870 = vadd.f32 %v5868, %v5869
    %v5871 = vtanh.pop %v5870
    %v5872 = vmul.f32 %v5866, %v5871
    %5873 = vst [vmem:[#allocation3 + $0xb8] sm:$0xff] %v5872
    %v5874 = vld [vmem:[#allocation2 + $0x300] sm:$0xff]
    %v5875 = vld [vmem:[#allocation2 + $0x308] sm:$0xff]
    %v5876 = vld [vmem:[#allocation2 + $0x310] sm:$0xff]
    %v5877 = vld [vmem:[#allocation2 + $0x318] sm:$0xff]
    %v5878 = vld [vmem:[#allocation4] sm:$0xff]
    %v5879 = vld [vmem:[#allocation4 + $0x8] sm:$0xff]
    %v5880 = vld [vmem:[#allocation4 + $0x10] sm:$0xff]
    %v5881 = vld [vmem:[#allocation4 + $0x18] sm:$0xff]
    %v5882 = vld [vmem:[#allocation4 + $0x20] sm:$0xff]
    %v5883 = vld [vmem:[#allocation4 + $0x28] sm:$0xff]
    %v5884 = vld [vmem:[#allocation4 + $0x30] sm:$0xff]
    %v5885 = vld [vmem:[#allocation4 + $0x38] sm:$0xff]
    %v5886 = vld [vmem:[#allocation4 + $0x40] sm:$0xff]
    %v5887 = vld [vmem:[#allocation4 + $0x48] sm:$0xff]
    %v5888 = vld [vmem:[#allocation4 + $0x50] sm:$0xff]
    %v5889 = vld [vmem:[#allocation4 + $0x58] sm:$0xff]
    %v5890 = vld [vmem:[#allocation4 + $0x60] sm:$0xff]
    %v5891 = vld [vmem:[#allocation4 + $0x68] sm:$0xff]
    %v5892 = vld [vmem:[#allocation4 + $0x70] sm:$0xff]
    %v5893 = vld [vmem:[#allocation4 + $0x78] sm:$0xff]
    %v5894 = vld [vmem:[#allocation4 + $0x80] sm:$0xff]
    %v5895 = vld [vmem:[#allocation4 + $0x88] sm:$0xff]
    %v5896 = vld [vmem:[#allocation4 + $0x90] sm:$0xff]
    %v5897 = vld [vmem:[#allocation4 + $0x98] sm:$0xff]
    %v5898 = vld [vmem:[#allocation4 + $0xa0] sm:$0xff]
    %v5899 = vld [vmem:[#allocation4 + $0xa8] sm:$0xff]
    %v5900 = vld [vmem:[#allocation4 + $0xb0] sm:$0xff]
    %v5901 = vld [vmem:[#allocation4 + $0xb8] sm:$0xff]
    %v5902 = vld [vmem:[#allocation4 + $0xc0] sm:$0xff]
    %v5903 = vld [vmem:[#allocation4 + $0xc8] sm:$0xff]
    %v5904 = vld [vmem:[#allocation4 + $0xd0] sm:$0xff]
    %v5905 = vld [vmem:[#allocation4 + $0xd8] sm:$0xff]
    %v5906 = vld [vmem:[#allocation4 + $0xe0] sm:$0xff]
    %v5907 = vld [vmem:[#allocation4 + $0xe8] sm:$0xff]
    %v5908 = vld [vmem:[#allocation4 + $0xf0] sm:$0xff]
    %v5909 = vld [vmem:[#allocation4 + $0xf8] sm:$0xff]
    %v5910 = vld [vmem:[#allocation4 + $0x100] sm:$0xff]
    %v5911 = vld [vmem:[#allocation4 + $0x108] sm:$0xff]
    %v5912 = vld [vmem:[#allocation4 + $0x110] sm:$0xff]
    %v5913 = vld [vmem:[#allocation4 + $0x118] sm:$0xff]
    %v5914 = vld [vmem:[#allocation4 + $0x120] sm:$0xff]
    %v5915 = vld [vmem:[#allocation4 + $0x128] sm:$0xff]
    %v5916 = vld [vmem:[#allocation4 + $0x130] sm:$0xff]
    %v5917 = vld [vmem:[#allocation4 + $0x138] sm:$0xff]
    %v5918 = vld [vmem:[#allocation4 + $0x140] sm:$0xff]
    %v5919 = vld [vmem:[#allocation4 + $0x148] sm:$0xff]
    %v5920 = vld [vmem:[#allocation4 + $0x150] sm:$0xff]
    %v5921 = vld [vmem:[#allocation4 + $0x158] sm:$0xff]
    %v5922 = vld [vmem:[#allocation4 + $0x160] sm:$0xff]
    %v5923 = vld [vmem:[#allocation4 + $0x168] sm:$0xff]
    %v5924 = vld [vmem:[#allocation4 + $0x170] sm:$0xff]
    %v5925 = vld [vmem:[#allocation4 + $0x178] sm:$0xff]
    %v5926 = vld [vmem:[#allocation4 + $0x180] sm:$0xff]
    %v5927 = vld [vmem:[#allocation4 + $0x188] sm:$0xff]
    %v5928 = vld [vmem:[#allocation4 + $0x190] sm:$0xff]
    %v5929 = vld [vmem:[#allocation4 + $0x198] sm:$0xff]
    %v5930 = vld [vmem:[#allocation4 + $0x1a0] sm:$0xff]
    %v5931 = vld [vmem:[#allocation4 + $0x1a8] sm:$0xff]
    %v5932 = vld [vmem:[#allocation4 + $0x1b0] sm:$0xff]
    %v5933 = vld [vmem:[#allocation4 + $0x1b8] sm:$0xff]
    %v5934 = vld [vmem:[#allocation4 + $0x1c0] sm:$0xff]
    %v5935 = vld [vmem:[#allocation4 + $0x1c8] sm:$0xff]
    %v5936 = vld [vmem:[#allocation4 + $0x1d0] sm:$0xff]
    %v5937 = vld [vmem:[#allocation4 + $0x1d8] sm:$0xff]
    %v5938 = vld [vmem:[#allocation4 + $0x1e0] sm:$0xff]
    %v5939 = vld [vmem:[#allocation4 + $0x1e8] sm:$0xff]
    %v5940 = vld [vmem:[#allocation4 + $0x1f0] sm:$0xff]
    %v5941 = vld [vmem:[#allocation4 + $0x1f8] sm:$0xff]
    %5942 = vmatpush.msra.mxu0 %v5938
    %5943 = vmatpush.msra.mxu0 %v5934
    %5944 = vmatpush.msra.mxu0 %v5930
    %5945 = vmatpush.msra.mxu0 %v5926
    %5946 = vmatpush.msra.mxu0 %v5922
    %5947 = vmatpush.msra.mxu0 %v5918
    %5948 = vmatpush.msra.mxu0 %v5914
    %5949 = vmatpush.msra.mxu0 %v5910
    %5950 = vmatpush.msra.mxu0 %v5906
    %5951 = vmatpush.msra.mxu0 %v5902
    %5952 = vmatpush.msra.mxu0 %v5898
    %5953 = vmatpush.msra.mxu0 %v5894
    %5954 = vmatpush.msra.mxu0 %v5890
    %5955 = vmatpush.msra.mxu0 %v5886
    %5956 = vmatpush.msra.mxu0 %v5882
    %5957 = vmatpush.msra.mxu0 %v5878
    %5958 = vmatmul.f32.gmra.mxu0 %v5872
    %v5959 = vpop.f32.mrf.mxu0
    %v5960 = vadd.f32 0.0, %v5959
    %5961 = vdwg.mxu0
    %5962 = vmatpush.msra.mxu0 %v5939
    %5963 = vmatpush.msra.mxu0 %v5935
    %5964 = vmatpush.msra.mxu0 %v5931
    %5965 = vmatpush.msra.mxu0 %v5927
    %5966 = vmatpush.msra.mxu0 %v5923
    %5967 = vmatpush.msra.mxu0 %v5919
    %5968 = vmatpush.msra.mxu0 %v5915
    %5969 = vmatpush.msra.mxu0 %v5911
    %5970 = vmatpush.msra.mxu0 %v5907
    %5971 = vmatpush.msra.mxu0 %v5903
    %5972 = vmatpush.msra.mxu0 %v5899
    %5973 = vmatpush.msra.mxu0 %v5895
    %5974 = vmatpush.msra.mxu0 %v5891
    %5975 = vmatpush.msra.mxu0 %v5887
    %5976 = vmatpush.msra.mxu0 %v5883
    %5977 = vmatpush.msra.mxu0 %v5879
    %5978 = vmatmul.f32.gmra.mxu0 %v5872
    %v5979 = vpop.f32.mrf.mxu0
    %v5980 = vadd.f32 0.0, %v5979
    %5981 = vdwg.mxu0
    %5982 = vmatpush.msra.mxu0 %v5940
    %5983 = vmatpush.msra.mxu0 %v5936
    %5984 = vmatpush.msra.mxu0 %v5932
    %5985 = vmatpush.msra.mxu0 %v5928
    %5986 = vmatpush.msra.mxu0 %v5924
    %5987 = vmatpush.msra.mxu0 %v5920
    %5988 = vmatpush.msra.mxu0 %v5916
    %5989 = vmatpush.msra.mxu0 %v5912
    %5990 = vmatpush.msra.mxu0 %v5908
    %5991 = vmatpush.msra.mxu0 %v5904
    %5992 = vmatpush.msra.mxu0 %v5900
    %5993 = vmatpush.msra.mxu0 %v5896
    %5994 = vmatpush.msra.mxu0 %v5892
    %5995 = vmatpush.msra.mxu0 %v5888
    %5996 = vmatpush.msra.mxu0 %v5884
    %5997 = vmatpush.msra.mxu0 %v5880
    %5998 = vmatmul.f32.gmra.mxu0 %v5872
    %v5999 = vpop.f32.mrf.mxu0
    %v6000 = vadd.f32 0.0, %v5999
    %6001 = vdwg.mxu0
    %6002 = vmatpush.msra.mxu0 %v5941
    %6003 = vmatpush.msra.mxu0 %v5937
    %6004 = vmatpush.msra.mxu0 %v5933
    %6005 = vmatpush.msra.mxu0 %v5929
    %6006 = vmatpush.msra.mxu0 %v5925
    %6007 = vmatpush.msra.mxu0 %v5921
    %6008 = vmatpush.msra.mxu0 %v5917
    %6009 = vmatpush.msra.mxu0 %v5913
    %6010 = vmatpush.msra.mxu0 %v5909
    %6011 = vmatpush.msra.mxu0 %v5905
    %6012 = vmatpush.msra.mxu0 %v5901
    %6013 = vmatpush.msra.mxu0 %v5897
    %6014 = vmatpush.msra.mxu0 %v5893
    %6015 = vmatpush.msra.mxu0 %v5889
    %6016 = vmatpush.msra.mxu0 %v5885
    %6017 = vmatpush.msra.mxu0 %v5881
    %6018 = vmatmul.f32.gmra.mxu0 %v5872
    %v6019 = vpop.f32.mrf.mxu0
    %v6020 = vadd.f32 0.0, %v6019
    %6021 = vdwg.mxu0
    %v6022 = vadd.f32 %v5874, %v5960
    %v6023 = vadd.f32 %v5875, %v5980
    %v6024 = vadd.f32 %v5876, %v6000
    %v6025 = vadd.f32 %v5877, %v6020
    %v6026 = vxor.u32 %v6022, 2147483648
    %v6027 = vxor.u32 %v6023, 2147483648
    %v6028 = vxor.u32 %v6024, 2147483648
    %v6029 = vmul.f32 %v6026, 1.442695
    %v6030 = vpow.pop %v6029
    %v6031 = vmul.f32 %v6027, 1.442695
    %v6032 = vpow.pop %v6031
    %v6033 = vmul.f32 %v6028, 1.442695
    %v6034 = vpow.pop %v6033
    %v6035 = vadd.f32 %v6030, 1.0
    %v6036 = vadd.f32 %v6032, 1.0
    %v6037 = vadd.f32 %v6034, 1.0
    %v6038 = vrcp.pop %v6035
    %v6039 = vmul.f32 %v6035, %v6038
    %v6040 = vsub.f32 1.0, %v6039
    %v6041 = vmul.f32 %v6038, %v6040
    %v6042 = vadd.f32 %v6038, %v6041
    %vm6043 = vweird.f32 %v6035
    %vm6044 = vweird.f32 %v6038
    %vm6045 = vmor %vm6043, %vm6044
    %v6046 = vsel %vm6045, %v6038, %v6042
    %v6047 = vand.u32 2147483647, %v6035
    %vm6048 = vcmp.eq.f32.partialorder %v6047, 8.507059e+37
    %v6049 = vand.u32 %v6035, 2147483648
    %v6050 = vor.u32 1.1754944e-38, %v6049
    %v6051 = vsel %vm6048, %v6050, %v6046
    %v6052 = vmul.f32 1.0, %v6051
    %v6053 = vrcp.pop %v6036
    %v6054 = vmul.f32 %v6036, %v6053
    %v6055 = vsub.f32 1.0, %v6054
    %v6056 = vmul.f32 %v6053, %v6055
    %v6057 = vadd.f32 %v6053, %v6056
    %vm6058 = vweird.f32 %v6036
    %vm6059 = vweird.f32 %v6053
    %vm6060 = vmor %vm6058, %vm6059
    %v6061 = vsel %vm6060, %v6053, %v6057
    %v6062 = vand.u32 2147483647, %v6036
    %vm6063 = vcmp.eq.f32.partialorder %v6062, 8.507059e+37
    %v6064 = vand.u32 %v6036, 2147483648
    %v6065 = vor.u32 1.1754944e-38, %v6064
    %v6066 = vsel %vm6063, %v6065, %v6061
    %v6067 = vmul.f32 1.0, %v6066
    %v6068 = vrcp.pop %v6037
    %v6069 = vmul.f32 %v6037, %v6068
    %v6070 = vsub.f32 1.0, %v6069
    %v6071 = vmul.f32 %v6068, %v6070
    %v6072 = vadd.f32 %v6068, %v6071
    %vm6073 = vweird.f32 %v6037
    %vm6074 = vweird.f32 %v6068
    %vm6075 = vmor %vm6073, %vm6074
    %v6076 = vsel %vm6075, %v6068, %v6072
    %v6077 = vand.u32 2147483647, %v6037
    %vm6078 = vcmp.eq.f32.partialorder %v6077, 8.507059e+37
    %v6079 = vand.u32 %v6037, 2147483648
    %v6080 = vor.u32 1.1754944e-38, %v6079
    %v6081 = vsel %vm6078, %v6080, %v6076
    %v6082 = vmul.f32 1.0, %v6081
    %v6083 = vtanh.pop %v6025
    %v6084 = vmul.f32 %v6067, %v5870
    %v6085 = vmul.f32 %v6052, %v6083
    %v6086 = vadd.f32 %v6084, %v6085
    %v6087 = vtanh.pop %v6086
    %v6088 = vmul.f32 %v6082, %v6087
    %6089 = vst [vmem:[#allocation3 + $0xc0] sm:$0xff] %v6088
    %v6090 = vld [vmem:[#allocation2 + $0x320] sm:$0xff]
    %v6091 = vld [vmem:[#allocation2 + $0x328] sm:$0xff]
    %v6092 = vld [vmem:[#allocation2 + $0x330] sm:$0xff]
    %v6093 = vld [vmem:[#allocation2 + $0x338] sm:$0xff]
    %v6094 = vld [vmem:[#allocation4] sm:$0xff]
    %v6095 = vld [vmem:[#allocation4 + $0x8] sm:$0xff]
    %v6096 = vld [vmem:[#allocation4 + $0x10] sm:$0xff]
    %v6097 = vld [vmem:[#allocation4 + $0x18] sm:$0xff]
    %v6098 = vld [vmem:[#allocation4 + $0x20] sm:$0xff]
    %v6099 = vld [vmem:[#allocation4 + $0x28] sm:$0xff]
    %v6100 = vld [vmem:[#allocation4 + $0x30] sm:$0xff]
    %v6101 = vld [vmem:[#allocation4 + $0x38] sm:$0xff]
    %v6102 = vld [vmem:[#allocation4 + $0x40] sm:$0xff]
    %v6103 = vld [vmem:[#allocation4 + $0x48] sm:$0xff]
    %v6104 = vld [vmem:[#allocation4 + $0x50] sm:$0xff]
    %v6105 = vld [vmem:[#allocation4 + $0x58] sm:$0xff]
    %v6106 = vld [vmem:[#allocation4 + $0x60] sm:$0xff]
    %v6107 = vld [vmem:[#allocation4 + $0x68] sm:$0xff]
    %v6108 = vld [vmem:[#allocation4 + $0x70] sm:$0xff]
    %v6109 = vld [vmem:[#allocation4 + $0x78] sm:$0xff]
    %v6110 = vld [vmem:[#allocation4 + $0x80] sm:$0xff]
    %v6111 = vld [vmem:[#allocation4 + $0x88] sm:$0xff]
    %v6112 = vld [vmem:[#allocation4 + $0x90] sm:$0xff]
    %v6113 = vld [vmem:[#allocation4 + $0x98] sm:$0xff]
    %v6114 = vld [vmem:[#allocation4 + $0xa0] sm:$0xff]
    %v6115 = vld [vmem:[#allocation4 + $0xa8] sm:$0xff]
    %v6116 = vld [vmem:[#allocation4 + $0xb0] sm:$0xff]
    %v6117 = vld [vmem:[#allocation4 + $0xb8] sm:$0xff]
    %v6118 = vld [vmem:[#allocation4 + $0xc0] sm:$0xff]
    %v6119 = vld [vmem:[#allocation4 + $0xc8] sm:$0xff]
    %v6120 = vld [vmem:[#allocation4 + $0xd0] sm:$0xff]
    %v6121 = vld [vmem:[#allocation4 + $0xd8] sm:$0xff]
    %v6122 = vld [vmem:[#allocation4 + $0xe0] sm:$0xff]
    %v6123 = vld [vmem:[#allocation4 + $0xe8] sm:$0xff]
    %v6124 = vld [vmem:[#allocation4 + $0xf0] sm:$0xff]
    %v6125 = vld [vmem:[#allocation4 + $0xf8] sm:$0xff]
    %v6126 = vld [vmem:[#allocation4 + $0x100] sm:$0xff]
    %v6127 = vld [vmem:[#allocation4 + $0x108] sm:$0xff]
    %v6128 = vld [vmem:[#allocation4 + $0x110] sm:$0xff]
    %v6129 = vld [vmem:[#allocation4 + $0x118] sm:$0xff]
    %v6130 = vld [vmem:[#allocation4 + $0x120] sm:$0xff]
    %v6131 = vld [vmem:[#allocation4 + $0x128] sm:$0xff]
    %v6132 = vld [vmem:[#allocation4 + $0x130] sm:$0xff]
    %v6133 = vld [vmem:[#allocation4 + $0x138] sm:$0xff]
    %v6134 = vld [vmem:[#allocation4 + $0x140] sm:$0xff]
    %v6135 = vld [vmem:[#allocation4 + $0x148] sm:$0xff]
    %v6136 = vld [vmem:[#allocation4 + $0x150] sm:$0xff]
    %v6137 = vld [vmem:[#allocation4 + $0x158] sm:$0xff]
    %v6138 = vld [vmem:[#allocation4 + $0x160] sm:$0xff]
    %v6139 = vld [vmem:[#allocation4 + $0x168] sm:$0xff]
    %v6140 = vld [vmem:[#allocation4 + $0x170] sm:$0xff]
    %v6141 = vld [vmem:[#allocation4 + $0x178] sm:$0xff]
    %v6142 = vld [vmem:[#allocation4 + $0x180] sm:$0xff]
    %v6143 = vld [vmem:[#allocation4 + $0x188] sm:$0xff]
    %v6144 = vld [vmem:[#allocation4 + $0x190] sm:$0xff]
    %v6145 = vld [vmem:[#allocation4 + $0x198] sm:$0xff]
    %v6146 = vld [vmem:[#allocation4 + $0x1a0] sm:$0xff]
    %v6147 = vld [vmem:[#allocation4 + $0x1a8] sm:$0xff]
    %v6148 = vld [vmem:[#allocation4 + $0x1b0] sm:$0xff]
    %v6149 = vld [vmem:[#allocation4 + $0x1b8] sm:$0xff]
    %v6150 = vld [vmem:[#allocation4 + $0x1c0] sm:$0xff]
    %v6151 = vld [vmem:[#allocation4 + $0x1c8] sm:$0xff]
    %v6152 = vld [vmem:[#allocation4 + $0x1d0] sm:$0xff]
    %v6153 = vld [vmem:[#allocation4 + $0x1d8] sm:$0xff]
    %v6154 = vld [vmem:[#allocation4 + $0x1e0] sm:$0xff]
    %v6155 = vld [vmem:[#allocation4 + $0x1e8] sm:$0xff]
    %v6156 = vld [vmem:[#allocation4 + $0x1f0] sm:$0xff]
    %v6157 = vld [vmem:[#allocation4 + $0x1f8] sm:$0xff]
    %6158 = vmatpush.msra.mxu0 %v6154
    %6159 = vmatpush.msra.mxu0 %v6150
    %6160 = vmatpush.msra.mxu0 %v6146
    %6161 = vmatpush.msra.mxu0 %v6142
    %6162 = vmatpush.msra.mxu0 %v6138
    %6163 = vmatpush.msra.mxu0 %v6134
    %6164 = vmatpush.msra.mxu0 %v6130
    %6165 = vmatpush.msra.mxu0 %v6126
    %6166 = vmatpush.msra.mxu0 %v6122
    %6167 = vmatpush.msra.mxu0 %v6118
    %6168 = vmatpush.msra.mxu0 %v6114
    %6169 = vmatpush.msra.mxu0 %v6110
    %6170 = vmatpush.msra.mxu0 %v6106
    %6171 = vmatpush.msra.mxu0 %v6102
    %6172 = vmatpush.msra.mxu0 %v6098
    %6173 = vmatpush.msra.mxu0 %v6094
    %6174 = vmatmul.f32.gmra.mxu0 %v6088
    %v6175 = vpop.f32.mrf.mxu0
    %v6176 = vadd.f32 0.0, %v6175
    %6177 = vdwg.mxu0
    %6178 = vmatpush.msra.mxu0 %v6155
    %6179 = vmatpush.msra.mxu0 %v6151
    %6180 = vmatpush.msra.mxu0 %v6147
    %6181 = vmatpush.msra.mxu0 %v6143
    %6182 = vmatpush.msra.mxu0 %v6139
    %6183 = vmatpush.msra.mxu0 %v6135
    %6184 = vmatpush.msra.mxu0 %v6131
    %6185 = vmatpush.msra.mxu0 %v6127
    %6186 = vmatpush.msra.mxu0 %v6123
    %6187 = vmatpush.msra.mxu0 %v6119
    %6188 = vmatpush.msra.mxu0 %v6115
    %6189 = vmatpush.msra.mxu0 %v6111
    %6190 = vmatpush.msra.mxu0 %v6107
    %6191 = vmatpush.msra.mxu0 %v6103
    %6192 = vmatpush.msra.mxu0 %v6099
    %6193 = vmatpush.msra.mxu0 %v6095
    %6194 = vmatmul.f32.gmra.mxu0 %v6088
    %v6195 = vpop.f32.mrf.mxu0
    %v6196 = vadd.f32 0.0, %v6195
    %6197 = vdwg.mxu0
    %6198 = vmatpush.msra.mxu0 %v6156
    %6199 = vmatpush.msra.mxu0 %v6152
    %6200 = vmatpush.msra.mxu0 %v6148
    %6201 = vmatpush.msra.mxu0 %v6144
    %6202 = vmatpush.msra.mxu0 %v6140
    %6203 = vmatpush.msra.mxu0 %v6136
    %6204 = vmatpush.msra.mxu0 %v6132
    %6205 = vmatpush.msra.mxu0 %v6128
    %6206 = vmatpush.msra.mxu0 %v6124
    %6207 = vmatpush.msra.mxu0 %v6120
    %6208 = vmatpush.msra.mxu0 %v6116
    %6209 = vmatpush.msra.mxu0 %v6112
    %6210 = vmatpush.msra.mxu0 %v6108
    %6211 = vmatpush.msra.mxu0 %v6104
    %6212 = vmatpush.msra.mxu0 %v6100
    %6213 = vmatpush.msra.mxu0 %v6096
    %6214 = vmatmul.f32.gmra.mxu0 %v6088
    %v6215 = vpop.f32.mrf.mxu0
    %v6216 = vadd.f32 0.0, %v6215
    %6217 = vdwg.mxu0
    %6218 = vmatpush.msra.mxu0 %v6157
    %6219 = vmatpush.msra.mxu0 %v6153
    %6220 = vmatpush.msra.mxu0 %v6149
    %6221 = vmatpush.msra.mxu0 %v6145
    %6222 = vmatpush.msra.mxu0 %v6141
    %6223 = vmatpush.msra.mxu0 %v6137
    %6224 = vmatpush.msra.mxu0 %v6133
    %6225 = vmatpush.msra.mxu0 %v6129
    %6226 = vmatpush.msra.mxu0 %v6125
    %6227 = vmatpush.msra.mxu0 %v6121
    %6228 = vmatpush.msra.mxu0 %v6117
    %6229 = vmatpush.msra.mxu0 %v6113
    %6230 = vmatpush.msra.mxu0 %v6109
    %6231 = vmatpush.msra.mxu0 %v6105
    %6232 = vmatpush.msra.mxu0 %v6101
    %6233 = vmatpush.msra.mxu0 %v6097
    %6234 = vmatmul.f32.gmra.mxu0 %v6088
    %v6235 = vpop.f32.mrf.mxu0
    %v6236 = vadd.f32 0.0, %v6235
    %6237 = vdwg.mxu0
    %v6238 = vadd.f32 %v6090, %v6176
    %v6239 = vadd.f32 %v6091, %v6196
    %v6240 = vadd.f32 %v6092, %v6216
    %v6241 = vadd.f32 %v6093, %v6236
    %v6242 = vxor.u32 %v6238, 2147483648
    %v6243 = vxor.u32 %v6239, 2147483648
    %v6244 = vxor.u32 %v6240, 2147483648
    %v6245 = vmul.f32 %v6242, 1.442695
    %v6246 = vpow.pop %v6245
    %v6247 = vmul.f32 %v6243, 1.442695
    %v6248 = vpow.pop %v6247
    %v6249 = vmul.f32 %v6244, 1.442695
    %v6250 = vpow.pop %v6249
    %v6251 = vadd.f32 %v6246, 1.0
    %v6252 = vadd.f32 %v6248, 1.0
    %v6253 = vadd.f32 %v6250, 1.0
    %v6254 = vrcp.pop %v6251
    %v6255 = vmul.f32 %v6251, %v6254
    %v6256 = vsub.f32 1.0, %v6255
    %v6257 = vmul.f32 %v6254, %v6256
    %v6258 = vadd.f32 %v6254, %v6257
    %vm6259 = vweird.f32 %v6251
    %vm6260 = vweird.f32 %v6254
    %vm6261 = vmor %vm6259, %vm6260
    %v6262 = vsel %vm6261, %v6254, %v6258
    %v6263 = vand.u32 2147483647, %v6251
    %vm6264 = vcmp.eq.f32.partialorder %v6263, 8.507059e+37
    %v6265 = vand.u32 %v6251, 2147483648
    %v6266 = vor.u32 1.1754944e-38, %v6265
    %v6267 = vsel %vm6264, %v6266, %v6262
    %v6268 = vmul.f32 1.0, %v6267
    %v6269 = vrcp.pop %v6252
    %v6270 = vmul.f32 %v6252, %v6269
    %v6271 = vsub.f32 1.0, %v6270
    %v6272 = vmul.f32 %v6269, %v6271
    %v6273 = vadd.f32 %v6269, %v6272
    %vm6274 = vweird.f32 %v6252
    %vm6275 = vweird.f32 %v6269
    %vm6276 = vmor %vm6274, %vm6275
    %v6277 = vsel %vm6276, %v6269, %v6273
    %v6278 = vand.u32 2147483647, %v6252
    %vm6279 = vcmp.eq.f32.partialorder %v6278, 8.507059e+37
    %v6280 = vand.u32 %v6252, 2147483648
    %v6281 = vor.u32 1.1754944e-38, %v6280
    %v6282 = vsel %vm6279, %v6281, %v6277
    %v6283 = vmul.f32 1.0, %v6282
    %v6284 = vrcp.pop %v6253
    %v6285 = vmul.f32 %v6253, %v6284
    %v6286 = vsub.f32 1.0, %v6285
    %v6287 = vmul.f32 %v6284, %v6286
    %v6288 = vadd.f32 %v6284, %v6287
    %vm6289 = vweird.f32 %v6253
    %vm6290 = vweird.f32 %v6284
    %vm6291 = vmor %vm6289, %vm6290
    %v6292 = vsel %vm6291, %v6284, %v6288
    %v6293 = vand.u32 2147483647, %v6253
    %vm6294 = vcmp.eq.f32.partialorder %v6293, 8.507059e+37
    %v6295 = vand.u32 %v6253, 2147483648
    %v6296 = vor.u32 1.1754944e-38, %v6295
    %v6297 = vsel %vm6294, %v6296, %v6292
    %v6298 = vmul.f32 1.0, %v6297
    %v6299 = vtanh.pop %v6241
    %v6300 = vmul.f32 %v6283, %v6086
    %v6301 = vmul.f32 %v6268, %v6299
    %v6302 = vadd.f32 %v6300, %v6301
    %v6303 = vtanh.pop %v6302
    %v6304 = vmul.f32 %v6298, %v6303
    %6305 = vst [vmem:[#allocation3 + $0xc8] sm:$0xff] %v6304
    %v6306 = vld [vmem:[#allocation2 + $0x340] sm:$0xff]
    %v6307 = vld [vmem:[#allocation2 + $0x348] sm:$0xff]
    %v6308 = vld [vmem:[#allocation2 + $0x350] sm:$0xff]
    %v6309 = vld [vmem:[#allocation2 + $0x358] sm:$0xff]
    %v6310 = vld [vmem:[#allocation4] sm:$0xff]
    %v6311 = vld [vmem:[#allocation4 + $0x8] sm:$0xff]
    %v6312 = vld [vmem:[#allocation4 + $0x10] sm:$0xff]
    %v6313 = vld [vmem:[#allocation4 + $0x18] sm:$0xff]
    %v6314 = vld [vmem:[#allocation4 + $0x20] sm:$0xff]
    %v6315 = vld [vmem:[#allocation4 + $0x28] sm:$0xff]
    %v6316 = vld [vmem:[#allocation4 + $0x30] sm:$0xff]
    %v6317 = vld [vmem:[#allocation4 + $0x38] sm:$0xff]
    %v6318 = vld [vmem:[#allocation4 + $0x40] sm:$0xff]
    %v6319 = vld [vmem:[#allocation4 + $0x48] sm:$0xff]
    %v6320 = vld [vmem:[#allocation4 + $0x50] sm:$0xff]
    %v6321 = vld [vmem:[#allocation4 + $0x58] sm:$0xff]
    %v6322 = vld [vmem:[#allocation4 + $0x60] sm:$0xff]
    %v6323 = vld [vmem:[#allocation4 + $0x68] sm:$0xff]
    %v6324 = vld [vmem:[#allocation4 + $0x70] sm:$0xff]
    %v6325 = vld [vmem:[#allocation4 + $0x78] sm:$0xff]
    %v6326 = vld [vmem:[#allocation4 + $0x80] sm:$0xff]
    %v6327 = vld [vmem:[#allocation4 + $0x88] sm:$0xff]
    %v6328 = vld [vmem:[#allocation4 + $0x90] sm:$0xff]
    %v6329 = vld [vmem:[#allocation4 + $0x98] sm:$0xff]
    %v6330 = vld [vmem:[#allocation4 + $0xa0] sm:$0xff]
    %v6331 = vld [vmem:[#allocation4 + $0xa8] sm:$0xff]
    %v6332 = vld [vmem:[#allocation4 + $0xb0] sm:$0xff]
    %v6333 = vld [vmem:[#allocation4 + $0xb8] sm:$0xff]
    %v6334 = vld [vmem:[#allocation4 + $0xc0] sm:$0xff]
    %v6335 = vld [vmem:[#allocation4 + $0xc8] sm:$0xff]
    %v6336 = vld [vmem:[#allocation4 + $0xd0] sm:$0xff]
    %v6337 = vld [vmem:[#allocation4 + $0xd8] sm:$0xff]
    %v6338 = vld [vmem:[#allocation4 + $0xe0] sm:$0xff]
    %v6339 = vld [vmem:[#allocation4 + $0xe8] sm:$0xff]
    %v6340 = vld [vmem:[#allocation4 + $0xf0] sm:$0xff]
    %v6341 = vld [vmem:[#allocation4 + $0xf8] sm:$0xff]
    %v6342 = vld [vmem:[#allocation4 + $0x100] sm:$0xff]
    %v6343 = vld [vmem:[#allocation4 + $0x108] sm:$0xff]
    %v6344 = vld [vmem:[#allocation4 + $0x110] sm:$0xff]
    %v6345 = vld [vmem:[#allocation4 + $0x118] sm:$0xff]
    %v6346 = vld [vmem:[#allocation4 + $0x120] sm:$0xff]
    %v6347 = vld [vmem:[#allocation4 + $0x128] sm:$0xff]
    %v6348 = vld [vmem:[#allocation4 + $0x130] sm:$0xff]
    %v6349 = vld [vmem:[#allocation4 + $0x138] sm:$0xff]
    %v6350 = vld [vmem:[#allocation4 + $0x140] sm:$0xff]
    %v6351 = vld [vmem:[#allocation4 + $0x148] sm:$0xff]
    %v6352 = vld [vmem:[#allocation4 + $0x150] sm:$0xff]
    %v6353 = vld [vmem:[#allocation4 + $0x158] sm:$0xff]
    %v6354 = vld [vmem:[#allocation4 + $0x160] sm:$0xff]
    %v6355 = vld [vmem:[#allocation4 + $0x168] sm:$0xff]
    %v6356 = vld [vmem:[#allocation4 + $0x170] sm:$0xff]
    %v6357 = vld [vmem:[#allocation4 + $0x178] sm:$0xff]
    %v6358 = vld [vmem:[#allocation4 + $0x180] sm:$0xff]
    %v6359 = vld [vmem:[#allocation4 + $0x188] sm:$0xff]
    %v6360 = vld [vmem:[#allocation4 + $0x190] sm:$0xff]
    %v6361 = vld [vmem:[#allocation4 + $0x198] sm:$0xff]
    %v6362 = vld [vmem:[#allocation4 + $0x1a0] sm:$0xff]
    %v6363 = vld [vmem:[#allocation4 + $0x1a8] sm:$0xff]
    %v6364 = vld [vmem:[#allocation4 + $0x1b0] sm:$0xff]
    %v6365 = vld [vmem:[#allocation4 + $0x1b8] sm:$0xff]
    %v6366 = vld [vmem:[#allocation4 + $0x1c0] sm:$0xff]
    %v6367 = vld [vmem:[#allocation4 + $0x1c8] sm:$0xff]
    %v6368 = vld [vmem:[#allocation4 + $0x1d0] sm:$0xff]
    %v6369 = vld [vmem:[#allocation4 + $0x1d8] sm:$0xff]
    %v6370 = vld [vmem:[#allocation4 + $0x1e0] sm:$0xff]
    %v6371 = vld [vmem:[#allocation4 + $0x1e8] sm:$0xff]
    %v6372 = vld [vmem:[#allocation4 + $0x1f0] sm:$0xff]
    %v6373 = vld [vmem:[#allocation4 + $0x1f8] sm:$0xff]
    %6374 = vmatpush.msra.mxu0 %v6370
    %6375 = vmatpush.msra.mxu0 %v6366
    %6376 = vmatpush.msra.mxu0 %v6362
    %6377 = vmatpush.msra.mxu0 %v6358
    %6378 = vmatpush.msra.mxu0 %v6354
    %6379 = vmatpush.msra.mxu0 %v6350
    %6380 = vmatpush.msra.mxu0 %v6346
    %6381 = vmatpush.msra.mxu0 %v6342
    %6382 = vmatpush.msra.mxu0 %v6338
    %6383 = vmatpush.msra.mxu0 %v6334
    %6384 = vmatpush.msra.mxu0 %v6330
    %6385 = vmatpush.msra.mxu0 %v6326
    %6386 = vmatpush.msra.mxu0 %v6322
    %6387 = vmatpush.msra.mxu0 %v6318
    %6388 = vmatpush.msra.mxu0 %v6314
    %6389 = vmatpush.msra.mxu0 %v6310
    %6390 = vmatmul.f32.gmra.mxu0 %v6304
    %v6391 = vpop.f32.mrf.mxu0
    %v6392 = vadd.f32 0.0, %v6391
    %6393 = vdwg.mxu0
    %6394 = vmatpush.msra.mxu0 %v6371
    %6395 = vmatpush.msra.mxu0 %v6367
    %6396 = vmatpush.msra.mxu0 %v6363
    %6397 = vmatpush.msra.mxu0 %v6359
    %6398 = vmatpush.msra.mxu0 %v6355
    %6399 = vmatpush.msra.mxu0 %v6351
    %6400 = vmatpush.msra.mxu0 %v6347
    %6401 = vmatpush.msra.mxu0 %v6343
    %6402 = vmatpush.msra.mxu0 %v6339
    %6403 = vmatpush.msra.mxu0 %v6335
    %6404 = vmatpush.msra.mxu0 %v6331
    %6405 = vmatpush.msra.mxu0 %v6327
    %6406 = vmatpush.msra.mxu0 %v6323
    %6407 = vmatpush.msra.mxu0 %v6319
    %6408 = vmatpush.msra.mxu0 %v6315
    %6409 = vmatpush.msra.mxu0 %v6311
    %6410 = vmatmul.f32.gmra.mxu0 %v6304
    %v6411 = vpop.f32.mrf.mxu0
    %v6412 = vadd.f32 0.0, %v6411
    %6413 = vdwg.mxu0
    %6414 = vmatpush.msra.mxu0 %v6372
    %6415 = vmatpush.msra.mxu0 %v6368
    %6416 = vmatpush.msra.mxu0 %v6364
    %6417 = vmatpush.msra.mxu0 %v6360
    %6418 = vmatpush.msra.mxu0 %v6356
    %6419 = vmatpush.msra.mxu0 %v6352
    %6420 = vmatpush.msra.mxu0 %v6348
    %6421 = vmatpush.msra.mxu0 %v6344
    %6422 = vmatpush.msra.mxu0 %v6340
    %6423 = vmatpush.msra.mxu0 %v6336
    %6424 = vmatpush.msra.mxu0 %v6332
    %6425 = vmatpush.msra.mxu0 %v6328
    %6426 = vmatpush.msra.mxu0 %v6324
    %6427 = vmatpush.msra.mxu0 %v6320
    %6428 = vmatpush.msra.mxu0 %v6316
    %6429 = vmatpush.msra.mxu0 %v6312
    %6430 = vmatmul.f32.gmra.mxu0 %v6304
    %v6431 = vpop.f32.mrf.mxu0
    %v6432 = vadd.f32 0.0, %v6431
    %6433 = vdwg.mxu0
    %6434 = vmatpush.msra.mxu0 %v6373
    %6435 = vmatpush.msra.mxu0 %v6369
    %6436 = vmatpush.msra.mxu0 %v6365
    %6437 = vmatpush.msra.mxu0 %v6361
    %6438 = vmatpush.msra.mxu0 %v6357
    %6439 = vmatpush.msra.mxu0 %v6353
    %6440 = vmatpush.msra.mxu0 %v6349
    %6441 = vmatpush.msra.mxu0 %v6345
    %6442 = vmatpush.msra.mxu0 %v6341
    %6443 = vmatpush.msra.mxu0 %v6337
    %6444 = vmatpush.msra.mxu0 %v6333
    %6445 = vmatpush.msra.mxu0 %v6329
    %6446 = vmatpush.msra.mxu0 %v6325
    %6447 = vmatpush.msra.mxu0 %v6321
    %6448 = vmatpush.msra.mxu0 %v6317
    %6449 = vmatpush.msra.mxu0 %v6313
    %6450 = vmatmul.f32.gmra.mxu0 %v6304
    %v6451 = vpop.f32.mrf.mxu0
    %v6452 = vadd.f32 0.0, %v6451
    %6453 = vdwg.mxu0
    %v6454 = vadd.f32 %v6306, %v6392
    %v6455 = vadd.f32 %v6307, %v6412
    %v6456 = vadd.f32 %v6308, %v6432
    %v6457 = vadd.f32 %v6309, %v6452
    %v6458 = vxor.u32 %v6454, 2147483648
    %v6459 = vxor.u32 %v6455, 2147483648
    %v6460 = vxor.u32 %v6456, 2147483648
    %v6461 = vmul.f32 %v6458, 1.442695
    %v6462 = vpow.pop %v6461
    %v6463 = vmul.f32 %v6459, 1.442695
    %v6464 = vpow.pop %v6463
    %v6465 = vmul.f32 %v6460, 1.442695
    %v6466 = vpow.pop %v6465
    %v6467 = vadd.f32 %v6462, 1.0
    %v6468 = vadd.f32 %v6464, 1.0
    %v6469 = vadd.f32 %v6466, 1.0
    %v6470 = vrcp.pop %v6467
    %v6471 = vmul.f32 %v6467, %v6470
    %v6472 = vsub.f32 1.0, %v6471
    %v6473 = vmul.f32 %v6470, %v6472
    %v6474 = vadd.f32 %v6470, %v6473
    %vm6475 = vweird.f32 %v6467
    %vm6476 = vweird.f32 %v6470
    %vm6477 = vmor %vm6475, %vm6476
    %v6478 = vsel %vm6477, %v6470, %v6474
    %v6479 = vand.u32 2147483647, %v6467
    %vm6480 = vcmp.eq.f32.partialorder %v6479, 8.507059e+37
    %v6481 = vand.u32 %v6467, 2147483648
    %v6482 = vor.u32 1.1754944e-38, %v6481
    %v6483 = vsel %vm6480, %v6482, %v6478
    %v6484 = vmul.f32 1.0, %v6483
    %v6485 = vrcp.pop %v6468
    %v6486 = vmul.f32 %v6468, %v6485
    %v6487 = vsub.f32 1.0, %v6486
    %v6488 = vmul.f32 %v6485, %v6487
    %v6489 = vadd.f32 %v6485, %v6488
    %vm6490 = vweird.f32 %v6468
    %vm6491 = vweird.f32 %v6485
    %vm6492 = vmor %vm6490, %vm6491
    %v6493 = vsel %vm6492, %v6485, %v6489
    %v6494 = vand.u32 2147483647, %v6468
    %vm6495 = vcmp.eq.f32.partialorder %v6494, 8.507059e+37
    %v6496 = vand.u32 %v6468, 2147483648
    %v6497 = vor.u32 1.1754944e-38, %v6496
    %v6498 = vsel %vm6495, %v6497, %v6493
    %v6499 = vmul.f32 1.0, %v6498
    %v6500 = vrcp.pop %v6469
    %v6501 = vmul.f32 %v6469, %v6500
    %v6502 = vsub.f32 1.0, %v6501
    %v6503 = vmul.f32 %v6500, %v6502
    %v6504 = vadd.f32 %v6500, %v6503
    %vm6505 = vweird.f32 %v6469
    %vm6506 = vweird.f32 %v6500
    %vm6507 = vmor %vm6505, %vm6506
    %v6508 = vsel %vm6507, %v6500, %v6504
    %v6509 = vand.u32 2147483647, %v6469
    %vm6510 = vcmp.eq.f32.partialorder %v6509, 8.507059e+37
    %v6511 = vand.u32 %v6469, 2147483648
    %v6512 = vor.u32 1.1754944e-38, %v6511
    %v6513 = vsel %vm6510, %v6512, %v6508
    %v6514 = vmul.f32 1.0, %v6513
    %v6515 = vtanh.pop %v6457
    %v6516 = vmul.f32 %v6499, %v6302
    %v6517 = vmul.f32 %v6484, %v6515
    %v6518 = vadd.f32 %v6516, %v6517
    %v6519 = vtanh.pop %v6518
    %v6520 = vmul.f32 %v6514, %v6519
    %6521 = vst [vmem:[#allocation3 + $0xd0] sm:$0xff] %v6520
    %v6522 = vld [vmem:[#allocation2 + $0x360] sm:$0xff]
    %v6523 = vld [vmem:[#allocation2 + $0x368] sm:$0xff]
    %v6524 = vld [vmem:[#allocation2 + $0x370] sm:$0xff]
    %v6525 = vld [vmem:[#allocation2 + $0x378] sm:$0xff]
    %v6526 = vld [vmem:[#allocation4] sm:$0xff]
    %v6527 = vld [vmem:[#allocation4 + $0x8] sm:$0xff]
    %v6528 = vld [vmem:[#allocation4 + $0x10] sm:$0xff]
    %v6529 = vld [vmem:[#allocation4 + $0x18] sm:$0xff]
    %v6530 = vld [vmem:[#allocation4 + $0x20] sm:$0xff]
    %v6531 = vld [vmem:[#allocation4 + $0x28] sm:$0xff]
    %v6532 = vld [vmem:[#allocation4 + $0x30] sm:$0xff]
    %v6533 = vld [vmem:[#allocation4 + $0x38] sm:$0xff]
    %v6534 = vld [vmem:[#allocation4 + $0x40] sm:$0xff]
    %v6535 = vld [vmem:[#allocation4 + $0x48] sm:$0xff]
    %v6536 = vld [vmem:[#allocation4 + $0x50] sm:$0xff]
    %v6537 = vld [vmem:[#allocation4 + $0x58] sm:$0xff]
    %v6538 = vld [vmem:[#allocation4 + $0x60] sm:$0xff]
    %v6539 = vld [vmem:[#allocation4 + $0x68] sm:$0xff]
    %v6540 = vld [vmem:[#allocation4 + $0x70] sm:$0xff]
    %v6541 = vld [vmem:[#allocation4 + $0x78] sm:$0xff]
    %v6542 = vld [vmem:[#allocation4 + $0x80] sm:$0xff]
    %v6543 = vld [vmem:[#allocation4 + $0x88] sm:$0xff]
    %v6544 = vld [vmem:[#allocation4 + $0x90] sm:$0xff]
    %v6545 = vld [vmem:[#allocation4 + $0x98] sm:$0xff]
    %v6546 = vld [vmem:[#allocation4 + $0xa0] sm:$0xff]
    %v6547 = vld [vmem:[#allocation4 + $0xa8] sm:$0xff]
    %v6548 = vld [vmem:[#allocation4 + $0xb0] sm:$0xff]
    %v6549 = vld [vmem:[#allocation4 + $0xb8] sm:$0xff]
    %v6550 = vld [vmem:[#allocation4 + $0xc0] sm:$0xff]
    %v6551 = vld [vmem:[#allocation4 + $0xc8] sm:$0xff]
    %v6552 = vld [vmem:[#allocation4 + $0xd0] sm:$0xff]
    %v6553 = vld [vmem:[#allocation4 + $0xd8] sm:$0xff]
    %v6554 = vld [vmem:[#allocation4 + $0xe0] sm:$0xff]
    %v6555 = vld [vmem:[#allocation4 + $0xe8] sm:$0xff]
    %v6556 = vld [vmem:[#allocation4 + $0xf0] sm:$0xff]
    %v6557 = vld [vmem:[#allocation4 + $0xf8] sm:$0xff]
    %v6558 = vld [vmem:[#allocation4 + $0x100] sm:$0xff]
    %v6559 = vld [vmem:[#allocation4 + $0x108] sm:$0xff]
    %v6560 = vld [vmem:[#allocation4 + $0x110] sm:$0xff]
    %v6561 = vld [vmem:[#allocation4 + $0x118] sm:$0xff]
    %v6562 = vld [vmem:[#allocation4 + $0x120] sm:$0xff]
    %v6563 = vld [vmem:[#allocation4 + $0x128] sm:$0xff]
    %v6564 = vld [vmem:[#allocation4 + $0x130] sm:$0xff]
    %v6565 = vld [vmem:[#allocation4 + $0x138] sm:$0xff]
    %v6566 = vld [vmem:[#allocation4 + $0x140] sm:$0xff]
    %v6567 = vld [vmem:[#allocation4 + $0x148] sm:$0xff]
    %v6568 = vld [vmem:[#allocation4 + $0x150] sm:$0xff]
    %v6569 = vld [vmem:[#allocation4 + $0x158] sm:$0xff]
    %v6570 = vld [vmem:[#allocation4 + $0x160] sm:$0xff]
    %v6571 = vld [vmem:[#allocation4 + $0x168] sm:$0xff]
    %v6572 = vld [vmem:[#allocation4 + $0x170] sm:$0xff]
    %v6573 = vld [vmem:[#allocation4 + $0x178] sm:$0xff]
    %v6574 = vld [vmem:[#allocation4 + $0x180] sm:$0xff]
    %v6575 = vld [vmem:[#allocation4 + $0x188] sm:$0xff]
    %v6576 = vld [vmem:[#allocation4 + $0x190] sm:$0xff]
    %v6577 = vld [vmem:[#allocation4 + $0x198] sm:$0xff]
    %v6578 = vld [vmem:[#allocation4 + $0x1a0] sm:$0xff]
    %v6579 = vld [vmem:[#allocation4 + $0x1a8] sm:$0xff]
    %v6580 = vld [vmem:[#allocation4 + $0x1b0] sm:$0xff]
    %v6581 = vld [vmem:[#allocation4 + $0x1b8] sm:$0xff]
    %v6582 = vld [vmem:[#allocation4 + $0x1c0] sm:$0xff]
    %v6583 = vld [vmem:[#allocation4 + $0x1c8] sm:$0xff]
    %v6584 = vld [vmem:[#allocation4 + $0x1d0] sm:$0xff]
    %v6585 = vld [vmem:[#allocation4 + $0x1d8] sm:$0xff]
    %v6586 = vld [vmem:[#allocation4 + $0x1e0] sm:$0xff]
    %v6587 = vld [vmem:[#allocation4 + $0x1e8] sm:$0xff]
    %v6588 = vld [vmem:[#allocation4 + $0x1f0] sm:$0xff]
    %v6589 = vld [vmem:[#allocation4 + $0x1f8] sm:$0xff]
    %6590 = vmatpush.msra.mxu0 %v6586
    %6591 = vmatpush.msra.mxu0 %v6582
    %6592 = vmatpush.msra.mxu0 %v6578
    %6593 = vmatpush.msra.mxu0 %v6574
    %6594 = vmatpush.msra.mxu0 %v6570
    %6595 = vmatpush.msra.mxu0 %v6566
    %6596 = vmatpush.msra.mxu0 %v6562
    %6597 = vmatpush.msra.mxu0 %v6558
    %6598 = vmatpush.msra.mxu0 %v6554
    %6599 = vmatpush.msra.mxu0 %v6550
    %6600 = vmatpush.msra.mxu0 %v6546
    %6601 = vmatpush.msra.mxu0 %v6542
    %6602 = vmatpush.msra.mxu0 %v6538
    %6603 = vmatpush.msra.mxu0 %v6534
    %6604 = vmatpush.msra.mxu0 %v6530
    %6605 = vmatpush.msra.mxu0 %v6526
    %6606 = vmatmul.f32.gmra.mxu0 %v6520
    %v6607 = vpop.f32.mrf.mxu0
    %v6608 = vadd.f32 0.0, %v6607
    %6609 = vdwg.mxu0
    %6610 = vmatpush.msra.mxu0 %v6587
    %6611 = vmatpush.msra.mxu0 %v6583
    %6612 = vmatpush.msra.mxu0 %v6579
    %6613 = vmatpush.msra.mxu0 %v6575
    %6614 = vmatpush.msra.mxu0 %v6571
    %6615 = vmatpush.msra.mxu0 %v6567
    %6616 = vmatpush.msra.mxu0 %v6563
    %6617 = vmatpush.msra.mxu0 %v6559
    %6618 = vmatpush.msra.mxu0 %v6555
    %6619 = vmatpush.msra.mxu0 %v6551
    %6620 = vmatpush.msra.mxu0 %v6547
    %6621 = vmatpush.msra.mxu0 %v6543
    %6622 = vmatpush.msra.mxu0 %v6539
    %6623 = vmatpush.msra.mxu0 %v6535
    %6624 = vmatpush.msra.mxu0 %v6531
    %6625 = vmatpush.msra.mxu0 %v6527
    %6626 = vmatmul.f32.gmra.mxu0 %v6520
    %v6627 = vpop.f32.mrf.mxu0
    %v6628 = vadd.f32 0.0, %v6627
    %6629 = vdwg.mxu0
    %6630 = vmatpush.msra.mxu0 %v6588
    %6631 = vmatpush.msra.mxu0 %v6584
    %6632 = vmatpush.msra.mxu0 %v6580
    %6633 = vmatpush.msra.mxu0 %v6576
    %6634 = vmatpush.msra.mxu0 %v6572
    %6635 = vmatpush.msra.mxu0 %v6568
    %6636 = vmatpush.msra.mxu0 %v6564
    %6637 = vmatpush.msra.mxu0 %v6560
    %6638 = vmatpush.msra.mxu0 %v6556
    %6639 = vmatpush.msra.mxu0 %v6552
    %6640 = vmatpush.msra.mxu0 %v6548
    %6641 = vmatpush.msra.mxu0 %v6544
    %6642 = vmatpush.msra.mxu0 %v6540
    %6643 = vmatpush.msra.mxu0 %v6536
    %6644 = vmatpush.msra.mxu0 %v6532
    %6645 = vmatpush.msra.mxu0 %v6528
    %6646 = vmatmul.f32.gmra.mxu0 %v6520
    %v6647 = vpop.f32.mrf.mxu0
    %v6648 = vadd.f32 0.0, %v6647
    %6649 = vdwg.mxu0
    %6650 = vmatpush.msra.mxu0 %v6589
    %6651 = vmatpush.msra.mxu0 %v6585
    %6652 = vmatpush.msra.mxu0 %v6581
    %6653 = vmatpush.msra.mxu0 %v6577
    %6654 = vmatpush.msra.mxu0 %v6573
    %6655 = vmatpush.msra.mxu0 %v6569
    %6656 = vmatpush.msra.mxu0 %v6565
    %6657 = vmatpush.msra.mxu0 %v6561
    %6658 = vmatpush.msra.mxu0 %v6557
    %6659 = vmatpush.msra.mxu0 %v6553
    %6660 = vmatpush.msra.mxu0 %v6549
    %6661 = vmatpush.msra.mxu0 %v6545
    %6662 = vmatpush.msra.mxu0 %v6541
    %6663 = vmatpush.msra.mxu0 %v6537
    %6664 = vmatpush.msra.mxu0 %v6533
    %6665 = vmatpush.msra.mxu0 %v6529
    %6666 = vmatmul.f32.gmra.mxu0 %v6520
    %v6667 = vpop.f32.mrf.mxu0
    %v6668 = vadd.f32 0.0, %v6667
    %6669 = vdwg.mxu0
    %v6670 = vadd.f32 %v6522, %v6608
    %v6671 = vadd.f32 %v6523, %v6628
    %v6672 = vadd.f32 %v6524, %v6648
    %v6673 = vadd.f32 %v6525, %v6668
    %v6674 = vxor.u32 %v6670, 2147483648
    %v6675 = vxor.u32 %v6671, 2147483648
    %v6676 = vxor.u32 %v6672, 2147483648
    %v6677 = vmul.f32 %v6674, 1.442695
    %v6678 = vpow.pop %v6677
    %v6679 = vmul.f32 %v6675, 1.442695
    %v6680 = vpow.pop %v6679
    %v6681 = vmul.f32 %v6676, 1.442695
    %v6682 = vpow.pop %v6681
    %v6683 = vadd.f32 %v6678, 1.0
    %v6684 = vadd.f32 %v6680, 1.0
    %v6685 = vadd.f32 %v6682, 1.0
    %v6686 = vrcp.pop %v6683
    %v6687 = vmul.f32 %v6683, %v6686
    %v6688 = vsub.f32 1.0, %v6687
    %v6689 = vmul.f32 %v6686, %v6688
    %v6690 = vadd.f32 %v6686, %v6689
    %vm6691 = vweird.f32 %v6683
    %vm6692 = vweird.f32 %v6686
    %vm6693 = vmor %vm6691, %vm6692
    %v6694 = vsel %vm6693, %v6686, %v6690
    %v6695 = vand.u32 2147483647, %v6683
    %vm6696 = vcmp.eq.f32.partialorder %v6695, 8.507059e+37
    %v6697 = vand.u32 %v6683, 2147483648
    %v6698 = vor.u32 1.1754944e-38, %v6697
    %v6699 = vsel %vm6696, %v6698, %v6694
    %v6700 = vmul.f32 1.0, %v6699
    %v6701 = vrcp.pop %v6684
    %v6702 = vmul.f32 %v6684, %v6701
    %v6703 = vsub.f32 1.0, %v6702
    %v6704 = vmul.f32 %v6701, %v6703
    %v6705 = vadd.f32 %v6701, %v6704
    %vm6706 = vweird.f32 %v6684
    %vm6707 = vweird.f32 %v6701
    %vm6708 = vmor %vm6706, %vm6707
    %v6709 = vsel %vm6708, %v6701, %v6705
    %v6710 = vand.u32 2147483647, %v6684
    %vm6711 = vcmp.eq.f32.partialorder %v6710, 8.507059e+37
    %v6712 = vand.u32 %v6684, 2147483648
    %v6713 = vor.u32 1.1754944e-38, %v6712
    %v6714 = vsel %vm6711, %v6713, %v6709
    %v6715 = vmul.f32 1.0, %v6714
    %v6716 = vrcp.pop %v6685
    %v6717 = vmul.f32 %v6685, %v6716
    %v6718 = vsub.f32 1.0, %v6717
    %v6719 = vmul.f32 %v6716, %v6718
    %v6720 = vadd.f32 %v6716, %v6719
    %vm6721 = vweird.f32 %v6685
    %vm6722 = vweird.f32 %v6716
    %vm6723 = vmor %vm6721, %vm6722
    %v6724 = vsel %vm6723, %v6716, %v6720
    %v6725 = vand.u32 2147483647, %v6685
    %vm6726 = vcmp.eq.f32.partialorder %v6725, 8.507059e+37
    %v6727 = vand.u32 %v6685, 2147483648
    %v6728 = vor.u32 1.1754944e-38, %v6727
    %v6729 = vsel %vm6726, %v6728, %v6724
    %v6730 = vmul.f32 1.0, %v6729
    %v6731 = vtanh.pop %v6673
    %v6732 = vmul.f32 %v6715, %v6518
    %v6733 = vmul.f32 %v6700, %v6731
    %v6734 = vadd.f32 %v6732, %v6733
    %v6735 = vtanh.pop %v6734
    %v6736 = vmul.f32 %v6730, %v6735
    %6737 = vst [vmem:[#allocation3 + $0xd8] sm:$0xff] %v6736
    %v6738 = vld [vmem:[#allocation2 + $0x380] sm:$0xff]
    %v6739 = vld [vmem:[#allocation2 + $0x388] sm:$0xff]
    %v6740 = vld [vmem:[#allocation2 + $0x390] sm:$0xff]
    %v6741 = vld [vmem:[#allocation2 + $0x398] sm:$0xff]
    %v6742 = vld [vmem:[#allocation4] sm:$0xff]
    %v6743 = vld [vmem:[#allocation4 + $0x8] sm:$0xff]
    %v6744 = vld [vmem:[#allocation4 + $0x10] sm:$0xff]
    %v6745 = vld [vmem:[#allocation4 + $0x18] sm:$0xff]
    %v6746 = vld [vmem:[#allocation4 + $0x20] sm:$0xff]
    %v6747 = vld [vmem:[#allocation4 + $0x28] sm:$0xff]
    %v6748 = vld [vmem:[#allocation4 + $0x30] sm:$0xff]
    %v6749 = vld [vmem:[#allocation4 + $0x38] sm:$0xff]
    %v6750 = vld [vmem:[#allocation4 + $0x40] sm:$0xff]
    %v6751 = vld [vmem:[#allocation4 + $0x48] sm:$0xff]
    %v6752 = vld [vmem:[#allocation4 + $0x50] sm:$0xff]
    %v6753 = vld [vmem:[#allocation4 + $0x58] sm:$0xff]
    %v6754 = vld [vmem:[#allocation4 + $0x60] sm:$0xff]
    %v6755 = vld [vmem:[#allocation4 + $0x68] sm:$0xff]
    %v6756 = vld [vmem:[#allocation4 + $0x70] sm:$0xff]
    %v6757 = vld [vmem:[#allocation4 + $0x78] sm:$0xff]
    %v6758 = vld [vmem:[#allocation4 + $0x80] sm:$0xff]
    %v6759 = vld [vmem:[#allocation4 + $0x88] sm:$0xff]
    %v6760 = vld [vmem:[#allocation4 + $0x90] sm:$0xff]
    %v6761 = vld [vmem:[#allocation4 + $0x98] sm:$0xff]
    %v6762 = vld [vmem:[#allocation4 + $0xa0] sm:$0xff]
    %v6763 = vld [vmem:[#allocation4 + $0xa8] sm:$0xff]
    %v6764 = vld [vmem:[#allocation4 + $0xb0] sm:$0xff]
    %v6765 = vld [vmem:[#allocation4 + $0xb8] sm:$0xff]
    %v6766 = vld [vmem:[#allocation4 + $0xc0] sm:$0xff]
    %v6767 = vld [vmem:[#allocation4 + $0xc8] sm:$0xff]
    %v6768 = vld [vmem:[#allocation4 + $0xd0] sm:$0xff]
    %v6769 = vld [vmem:[#allocation4 + $0xd8] sm:$0xff]
    %v6770 = vld [vmem:[#allocation4 + $0xe0] sm:$0xff]
    %v6771 = vld [vmem:[#allocation4 + $0xe8] sm:$0xff]
    %v6772 = vld [vmem:[#allocation4 + $0xf0] sm:$0xff]
    %v6773 = vld [vmem:[#allocation4 + $0xf8] sm:$0xff]
    %v6774 = vld [vmem:[#allocation4 + $0x100] sm:$0xff]
    %v6775 = vld [vmem:[#allocation4 + $0x108] sm:$0xff]
    %v6776 = vld [vmem:[#allocation4 + $0x110] sm:$0xff]
    %v6777 = vld [vmem:[#allocation4 + $0x118] sm:$0xff]
    %v6778 = vld [vmem:[#allocation4 + $0x120] sm:$0xff]
    %v6779 = vld [vmem:[#allocation4 + $0x128] sm:$0xff]
    %v6780 = vld [vmem:[#allocation4 + $0x130] sm:$0xff]
    %v6781 = vld [vmem:[#allocation4 + $0x138] sm:$0xff]
    %v6782 = vld [vmem:[#allocation4 + $0x140] sm:$0xff]
    %v6783 = vld [vmem:[#allocation4 + $0x148] sm:$0xff]
    %v6784 = vld [vmem:[#allocation4 + $0x150] sm:$0xff]
    %v6785 = vld [vmem:[#allocation4 + $0x158] sm:$0xff]
    %v6786 = vld [vmem:[#allocation4 + $0x160] sm:$0xff]
    %v6787 = vld [vmem:[#allocation4 + $0x168] sm:$0xff]
    %v6788 = vld [vmem:[#allocation4 + $0x170] sm:$0xff]
    %v6789 = vld [vmem:[#allocation4 + $0x178] sm:$0xff]
    %v6790 = vld [vmem:[#allocation4 + $0x180] sm:$0xff]
    %v6791 = vld [vmem:[#allocation4 + $0x188] sm:$0xff]
    %v6792 = vld [vmem:[#allocation4 + $0x190] sm:$0xff]
    %v6793 = vld [vmem:[#allocation4 + $0x198] sm:$0xff]
    %v6794 = vld [vmem:[#allocation4 + $0x1a0] sm:$0xff]
    %v6795 = vld [vmem:[#allocation4 + $0x1a8] sm:$0xff]
    %v6796 = vld [vmem:[#allocation4 + $0x1b0] sm:$0xff]
    %v6797 = vld [vmem:[#allocation4 + $0x1b8] sm:$0xff]
    %v6798 = vld [vmem:[#allocation4 + $0x1c0] sm:$0xff]
    %v6799 = vld [vmem:[#allocation4 + $0x1c8] sm:$0xff]
    %v6800 = vld [vmem:[#allocation4 + $0x1d0] sm:$0xff]
    %v6801 = vld [vmem:[#allocation4 + $0x1d8] sm:$0xff]
    %v6802 = vld [vmem:[#allocation4 + $0x1e0] sm:$0xff]
    %v6803 = vld [vmem:[#allocation4 + $0x1e8] sm:$0xff]
    %v6804 = vld [vmem:[#allocation4 + $0x1f0] sm:$0xff]
    %v6805 = vld [vmem:[#allocation4 + $0x1f8] sm:$0xff]
    %6806 = vmatpush.msra.mxu0 %v6802
    %6807 = vmatpush.msra.mxu0 %v6798
    %6808 = vmatpush.msra.mxu0 %v6794
    %6809 = vmatpush.msra.mxu0 %v6790
    %6810 = vmatpush.msra.mxu0 %v6786
    %6811 = vmatpush.msra.mxu0 %v6782
    %6812 = vmatpush.msra.mxu0 %v6778
    %6813 = vmatpush.msra.mxu0 %v6774
    %6814 = vmatpush.msra.mxu0 %v6770
    %6815 = vmatpush.msra.mxu0 %v6766
    %6816 = vmatpush.msra.mxu0 %v6762
    %6817 = vmatpush.msra.mxu0 %v6758
    %6818 = vmatpush.msra.mxu0 %v6754
    %6819 = vmatpush.msra.mxu0 %v6750
    %6820 = vmatpush.msra.mxu0 %v6746
    %6821 = vmatpush.msra.mxu0 %v6742
    %6822 = vmatmul.f32.gmra.mxu0 %v6736
    %v6823 = vpop.f32.mrf.mxu0
    %v6824 = vadd.f32 0.0, %v6823
    %6825 = vdwg.mxu0
    %6826 = vmatpush.msra.mxu0 %v6803
    %6827 = vmatpush.msra.mxu0 %v6799
    %6828 = vmatpush.msra.mxu0 %v6795
    %6829 = vmatpush.msra.mxu0 %v6791
    %6830 = vmatpush.msra.mxu0 %v6787
    %6831 = vmatpush.msra.mxu0 %v6783
    %6832 = vmatpush.msra.mxu0 %v6779
    %6833 = vmatpush.msra.mxu0 %v6775
    %6834 = vmatpush.msra.mxu0 %v6771
    %6835 = vmatpush.msra.mxu0 %v6767
    %6836 = vmatpush.msra.mxu0 %v6763
    %6837 = vmatpush.msra.mxu0 %v6759
    %6838 = vmatpush.msra.mxu0 %v6755
    %6839 = vmatpush.msra.mxu0 %v6751
    %6840 = vmatpush.msra.mxu0 %v6747
    %6841 = vmatpush.msra.mxu0 %v6743
    %6842 = vmatmul.f32.gmra.mxu0 %v6736
    %v6843 = vpop.f32.mrf.mxu0
    %v6844 = vadd.f32 0.0, %v6843
    %6845 = vdwg.mxu0
    %6846 = vmatpush.msra.mxu0 %v6804
    %6847 = vmatpush.msra.mxu0 %v6800
    %6848 = vmatpush.msra.mxu0 %v6796
    %6849 = vmatpush.msra.mxu0 %v6792
    %6850 = vmatpush.msra.mxu0 %v6788
    %6851 = vmatpush.msra.mxu0 %v6784
    %6852 = vmatpush.msra.mxu0 %v6780
    %6853 = vmatpush.msra.mxu0 %v6776
    %6854 = vmatpush.msra.mxu0 %v6772
    %6855 = vmatpush.msra.mxu0 %v6768
    %6856 = vmatpush.msra.mxu0 %v6764
    %6857 = vmatpush.msra.mxu0 %v6760
    %6858 = vmatpush.msra.mxu0 %v6756
    %6859 = vmatpush.msra.mxu0 %v6752
    %6860 = vmatpush.msra.mxu0 %v6748
    %6861 = vmatpush.msra.mxu0 %v6744
    %6862 = vmatmul.f32.gmra.mxu0 %v6736
    %v6863 = vpop.f32.mrf.mxu0
    %v6864 = vadd.f32 0.0, %v6863
    %6865 = vdwg.mxu0
    %6866 = vmatpush.msra.mxu0 %v6805
    %6867 = vmatpush.msra.mxu0 %v6801
    %6868 = vmatpush.msra.mxu0 %v6797
    %6869 = vmatpush.msra.mxu0 %v6793
    %6870 = vmatpush.msra.mxu0 %v6789
    %6871 = vmatpush.msra.mxu0 %v6785
    %6872 = vmatpush.msra.mxu0 %v6781
    %6873 = vmatpush.msra.mxu0 %v6777
    %6874 = vmatpush.msra.mxu0 %v6773
    %6875 = vmatpush.msra.mxu0 %v6769
    %6876 = vmatpush.msra.mxu0 %v6765
    %6877 = vmatpush.msra.mxu0 %v6761
    %6878 = vmatpush.msra.mxu0 %v6757
    %6879 = vmatpush.msra.mxu0 %v6753
    %6880 = vmatpush.msra.mxu0 %v6749
    %6881 = vmatpush.msra.mxu0 %v6745
    %6882 = vmatmul.f32.gmra.mxu0 %v6736
    %v6883 = vpop.f32.mrf.mxu0
    %v6884 = vadd.f32 0.0, %v6883
    %6885 = vdwg.mxu0
    %v6886 = vadd.f32 %v6738, %v6824
    %v6887 = vadd.f32 %v6739, %v6844
    %v6888 = vadd.f32 %v6740, %v6864
    %v6889 = vadd.f32 %v6741, %v6884
    %v6890 = vxor.u32 %v6886, 2147483648
    %v6891 = vxor.u32 %v6887, 2147483648
    %v6892 = vxor.u32 %v6888, 2147483648
    %v6893 = vmul.f32 %v6890, 1.442695
    %v6894 = vpow.pop %v6893
    %v6895 = vmul.f32 %v6891, 1.442695
    %v6896 = vpow.pop %v6895
    %v6897 = vmul.f32 %v6892, 1.442695
    %v6898 = vpow.pop %v6897
    %v6899 = vadd.f32 %v6894, 1.0
    %v6900 = vadd.f32 %v6896, 1.0
    %v6901 = vadd.f32 %v6898, 1.0
    %v6902 = vrcp.pop %v6899
    %v6903 = vmul.f32 %v6899, %v6902
    %v6904 = vsub.f32 1.0, %v6903
    %v6905 = vmul.f32 %v6902, %v6904
    %v6906 = vadd.f32 %v6902, %v6905
    %vm6907 = vweird.f32 %v6899
    %vm6908 = vweird.f32 %v6902
    %vm6909 = vmor %vm6907, %vm6908
    %v6910 = vsel %vm6909, %v6902, %v6906
    %v6911 = vand.u32 2147483647, %v6899
    %vm6912 = vcmp.eq.f32.partialorder %v6911, 8.507059e+37
    %v6913 = vand.u32 %v6899, 2147483648
    %v6914 = vor.u32 1.1754944e-38, %v6913
    %v6915 = vsel %vm6912, %v6914, %v6910
    %v6916 = vmul.f32 1.0, %v6915
    %v6917 = vrcp.pop %v6900
    %v6918 = vmul.f32 %v6900, %v6917
    %v6919 = vsub.f32 1.0, %v6918
    %v6920 = vmul.f32 %v6917, %v6919
    %v6921 = vadd.f32 %v6917, %v6920
    %vm6922 = vweird.f32 %v6900
    %vm6923 = vweird.f32 %v6917
    %vm6924 = vmor %vm6922, %vm6923
    %v6925 = vsel %vm6924, %v6917, %v6921
    %v6926 = vand.u32 2147483647, %v6900
    %vm6927 = vcmp.eq.f32.partialorder %v6926, 8.507059e+37
    %v6928 = vand.u32 %v6900, 2147483648
    %v6929 = vor.u32 1.1754944e-38, %v6928
    %v6930 = vsel %vm6927, %v6929, %v6925
    %v6931 = vmul.f32 1.0, %v6930
    %v6932 = vrcp.pop %v6901
    %v6933 = vmul.f32 %v6901, %v6932
    %v6934 = vsub.f32 1.0, %v6933
    %v6935 = vmul.f32 %v6932, %v6934
    %v6936 = vadd.f32 %v6932, %v6935
    %vm6937 = vweird.f32 %v6901
    %vm6938 = vweird.f32 %v6932
    %vm6939 = vmor %vm6937, %vm6938
    %v6940 = vsel %vm6939, %v6932, %v6936
    %v6941 = vand.u32 2147483647, %v6901
    %vm6942 = vcmp.eq.f32.partialorder %v6941, 8.507059e+37
    %v6943 = vand.u32 %v6901, 2147483648
    %v6944 = vor.u32 1.1754944e-38, %v6943
    %v6945 = vsel %vm6942, %v6944, %v6940
    %v6946 = vmul.f32 1.0, %v6945
    %v6947 = vtanh.pop %v6889
    %v6948 = vmul.f32 %v6931, %v6734
    %v6949 = vmul.f32 %v6916, %v6947
    %v6950 = vadd.f32 %v6948, %v6949
    %v6951 = vtanh.pop %v6950
    %v6952 = vmul.f32 %v6946, %v6951
    %6953 = vst [vmem:[#allocation3 + $0xe0] sm:$0xff] %v6952
    %v6954 = vld [vmem:[#allocation2 + $0x3a0] sm:$0xff]
    %v6955 = vld [vmem:[#allocation2 + $0x3a8] sm:$0xff]
    %v6956 = vld [vmem:[#allocation2 + $0x3b0] sm:$0xff]
    %v6957 = vld [vmem:[#allocation2 + $0x3b8] sm:$0xff]
    %v6958 = vld [vmem:[#allocation4] sm:$0xff]
    %v6959 = vld [vmem:[#allocation4 + $0x8] sm:$0xff]
    %v6960 = vld [vmem:[#allocation4 + $0x10] sm:$0xff]
    %v6961 = vld [vmem:[#allocation4 + $0x18] sm:$0xff]
    %v6962 = vld [vmem:[#allocation4 + $0x20] sm:$0xff]
    %v6963 = vld [vmem:[#allocation4 + $0x28] sm:$0xff]
    %v6964 = vld [vmem:[#allocation4 + $0x30] sm:$0xff]
    %v6965 = vld [vmem:[#allocation4 + $0x38] sm:$0xff]
    %v6966 = vld [vmem:[#allocation4 + $0x40] sm:$0xff]
    %v6967 = vld [vmem:[#allocation4 + $0x48] sm:$0xff]
    %v6968 = vld [vmem:[#allocation4 + $0x50] sm:$0xff]
    %v6969 = vld [vmem:[#allocation4 + $0x58] sm:$0xff]
    %v6970 = vld [vmem:[#allocation4 + $0x60] sm:$0xff]
    %v6971 = vld [vmem:[#allocation4 + $0x68] sm:$0xff]
    %v6972 = vld [vmem:[#allocation4 + $0x70] sm:$0xff]
    %v6973 = vld [vmem:[#allocation4 + $0x78] sm:$0xff]
    %v6974 = vld [vmem:[#allocation4 + $0x80] sm:$0xff]
    %v6975 = vld [vmem:[#allocation4 + $0x88] sm:$0xff]
    %v6976 = vld [vmem:[#allocation4 + $0x90] sm:$0xff]
    %v6977 = vld [vmem:[#allocation4 + $0x98] sm:$0xff]
    %v6978 = vld [vmem:[#allocation4 + $0xa0] sm:$0xff]
    %v6979 = vld [vmem:[#allocation4 + $0xa8] sm:$0xff]
    %v6980 = vld [vmem:[#allocation4 + $0xb0] sm:$0xff]
    %v6981 = vld [vmem:[#allocation4 + $0xb8] sm:$0xff]
    %v6982 = vld [vmem:[#allocation4 + $0xc0] sm:$0xff]
    %v6983 = vld [vmem:[#allocation4 + $0xc8] sm:$0xff]
    %v6984 = vld [vmem:[#allocation4 + $0xd0] sm:$0xff]
    %v6985 = vld [vmem:[#allocation4 + $0xd8] sm:$0xff]
    %v6986 = vld [vmem:[#allocation4 + $0xe0] sm:$0xff]
    %v6987 = vld [vmem:[#allocation4 + $0xe8] sm:$0xff]
    %v6988 = vld [vmem:[#allocation4 + $0xf0] sm:$0xff]
    %v6989 = vld [vmem:[#allocation4 + $0xf8] sm:$0xff]
    %v6990 = vld [vmem:[#allocation4 + $0x100] sm:$0xff]
    %v6991 = vld [vmem:[#allocation4 + $0x108] sm:$0xff]
    %v6992 = vld [vmem:[#allocation4 + $0x110] sm:$0xff]
    %v6993 = vld [vmem:[#allocation4 + $0x118] sm:$0xff]
    %v6994 = vld [vmem:[#allocation4 + $0x120] sm:$0xff]
    %v6995 = vld [vmem:[#allocation4 + $0x128] sm:$0xff]
    %v6996 = vld [vmem:[#allocation4 + $0x130] sm:$0xff]
    %v6997 = vld [vmem:[#allocation4 + $0x138] sm:$0xff]
    %v6998 = vld [vmem:[#allocation4 + $0x140] sm:$0xff]
    %v6999 = vld [vmem:[#allocation4 + $0x148] sm:$0xff]
    %v7000 = vld [vmem:[#allocation4 + $0x150] sm:$0xff]
    %v7001 = vld [vmem:[#allocation4 + $0x158] sm:$0xff]
    %v7002 = vld [vmem:[#allocation4 + $0x160] sm:$0xff]
    %v7003 = vld [vmem:[#allocation4 + $0x168] sm:$0xff]
    %v7004 = vld [vmem:[#allocation4 + $0x170] sm:$0xff]
    %v7005 = vld [vmem:[#allocation4 + $0x178] sm:$0xff]
    %v7006 = vld [vmem:[#allocation4 + $0x180] sm:$0xff]
    %v7007 = vld [vmem:[#allocation4 + $0x188] sm:$0xff]
    %v7008 = vld [vmem:[#allocation4 + $0x190] sm:$0xff]
    %v7009 = vld [vmem:[#allocation4 + $0x198] sm:$0xff]
    %v7010 = vld [vmem:[#allocation4 + $0x1a0] sm:$0xff]
    %v7011 = vld [vmem:[#allocation4 + $0x1a8] sm:$0xff]
    %v7012 = vld [vmem:[#allocation4 + $0x1b0] sm:$0xff]
    %v7013 = vld [vmem:[#allocation4 + $0x1b8] sm:$0xff]
    %v7014 = vld [vmem:[#allocation4 + $0x1c0] sm:$0xff]
    %v7015 = vld [vmem:[#allocation4 + $0x1c8] sm:$0xff]
    %v7016 = vld [vmem:[#allocation4 + $0x1d0] sm:$0xff]
    %v7017 = vld [vmem:[#allocation4 + $0x1d8] sm:$0xff]
    %v7018 = vld [vmem:[#allocation4 + $0x1e0] sm:$0xff]
    %v7019 = vld [vmem:[#allocation4 + $0x1e8] sm:$0xff]
    %v7020 = vld [vmem:[#allocation4 + $0x1f0] sm:$0xff]
    %v7021 = vld [vmem:[#allocation4 + $0x1f8] sm:$0xff]
    %7022 = vmatpush.msra.mxu0 %v7018
    %7023 = vmatpush.msra.mxu0 %v7014
    %7024 = vmatpush.msra.mxu0 %v7010
    %7025 = vmatpush.msra.mxu0 %v7006
    %7026 = vmatpush.msra.mxu0 %v7002
    %7027 = vmatpush.msra.mxu0 %v6998
    %7028 = vmatpush.msra.mxu0 %v6994
    %7029 = vmatpush.msra.mxu0 %v6990
    %7030 = vmatpush.msra.mxu0 %v6986
    %7031 = vmatpush.msra.mxu0 %v6982
    %7032 = vmatpush.msra.mxu0 %v6978
    %7033 = vmatpush.msra.mxu0 %v6974
    %7034 = vmatpush.msra.mxu0 %v6970
    %7035 = vmatpush.msra.mxu0 %v6966
    %7036 = vmatpush.msra.mxu0 %v6962
    %7037 = vmatpush.msra.mxu0 %v6958
    %7038 = vmatmul.f32.gmra.mxu0 %v6952
    %v7039 = vpop.f32.mrf.mxu0
    %v7040 = vadd.f32 0.0, %v7039
    %7041 = vdwg.mxu0
    %7042 = vmatpush.msra.mxu0 %v7019
    %7043 = vmatpush.msra.mxu0 %v7015
    %7044 = vmatpush.msra.mxu0 %v7011
    %7045 = vmatpush.msra.mxu0 %v7007
    %7046 = vmatpush.msra.mxu0 %v7003
    %7047 = vmatpush.msra.mxu0 %v6999
    %7048 = vmatpush.msra.mxu0 %v6995
    %7049 = vmatpush.msra.mxu0 %v6991
    %7050 = vmatpush.msra.mxu0 %v6987
    %7051 = vmatpush.msra.mxu0 %v6983
    %7052 = vmatpush.msra.mxu0 %v6979
    %7053 = vmatpush.msra.mxu0 %v6975
    %7054 = vmatpush.msra.mxu0 %v6971
    %7055 = vmatpush.msra.mxu0 %v6967
    %7056 = vmatpush.msra.mxu0 %v6963
    %7057 = vmatpush.msra.mxu0 %v6959
    %7058 = vmatmul.f32.gmra.mxu0 %v6952
    %v7059 = vpop.f32.mrf.mxu0
    %v7060 = vadd.f32 0.0, %v7059
    %7061 = vdwg.mxu0
    %7062 = vmatpush.msra.mxu0 %v7020
    %7063 = vmatpush.msra.mxu0 %v7016
    %7064 = vmatpush.msra.mxu0 %v7012
    %7065 = vmatpush.msra.mxu0 %v7008
    %7066 = vmatpush.msra.mxu0 %v7004
    %7067 = vmatpush.msra.mxu0 %v7000
    %7068 = vmatpush.msra.mxu0 %v6996
    %7069 = vmatpush.msra.mxu0 %v6992
    %7070 = vmatpush.msra.mxu0 %v6988
    %7071 = vmatpush.msra.mxu0 %v6984
    %7072 = vmatpush.msra.mxu0 %v6980
    %7073 = vmatpush.msra.mxu0 %v6976
    %7074 = vmatpush.msra.mxu0 %v6972
    %7075 = vmatpush.msra.mxu0 %v6968
    %7076 = vmatpush.msra.mxu0 %v6964
    %7077 = vmatpush.msra.mxu0 %v6960
    %7078 = vmatmul.f32.gmra.mxu0 %v6952
    %v7079 = vpop.f32.mrf.mxu0
    %v7080 = vadd.f32 0.0, %v7079
    %7081 = vdwg.mxu0
    %7082 = vmatpush.msra.mxu0 %v7021
    %7083 = vmatpush.msra.mxu0 %v7017
    %7084 = vmatpush.msra.mxu0 %v7013
    %7085 = vmatpush.msra.mxu0 %v7009
    %7086 = vmatpush.msra.mxu0 %v7005
    %7087 = vmatpush.msra.mxu0 %v7001
    %7088 = vmatpush.msra.mxu0 %v6997
    %7089 = vmatpush.msra.mxu0 %v6993
    %7090 = vmatpush.msra.mxu0 %v6989
    %7091 = vmatpush.msra.mxu0 %v6985
    %7092 = vmatpush.msra.mxu0 %v6981
    %7093 = vmatpush.msra.mxu0 %v6977
    %7094 = vmatpush.msra.mxu0 %v6973
    %7095 = vmatpush.msra.mxu0 %v6969
    %7096 = vmatpush.msra.mxu0 %v6965
    %7097 = vmatpush.msra.mxu0 %v6961
    %7098 = vmatmul.f32.gmra.mxu0 %v6952
    %v7099 = vpop.f32.mrf.mxu0
    %v7100 = vadd.f32 0.0, %v7099
    %7101 = vdwg.mxu0
    %v7102 = vadd.f32 %v6954, %v7040
    %v7103 = vadd.f32 %v6955, %v7060
    %v7104 = vadd.f32 %v6956, %v7080
    %v7105 = vadd.f32 %v6957, %v7100
    %v7106 = vxor.u32 %v7102, 2147483648
    %v7107 = vxor.u32 %v7103, 2147483648
    %v7108 = vxor.u32 %v7104, 2147483648
    %v7109 = vmul.f32 %v7106, 1.442695
    %v7110 = vpow.pop %v7109
    %v7111 = vmul.f32 %v7107, 1.442695
    %v7112 = vpow.pop %v7111
    %v7113 = vmul.f32 %v7108, 1.442695
    %v7114 = vpow.pop %v7113
    %v7115 = vadd.f32 %v7110, 1.0
    %v7116 = vadd.f32 %v7112, 1.0
    %v7117 = vadd.f32 %v7114, 1.0
    %v7118 = vrcp.pop %v7115
    %v7119 = vmul.f32 %v7115, %v7118
    %v7120 = vsub.f32 1.0, %v7119
    %v7121 = vmul.f32 %v7118, %v7120
    %v7122 = vadd.f32 %v7118, %v7121
    %vm7123 = vweird.f32 %v7115
    %vm7124 = vweird.f32 %v7118
    %vm7125 = vmor %vm7123, %vm7124
    %v7126 = vsel %vm7125, %v7118, %v7122
    %v7127 = vand.u32 2147483647, %v7115
    %vm7128 = vcmp.eq.f32.partialorder %v7127, 8.507059e+37
    %v7129 = vand.u32 %v7115, 2147483648
    %v7130 = vor.u32 1.1754944e-38, %v7129
    %v7131 = vsel %vm7128, %v7130, %v7126
    %v7132 = vmul.f32 1.0, %v7131
    %v7133 = vrcp.pop %v7116
    %v7134 = vmul.f32 %v7116, %v7133
    %v7135 = vsub.f32 1.0, %v7134
    %v7136 = vmul.f32 %v7133, %v7135
    %v7137 = vadd.f32 %v7133, %v7136
    %vm7138 = vweird.f32 %v7116
    %vm7139 = vweird.f32 %v7133
    %vm7140 = vmor %vm7138, %vm7139
    %v7141 = vsel %vm7140, %v7133, %v7137
    %v7142 = vand.u32 2147483647, %v7116
    %vm7143 = vcmp.eq.f32.partialorder %v7142, 8.507059e+37
    %v7144 = vand.u32 %v7116, 2147483648
    %v7145 = vor.u32 1.1754944e-38, %v7144
    %v7146 = vsel %vm7143, %v7145, %v7141
    %v7147 = vmul.f32 1.0, %v7146
    %v7148 = vrcp.pop %v7117
    %v7149 = vmul.f32 %v7117, %v7148
    %v7150 = vsub.f32 1.0, %v7149
    %v7151 = vmul.f32 %v7148, %v7150
    %v7152 = vadd.f32 %v7148, %v7151
    %vm7153 = vweird.f32 %v7117
    %vm7154 = vweird.f32 %v7148
    %vm7155 = vmor %vm7153, %vm7154
    %v7156 = vsel %vm7155, %v7148, %v7152
    %v7157 = vand.u32 2147483647, %v7117
    %vm7158 = vcmp.eq.f32.partialorder %v7157, 8.507059e+37
    %v7159 = vand.u32 %v7117, 2147483648
    %v7160 = vor.u32 1.1754944e-38, %v7159
    %v7161 = vsel %vm7158, %v7160, %v7156
    %v7162 = vmul.f32 1.0, %v7161
    %v7163 = vtanh.pop %v7105
    %v7164 = vmul.f32 %v7147, %v6950
    %v7165 = vmul.f32 %v7132, %v7163
    %v7166 = vadd.f32 %v7164, %v7165
    %v7167 = vtanh.pop %v7166
    %v7168 = vmul.f32 %v7162, %v7167
    %7169 = vst [vmem:[#allocation3 + $0xe8] sm:$0xff] %v7168
    %v7170 = vld [vmem:[#allocation2 + $0x3c0] sm:$0xff]
    %v7171 = vld [vmem:[#allocation2 + $0x3c8] sm:$0xff]
    %v7172 = vld [vmem:[#allocation2 + $0x3d0] sm:$0xff]
    %v7173 = vld [vmem:[#allocation2 + $0x3d8] sm:$0xff]
    %v7174 = vld [vmem:[#allocation4] sm:$0xff]
    %v7175 = vld [vmem:[#allocation4 + $0x8] sm:$0xff]
    %v7176 = vld [vmem:[#allocation4 + $0x10] sm:$0xff]
    %v7177 = vld [vmem:[#allocation4 + $0x18] sm:$0xff]
    %v7178 = vld [vmem:[#allocation4 + $0x20] sm:$0xff]
    %v7179 = vld [vmem:[#allocation4 + $0x28] sm:$0xff]
    %v7180 = vld [vmem:[#allocation4 + $0x30] sm:$0xff]
    %v7181 = vld [vmem:[#allocation4 + $0x38] sm:$0xff]
    %v7182 = vld [vmem:[#allocation4 + $0x40] sm:$0xff]
    %v7183 = vld [vmem:[#allocation4 + $0x48] sm:$0xff]
    %v7184 = vld [vmem:[#allocation4 + $0x50] sm:$0xff]
    %v7185 = vld [vmem:[#allocation4 + $0x58] sm:$0xff]
    %v7186 = vld [vmem:[#allocation4 + $0x60] sm:$0xff]
    %v7187 = vld [vmem:[#allocation4 + $0x68] sm:$0xff]
    %v7188 = vld [vmem:[#allocation4 + $0x70] sm:$0xff]
    %v7189 = vld [vmem:[#allocation4 + $0x78] sm:$0xff]
    %v7190 = vld [vmem:[#allocation4 + $0x80] sm:$0xff]
    %v7191 = vld [vmem:[#allocation4 + $0x88] sm:$0xff]
    %v7192 = vld [vmem:[#allocation4 + $0x90] sm:$0xff]
    %v7193 = vld [vmem:[#allocation4 + $0x98] sm:$0xff]
    %v7194 = vld [vmem:[#allocation4 + $0xa0] sm:$0xff]
    %v7195 = vld [vmem:[#allocation4 + $0xa8] sm:$0xff]
    %v7196 = vld [vmem:[#allocation4 + $0xb0] sm:$0xff]
    %v7197 = vld [vmem:[#allocation4 + $0xb8] sm:$0xff]
    %v7198 = vld [vmem:[#allocation4 + $0xc0] sm:$0xff]
    %v7199 = vld [vmem:[#allocation4 + $0xc8] sm:$0xff]
    %v7200 = vld [vmem:[#allocation4 + $0xd0] sm:$0xff]
    %v7201 = vld [vmem:[#allocation4 + $0xd8] sm:$0xff]
    %v7202 = vld [vmem:[#allocation4 + $0xe0] sm:$0xff]
    %v7203 = vld [vmem:[#allocation4 + $0xe8] sm:$0xff]
    %v7204 = vld [vmem:[#allocation4 + $0xf0] sm:$0xff]
    %v7205 = vld [vmem:[#allocation4 + $0xf8] sm:$0xff]
    %v7206 = vld [vmem:[#allocation4 + $0x100] sm:$0xff]
    %v7207 = vld [vmem:[#allocation4 + $0x108] sm:$0xff]
    %v7208 = vld [vmem:[#allocation4 + $0x110] sm:$0xff]
    %v7209 = vld [vmem:[#allocation4 + $0x118] sm:$0xff]
    %v7210 = vld [vmem:[#allocation4 + $0x120] sm:$0xff]
    %v7211 = vld [vmem:[#allocation4 + $0x128] sm:$0xff]
    %v7212 = vld [vmem:[#allocation4 + $0x130] sm:$0xff]
    %v7213 = vld [vmem:[#allocation4 + $0x138] sm:$0xff]
    %v7214 = vld [vmem:[#allocation4 + $0x140] sm:$0xff]
    %v7215 = vld [vmem:[#allocation4 + $0x148] sm:$0xff]
    %v7216 = vld [vmem:[#allocation4 + $0x150] sm:$0xff]
    %v7217 = vld [vmem:[#allocation4 + $0x158] sm:$0xff]
    %v7218 = vld [vmem:[#allocation4 + $0x160] sm:$0xff]
    %v7219 = vld [vmem:[#allocation4 + $0x168] sm:$0xff]
    %v7220 = vld [vmem:[#allocation4 + $0x170] sm:$0xff]
    %v7221 = vld [vmem:[#allocation4 + $0x178] sm:$0xff]
    %v7222 = vld [vmem:[#allocation4 + $0x180] sm:$0xff]
    %v7223 = vld [vmem:[#allocation4 + $0x188] sm:$0xff]
    %v7224 = vld [vmem:[#allocation4 + $0x190] sm:$0xff]
    %v7225 = vld [vmem:[#allocation4 + $0x198] sm:$0xff]
    %v7226 = vld [vmem:[#allocation4 + $0x1a0] sm:$0xff]
    %v7227 = vld [vmem:[#allocation4 + $0x1a8] sm:$0xff]
    %v7228 = vld [vmem:[#allocation4 + $0x1b0] sm:$0xff]
    %v7229 = vld [vmem:[#allocation4 + $0x1b8] sm:$0xff]
    %v7230 = vld [vmem:[#allocation4 + $0x1c0] sm:$0xff]
    %v7231 = vld [vmem:[#allocation4 + $0x1c8] sm:$0xff]
    %v7232 = vld [vmem:[#allocation4 + $0x1d0] sm:$0xff]
    %v7233 = vld [vmem:[#allocation4 + $0x1d8] sm:$0xff]
    %v7234 = vld [vmem:[#allocation4 + $0x1e0] sm:$0xff]
    %v7235 = vld [vmem:[#allocation4 + $0x1e8] sm:$0xff]
    %v7236 = vld [vmem:[#allocation4 + $0x1f0] sm:$0xff]
    %v7237 = vld [vmem:[#allocation4 + $0x1f8] sm:$0xff]
    %7238 = vmatpush.msra.mxu0 %v7234
    %7239 = vmatpush.msra.mxu0 %v7230
    %7240 = vmatpush.msra.mxu0 %v7226
    %7241 = vmatpush.msra.mxu0 %v7222
    %7242 = vmatpush.msra.mxu0 %v7218
    %7243 = vmatpush.msra.mxu0 %v7214
    %7244 = vmatpush.msra.mxu0 %v7210
    %7245 = vmatpush.msra.mxu0 %v7206
    %7246 = vmatpush.msra.mxu0 %v7202
    %7247 = vmatpush.msra.mxu0 %v7198
    %7248 = vmatpush.msra.mxu0 %v7194
    %7249 = vmatpush.msra.mxu0 %v7190
    %7250 = vmatpush.msra.mxu0 %v7186
    %7251 = vmatpush.msra.mxu0 %v7182
    %7252 = vmatpush.msra.mxu0 %v7178
    %7253 = vmatpush.msra.mxu0 %v7174
    %7254 = vmatmul.f32.gmra.mxu0 %v7168
    %v7255 = vpop.f32.mrf.mxu0
    %v7256 = vadd.f32 0.0, %v7255
    %7257 = vdwg.mxu0
    %7258 = vmatpush.msra.mxu0 %v7235
    %7259 = vmatpush.msra.mxu0 %v7231
    %7260 = vmatpush.msra.mxu0 %v7227
    %7261 = vmatpush.msra.mxu0 %v7223
    %7262 = vmatpush.msra.mxu0 %v7219
    %7263 = vmatpush.msra.mxu0 %v7215
    %7264 = vmatpush.msra.mxu0 %v7211
    %7265 = vmatpush.msra.mxu0 %v7207
    %7266 = vmatpush.msra.mxu0 %v7203
    %7267 = vmatpush.msra.mxu0 %v7199
    %7268 = vmatpush.msra.mxu0 %v7195
    %7269 = vmatpush.msra.mxu0 %v7191
    %7270 = vmatpush.msra.mxu0 %v7187
    %7271 = vmatpush.msra.mxu0 %v7183
    %7272 = vmatpush.msra.mxu0 %v7179
    %7273 = vmatpush.msra.mxu0 %v7175
    %7274 = vmatmul.f32.gmra.mxu0 %v7168
    %v7275 = vpop.f32.mrf.mxu0
    %v7276 = vadd.f32 0.0, %v7275
    %7277 = vdwg.mxu0
    %7278 = vmatpush.msra.mxu0 %v7236
    %7279 = vmatpush.msra.mxu0 %v7232
    %7280 = vmatpush.msra.mxu0 %v7228
    %7281 = vmatpush.msra.mxu0 %v7224
    %7282 = vmatpush.msra.mxu0 %v7220
    %7283 = vmatpush.msra.mxu0 %v7216
    %7284 = vmatpush.msra.mxu0 %v7212
    %7285 = vmatpush.msra.mxu0 %v7208
    %7286 = vmatpush.msra.mxu0 %v7204
    %7287 = vmatpush.msra.mxu0 %v7200
    %7288 = vmatpush.msra.mxu0 %v7196
    %7289 = vmatpush.msra.mxu0 %v7192
    %7290 = vmatpush.msra.mxu0 %v7188
    %7291 = vmatpush.msra.mxu0 %v7184
    %7292 = vmatpush.msra.mxu0 %v7180
    %7293 = vmatpush.msra.mxu0 %v7176
    %7294 = vmatmul.f32.gmra.mxu0 %v7168
    %v7295 = vpop.f32.mrf.mxu0
    %v7296 = vadd.f32 0.0, %v7295
    %7297 = vdwg.mxu0
    %7298 = vmatpush.msra.mxu0 %v7237
    %7299 = vmatpush.msra.mxu0 %v7233
    %7300 = vmatpush.msra.mxu0 %v7229
    %7301 = vmatpush.msra.mxu0 %v7225
    %7302 = vmatpush.msra.mxu0 %v7221
    %7303 = vmatpush.msra.mxu0 %v7217
    %7304 = vmatpush.msra.mxu0 %v7213
    %7305 = vmatpush.msra.mxu0 %v7209
    %7306 = vmatpush.msra.mxu0 %v7205
    %7307 = vmatpush.msra.mxu0 %v7201
    %7308 = vmatpush.msra.mxu0 %v7197
    %7309 = vmatpush.msra.mxu0 %v7193
    %7310 = vmatpush.msra.mxu0 %v7189
    %7311 = vmatpush.msra.mxu0 %v7185
    %7312 = vmatpush.msra.mxu0 %v7181
    %7313 = vmatpush.msra.mxu0 %v7177
    %7314 = vmatmul.f32.gmra.mxu0 %v7168
    %v7315 = vpop.f32.mrf.mxu0
    %v7316 = vadd.f32 0.0, %v7315
    %7317 = vdwg.mxu0
    %v7318 = vadd.f32 %v7170, %v7256
    %v7319 = vadd.f32 %v7171, %v7276
    %v7320 = vadd.f32 %v7172, %v7296
    %v7321 = vadd.f32 %v7173, %v7316
    %v7322 = vxor.u32 %v7318, 2147483648
    %v7323 = vxor.u32 %v7319, 2147483648
    %v7324 = vxor.u32 %v7320, 2147483648
    %v7325 = vmul.f32 %v7322, 1.442695
    %v7326 = vpow.pop %v7325
    %v7327 = vmul.f32 %v7323, 1.442695
    %v7328 = vpow.pop %v7327
    %v7329 = vmul.f32 %v7324, 1.442695
    %v7330 = vpow.pop %v7329
    %v7331 = vadd.f32 %v7326, 1.0
    %v7332 = vadd.f32 %v7328, 1.0
    %v7333 = vadd.f32 %v7330, 1.0
    %v7334 = vrcp.pop %v7331
    %v7335 = vmul.f32 %v7331, %v7334
    %v7336 = vsub.f32 1.0, %v7335
    %v7337 = vmul.f32 %v7334, %v7336
    %v7338 = vadd.f32 %v7334, %v7337
    %vm7339 = vweird.f32 %v7331
    %vm7340 = vweird.f32 %v7334
    %vm7341 = vmor %vm7339, %vm7340
    %v7342 = vsel %vm7341, %v7334, %v7338
    %v7343 = vand.u32 2147483647, %v7331
    %vm7344 = vcmp.eq.f32.partialorder %v7343, 8.507059e+37
    %v7345 = vand.u32 %v7331, 2147483648
    %v7346 = vor.u32 1.1754944e-38, %v7345
    %v7347 = vsel %vm7344, %v7346, %v7342
    %v7348 = vmul.f32 1.0, %v7347
    %v7349 = vrcp.pop %v7332
    %v7350 = vmul.f32 %v7332, %v7349
    %v7351 = vsub.f32 1.0, %v7350
    %v7352 = vmul.f32 %v7349, %v7351
    %v7353 = vadd.f32 %v7349, %v7352
    %vm7354 = vweird.f32 %v7332
    %vm7355 = vweird.f32 %v7349
    %vm7356 = vmor %vm7354, %vm7355
    %v7357 = vsel %vm7356, %v7349, %v7353
    %v7358 = vand.u32 2147483647, %v7332
    %vm7359 = vcmp.eq.f32.partialorder %v7358, 8.507059e+37
    %v7360 = vand.u32 %v7332, 2147483648
    %v7361 = vor.u32 1.1754944e-38, %v7360
    %v7362 = vsel %vm7359, %v7361, %v7357
    %v7363 = vmul.f32 1.0, %v7362
    %v7364 = vrcp.pop %v7333
    %v7365 = vmul.f32 %v7333, %v7364
    %v7366 = vsub.f32 1.0, %v7365
    %v7367 = vmul.f32 %v7364, %v7366
    %v7368 = vadd.f32 %v7364, %v7367
    %vm7369 = vweird.f32 %v7333
    %vm7370 = vweird.f32 %v7364
    %vm7371 = vmor %vm7369, %vm7370
    %v7372 = vsel %vm7371, %v7364, %v7368
    %v7373 = vand.u32 2147483647, %v7333
    %vm7374 = vcmp.eq.f32.partialorder %v7373, 8.507059e+37
    %v7375 = vand.u32 %v7333, 2147483648
    %v7376 = vor.u32 1.1754944e-38, %v7375
    %v7377 = vsel %vm7374, %v7376, %v7372
    %v7378 = vmul.f32 1.0, %v7377
    %v7379 = vtanh.pop %v7321
    %v7380 = vmul.f32 %v7363, %v7166
    %v7381 = vmul.f32 %v7348, %v7379
    %v7382 = vadd.f32 %v7380, %v7381
    %v7383 = vtanh.pop %v7382
    %v7384 = vmul.f32 %v7378, %v7383
    %7385 = vst [vmem:[#allocation3 + $0xf0] sm:$0xff] %v7384
    %v7386 = vld [vmem:[#allocation2 + $0x3e0] sm:$0xff]
    %v7387 = vld [vmem:[#allocation2 + $0x3e8] sm:$0xff]
    %v7388 = vld [vmem:[#allocation2 + $0x3f0] sm:$0xff]
    %v7389 = vld [vmem:[#allocation2 + $0x3f8] sm:$0xff]
    %v7390 = vld [vmem:[#allocation4] sm:$0xff]
    %v7391 = vld [vmem:[#allocation4 + $0x8] sm:$0xff]
    %v7392 = vld [vmem:[#allocation4 + $0x10] sm:$0xff]
    %v7393 = vld [vmem:[#allocation4 + $0x18] sm:$0xff]
    %v7394 = vld [vmem:[#allocation4 + $0x20] sm:$0xff]
    %v7395 = vld [vmem:[#allocation4 + $0x28] sm:$0xff]
    %v7396 = vld [vmem:[#allocation4 + $0x30] sm:$0xff]
    %v7397 = vld [vmem:[#allocation4 + $0x38] sm:$0xff]
    %v7398 = vld [vmem:[#allocation4 + $0x40] sm:$0xff]
    %v7399 = vld [vmem:[#allocation4 + $0x48] sm:$0xff]
    %v7400 = vld [vmem:[#allocation4 + $0x50] sm:$0xff]
    %v7401 = vld [vmem:[#allocation4 + $0x58] sm:$0xff]
    %v7402 = vld [vmem:[#allocation4 + $0x60] sm:$0xff]
    %v7403 = vld [vmem:[#allocation4 + $0x68] sm:$0xff]
    %v7404 = vld [vmem:[#allocation4 + $0x70] sm:$0xff]
    %v7405 = vld [vmem:[#allocation4 + $0x78] sm:$0xff]
    %v7406 = vld [vmem:[#allocation4 + $0x80] sm:$0xff]
    %v7407 = vld [vmem:[#allocation4 + $0x88] sm:$0xff]
    %v7408 = vld [vmem:[#allocation4 + $0x90] sm:$0xff]
    %v7409 = vld [vmem:[#allocation4 + $0x98] sm:$0xff]
    %v7410 = vld [vmem:[#allocation4 + $0xa0] sm:$0xff]
    %v7411 = vld [vmem:[#allocation4 + $0xa8] sm:$0xff]
    %v7412 = vld [vmem:[#allocation4 + $0xb0] sm:$0xff]
    %v7413 = vld [vmem:[#allocation4 + $0xb8] sm:$0xff]
    %v7414 = vld [vmem:[#allocation4 + $0xc0] sm:$0xff]
    %v7415 = vld [vmem:[#allocation4 + $0xc8] sm:$0xff]
    %v7416 = vld [vmem:[#allocation4 + $0xd0] sm:$0xff]
    %v7417 = vld [vmem:[#allocation4 + $0xd8] sm:$0xff]
    %v7418 = vld [vmem:[#allocation4 + $0xe0] sm:$0xff]
    %v7419 = vld [vmem:[#allocation4 + $0xe8] sm:$0xff]
    %v7420 = vld [vmem:[#allocation4 + $0xf0] sm:$0xff]
    %v7421 = vld [vmem:[#allocation4 + $0xf8] sm:$0xff]
    %v7422 = vld [vmem:[#allocation4 + $0x100] sm:$0xff]
    %v7423 = vld [vmem:[#allocation4 + $0x108] sm:$0xff]
    %v7424 = vld [vmem:[#allocation4 + $0x110] sm:$0xff]
    %v7425 = vld [vmem:[#allocation4 + $0x118] sm:$0xff]
    %v7426 = vld [vmem:[#allocation4 + $0x120] sm:$0xff]
    %v7427 = vld [vmem:[#allocation4 + $0x128] sm:$0xff]
    %v7428 = vld [vmem:[#allocation4 + $0x130] sm:$0xff]
    %v7429 = vld [vmem:[#allocation4 + $0x138] sm:$0xff]
    %v7430 = vld [vmem:[#allocation4 + $0x140] sm:$0xff]
    %v7431 = vld [vmem:[#allocation4 + $0x148] sm:$0xff]
    %v7432 = vld [vmem:[#allocation4 + $0x150] sm:$0xff]
    %v7433 = vld [vmem:[#allocation4 + $0x158] sm:$0xff]
    %v7434 = vld [vmem:[#allocation4 + $0x160] sm:$0xff]
    %v7435 = vld [vmem:[#allocation4 + $0x168] sm:$0xff]
    %v7436 = vld [vmem:[#allocation4 + $0x170] sm:$0xff]
    %v7437 = vld [vmem:[#allocation4 + $0x178] sm:$0xff]
    %v7438 = vld [vmem:[#allocation4 + $0x180] sm:$0xff]
    %v7439 = vld [vmem:[#allocation4 + $0x188] sm:$0xff]
    %v7440 = vld [vmem:[#allocation4 + $0x190] sm:$0xff]
    %v7441 = vld [vmem:[#allocation4 + $0x198] sm:$0xff]
    %v7442 = vld [vmem:[#allocation4 + $0x1a0] sm:$0xff]
    %v7443 = vld [vmem:[#allocation4 + $0x1a8] sm:$0xff]
    %v7444 = vld [vmem:[#allocation4 + $0x1b0] sm:$0xff]
    %v7445 = vld [vmem:[#allocation4 + $0x1b8] sm:$0xff]
    %v7446 = vld [vmem:[#allocation4 + $0x1c0] sm:$0xff]
    %v7447 = vld [vmem:[#allocation4 + $0x1c8] sm:$0xff]
    %v7448 = vld [vmem:[#allocation4 + $0x1d0] sm:$0xff]
    %v7449 = vld [vmem:[#allocation4 + $0x1d8] sm:$0xff]
    %v7450 = vld [vmem:[#allocation4 + $0x1e0] sm:$0xff]
    %v7451 = vld [vmem:[#allocation4 + $0x1e8] sm:$0xff]
    %v7452 = vld [vmem:[#allocation4 + $0x1f0] sm:$0xff]
    %v7453 = vld [vmem:[#allocation4 + $0x1f8] sm:$0xff]
    %7454 = vmatpush.msra.mxu0 %v7450
    %7455 = vmatpush.msra.mxu0 %v7446
    %7456 = vmatpush.msra.mxu0 %v7442
    %7457 = vmatpush.msra.mxu0 %v7438
    %7458 = vmatpush.msra.mxu0 %v7434
    %7459 = vmatpush.msra.mxu0 %v7430
    %7460 = vmatpush.msra.mxu0 %v7426
    %7461 = vmatpush.msra.mxu0 %v7422
    %7462 = vmatpush.msra.mxu0 %v7418
    %7463 = vmatpush.msra.mxu0 %v7414
    %7464 = vmatpush.msra.mxu0 %v7410
    %7465 = vmatpush.msra.mxu0 %v7406
    %7466 = vmatpush.msra.mxu0 %v7402
    %7467 = vmatpush.msra.mxu0 %v7398
    %7468 = vmatpush.msra.mxu0 %v7394
    %7469 = vmatpush.msra.mxu0 %v7390
    %7470 = vmatmul.f32.gmra.mxu0 %v7384
    %v7471 = vpop.f32.mrf.mxu0
    %v7472 = vadd.f32 0.0, %v7471
    %7473 = vdwg.mxu0
    %7474 = vmatpush.msra.mxu0 %v7451
    %7475 = vmatpush.msra.mxu0 %v7447
    %7476 = vmatpush.msra.mxu0 %v7443
    %7477 = vmatpush.msra.mxu0 %v7439
    %7478 = vmatpush.msra.mxu0 %v7435
    %7479 = vmatpush.msra.mxu0 %v7431
    %7480 = vmatpush.msra.mxu0 %v7427
    %7481 = vmatpush.msra.mxu0 %v7423
    %7482 = vmatpush.msra.mxu0 %v7419
    %7483 = vmatpush.msra.mxu0 %v7415
    %7484 = vmatpush.msra.mxu0 %v7411
    %7485 = vmatpush.msra.mxu0 %v7407
    %7486 = vmatpush.msra.mxu0 %v7403
    %7487 = vmatpush.msra.mxu0 %v7399
    %7488 = vmatpush.msra.mxu0 %v7395
    %7489 = vmatpush.msra.mxu0 %v7391
    %7490 = vmatmul.f32.gmra.mxu0 %v7384
    %v7491 = vpop.f32.mrf.mxu0
    %v7492 = vadd.f32 0.0, %v7491
    %7493 = vdwg.mxu0
    %7494 = vmatpush.msra.mxu0 %v7452
    %7495 = vmatpush.msra.mxu0 %v7448
    %7496 = vmatpush.msra.mxu0 %v7444
    %7497 = vmatpush.msra.mxu0 %v7440
    %7498 = vmatpush.msra.mxu0 %v7436
    %7499 = vmatpush.msra.mxu0 %v7432
    %7500 = vmatpush.msra.mxu0 %v7428
    %7501 = vmatpush.msra.mxu0 %v7424
    %7502 = vmatpush.msra.mxu0 %v7420
    %7503 = vmatpush.msra.mxu0 %v7416
    %7504 = vmatpush.msra.mxu0 %v7412
    %7505 = vmatpush.msra.mxu0 %v7408
    %7506 = vmatpush.msra.mxu0 %v7404
    %7507 = vmatpush.msra.mxu0 %v7400
    %7508 = vmatpush.msra.mxu0 %v7396
    %7509 = vmatpush.msra.mxu0 %v7392
    %7510 = vmatmul.f32.gmra.mxu0 %v7384
    %v7511 = vpop.f32.mrf.mxu0
    %v7512 = vadd.f32 0.0, %v7511
    %7513 = vdwg.mxu0
    %7514 = vmatpush.msra.mxu0 %v7453
    %7515 = vmatpush.msra.mxu0 %v7449
    %7516 = vmatpush.msra.mxu0 %v7445
    %7517 = vmatpush.msra.mxu0 %v7441
    %7518 = vmatpush.msra.mxu0 %v7437
    %7519 = vmatpush.msra.mxu0 %v7433
    %7520 = vmatpush.msra.mxu0 %v7429
    %7521 = vmatpush.msra.mxu0 %v7425
    %7522 = vmatpush.msra.mxu0 %v7421
    %7523 = vmatpush.msra.mxu0 %v7417
    %7524 = vmatpush.msra.mxu0 %v7413
    %7525 = vmatpush.msra.mxu0 %v7409
    %7526 = vmatpush.msra.mxu0 %v7405
    %7527 = vmatpush.msra.mxu0 %v7401
    %7528 = vmatpush.msra.mxu0 %v7397
    %7529 = vmatpush.msra.mxu0 %v7393
    %7530 = vmatmul.f32.gmra.mxu0 %v7384
    %v7531 = vpop.f32.mrf.mxu0
    %v7532 = vadd.f32 0.0, %v7531
    %7533 = vdwg.mxu0
    %v7534 = vadd.f32 %v7386, %v7472
    %v7535 = vadd.f32 %v7387, %v7492
    %v7536 = vadd.f32 %v7388, %v7512
    %v7537 = vadd.f32 %v7389, %v7532
    %v7538 = vxor.u32 %v7534, 2147483648
    %v7539 = vxor.u32 %v7535, 2147483648
    %v7540 = vxor.u32 %v7536, 2147483648
    %v7541 = vmul.f32 %v7538, 1.442695
    %v7542 = vpow.pop %v7541
    %v7543 = vmul.f32 %v7539, 1.442695
    %v7544 = vpow.pop %v7543
    %v7545 = vmul.f32 %v7540, 1.442695
    %v7546 = vpow.pop %v7545
    %v7547 = vadd.f32 %v7542, 1.0
    %v7548 = vadd.f32 %v7544, 1.0
    %v7549 = vadd.f32 %v7546, 1.0
    %v7550 = vrcp.pop %v7547
    %v7551 = vmul.f32 %v7547, %v7550
    %v7552 = vsub.f32 1.0, %v7551
    %v7553 = vmul.f32 %v7550, %v7552
    %v7554 = vadd.f32 %v7550, %v7553
    %vm7555 = vweird.f32 %v7547
    %vm7556 = vweird.f32 %v7550
    %vm7557 = vmor %vm7555, %vm7556
    %v7558 = vsel %vm7557, %v7550, %v7554
    %v7559 = vand.u32 2147483647, %v7547
    %vm7560 = vcmp.eq.f32.partialorder %v7559, 8.507059e+37
    %v7561 = vand.u32 %v7547, 2147483648
    %v7562 = vor.u32 1.1754944e-38, %v7561
    %v7563 = vsel %vm7560, %v7562, %v7558
    %v7564 = vmul.f32 1.0, %v7563
    %v7565 = vrcp.pop %v7548
    %v7566 = vmul.f32 %v7548, %v7565
    %v7567 = vsub.f32 1.0, %v7566
    %v7568 = vmul.f32 %v7565, %v7567
    %v7569 = vadd.f32 %v7565, %v7568
    %vm7570 = vweird.f32 %v7548
    %vm7571 = vweird.f32 %v7565
    %vm7572 = vmor %vm7570, %vm7571
    %v7573 = vsel %vm7572, %v7565, %v7569
    %v7574 = vand.u32 2147483647, %v7548
    %vm7575 = vcmp.eq.f32.partialorder %v7574, 8.507059e+37
    %v7576 = vand.u32 %v7548, 2147483648
    %v7577 = vor.u32 1.1754944e-38, %v7576
    %v7578 = vsel %vm7575, %v7577, %v7573
    %v7579 = vmul.f32 1.0, %v7578
    %v7580 = vrcp.pop %v7549
    %v7581 = vmul.f32 %v7549, %v7580
    %v7582 = vsub.f32 1.0, %v7581
    %v7583 = vmul.f32 %v7580, %v7582
    %v7584 = vadd.f32 %v7580, %v7583
    %vm7585 = vweird.f32 %v7549
    %vm7586 = vweird.f32 %v7580
    %vm7587 = vmor %vm7585, %vm7586
    %v7588 = vsel %vm7587, %v7580, %v7584
    %v7589 = vand.u32 2147483647, %v7549
    %vm7590 = vcmp.eq.f32.partialorder %v7589, 8.507059e+37
    %v7591 = vand.u32 %v7549, 2147483648
    %v7592 = vor.u32 1.1754944e-38, %v7591
    %v7593 = vsel %vm7590, %v7592, %v7588
    %v7594 = vmul.f32 1.0, %v7593
    %v7595 = vtanh.pop %v7537
    %v7596 = vmul.f32 %v7579, %v7382
    %v7597 = vmul.f32 %v7564, %v7595
    %v7598 = vadd.f32 %v7596, %v7597
    %v7599 = vtanh.pop %v7598
    %v7600 = vmul.f32 %v7594, %v7599
    %7601 = vst [vmem:[#allocation3 + $0xf8] sm:$0xff] %v7600
    %v7602 = vld [vmem:[#allocation2 + $0x400] sm:$0xff]
    %v7603 = vld [vmem:[#allocation2 + $0x408] sm:$0xff]
    %v7604 = vld [vmem:[#allocation2 + $0x410] sm:$0xff]
    %v7605 = vld [vmem:[#allocation2 + $0x418] sm:$0xff]
    %v7606 = vld [vmem:[#allocation4] sm:$0xff]
    %v7607 = vld [vmem:[#allocation4 + $0x8] sm:$0xff]
    %v7608 = vld [vmem:[#allocation4 + $0x10] sm:$0xff]
    %v7609 = vld [vmem:[#allocation4 + $0x18] sm:$0xff]
    %v7610 = vld [vmem:[#allocation4 + $0x20] sm:$0xff]
    %v7611 = vld [vmem:[#allocation4 + $0x28] sm:$0xff]
    %v7612 = vld [vmem:[#allocation4 + $0x30] sm:$0xff]
    %v7613 = vld [vmem:[#allocation4 + $0x38] sm:$0xff]
    %v7614 = vld [vmem:[#allocation4 + $0x40] sm:$0xff]
    %v7615 = vld [vmem:[#allocation4 + $0x48] sm:$0xff]
    %v7616 = vld [vmem:[#allocation4 + $0x50] sm:$0xff]
    %v7617 = vld [vmem:[#allocation4 + $0x58] sm:$0xff]
    %v7618 = vld [vmem:[#allocation4 + $0x60] sm:$0xff]
    %v7619 = vld [vmem:[#allocation4 + $0x68] sm:$0xff]
    %v7620 = vld [vmem:[#allocation4 + $0x70] sm:$0xff]
    %v7621 = vld [vmem:[#allocation4 + $0x78] sm:$0xff]
    %v7622 = vld [vmem:[#allocation4 + $0x80] sm:$0xff]
    %v7623 = vld [vmem:[#allocation4 + $0x88] sm:$0xff]
    %v7624 = vld [vmem:[#allocation4 + $0x90] sm:$0xff]
    %v7625 = vld [vmem:[#allocation4 + $0x98] sm:$0xff]
    %v7626 = vld [vmem:[#allocation4 + $0xa0] sm:$0xff]
    %v7627 = vld [vmem:[#allocation4 + $0xa8] sm:$0xff]
    %v7628 = vld [vmem:[#allocation4 + $0xb0] sm:$0xff]
    %v7629 = vld [vmem:[#allocation4 + $0xb8] sm:$0xff]
    %v7630 = vld [vmem:[#allocation4 + $0xc0] sm:$0xff]
    %v7631 = vld [vmem:[#allocation4 + $0xc8] sm:$0xff]
    %v7632 = vld [vmem:[#allocation4 + $0xd0] sm:$0xff]
    %v7633 = vld [vmem:[#allocation4 + $0xd8] sm:$0xff]
    %v7634 = vld [vmem:[#allocation4 + $0xe0] sm:$0xff]
    %v7635 = vld [vmem:[#allocation4 + $0xe8] sm:$0xff]
    %v7636 = vld [vmem:[#allocation4 + $0xf0] sm:$0xff]
    %v7637 = vld [vmem:[#allocation4 + $0xf8] sm:$0xff]
    %v7638 = vld [vmem:[#allocation4 + $0x100] sm:$0xff]
    %v7639 = vld [vmem:[#allocation4 + $0x108] sm:$0xff]
    %v7640 = vld [vmem:[#allocation4 + $0x110] sm:$0xff]
    %v7641 = vld [vmem:[#allocation4 + $0x118] sm:$0xff]
    %v7642 = vld [vmem:[#allocation4 + $0x120] sm:$0xff]
    %v7643 = vld [vmem:[#allocation4 + $0x128] sm:$0xff]
    %v7644 = vld [vmem:[#allocation4 + $0x130] sm:$0xff]
    %v7645 = vld [vmem:[#allocation4 + $0x138] sm:$0xff]
    %v7646 = vld [vmem:[#allocation4 + $0x140] sm:$0xff]
    %v7647 = vld [vmem:[#allocation4 + $0x148] sm:$0xff]
    %v7648 = vld [vmem:[#allocation4 + $0x150] sm:$0xff]
    %v7649 = vld [vmem:[#allocation4 + $0x158] sm:$0xff]
    %v7650 = vld [vmem:[#allocation4 + $0x160] sm:$0xff]
    %v7651 = vld [vmem:[#allocation4 + $0x168] sm:$0xff]
    %v7652 = vld [vmem:[#allocation4 + $0x170] sm:$0xff]
    %v7653 = vld [vmem:[#allocation4 + $0x178] sm:$0xff]
    %v7654 = vld [vmem:[#allocation4 + $0x180] sm:$0xff]
    %v7655 = vld [vmem:[#allocation4 + $0x188] sm:$0xff]
    %v7656 = vld [vmem:[#allocation4 + $0x190] sm:$0xff]
    %v7657 = vld [vmem:[#allocation4 + $0x198] sm:$0xff]
    %v7658 = vld [vmem:[#allocation4 + $0x1a0] sm:$0xff]
    %v7659 = vld [vmem:[#allocation4 + $0x1a8] sm:$0xff]
    %v7660 = vld [vmem:[#allocation4 + $0x1b0] sm:$0xff]
    %v7661 = vld [vmem:[#allocation4 + $0x1b8] sm:$0xff]
    %v7662 = vld [vmem:[#allocation4 + $0x1c0] sm:$0xff]
    %v7663 = vld [vmem:[#allocation4 + $0x1c8] sm:$0xff]
    %v7664 = vld [vmem:[#allocation4 + $0x1d0] sm:$0xff]
    %v7665 = vld [vmem:[#allocation4 + $0x1d8] sm:$0xff]
    %v7666 = vld [vmem:[#allocation4 + $0x1e0] sm:$0xff]
    %v7667 = vld [vmem:[#allocation4 + $0x1e8] sm:$0xff]
    %v7668 = vld [vmem:[#allocation4 + $0x1f0] sm:$0xff]
    %v7669 = vld [vmem:[#allocation4 + $0x1f8] sm:$0xff]
    %7670 = vmatpush.msra.mxu0 %v7666
    %7671 = vmatpush.msra.mxu0 %v7662
    %7672 = vmatpush.msra.mxu0 %v7658
    %7673 = vmatpush.msra.mxu0 %v7654
    %7674 = vmatpush.msra.mxu0 %v7650
    %7675 = vmatpush.msra.mxu0 %v7646
    %7676 = vmatpush.msra.mxu0 %v7642
    %7677 = vmatpush.msra.mxu0 %v7638
    %7678 = vmatpush.msra.mxu0 %v7634
    %7679 = vmatpush.msra.mxu0 %v7630
    %7680 = vmatpush.msra.mxu0 %v7626
    %7681 = vmatpush.msra.mxu0 %v7622
    %7682 = vmatpush.msra.mxu0 %v7618
    %7683 = vmatpush.msra.mxu0 %v7614
    %7684 = vmatpush.msra.mxu0 %v7610
    %7685 = vmatpush.msra.mxu0 %v7606
    %7686 = vmatmul.f32.gmra.mxu0 %v7600
    %v7687 = vpop.f32.mrf.mxu0
    %v7688 = vadd.f32 0.0, %v7687
    %7689 = vdwg.mxu0
    %7690 = vmatpush.msra.mxu0 %v7667
    %7691 = vmatpush.msra.mxu0 %v7663
    %7692 = vmatpush.msra.mxu0 %v7659
    %7693 = vmatpush.msra.mxu0 %v7655
    %7694 = vmatpush.msra.mxu0 %v7651
    %7695 = vmatpush.msra.mxu0 %v7647
    %7696 = vmatpush.msra.mxu0 %v7643
    %7697 = vmatpush.msra.mxu0 %v7639
    %7698 = vmatpush.msra.mxu0 %v7635
    %7699 = vmatpush.msra.mxu0 %v7631
    %7700 = vmatpush.msra.mxu0 %v7627
    %7701 = vmatpush.msra.mxu0 %v7623
    %7702 = vmatpush.msra.mxu0 %v7619
    %7703 = vmatpush.msra.mxu0 %v7615
    %7704 = vmatpush.msra.mxu0 %v7611
    %7705 = vmatpush.msra.mxu0 %v7607
    %7706 = vmatmul.f32.gmra.mxu0 %v7600
    %v7707 = vpop.f32.mrf.mxu0
    %v7708 = vadd.f32 0.0, %v7707
    %7709 = vdwg.mxu0
    %7710 = vmatpush.msra.mxu0 %v7668
    %7711 = vmatpush.msra.mxu0 %v7664
    %7712 = vmatpush.msra.mxu0 %v7660
    %7713 = vmatpush.msra.mxu0 %v7656
    %7714 = vmatpush.msra.mxu0 %v7652
    %7715 = vmatpush.msra.mxu0 %v7648
    %7716 = vmatpush.msra.mxu0 %v7644
    %7717 = vmatpush.msra.mxu0 %v7640
    %7718 = vmatpush.msra.mxu0 %v7636
    %7719 = vmatpush.msra.mxu0 %v7632
    %7720 = vmatpush.msra.mxu0 %v7628
    %7721 = vmatpush.msra.mxu0 %v7624
    %7722 = vmatpush.msra.mxu0 %v7620
    %7723 = vmatpush.msra.mxu0 %v7616
    %7724 = vmatpush.msra.mxu0 %v7612
    %7725 = vmatpush.msra.mxu0 %v7608
    %7726 = vmatmul.f32.gmra.mxu0 %v7600
    %v7727 = vpop.f32.mrf.mxu0
    %v7728 = vadd.f32 0.0, %v7727
    %7729 = vdwg.mxu0
    %7730 = vmatpush.msra.mxu0 %v7669
    %7731 = vmatpush.msra.mxu0 %v7665
    %7732 = vmatpush.msra.mxu0 %v7661
    %7733 = vmatpush.msra.mxu0 %v7657
    %7734 = vmatpush.msra.mxu0 %v7653
    %7735 = vmatpush.msra.mxu0 %v7649
    %7736 = vmatpush.msra.mxu0 %v7645
    %7737 = vmatpush.msra.mxu0 %v7641
    %7738 = vmatpush.msra.mxu0 %v7637
    %7739 = vmatpush.msra.mxu0 %v7633
    %7740 = vmatpush.msra.mxu0 %v7629
    %7741 = vmatpush.msra.mxu0 %v7625
    %7742 = vmatpush.msra.mxu0 %v7621
    %7743 = vmatpush.msra.mxu0 %v7617
    %7744 = vmatpush.msra.mxu0 %v7613
    %7745 = vmatpush.msra.mxu0 %v7609
    %7746 = vmatmul.f32.gmra.mxu0 %v7600
    %v7747 = vpop.f32.mrf.mxu0
    %v7748 = vadd.f32 0.0, %v7747
    %7749 = vdwg.mxu0
    %v7750 = vadd.f32 %v7602, %v7688
    %v7751 = vadd.f32 %v7603, %v7708
    %v7752 = vadd.f32 %v7604, %v7728
    %v7753 = vadd.f32 %v7605, %v7748
    %v7754 = vxor.u32 %v7750, 2147483648
    %v7755 = vxor.u32 %v7751, 2147483648
    %v7756 = vxor.u32 %v7752, 2147483648
    %v7757 = vmul.f32 %v7754, 1.442695
    %v7758 = vpow.pop %v7757
    %v7759 = vmul.f32 %v7755, 1.442695
    %v7760 = vpow.pop %v7759
    %v7761 = vmul.f32 %v7756, 1.442695
    %v7762 = vpow.pop %v7761
    %v7763 = vadd.f32 %v7758, 1.0
    %v7764 = vadd.f32 %v7760, 1.0
    %v7765 = vadd.f32 %v7762, 1.0
    %v7766 = vrcp.pop %v7763
    %v7767 = vmul.f32 %v7763, %v7766
    %v7768 = vsub.f32 1.0, %v7767
    %v7769 = vmul.f32 %v7766, %v7768
    %v7770 = vadd.f32 %v7766, %v7769
    %vm7771 = vweird.f32 %v7763
    %vm7772 = vweird.f32 %v7766
    %vm7773 = vmor %vm7771, %vm7772
    %v7774 = vsel %vm7773, %v7766, %v7770
    %v7775 = vand.u32 2147483647, %v7763
    %vm7776 = vcmp.eq.f32.partialorder %v7775, 8.507059e+37
    %v7777 = vand.u32 %v7763, 2147483648
    %v7778 = vor.u32 1.1754944e-38, %v7777
    %v7779 = vsel %vm7776, %v7778, %v7774
    %v7780 = vmul.f32 1.0, %v7779
    %v7781 = vrcp.pop %v7764
    %v7782 = vmul.f32 %v7764, %v7781
    %v7783 = vsub.f32 1.0, %v7782
    %v7784 = vmul.f32 %v7781, %v7783
    %v7785 = vadd.f32 %v7781, %v7784
    %vm7786 = vweird.f32 %v7764
    %vm7787 = vweird.f32 %v7781
    %vm7788 = vmor %vm7786, %vm7787
    %v7789 = vsel %vm7788, %v7781, %v7785
    %v7790 = vand.u32 2147483647, %v7764
    %vm7791 = vcmp.eq.f32.partialorder %v7790, 8.507059e+37
    %v7792 = vand.u32 %v7764, 2147483648
    %v7793 = vor.u32 1.1754944e-38, %v7792
    %v7794 = vsel %vm7791, %v7793, %v7789
    %v7795 = vmul.f32 1.0, %v7794
    %v7796 = vrcp.pop %v7765
    %v7797 = vmul.f32 %v7765, %v7796
    %v7798 = vsub.f32 1.0, %v7797
    %v7799 = vmul.f32 %v7796, %v7798
    %v7800 = vadd.f32 %v7796, %v7799
    %vm7801 = vweird.f32 %v7765
    %vm7802 = vweird.f32 %v7796
    %vm7803 = vmor %vm7801, %vm7802
    %v7804 = vsel %vm7803, %v7796, %v7800
    %v7805 = vand.u32 2147483647, %v7765
    %vm7806 = vcmp.eq.f32.partialorder %v7805, 8.507059e+37
    %v7807 = vand.u32 %v7765, 2147483648
    %v7808 = vor.u32 1.1754944e-38, %v7807
    %v7809 = vsel %vm7806, %v7808, %v7804
    %v7810 = vmul.f32 1.0, %v7809
    %v7811 = vtanh.pop %v7753
    %v7812 = vmul.f32 %v7795, %v7598
    %v7813 = vmul.f32 %v7780, %v7811
    %v7814 = vadd.f32 %v7812, %v7813
    %v7815 = vtanh.pop %v7814
    %v7816 = vmul.f32 %v7810, %v7815
    %7817 = vst [vmem:[#allocation3 + $0x100] sm:$0xff] %v7816
    %v7818 = vld [vmem:[#allocation2 + $0x420] sm:$0xff]
    %v7819 = vld [vmem:[#allocation2 + $0x428] sm:$0xff]
    %v7820 = vld [vmem:[#allocation2 + $0x430] sm:$0xff]
    %v7821 = vld [vmem:[#allocation2 + $0x438] sm:$0xff]
    %v7822 = vld [vmem:[#allocation4] sm:$0xff]
    %v7823 = vld [vmem:[#allocation4 + $0x8] sm:$0xff]
    %v7824 = vld [vmem:[#allocation4 + $0x10] sm:$0xff]
    %v7825 = vld [vmem:[#allocation4 + $0x18] sm:$0xff]
    %v7826 = vld [vmem:[#allocation4 + $0x20] sm:$0xff]
    %v7827 = vld [vmem:[#allocation4 + $0x28] sm:$0xff]
    %v7828 = vld [vmem:[#allocation4 + $0x30] sm:$0xff]
    %v7829 = vld [vmem:[#allocation4 + $0x38] sm:$0xff]
    %v7830 = vld [vmem:[#allocation4 + $0x40] sm:$0xff]
    %v7831 = vld [vmem:[#allocation4 + $0x48] sm:$0xff]
    %v7832 = vld [vmem:[#allocation4 + $0x50] sm:$0xff]
    %v7833 = vld [vmem:[#allocation4 + $0x58] sm:$0xff]
    %v7834 = vld [vmem:[#allocation4 + $0x60] sm:$0xff]
    %v7835 = vld [vmem:[#allocation4 + $0x68] sm:$0xff]
    %v7836 = vld [vmem:[#allocation4 + $0x70] sm:$0xff]
    %v7837 = vld [vmem:[#allocation4 + $0x78] sm:$0xff]
    %v7838 = vld [vmem:[#allocation4 + $0x80] sm:$0xff]
    %v7839 = vld [vmem:[#allocation4 + $0x88] sm:$0xff]
    %v7840 = vld [vmem:[#allocation4 + $0x90] sm:$0xff]
    %v7841 = vld [vmem:[#allocation4 + $0x98] sm:$0xff]
    %v7842 = vld [vmem:[#allocation4 + $0xa0] sm:$0xff]
    %v7843 = vld [vmem:[#allocation4 + $0xa8] sm:$0xff]
    %v7844 = vld [vmem:[#allocation4 + $0xb0] sm:$0xff]
    %v7845 = vld [vmem:[#allocation4 + $0xb8] sm:$0xff]
    %v7846 = vld [vmem:[#allocation4 + $0xc0] sm:$0xff]
    %v7847 = vld [vmem:[#allocation4 + $0xc8] sm:$0xff]
    %v7848 = vld [vmem:[#allocation4 + $0xd0] sm:$0xff]
    %v7849 = vld [vmem:[#allocation4 + $0xd8] sm:$0xff]
    %v7850 = vld [vmem:[#allocation4 + $0xe0] sm:$0xff]
    %v7851 = vld [vmem:[#allocation4 + $0xe8] sm:$0xff]
    %v7852 = vld [vmem:[#allocation4 + $0xf0] sm:$0xff]
    %v7853 = vld [vmem:[#allocation4 + $0xf8] sm:$0xff]
    %v7854 = vld [vmem:[#allocation4 + $0x100] sm:$0xff]
    %v7855 = vld [vmem:[#allocation4 + $0x108] sm:$0xff]
    %v7856 = vld [vmem:[#allocation4 + $0x110] sm:$0xff]
    %v7857 = vld [vmem:[#allocation4 + $0x118] sm:$0xff]
    %v7858 = vld [vmem:[#allocation4 + $0x120] sm:$0xff]
    %v7859 = vld [vmem:[#allocation4 + $0x128] sm:$0xff]
    %v7860 = vld [vmem:[#allocation4 + $0x130] sm:$0xff]
    %v7861 = vld [vmem:[#allocation4 + $0x138] sm:$0xff]
    %v7862 = vld [vmem:[#allocation4 + $0x140] sm:$0xff]
    %v7863 = vld [vmem:[#allocation4 + $0x148] sm:$0xff]
    %v7864 = vld [vmem:[#allocation4 + $0x150] sm:$0xff]
    %v7865 = vld [vmem:[#allocation4 + $0x158] sm:$0xff]
    %v7866 = vld [vmem:[#allocation4 + $0x160] sm:$0xff]
    %v7867 = vld [vmem:[#allocation4 + $0x168] sm:$0xff]
    %v7868 = vld [vmem:[#allocation4 + $0x170] sm:$0xff]
    %v7869 = vld [vmem:[#allocation4 + $0x178] sm:$0xff]
    %v7870 = vld [vmem:[#allocation4 + $0x180] sm:$0xff]
    %v7871 = vld [vmem:[#allocation4 + $0x188] sm:$0xff]
    %v7872 = vld [vmem:[#allocation4 + $0x190] sm:$0xff]
    %v7873 = vld [vmem:[#allocation4 + $0x198] sm:$0xff]
    %v7874 = vld [vmem:[#allocation4 + $0x1a0] sm:$0xff]
    %v7875 = vld [vmem:[#allocation4 + $0x1a8] sm:$0xff]
    %v7876 = vld [vmem:[#allocation4 + $0x1b0] sm:$0xff]
    %v7877 = vld [vmem:[#allocation4 + $0x1b8] sm:$0xff]
    %v7878 = vld [vmem:[#allocation4 + $0x1c0] sm:$0xff]
    %v7879 = vld [vmem:[#allocation4 + $0x1c8] sm:$0xff]
    %v7880 = vld [vmem:[#allocation4 + $0x1d0] sm:$0xff]
    %v7881 = vld [vmem:[#allocation4 + $0x1d8] sm:$0xff]
    %v7882 = vld [vmem:[#allocation4 + $0x1e0] sm:$0xff]
    %v7883 = vld [vmem:[#allocation4 + $0x1e8] sm:$0xff]
    %v7884 = vld [vmem:[#allocation4 + $0x1f0] sm:$0xff]
    %v7885 = vld [vmem:[#allocation4 + $0x1f8] sm:$0xff]
    %7886 = vmatpush.msra.mxu0 %v7882
    %7887 = vmatpush.msra.mxu0 %v7878
    %7888 = vmatpush.msra.mxu0 %v7874
    %7889 = vmatpush.msra.mxu0 %v7870
    %7890 = vmatpush.msra.mxu0 %v7866
    %7891 = vmatpush.msra.mxu0 %v7862
    %7892 = vmatpush.msra.mxu0 %v7858
    %7893 = vmatpush.msra.mxu0 %v7854
    %7894 = vmatpush.msra.mxu0 %v7850
    %7895 = vmatpush.msra.mxu0 %v7846
    %7896 = vmatpush.msra.mxu0 %v7842
    %7897 = vmatpush.msra.mxu0 %v7838
    %7898 = vmatpush.msra.mxu0 %v7834
    %7899 = vmatpush.msra.mxu0 %v7830
    %7900 = vmatpush.msra.mxu0 %v7826
    %7901 = vmatpush.msra.mxu0 %v7822
    %7902 = vmatmul.f32.gmra.mxu0 %v7816
    %v7903 = vpop.f32.mrf.mxu0
    %v7904 = vadd.f32 0.0, %v7903
    %7905 = vdwg.mxu0
    %7906 = vmatpush.msra.mxu0 %v7883
    %7907 = vmatpush.msra.mxu0 %v7879
    %7908 = vmatpush.msra.mxu0 %v7875
    %7909 = vmatpush.msra.mxu0 %v7871
    %7910 = vmatpush.msra.mxu0 %v7867
    %7911 = vmatpush.msra.mxu0 %v7863
    %7912 = vmatpush.msra.mxu0 %v7859
    %7913 = vmatpush.msra.mxu0 %v7855
    %7914 = vmatpush.msra.mxu0 %v7851
    %7915 = vmatpush.msra.mxu0 %v7847
    %7916 = vmatpush.msra.mxu0 %v7843
    %7917 = vmatpush.msra.mxu0 %v7839
    %7918 = vmatpush.msra.mxu0 %v7835
    %7919 = vmatpush.msra.mxu0 %v7831
    %7920 = vmatpush.msra.mxu0 %v7827
    %7921 = vmatpush.msra.mxu0 %v7823
    %7922 = vmatmul.f32.gmra.mxu0 %v7816
    %v7923 = vpop.f32.mrf.mxu0
    %v7924 = vadd.f32 0.0, %v7923
    %7925 = vdwg.mxu0
    %7926 = vmatpush.msra.mxu0 %v7884
    %7927 = vmatpush.msra.mxu0 %v7880
    %7928 = vmatpush.msra.mxu0 %v7876
    %7929 = vmatpush.msra.mxu0 %v7872
    %7930 = vmatpush.msra.mxu0 %v7868
    %7931 = vmatpush.msra.mxu0 %v7864
    %7932 = vmatpush.msra.mxu0 %v7860
    %7933 = vmatpush.msra.mxu0 %v7856
    %7934 = vmatpush.msra.mxu0 %v7852
    %7935 = vmatpush.msra.mxu0 %v7848
    %7936 = vmatpush.msra.mxu0 %v7844
    %7937 = vmatpush.msra.mxu0 %v7840
    %7938 = vmatpush.msra.mxu0 %v7836
    %7939 = vmatpush.msra.mxu0 %v7832
    %7940 = vmatpush.msra.mxu0 %v7828
    %7941 = vmatpush.msra.mxu0 %v7824
    %7942 = vmatmul.f32.gmra.mxu0 %v7816
    %v7943 = vpop.f32.mrf.mxu0
    %v7944 = vadd.f32 0.0, %v7943
    %7945 = vdwg.mxu0
    %7946 = vmatpush.msra.mxu0 %v7885
    %7947 = vmatpush.msra.mxu0 %v7881
    %7948 = vmatpush.msra.mxu0 %v7877
    %7949 = vmatpush.msra.mxu0 %v7873
    %7950 = vmatpush.msra.mxu0 %v7869
    %7951 = vmatpush.msra.mxu0 %v7865
    %7952 = vmatpush.msra.mxu0 %v7861
    %7953 = vmatpush.msra.mxu0 %v7857
    %7954 = vmatpush.msra.mxu0 %v7853
    %7955 = vmatpush.msra.mxu0 %v7849
    %7956 = vmatpush.msra.mxu0 %v7845
    %7957 = vmatpush.msra.mxu0 %v7841
    %7958 = vmatpush.msra.mxu0 %v7837
    %7959 = vmatpush.msra.mxu0 %v7833
    %7960 = vmatpush.msra.mxu0 %v7829
    %7961 = vmatpush.msra.mxu0 %v7825
    %7962 = vmatmul.f32.gmra.mxu0 %v7816
    %v7963 = vpop.f32.mrf.mxu0
    %v7964 = vadd.f32 0.0, %v7963
    %7965 = vdwg.mxu0
    %v7966 = vadd.f32 %v7818, %v7904
    %v7967 = vadd.f32 %v7819, %v7924
    %v7968 = vadd.f32 %v7820, %v7944
    %v7969 = vadd.f32 %v7821, %v7964
    %v7970 = vxor.u32 %v7966, 2147483648
    %v7971 = vxor.u32 %v7967, 2147483648
    %v7972 = vxor.u32 %v7968, 2147483648
    %v7973 = vmul.f32 %v7970, 1.442695
    %v7974 = vpow.pop %v7973
    %v7975 = vmul.f32 %v7971, 1.442695
    %v7976 = vpow.pop %v7975
    %v7977 = vmul.f32 %v7972, 1.442695
    %v7978 = vpow.pop %v7977
    %v7979 = vadd.f32 %v7974, 1.0
    %v7980 = vadd.f32 %v7976, 1.0
    %v7981 = vadd.f32 %v7978, 1.0
    %v7982 = vrcp.pop %v7979
    %v7983 = vmul.f32 %v7979, %v7982
    %v7984 = vsub.f32 1.0, %v7983
    %v7985 = vmul.f32 %v7982, %v7984
    %v7986 = vadd.f32 %v7982, %v7985
    %vm7987 = vweird.f32 %v7979
    %vm7988 = vweird.f32 %v7982
    %vm7989 = vmor %vm7987, %vm7988
    %v7990 = vsel %vm7989, %v7982, %v7986
    %v7991 = vand.u32 2147483647, %v7979
    %vm7992 = vcmp.eq.f32.partialorder %v7991, 8.507059e+37
    %v7993 = vand.u32 %v7979, 2147483648
    %v7994 = vor.u32 1.1754944e-38, %v7993
    %v7995 = vsel %vm7992, %v7994, %v7990
    %v7996 = vmul.f32 1.0, %v7995
    %v7997 = vrcp.pop %v7980
    %v7998 = vmul.f32 %v7980, %v7997
    %v7999 = vsub.f32 1.0, %v7998
    %v8000 = vmul.f32 %v7997, %v7999
    %v8001 = vadd.f32 %v7997, %v8000
    %vm8002 = vweird.f32 %v7980
    %vm8003 = vweird.f32 %v7997
    %vm8004 = vmor %vm8002, %vm8003
    %v8005 = vsel %vm8004, %v7997, %v8001
    %v8006 = vand.u32 2147483647, %v7980
    %vm8007 = vcmp.eq.f32.partialorder %v8006, 8.507059e+37
    %v8008 = vand.u32 %v7980, 2147483648
    %v8009 = vor.u32 1.1754944e-38, %v8008
    %v8010 = vsel %vm8007, %v8009, %v8005
    %v8011 = vmul.f32 1.0, %v8010
    %v8012 = vrcp.pop %v7981
    %v8013 = vmul.f32 %v7981, %v8012
    %v8014 = vsub.f32 1.0, %v8013
    %v8015 = vmul.f32 %v8012, %v8014
    %v8016 = vadd.f32 %v8012, %v8015
    %vm8017 = vweird.f32 %v7981
    %vm8018 = vweird.f32 %v8012
    %vm8019 = vmor %vm8017, %vm8018
    %v8020 = vsel %vm8019, %v8012, %v8016
    %v8021 = vand.u32 2147483647, %v7981
    %vm8022 = vcmp.eq.f32.partialorder %v8021, 8.507059e+37
    %v8023 = vand.u32 %v7981, 2147483648
    %v8024 = vor.u32 1.1754944e-38, %v8023
    %v8025 = vsel %vm8022, %v8024, %v8020
    %v8026 = vmul.f32 1.0, %v8025
    %v8027 = vtanh.pop %v7969
    %v8028 = vmul.f32 %v8011, %v7814
    %v8029 = vmul.f32 %v7996, %v8027
    %v8030 = vadd.f32 %v8028, %v8029
    %v8031 = vtanh.pop %v8030
    %v8032 = vmul.f32 %v8026, %v8031
    %8033 = vst [vmem:[#allocation3 + $0x108] sm:$0xff] %v8032
    %v8034 = vld [vmem:[#allocation2 + $0x440] sm:$0xff]
    %v8035 = vld [vmem:[#allocation2 + $0x448] sm:$0xff]
    %v8036 = vld [vmem:[#allocation2 + $0x450] sm:$0xff]
    %v8037 = vld [vmem:[#allocation2 + $0x458] sm:$0xff]
    %v8038 = vld [vmem:[#allocation4] sm:$0xff]
    %v8039 = vld [vmem:[#allocation4 + $0x8] sm:$0xff]
    %v8040 = vld [vmem:[#allocation4 + $0x10] sm:$0xff]
    %v8041 = vld [vmem:[#allocation4 + $0x18] sm:$0xff]
    %v8042 = vld [vmem:[#allocation4 + $0x20] sm:$0xff]
    %v8043 = vld [vmem:[#allocation4 + $0x28] sm:$0xff]
    %v8044 = vld [vmem:[#allocation4 + $0x30] sm:$0xff]
    %v8045 = vld [vmem:[#allocation4 + $0x38] sm:$0xff]
    %v8046 = vld [vmem:[#allocation4 + $0x40] sm:$0xff]
    %v8047 = vld [vmem:[#allocation4 + $0x48] sm:$0xff]
    %v8048 = vld [vmem:[#allocation4 + $0x50] sm:$0xff]
    %v8049 = vld [vmem:[#allocation4 + $0x58] sm:$0xff]
    %v8050 = vld [vmem:[#allocation4 + $0x60] sm:$0xff]
    %v8051 = vld [vmem:[#allocation4 + $0x68] sm:$0xff]
    %v8052 = vld [vmem:[#allocation4 + $0x70] sm:$0xff]
    %v8053 = vld [vmem:[#allocation4 + $0x78] sm:$0xff]
    %v8054 = vld [vmem:[#allocation4 + $0x80] sm:$0xff]
    %v8055 = vld [vmem:[#allocation4 + $0x88] sm:$0xff]
    %v8056 = vld [vmem:[#allocation4 + $0x90] sm:$0xff]
    %v8057 = vld [vmem:[#allocation4 + $0x98] sm:$0xff]
    %v8058 = vld [vmem:[#allocation4 + $0xa0] sm:$0xff]
    %v8059 = vld [vmem:[#allocation4 + $0xa8] sm:$0xff]
    %v8060 = vld [vmem:[#allocation4 + $0xb0] sm:$0xff]
    %v8061 = vld [vmem:[#allocation4 + $0xb8] sm:$0xff]
    %v8062 = vld [vmem:[#allocation4 + $0xc0] sm:$0xff]
    %v8063 = vld [vmem:[#allocation4 + $0xc8] sm:$0xff]
    %v8064 = vld [vmem:[#allocation4 + $0xd0] sm:$0xff]
    %v8065 = vld [vmem:[#allocation4 + $0xd8] sm:$0xff]
    %v8066 = vld [vmem:[#allocation4 + $0xe0] sm:$0xff]
    %v8067 = vld [vmem:[#allocation4 + $0xe8] sm:$0xff]
    %v8068 = vld [vmem:[#allocation4 + $0xf0] sm:$0xff]
    %v8069 = vld [vmem:[#allocation4 + $0xf8] sm:$0xff]
    %v8070 = vld [vmem:[#allocation4 + $0x100] sm:$0xff]
    %v8071 = vld [vmem:[#allocation4 + $0x108] sm:$0xff]
    %v8072 = vld [vmem:[#allocation4 + $0x110] sm:$0xff]
    %v8073 = vld [vmem:[#allocation4 + $0x118] sm:$0xff]
    %v8074 = vld [vmem:[#allocation4 + $0x120] sm:$0xff]
    %v8075 = vld [vmem:[#allocation4 + $0x128] sm:$0xff]
    %v8076 = vld [vmem:[#allocation4 + $0x130] sm:$0xff]
    %v8077 = vld [vmem:[#allocation4 + $0x138] sm:$0xff]
    %v8078 = vld [vmem:[#allocation4 + $0x140] sm:$0xff]
    %v8079 = vld [vmem:[#allocation4 + $0x148] sm:$0xff]
    %v8080 = vld [vmem:[#allocation4 + $0x150] sm:$0xff]
    %v8081 = vld [vmem:[#allocation4 + $0x158] sm:$0xff]
    %v8082 = vld [vmem:[#allocation4 + $0x160] sm:$0xff]
    %v8083 = vld [vmem:[#allocation4 + $0x168] sm:$0xff]
    %v8084 = vld [vmem:[#allocation4 + $0x170] sm:$0xff]
    %v8085 = vld [vmem:[#allocation4 + $0x178] sm:$0xff]
    %v8086 = vld [vmem:[#allocation4 + $0x180] sm:$0xff]
    %v8087 = vld [vmem:[#allocation4 + $0x188] sm:$0xff]
    %v8088 = vld [vmem:[#allocation4 + $0x190] sm:$0xff]
    %v8089 = vld [vmem:[#allocation4 + $0x198] sm:$0xff]
    %v8090 = vld [vmem:[#allocation4 + $0x1a0] sm:$0xff]
    %v8091 = vld [vmem:[#allocation4 + $0x1a8] sm:$0xff]
    %v8092 = vld [vmem:[#allocation4 + $0x1b0] sm:$0xff]
    %v8093 = vld [vmem:[#allocation4 + $0x1b8] sm:$0xff]
    %v8094 = vld [vmem:[#allocation4 + $0x1c0] sm:$0xff]
    %v8095 = vld [vmem:[#allocation4 + $0x1c8] sm:$0xff]
    %v8096 = vld [vmem:[#allocation4 + $0x1d0] sm:$0xff]
    %v8097 = vld [vmem:[#allocation4 + $0x1d8] sm:$0xff]
    %v8098 = vld [vmem:[#allocation4 + $0x1e0] sm:$0xff]
    %v8099 = vld [vmem:[#allocation4 + $0x1e8] sm:$0xff]
    %v8100 = vld [vmem:[#allocation4 + $0x1f0] sm:$0xff]
    %v8101 = vld [vmem:[#allocation4 + $0x1f8] sm:$0xff]
    %8102 = vmatpush.msra.mxu0 %v8098
    %8103 = vmatpush.msra.mxu0 %v8094
    %8104 = vmatpush.msra.mxu0 %v8090
    %8105 = vmatpush.msra.mxu0 %v8086
    %8106 = vmatpush.msra.mxu0 %v8082
    %8107 = vmatpush.msra.mxu0 %v8078
    %8108 = vmatpush.msra.mxu0 %v8074
    %8109 = vmatpush.msra.mxu0 %v8070
    %8110 = vmatpush.msra.mxu0 %v8066
    %8111 = vmatpush.msra.mxu0 %v8062
    %8112 = vmatpush.msra.mxu0 %v8058
    %8113 = vmatpush.msra.mxu0 %v8054
    %8114 = vmatpush.msra.mxu0 %v8050
    %8115 = vmatpush.msra.mxu0 %v8046
    %8116 = vmatpush.msra.mxu0 %v8042
    %8117 = vmatpush.msra.mxu0 %v8038
    %8118 = vmatmul.f32.gmra.mxu0 %v8032
    %v8119 = vpop.f32.mrf.mxu0
    %v8120 = vadd.f32 0.0, %v8119
    %8121 = vdwg.mxu0
    %8122 = vmatpush.msra.mxu0 %v8099
    %8123 = vmatpush.msra.mxu0 %v8095
    %8124 = vmatpush.msra.mxu0 %v8091
    %8125 = vmatpush.msra.mxu0 %v8087
    %8126 = vmatpush.msra.mxu0 %v8083
    %8127 = vmatpush.msra.mxu0 %v8079
    %8128 = vmatpush.msra.mxu0 %v8075
    %8129 = vmatpush.msra.mxu0 %v8071
    %8130 = vmatpush.msra.mxu0 %v8067
    %8131 = vmatpush.msra.mxu0 %v8063
    %8132 = vmatpush.msra.mxu0 %v8059
    %8133 = vmatpush.msra.mxu0 %v8055
    %8134 = vmatpush.msra.mxu0 %v8051
    %8135 = vmatpush.msra.mxu0 %v8047
    %8136 = vmatpush.msra.mxu0 %v8043
    %8137 = vmatpush.msra.mxu0 %v8039
    %8138 = vmatmul.f32.gmra.mxu0 %v8032
    %v8139 = vpop.f32.mrf.mxu0
    %v8140 = vadd.f32 0.0, %v8139
    %8141 = vdwg.mxu0
    %8142 = vmatpush.msra.mxu0 %v8100
    %8143 = vmatpush.msra.mxu0 %v8096
    %8144 = vmatpush.msra.mxu0 %v8092
    %8145 = vmatpush.msra.mxu0 %v8088
    %8146 = vmatpush.msra.mxu0 %v8084
    %8147 = vmatpush.msra.mxu0 %v8080
    %8148 = vmatpush.msra.mxu0 %v8076
    %8149 = vmatpush.msra.mxu0 %v8072
    %8150 = vmatpush.msra.mxu0 %v8068
    %8151 = vmatpush.msra.mxu0 %v8064
    %8152 = vmatpush.msra.mxu0 %v8060
    %8153 = vmatpush.msra.mxu0 %v8056
    %8154 = vmatpush.msra.mxu0 %v8052
    %8155 = vmatpush.msra.mxu0 %v8048
    %8156 = vmatpush.msra.mxu0 %v8044
    %8157 = vmatpush.msra.mxu0 %v8040
    %8158 = vmatmul.f32.gmra.mxu0 %v8032
    %v8159 = vpop.f32.mrf.mxu0
    %v8160 = vadd.f32 0.0, %v8159
    %8161 = vdwg.mxu0
    %8162 = vmatpush.msra.mxu0 %v8101
    %8163 = vmatpush.msra.mxu0 %v8097
    %8164 = vmatpush.msra.mxu0 %v8093
    %8165 = vmatpush.msra.mxu0 %v8089
    %8166 = vmatpush.msra.mxu0 %v8085
    %8167 = vmatpush.msra.mxu0 %v8081
    %8168 = vmatpush.msra.mxu0 %v8077
    %8169 = vmatpush.msra.mxu0 %v8073
    %8170 = vmatpush.msra.mxu0 %v8069
    %8171 = vmatpush.msra.mxu0 %v8065
    %8172 = vmatpush.msra.mxu0 %v8061
    %8173 = vmatpush.msra.mxu0 %v8057
    %8174 = vmatpush.msra.mxu0 %v8053
    %8175 = vmatpush.msra.mxu0 %v8049
    %8176 = vmatpush.msra.mxu0 %v8045
    %8177 = vmatpush.msra.mxu0 %v8041
    %8178 = vmatmul.f32.gmra.mxu0 %v8032
    %v8179 = vpop.f32.mrf.mxu0
    %v8180 = vadd.f32 0.0, %v8179
    %8181 = vdwg.mxu0
    %v8182 = vadd.f32 %v8034, %v8120
    %v8183 = vadd.f32 %v8035, %v8140
    %v8184 = vadd.f32 %v8036, %v8160
    %v8185 = vadd.f32 %v8037, %v8180
    %v8186 = vxor.u32 %v8182, 2147483648
    %v8187 = vxor.u32 %v8183, 2147483648
    %v8188 = vxor.u32 %v8184, 2147483648
    %v8189 = vmul.f32 %v8186, 1.442695
    %v8190 = vpow.pop %v8189
    %v8191 = vmul.f32 %v8187, 1.442695
    %v8192 = vpow.pop %v8191
    %v8193 = vmul.f32 %v8188, 1.442695
    %v8194 = vpow.pop %v8193
    %v8195 = vadd.f32 %v8190, 1.0
    %v8196 = vadd.f32 %v8192, 1.0
    %v8197 = vadd.f32 %v8194, 1.0
    %v8198 = vrcp.pop %v8195
    %v8199 = vmul.f32 %v8195, %v8198
    %v8200 = vsub.f32 1.0, %v8199
    %v8201 = vmul.f32 %v8198, %v8200
    %v8202 = vadd.f32 %v8198, %v8201
    %vm8203 = vweird.f32 %v8195
    %vm8204 = vweird.f32 %v8198
    %vm8205 = vmor %vm8203, %vm8204
    %v8206 = vsel %vm8205, %v8198, %v8202
    %v8207 = vand.u32 2147483647, %v8195
    %vm8208 = vcmp.eq.f32.partialorder %v8207, 8.507059e+37
    %v8209 = vand.u32 %v8195, 2147483648
    %v8210 = vor.u32 1.1754944e-38, %v8209
    %v8211 = vsel %vm8208, %v8210, %v8206
    %v8212 = vmul.f32 1.0, %v8211
    %v8213 = vrcp.pop %v8196
    %v8214 = vmul.f32 %v8196, %v8213
    %v8215 = vsub.f32 1.0, %v8214
    %v8216 = vmul.f32 %v8213, %v8215
    %v8217 = vadd.f32 %v8213, %v8216
    %vm8218 = vweird.f32 %v8196
    %vm8219 = vweird.f32 %v8213
    %vm8220 = vmor %vm8218, %vm8219
    %v8221 = vsel %vm8220, %v8213, %v8217
    %v8222 = vand.u32 2147483647, %v8196
    %vm8223 = vcmp.eq.f32.partialorder %v8222, 8.507059e+37
    %v8224 = vand.u32 %v8196, 2147483648
    %v8225 = vor.u32 1.1754944e-38, %v8224
    %v8226 = vsel %vm8223, %v8225, %v8221
    %v8227 = vmul.f32 1.0, %v8226
    %v8228 = vrcp.pop %v8197
    %v8229 = vmul.f32 %v8197, %v8228
    %v8230 = vsub.f32 1.0, %v8229
    %v8231 = vmul.f32 %v8228, %v8230
    %v8232 = vadd.f32 %v8228, %v8231
    %vm8233 = vweird.f32 %v8197
    %vm8234 = vweird.f32 %v8228
    %vm8235 = vmor %vm8233, %vm8234
    %v8236 = vsel %vm8235, %v8228, %v8232
    %v8237 = vand.u32 2147483647, %v8197
    %vm8238 = vcmp.eq.f32.partialorder %v8237, 8.507059e+37
    %v8239 = vand.u32 %v8197, 2147483648
    %v8240 = vor.u32 1.1754944e-38, %v8239
    %v8241 = vsel %vm8238, %v8240, %v8236
    %v8242 = vmul.f32 1.0, %v8241
    %v8243 = vtanh.pop %v8185
    %v8244 = vmul.f32 %v8227, %v8030
    %v8245 = vmul.f32 %v8212, %v8243
    %v8246 = vadd.f32 %v8244, %v8245
    %v8247 = vtanh.pop %v8246
    %v8248 = vmul.f32 %v8242, %v8247
    %8249 = vst [vmem:[#allocation3 + $0x110] sm:$0xff] %v8248
    %v8250 = vld [vmem:[#allocation3 + $0x28] sm:$0xff]
    %v8251 = vld [vmem:[#allocation3 + $0x30] sm:$0xff]
    %v8252 = vld [vmem:[#allocation3 + $0x38] sm:$0xff]
    %v8253 = vld [vmem:[#allocation3 + $0x40] sm:$0xff]
    %v8254 = vld [vmem:[#allocation3 + $0x48] sm:$0xff]
    %v8255 = vld [vmem:[#allocation3 + $0x50] sm:$0xff]
    %v8256 = vld [vmem:[#allocation3 + $0x58] sm:$0xff]
    %v8257 = vld [vmem:[#allocation3 + $0x60] sm:$0xff]
    %v8258 = vld [vmem:[#allocation3 + $0x68] sm:$0xff]
    %v8259 = vld [vmem:[#allocation3 + $0x70] sm:$0xff]
    %v8260 = vld [vmem:[#allocation3 + $0x78] sm:$0xff]
    %v8261 = vld [vmem:[#allocation3 + $0x80] sm:$0xff]
    %v8262 = vld [vmem:[#allocation3 + $0x88] sm:$0xff]
    %v8263 = vld [vmem:[#allocation3 + $0x90] sm:$0xff]
    %v8264 = vld [vmem:[#allocation3 + $0x98] sm:$0xff]
    %v8265 = vld [vmem:[#allocation3 + $0xa0] sm:$0xff]
    %v8266 = vld [vmem:[#allocation3 + $0xa8] sm:$0xff]
    %v8267 = vld [vmem:[#allocation3 + $0xb0] sm:$0xff]
    %v8268 = vld [vmem:[#allocation3 + $0xb8] sm:$0xff]
    %v8269 = vld [vmem:[#allocation3 + $0xc0] sm:$0xff]
    %v8270 = vld [vmem:[#allocation3 + $0xc8] sm:$0xff]
    %v8271 = vld [vmem:[#allocation3 + $0xd0] sm:$0xff]
    %v8272 = vld [vmem:[#allocation3 + $0xd8] sm:$0xff]
    %v8273 = vld [vmem:[#allocation3 + $0xe0] sm:$0xff]
    %v8274 = vld [vmem:[#allocation3 + $0xe8] sm:$0xff]
    %v8275 = vld [vmem:[#allocation3 + $0xf0] sm:$0xff]
    %v8276 = vld [vmem:[#allocation3 + $0xf8] sm:$0xff]
    %v8277 = vld [vmem:[#allocation3 + $0x100] sm:$0xff]
    %v8278 = vld [vmem:[#allocation3 + $0x108] sm:$0xff]
    %v8279 = vld [vmem:[#allocation3 + $0x110] sm:$0xff]
    %v8280 = vld [vmem:[%s4] sm:$0xff]
    %v8281 = vld [vmem:[%s4 + $0x8] sm:$0xff]
    %v8282 = vld [vmem:[%s4 + $0x10] sm:$0xff]
    %v8283 = vld [vmem:[%s4 + $0x18] sm:$0xff]
    %v8284 = vld [vmem:[%s4 + $0x20] sm:$0xff]
    %v8285 = vld [vmem:[%s4 + $0x28] sm:$0xff]
    %v8286 = vld [vmem:[%s4 + $0x30] sm:$0xff]
    %v8287 = vld [vmem:[%s4 + $0x38] sm:$0xff]
    %v8288 = vld [vmem:[%s4 + $0x40] sm:$0xff]
    %v8289 = vld [vmem:[%s4 + $0x48] sm:$0xff]
    %v8290 = vld [vmem:[%s4 + $0x50] sm:$0xff]
    %v8291 = vld [vmem:[%s4 + $0x58] sm:$0xff]
    %v8292 = vld [vmem:[%s4 + $0x60] sm:$0xff]
    %v8293 = vld [vmem:[%s4 + $0x68] sm:$0xff]
    %v8294 = vld [vmem:[%s4 + $0x70] sm:$0xff]
    %v8295 = vld [vmem:[%s4 + $0x78] sm:$0xff]
    %v8296 = vld [vmem:[%s5] sm:$0x1]
    %v8298 = vperm.slane %v8296, 0
    %8300 = vmatpush.msra.mxu0 %v8295
    %8301 = vmatpush.msra.mxu0 %v8294
    %8302 = vmatpush.msra.mxu0 %v8293
    %8303 = vmatpush.msra.mxu0 %v8292
    %8304 = vmatpush.msra.mxu0 %v8291
    %8305 = vmatpush.msra.mxu0 %v8290
    %8306 = vmatpush.msra.mxu0 %v8289
    %8307 = vmatpush.msra.mxu0 %v8288
    %8308 = vmatpush.msra.mxu0 %v8287
    %8309 = vmatpush.msra.mxu0 %v8286
    %8310 = vmatpush.msra.mxu0 %v8285
    %8311 = vmatpush.msra.mxu0 %v8284
    %8312 = vmatpush.msra.mxu0 %v8283
    %8313 = vmatpush.msra.mxu0 %v8282
    %8314 = vmatpush.msra.mxu0 %v8281
    %8315 = vmatpush.msra.mxu0 %v8280
    %8316 = vmatmul.f32.gmra.mxu0 %v8250
    %v8317 = vpop.f32.mrf.mxu0
    %v8318 = vadd.f32 %v8298, %v8317
    %8319 = vmatmul.f32.gmra.mxu0 %v8251
    %v8320 = vpop.f32.mrf.mxu0
    %v8321 = vadd.f32 %v8298, %v8320
    %8322 = vmatmul.f32.gmra.mxu0 %v8252
    %v8323 = vpop.f32.mrf.mxu0
    %v8324 = vadd.f32 %v8298, %v8323
    %8325 = vmatmul.f32.gmra.mxu0 %v8253
    %v8326 = vpop.f32.mrf.mxu0
    %v8327 = vadd.f32 %v8298, %v8326
    %8328 = vmatmul.f32.gmra.mxu0 %v8254
    %v8329 = vpop.f32.mrf.mxu0
    %v8330 = vadd.f32 %v8298, %v8329
    %8331 = vmatmul.f32.gmra.mxu0 %v8255
    %v8332 = vpop.f32.mrf.mxu0
    %v8333 = vadd.f32 %v8298, %v8332
    %8334 = vmatmul.f32.gmra.mxu0 %v8256
    %v8335 = vpop.f32.mrf.mxu0
    %v8336 = vadd.f32 %v8298, %v8335
    %8337 = vmatmul.f32.gmra.mxu0 %v8257
    %v8338 = vpop.f32.mrf.mxu0
    %v8339 = vadd.f32 %v8298, %v8338
    %8340 = vmatmul.f32.gmra.mxu0 %v8258
    %v8341 = vpop.f32.mrf.mxu0
    %v8342 = vadd.f32 %v8298, %v8341
    %8343 = vmatmul.f32.gmra.mxu0 %v8259
    %v8344 = vpop.f32.mrf.mxu0
    %v8345 = vadd.f32 %v8298, %v8344
    %8346 = vmatmul.f32.gmra.mxu0 %v8260
    %v8347 = vpop.f32.mrf.mxu0
    %v8348 = vadd.f32 %v8298, %v8347
    %8349 = vmatmul.f32.gmra.mxu0 %v8261
    %v8350 = vpop.f32.mrf.mxu0
    %v8351 = vadd.f32 %v8298, %v8350
    %8352 = vmatmul.f32.gmra.mxu0 %v8262
    %v8353 = vpop.f32.mrf.mxu0
    %v8354 = vadd.f32 %v8298, %v8353
    %8355 = vmatmul.f32.gmra.mxu0 %v8263
    %v8356 = vpop.f32.mrf.mxu0
    %v8357 = vadd.f32 %v8298, %v8356
    %8358 = vmatmul.f32.gmra.mxu0 %v8264
    %v8359 = vpop.f32.mrf.mxu0
    %v8360 = vadd.f32 %v8298, %v8359
    %8361 = vmatmul.f32.gmra.mxu0 %v8265
    %v8362 = vpop.f32.mrf.mxu0
    %v8363 = vadd.f32 %v8298, %v8362
    %8364 = vmatmul.f32.gmra.mxu0 %v8266
    %v8365 = vpop.f32.mrf.mxu0
    %v8366 = vadd.f32 %v8298, %v8365
    %8367 = vmatmul.f32.gmra.mxu0 %v8267
    %v8368 = vpop.f32.mrf.mxu0
    %v8369 = vadd.f32 %v8298, %v8368
    %8370 = vmatmul.f32.gmra.mxu0 %v8268
    %v8371 = vpop.f32.mrf.mxu0
    %v8372 = vadd.f32 %v8298, %v8371
    %8373 = vmatmul.f32.gmra.mxu0 %v8269
    %v8374 = vpop.f32.mrf.mxu0
    %v8375 = vadd.f32 %v8298, %v8374
    %8376 = vmatmul.f32.gmra.mxu0 %v8270
    %v8377 = vpop.f32.mrf.mxu0
    %v8378 = vadd.f32 %v8298, %v8377
    %8379 = vmatmul.f32.gmra.mxu0 %v8271
    %v8380 = vpop.f32.mrf.mxu0
    %v8381 = vadd.f32 %v8298, %v8380
    %8382 = vmatmul.f32.gmra.mxu0 %v8272
    %v8383 = vpop.f32.mrf.mxu0
    %v8384 = vadd.f32 %v8298, %v8383
    %8385 = vmatmul.f32.gmra.mxu0 %v8273
    %v8386 = vpop.f32.mrf.mxu0
    %v8387 = vadd.f32 %v8298, %v8386
    %8388 = vmatmul.f32.gmra.mxu0 %v8274
    %v8389 = vpop.f32.mrf.mxu0
    %v8390 = vadd.f32 %v8298, %v8389
    %8391 = vmatmul.f32.gmra.mxu0 %v8275
    %v8392 = vpop.f32.mrf.mxu0
    %v8393 = vadd.f32 %v8298, %v8392
    %8394 = vmatmul.f32.gmra.mxu0 %v8276
    %v8395 = vpop.f32.mrf.mxu0
    %v8396 = vadd.f32 %v8298, %v8395
    %8397 = vmatmul.f32.gmra.mxu0 %v8277
    %v8398 = vpop.f32.mrf.mxu0
    %v8399 = vadd.f32 %v8298, %v8398
    %8400 = vmatmul.f32.gmra.mxu0 %v8278
    %v8401 = vpop.f32.mrf.mxu0
    %v8402 = vadd.f32 %v8298, %v8401
    %8403 = vmatmul.f32.gmra.mxu0 %v8279
    %v8404 = vpop.f32.mrf.mxu0
    %v8405 = vadd.f32 %v8298, %v8404
    %8406 = vdwg.mxu0
    %8407 = vst [vmem:[#allocation7] sm:$0xff] %v8318
    %8408 = vst [vmem:[#allocation7 + $0x8] sm:$0xff] %v8321
    %8409 = vst [vmem:[#allocation7 + $0x10] sm:$0xff] %v8324
    %8410 = vst [vmem:[#allocation7 + $0x18] sm:$0xff] %v8327
    %8411 = vst [vmem:[#allocation7 + $0x20] sm:$0xff] %v8330
    %8412 = vst [vmem:[#allocation7 + $0x28] sm:$0xff] %v8333
    %8413 = vst [vmem:[#allocation7 + $0x30] sm:$0xff] %v8336
    %8414 = vst [vmem:[#allocation7 + $0x38] sm:$0xff] %v8339
    %8415 = vst [vmem:[#allocation7 + $0x40] sm:$0xff] %v8342
    %8416 = vst [vmem:[#allocation7 + $0x48] sm:$0xff] %v8345
    %8417 = vst [vmem:[#allocation7 + $0x50] sm:$0xff] %v8348
    %8418 = vst [vmem:[#allocation7 + $0x58] sm:$0xff] %v8351
    %8419 = vst [vmem:[#allocation7 + $0x60] sm:$0xff] %v8354
    %8420 = vst [vmem:[#allocation7 + $0x68] sm:$0xff] %v8357
    %8421 = vst [vmem:[#allocation7 + $0x70] sm:$0xff] %v8360
    %8422 = vst [vmem:[#allocation7 + $0x78] sm:$0xff] %v8363
    %8423 = vst [vmem:[#allocation7 + $0x80] sm:$0xff] %v8366
    %8424 = vst [vmem:[#allocation7 + $0x88] sm:$0xff] %v8369
    %8425 = vst [vmem:[#allocation7 + $0x90] sm:$0xff] %v8372
    %8426 = vst [vmem:[#allocation7 + $0x98] sm:$0xff] %v8375
    %8427 = vst [vmem:[#allocation7 + $0xa0] sm:$0xff] %v8378
    %8428 = vst [vmem:[#allocation7 + $0xa8] sm:$0xff] %v8381
    %8429 = vst [vmem:[#allocation7 + $0xb0] sm:$0xff] %v8384
    %8430 = vst [vmem:[#allocation7 + $0xb8] sm:$0xff] %v8387
    %8431 = vst [vmem:[#allocation7 + $0xc0] sm:$0xff] %v8390
    %8432 = vst [vmem:[#allocation7 + $0xc8] sm:$0xff] %v8393
    %8433 = vst [vmem:[#allocation7 + $0xd0] sm:$0xff] %v8396
    %8434 = vst [vmem:[#allocation7 + $0xd8] sm:$0xff] %v8399
    %8435 = vst [vmem:[#allocation7 + $0xe0] sm:$0xff] %v8402
    %8436 = vst [vmem:[#allocation7 + $0xe8] sm:$0xff] %v8405
    // Predicated region
    $region30: #{tpu_custom_call.1} parent=1 // pred_check
      _
    $region31: #{tpu_custom_call.1} parent=1 // pred_check_branch
      %8438 = sbr.rel (0) target = $region33
    $region32: #{tpu_custom_call.1} parent=1 // pred_region
      %8440 = vsyncadd [#allocation6], 0
      %s8441 = sshll.u32 [#allocation7], 4
      %s8442 = int_to_ptr.vmem [resolvable:$true] %s8441
      %s8443 = sshll.u32 %s6, 4
      %s8444 = int_to_ptr.hbm [resolvable:$true] %s8443
      %8449 = dma.vmem_to_hbm [thread:$0]  %s8442, 3840, %s8444, [#allocation6], 128, 128, 8
    $region33: #{tpu_custom_call.1} parent=1 // pred_fallthru
      _
    // Predicated region
    $region34: #{tpu_custom_call.1} parent=1 // pred_check
      _
    $region35: #{tpu_custom_call.1} parent=1 // pred_check_branch
      %8451 = sbr.rel (0) target = $region37
    $region36: #{tpu_custom_call.1} parent=1 // pred_region
      %8453 = dma.done [#allocation6], 3840
    $region37: #{tpu_custom_call.1} parent=1 // pred_fallthru
      _
    %8454 = vsyncpa [#allocation5], 1
    %8455 = vsyncpa [#allocation6], 1

</llo_original>
